<compile_context>
chip_gen: v7x
topology: tpu7x:2x2x1
jax: 0.10.0
libtpu: 0.0.40
codegen_flags: <defaults>
</compile_context>

<pallas_src>
from functools import partial

import jax
import jax.numpy as jnp
from jax.experimental import pallas as pl
from jax.experimental.pallas import tpu as pltpu


def mlp_proj_kernel(x_ref, w1_ref, b1_ref, w2_ref, b2_ref, g_ref, beta_ref,
                    o_ref, *, eps, cross_dim, tokens_per_block):
    # ---- Linear 1 + exact-erf GELU (tiny; hidden under the W2 tile DMA) -----
    x = x_ref[...].astype(jnp.bfloat16)
    h = jnp.dot(x, w1_ref[...], preferred_element_type=jnp.float32)
    h = h + b1_ref[...]
    h = 0.5 * h * (1.0 + jax.lax.erf(h * 0.7071067811865476))

    # ---- Linear 2: tokens_per_block tokens' output columns per grid step ----
    y = jnp.dot(h.astype(jnp.bfloat16), w2_ref[...],
                preferred_element_type=jnp.float32)
    y = y + b2_ref[...]

    # ---- LayerNorm over cross_dim per token (biased variance, eps inside
    #      rsqrt, affine) — matches torch.nn.LayerNorm defaults.  Static
    #      128-aligned slices; no reshape/relayout. ---------------------------
    gamma = g_ref[...]
    beta = beta_ref[...]
    for j in range(tokens_per_block):
        lo = j * cross_dim
        hi = lo + cross_dim
        yj = y[:, lo:hi]
        mean = jnp.mean(yj, axis=-1, keepdims=True)
        var = jnp.mean(jnp.square(yj - mean), axis=-1, keepdims=True)
        yj = (yj - mean) * jax.lax.rsqrt(var + eps)
        yj = yj * gamma + beta
        o_ref[:, lo:hi] = yj.astype(o_ref.dtype)


def _pick_tokens_per_block(num_tokens, cross_dim, hid, itemsize,
                           budget_bytes=4 * 1024 * 1024):
    """Largest divisor of num_tokens whose W2 tile fits the VMEM budget."""
    if cross_dim % 128 != 0:
        # Block last dim must be a multiple of 128 or the full extent.
        return num_tokens
    best = 1
    for tpt in range(1, num_tokens + 1):
        if num_tokens % tpt:
            continue
        if tpt == 1 or hid * tpt * cross_dim * itemsize <= budget_bytes:
            best = tpt
    return best


def mlp_proj(id_embeds, params, *, num_tokens, cross_dim, eps=1e-5):
    B, id_dim = id_embeds.shape
    hid = params["w1"].shape[1]
    out_dim = num_tokens * cross_dim
    assert params["w2"].shape == (hid, out_dim)

    tpt = _pick_tokens_per_block(num_tokens, cross_dim, hid,
                                 params["w2"].dtype.itemsize)
    tile_n = tpt * cross_dim
    n_steps = num_tokens // tpt

    kernel = partial(mlp_proj_kernel, eps=float(eps), cross_dim=cross_dim,
                     tokens_per_block=tpt)

    out = pl.pallas_call(
        kernel,
        out_shape=jax.ShapeDtypeStruct((B, out_dim), id_embeds.dtype),
        grid=(n_steps,),
        in_specs=[
            pl.BlockSpec((B, id_dim), lambda t: (0, 0)),     # x     (resident)
            pl.BlockSpec((id_dim, hid), lambda t: (0, 0)),   # W1    (resident)
            pl.BlockSpec((1, hid), lambda t: (0, 0)),        # b1    (resident)
            pl.BlockSpec((hid, tile_n), lambda t: (0, t)),   # W2    (streamed)
            pl.BlockSpec((1, tile_n), lambda t: (0, t)),     # b2    (streamed)
            pl.BlockSpec((1, cross_dim), lambda t: (0, 0)),  # gamma (resident)
            pl.BlockSpec((1, cross_dim), lambda t: (0, 0)),  # beta  (resident)
        ],
        out_specs=pl.BlockSpec((B, tile_n), lambda t: (0, t)),
        compiler_params=pltpu.CompilerParams(
            # each step's tokens are independent -> megacore-safe on v7x
            dimension_semantics=("parallel",),
            # resident W1 + 2x double-buffered W2 tiles + small tiles:
            # a few MiB here; 32 MiB leaves headroom on v5e/v6e/v7x alike.
            vmem_limit_bytes=32 * 1024 * 1024,
        ),
    )(id_embeds, params["w1"], params["b1"], params["w2"], params["b2"],
      params["gamma"], params["beta"])

    # (B, num_tokens*cross_dim) -> (B, num_tokens, cross_dim): zero-copy.
    return out.reshape(B, num_tokens, cross_dim)


def init_params(key, id_dim, cross_dim, num_tokens):
    hid = id_dim * 2
    out_dim = cross_dim * num_tokens
    k1, k2, k3, k4 = jax.random.split(key, 4)
    s1 = id_dim ** -0.5
    s2 = hid ** -0.5
    return {
        # weights in bf16: halves the dominant W2 HBM stream (MXU-native).
        # TODO(synk): optional int8 W2 path for v5e/v6e (not portable to v7x).
        "w1": jax.random.uniform(k1, (id_dim, hid), jnp.float32, -s1, s1
                                 ).astype(jnp.bfloat16),
        "b1": jax.random.uniform(k2, (1, hid), jnp.float32, -s1, s1),
        "w2": jax.random.uniform(k3, (hid, out_dim), jnp.float32, -s2, s2
                                 ).astype(jnp.bfloat16),
        "b2": jax.random.uniform(k4, (1, out_dim), jnp.float32, -s2, s2),
        "gamma": jnp.ones((1, cross_dim), jnp.float32),
        "beta": jnp.zeros((1, cross_dim), jnp.float32),
    }


def _reference(id_embeds, params, *, num_tokens, cross_dim, eps=1e-5):
    # Pure-JAX reference with the same bf16 roundings as the kernel.
    x = id_embeds.astype(jnp.bfloat16)
    h = jnp.dot(x, params["w1"], preferred_element_type=jnp.float32) + params["b1"]
    h = 0.5 * h * (1.0 + jax.lax.erf(h * 0.7071067811865476))
    y = jnp.dot(h.astype(jnp.bfloat16), params["w2"],
                preferred_element_type=jnp.float32) + params["b2"]
    y = y.reshape(-1, num_tokens, cross_dim)
    mean = jnp.mean(y, axis=-1, keepdims=True)
    var = jnp.mean(jnp.square(y - mean), axis=-1, keepdims=True)
    y = (y - mean) * jax.lax.rsqrt(var + eps)
    return (y * params["gamma"] + params["beta"]).astype(id_embeds.dtype)


if __name__ == "__main__":
    # Module-default dims (small: W2 is 1024x3072 bf16 = 6 MiB).
    B = 2
    ID_DIM = 512        # id_embeddings_dim
    CROSS_DIM = 768     # cross_attention_dim
    NUM_TOKENS = 4

    key = jax.random.PRNGKey(0)
    k_params, k_x = jax.random.split(key)
    params = init_params(k_params, ID_DIM, CROSS_DIM, NUM_TOKENS)
    id_embeds = jax.random.normal(k_x, (B, ID_DIM), jnp.float32)

    out = mlp_proj(id_embeds, params, num_tokens=NUM_TOKENS, cross_dim=CROSS_DIM)
    out = jax.block_until_ready(out)

    ref = _reference(id_embeds, params, num_tokens=NUM_TOKENS, cross_dim=CROSS_DIM)
    assert out.shape == (B, NUM_TOKENS, CROSS_DIM)
    # bf16 weights + f32 accumulation in both paths; loose tol covers erf /
    # accumulation-order differences between Mosaic and XLA lowerings.
    assert jnp.allclose(out, ref, atol=1e-2, rtol=1e-2), float(
        jnp.max(jnp.abs(out - ref)))
    print("KERNEL_OK")
</pallas_src>

<mosaic_0001>
module attributes {stable_mosaic.version = 11 : i64} {
  func.func @mlp_proj_kernel(%arg0: i32, %arg1: memref<2x512xf32, #tpu.memory_space<vmem>>, %arg2: memref<512x1024xbf16, #tpu.memory_space<vmem>>, %arg3: memref<1x1024xf32, #tpu.memory_space<vmem>>, %arg4: memref<1024x1536xbf16, #tpu.memory_space<vmem>>, %arg5: memref<1x1536xf32, #tpu.memory_space<vmem>>, %arg6: memref<1x768xf32, #tpu.memory_space<vmem>>, %arg7: memref<1x768xf32, #tpu.memory_space<vmem>>, %arg8: memref<2x1536xf32, #tpu.memory_space<vmem>>) attributes {dimension_semantics = [#tpu.dimension_semantics<parallel>], iteration_bounds = array<i64: 2>, scalar_prefetch = 0 : i64, scratch_operands = 0 : i64, tpu.core_type = #tpu.core_type<tc>, window_params = [{pipeline_mode = #tpu.pipeline_mode<synchronous>, transform_indices = @transform_0, window_bounds = array<i64: 2, 512>}, {pipeline_mode = #tpu.pipeline_mode<synchronous>, transform_indices = @transform_1, window_bounds = array<i64: 512, 1024>}, {pipeline_mode = #tpu.pipeline_mode<synchronous>, transform_indices = @transform_2, window_bounds = array<i64: 1, 1024>}, {transform_indices = @transform_3, window_bounds = array<i64: 1024, 1536>}, {transform_indices = @transform_4, window_bounds = array<i64: 1, 1536>}, {pipeline_mode = #tpu.pipeline_mode<synchronous>, transform_indices = @transform_5, window_bounds = array<i64: 1, 768>}, {pipeline_mode = #tpu.pipeline_mode<synchronous>, transform_indices = @transform_6, window_bounds = array<i64: 1, 768>}, {transform_indices = @transform_7, window_bounds = array<i64: 2, 1536>}]} {
    %c0 = arith.constant 0 : index
    %c0_0 = arith.constant 0 : index
    %0 = vector.load %arg1[%c0, %c0_0] : memref<2x512xf32, #tpu.memory_space<vmem>>, vector<2x512xf32>
    %1 = arith.truncf %0 : vector<2x512xf32> to vector<2x512xbf16>
    %c0_1 = arith.constant 0 : index
    %c0_2 = arith.constant 0 : index
    %2 = vector.load %arg2[%c0_1, %c0_2] : memref<512x1024xbf16, #tpu.memory_space<vmem>>, vector<512x1024xbf16>
    %cst = arith.constant dense<0.000000e+00> : vector<2x1024xf32>
    %3 = tpu.matmul %1, %2, %cst {dimension_numbers = #tpu.dot_dimension_numbers<[1], [0], [0], [1], [0, 0, 1, 1], [], []>} : vector<2x512xbf16>, vector<512x1024xbf16>, vector<2x1024xf32> -> vector<2x1024xf32>
    %c0_3 = arith.constant 0 : index
    %c0_4 = arith.constant 0 : index
    %4 = vector.load %arg3[%c0_3, %c0_4] : memref<1x1024xf32, #tpu.memory_space<vmem>>, vector<1x1024xf32>
    %5 = vector.broadcast %4 : vector<1x1024xf32> to vector<2x1024xf32>
    %6 = arith.addf %3, %5 : vector<2x1024xf32>
    %cst_5 = arith.constant 5.000000e-01 : f32
    %7 = vector.broadcast %cst_5 : f32 to vector<2x1024xf32>
    %8 = arith.mulf %7, %6 : vector<2x1024xf32>
    %cst_6 = arith.constant 0.707106769 : f32
    %9 = vector.broadcast %cst_6 : f32 to vector<2x1024xf32>
    %10 = arith.mulf %6, %9 : vector<2x1024xf32>
    %11 = math.erf %10 : vector<2x1024xf32>
    %cst_7 = arith.constant 1.000000e+00 : f32
    %12 = vector.broadcast %cst_7 : f32 to vector<2x1024xf32>
    %13 = arith.addf %12, %11 : vector<2x1024xf32>
    %14 = arith.mulf %8, %13 : vector<2x1024xf32>
    %15 = arith.truncf %14 : vector<2x1024xf32> to vector<2x1024xbf16>
    %c0_8 = arith.constant 0 : index
    %c0_9 = arith.constant 0 : index
    %16 = vector.load %arg4[%c0_8, %c0_9] : memref<1024x1536xbf16, #tpu.memory_space<vmem>>, vector<1024x1536xbf16>
    %cst_10 = arith.constant dense<0.000000e+00> : vector<2x1536xf32>
    %17 = tpu.matmul %15, %16, %cst_10 {dimension_numbers = #tpu.dot_dimension_numbers<[1], [0], [0], [1], [0, 0, 1, 1], [], []>} : vector<2x1024xbf16>, vector<1024x1536xbf16>, vector<2x1536xf32> -> vector<2x1536xf32>
    %c0_11 = arith.constant 0 : index
    %c0_12 = arith.constant 0 : index
    %18 = vector.load %arg5[%c0_11, %c0_12] : memref<1x1536xf32, #tpu.memory_space<vmem>>, vector<1x1536xf32>
    %19 = vector.broadcast %18 : vector<1x1536xf32> to vector<2x1536xf32>
    %20 = arith.addf %17, %19 : vector<2x1536xf32>
    %c0_13 = arith.constant 0 : index
    %c0_14 = arith.constant 0 : index
    %21 = vector.load %arg6[%c0_13, %c0_14] : memref<1x768xf32, #tpu.memory_space<vmem>>, vector<1x768xf32>
    %c0_15 = arith.constant 0 : index
    %c0_16 = arith.constant 0 : index
    %22 = vector.load %arg7[%c0_15, %c0_16] : memref<1x768xf32, #tpu.memory_space<vmem>>, vector<1x768xf32>
    %23 = vector.extract_strided_slice %20 {offsets = [0, 0], sizes = [2, 768], strides = [1, 1]} : vector<2x1536xf32> to vector<2x768xf32>
    %cst_17 = arith.constant dense<0.000000e+00> : vector<2xf32>
    %24 = vector.multi_reduction <add>, %23, %cst_17 [1] : vector<2x768xf32> to vector<2xf32>
    %25 = vector.shape_cast %24 : vector<2xf32> to vector<2x1xf32>
    %cst_18 = arith.constant 7.680000e+02 : f32
    %26 = vector.broadcast %cst_18 : f32 to vector<2x1xf32>
    %27 = arith.divf %25, %26 : vector<2x1xf32>
    %28 = vector.broadcast %27 : vector<2x1xf32> to vector<2x768xf32>
    %29 = arith.subf %23, %28 : vector<2x768xf32>
    %30 = arith.mulf %29, %29 : vector<2x768xf32>
    %cst_19 = arith.constant dense<0.000000e+00> : vector<2xf32>
    %31 = vector.multi_reduction <add>, %30, %cst_19 [1] : vector<2x768xf32> to vector<2xf32>
    %32 = vector.shape_cast %31 : vector<2xf32> to vector<2x1xf32>
    %cst_20 = arith.constant 7.680000e+02 : f32
    %33 = vector.broadcast %cst_20 : f32 to vector<2x1xf32>
    %34 = arith.divf %32, %33 : vector<2x1xf32>
    %35 = vector.broadcast %27 : vector<2x1xf32> to vector<2x768xf32>
    %36 = arith.subf %23, %35 : vector<2x768xf32>
    %cst_21 = arith.constant 9.99999974E-6 : f32
    %37 = vector.broadcast %cst_21 : f32 to vector<2x1xf32>
    %38 = arith.addf %34, %37 : vector<2x1xf32>
    %39 = math.rsqrt %38 : vector<2x1xf32>
    %40 = vector.broadcast %39 : vector<2x1xf32> to vector<2x768xf32>
    %41 = arith.mulf %36, %40 : vector<2x768xf32>
    %42 = vector.broadcast %21 : vector<1x768xf32> to vector<2x768xf32>
    %43 = arith.mulf %41, %42 : vector<2x768xf32>
    %44 = vector.broadcast %22 : vector<1x768xf32> to vector<2x768xf32>
    %45 = arith.addf %43, %44 : vector<2x768xf32>
    %c0_22 = arith.constant 0 : index
    %c0_23 = arith.constant 0 : index
    %46 = vector.load %arg8[%c0_22, %c0_23] : memref<2x1536xf32, #tpu.memory_space<vmem>>, vector<2x768xf32>
    tpu.vector_store %arg8[%c0_22, %c0_23], %45 {strides = array<i32>} : memref<2x1536xf32, #tpu.memory_space<vmem>>, vector<2x768xf32>,
    %47 = vector.extract_strided_slice %20 {offsets = [0, 768], sizes = [2, 768], strides = [1, 1]} : vector<2x1536xf32> to vector<2x768xf32>
    %cst_24 = arith.constant dense<0.000000e+00> : vector<2xf32>
    %48 = vector.multi_reduction <add>, %47, %cst_24 [1] : vector<2x768xf32> to vector<2xf32>
    %49 = vector.shape_cast %48 : vector<2xf32> to vector<2x1xf32>
    %cst_25 = arith.constant 7.680000e+02 : f32
    %50 = vector.broadcast %cst_25 : f32 to vector<2x1xf32>
    %51 = arith.divf %49, %50 : vector<2x1xf32>
    %52 = vector.broadcast %51 : vector<2x1xf32> to vector<2x768xf32>
    %53 = arith.subf %47, %52 : vector<2x768xf32>
    %54 = arith.mulf %53, %53 : vector<2x768xf32>
    %cst_26 = arith.constant dense<0.000000e+00> : vector<2xf32>
    %55 = vector.multi_reduction <add>, %54, %cst_26 [1] : vector<2x768xf32> to vector<2xf32>
    %56 = vector.shape_cast %55 : vector<2xf32> to vector<2x1xf32>
    %cst_27 = arith.constant 7.680000e+02 : f32
    %57 = vector.broadcast %cst_27 : f32 to vector<2x1xf32>
    %58 = arith.divf %56, %57 : vector<2x1xf32>
    %59 = vector.broadcast %51 : vector<2x1xf32> to vector<2x768xf32>
    %60 = arith.subf %47, %59 : vector<2x768xf32>
    %cst_28 = arith.constant 9.99999974E-6 : f32
    %61 = vector.broadcast %cst_28 : f32 to vector<2x1xf32>
    %62 = arith.addf %58, %61 : vector<2x1xf32>
    %63 = math.rsqrt %62 : vector<2x1xf32>
    %64 = vector.broadcast %63 : vector<2x1xf32> to vector<2x768xf32>
    %65 = arith.mulf %60, %64 : vector<2x768xf32>
    %66 = vector.broadcast %21 : vector<1x768xf32> to vector<2x768xf32>
    %67 = arith.mulf %65, %66 : vector<2x768xf32>
    %68 = vector.broadcast %22 : vector<1x768xf32> to vector<2x768xf32>
    %69 = arith.addf %67, %68 : vector<2x768xf32>
    %c0_29 = arith.constant 0 : index
    %c768 = arith.constant 768 : index
    %70 = vector.load %arg8[%c0_29, %c768] : memref<2x1536xf32, #tpu.memory_space<vmem>>, vector<2x768xf32>
    tpu.vector_store %arg8[%c0_29, %c768], %69 {strides = array<i32>} : memref<2x1536xf32, #tpu.memory_space<vmem>>, vector<2x768xf32>,
    return
  }
  func.func @transform_0(%arg0: i32) -> (i32, i32) {
    %c0_i32 = arith.constant 0 : i32
    %c0_i32_0 = arith.constant 0 : i32
    %c0_i32_1 = arith.constant 0 : i32
    return %c0_i32, %c0_i32_0 : i32, i32
  }
  func.func @transform_1(%arg0: i32) -> (i32, i32) {
    %c0_i32 = arith.constant 0 : i32
    %c0_i32_0 = arith.constant 0 : i32
    %c0_i32_1 = arith.constant 0 : i32
    return %c0_i32, %c0_i32_0 : i32, i32
  }
  func.func @transform_2(%arg0: i32) -> (i32, i32) {
    %c0_i32 = arith.constant 0 : i32
    %c0_i32_0 = arith.constant 0 : i32
    %c0_i32_1 = arith.constant 0 : i32
    return %c0_i32, %c0_i32_0 : i32, i32
  }
  func.func @transform_3(%arg0: i32) -> (i32, i32) {
    %c0_i32 = arith.constant 0 : i32
    %c0_i32_0 = arith.constant 0 : i32
    return %c0_i32, %arg0 : i32, i32
  }
  func.func @transform_4(%arg0: i32) -> (i32, i32) {
    %c0_i32 = arith.constant 0 : i32
    %c0_i32_0 = arith.constant 0 : i32
    return %c0_i32, %arg0 : i32, i32
  }
  func.func @transform_5(%arg0: i32) -> (i32, i32) {
    %c0_i32 = arith.constant 0 : i32
    %c0_i32_0 = arith.constant 0 : i32
    %c0_i32_1 = arith.constant 0 : i32
    return %c0_i32, %c0_i32_0 : i32, i32
  }
  func.func @transform_6(%arg0: i32) -> (i32, i32) {
    %c0_i32 = arith.constant 0 : i32
    %c0_i32_0 = arith.constant 0 : i32
    %c0_i32_1 = arith.constant 0 : i32
    return %c0_i32, %c0_i32_0 : i32, i32
  }
  func.func @transform_7(%arg0: i32) -> (i32, i32) {
    %c0_i32 = arith.constant 0 : i32
    %c0_i32_0 = arith.constant 0 : i32
    return %c0_i32, %arg0 : i32, i32
  }
}

</mosaic_0001>

<llo_original>
// kernel: tpu_custom_call.1
$region0: #{tpu_custom_call.1}
  #allocation0 [shape = 'u32[]', space=smem, size = 0x4, offset = 0x4, fixed_abs, tag = 'smem constant byte address 0x4 - core index']
  #allocation1 [shape = 'u32[144,128]{1,0:T(1,128)}', space=vmem, size = 0x12000, scoped, tag = 'internal scratch']
  %s0 = inlined_call_operand.hbm [shape: f32[2,512], index: 0, kind: input, shape index: {}]
  %s1 = inlined_call_operand.hbm [shape: bf16[512,1024], index: 1, kind: input, shape index: {}]
  %s2 = inlined_call_operand.hbm [shape: f32[1,1024], index: 2, kind: input, shape index: {}]
  %s3 = inlined_call_operand.hbm [shape: bf16[1024,3072], index: 3, kind: input, shape index: {}]
  %s4 = inlined_call_operand.hbm [shape: f32[1,3072], index: 4, kind: input, shape index: {}]
  %s5 = inlined_call_operand.hbm [shape: f32[1,768], index: 5, kind: input, shape index: {}]
  %s6 = inlined_call_operand.hbm [shape: f32[1,768], index: 6, kind: input, shape index: {}]
  %s7 = inlined_call_operand.hbm [shape: f32[2,3072], index: 7, kind: output, shape index: {}]
  %s8 = sld [smem:[#allocation0]]
  $region89: #{tpu_custom_call.1} parent=0
    _
  %s10 = ssub.s32 1, %s8
  %s11 = scalar_select 0, %s10, %s8
  $region1: #{tpu_custom_call.1} parent=0
    #allocation2 [shape = 'u8[4096]{0}', space=vmem, size = 0x1000, scoped, tag = 'input window, operand 0, single buffered']
    #allocation3 [shape = 's32[2]{0}', space=sflag, size = 0x8, scoped, tag = 'scoped memory for tpu_custom_call.1']
    #allocation4 [shape = 's32[2]{0}', space=sflag, size = 0x8, scoped, tag = 'scoped memory for tpu_custom_call.1']
    #allocation5 [shape = 'u8[1048576]{0}', space=vmem, size = 0x100000, scoped, tag = 'input window, operand 1, single buffered']
    #allocation6 [shape = 's32[1]{0}', space=sflag, size = 0x4, scoped, tag = 'scoped memory for tpu_custom_call.1']
    #allocation7 [shape = 'u8[4096]{0}', space=vmem, size = 0x1000, scoped, tag = 'input window, operand 2, single buffered']
    #allocation8 [shape = 'u8[6291456]{0}', space=vmem, size = 0x600000, scoped, tag = 'input window, operand 3']
    #allocation9 [shape = 's32[2]{0}', space=sflag, size = 0x8, scoped, tag = 'scoped memory for tpu_custom_call.1']
    #allocation10 [shape = 'u8[12288]{0}', space=vmem, size = 0x3000, scoped, tag = 'input window, operand 4']
    #allocation11 [shape = 'u8[3072]{0}', space=vmem, size = 0xc00, scoped, tag = 'input window, operand 5, single buffered']
    #allocation12 [shape = 's32[1]{0}', space=sflag, size = 0x4, scoped, tag = 'scoped memory for tpu_custom_call.1']
    #allocation13 [shape = 'u8[3072]{0}', space=vmem, size = 0xc00, scoped, tag = 'input window, operand 6, single buffered']
    #allocation14 [shape = 'u8[24576]{0}', space=vmem, size = 0x6000, scoped, tag = 'output window, operand 0']
    %12 = vsyncpa [#allocation3], 0
    %13 = vsyncpa [#allocation6], 0
    %14 = vsyncpa [#allocation9], 0
    %s15 = scalar_lea.sflag [#allocation9], 1
    %16 = vsyncpa %s15, 0
    %17 = vsyncpa [#allocation12], 0
    %18 = vsyncpa [#allocation4], 0
    %s19 = scalar_lea.sflag [#allocation4], 1
    %20 = vsyncpa %s19, 0
    loop: start=0, step=1, limit=4
    $region2: #{tpu_custom_call.1} parent=1 // loop_pre_header
      _
    $region3: #{tpu_custom_call.1} parent=1 // loop_header
      %s22 = sphi 0, %s26
      %p23 = scmp.ge.s32.totalorder %s22, 4
      %s30 = sphi 0, %s30
      %s32 = sphi 0, %s30
      %s33 = sphi 0, %s32
      %s47 = sphi 0, %s33
      %s51 = sphi 0, %s51
      %s53 = sphi 0, %s51
      %s54 = sphi 0, %s53
      %s68 = sphi 0, %s54
      %s72 = sphi 0, %s72
      %s74 = sphi 0, %s72
      %s75 = sphi 0, %s74
      %s89 = sphi 0, %s75
      %s95 = sphi 0, %s97
      %s98 = sphi 0, %s95
      %s99 = sphi 0, %s98
      %s115 = sphi 0, %s99
      %s121 = sphi 0, %s123
      %s124 = sphi 0, %s121
      %s125 = sphi 0, %s124
      %s141 = sphi 0, %s125
      %s145 = sphi 0, %s145
      %s147 = sphi 0, %s145
      %s148 = sphi 0, %s147
      %s162 = sphi 0, %s148
      %s166 = sphi 0, %s166
      %s168 = sphi 0, %s166
      %s169 = sphi 0, %s168
      %s183 = sphi 0, %s169
      %s189 = sphi 0, %s191
      %s192 = sphi 0, %s189
      %s193 = sphi 0, %s192
      %s209 = sphi 0, %s193
    $region4: #{tpu_custom_call.1} parent=1 // loop_header_branch
      %25 = sbr.rel (%p23) target = $region8
    $region5: #{tpu_custom_call.1} parent=1 // loop_body
      %s27 = ssub.s32 %s22, 1
      %s28 = ssub.s32 %s22, 2
      %s29 = sadd.s32 %s22, 1
      %s31 = sadd.s32 %s30, 1
      %p34 = scmp.eq.s32.totalorder %s22, 1
      %p35 = scmp.ne.s32.totalorder %s30, %s32
      %p36 = scmp.eq.s32.totalorder %s22, 0
      %p37 = por %p35, %p36
      %p38 = scmp.ne.s32.totalorder %s30, %s32
      %p39 = scmp.eq.s32.totalorder %s27, 1
      %p40 = por %p38, %p39
      %p41 = scmp.ne.s32.totalorder %s32, %s33
      %p42 = scmp.eq.s32.totalorder %s27, 0
      %p43 = por %p41, %p42
      %p44 = scmp.ne.s32.totalorder %s32, %s33
      %p45 = scmp.eq.s32.totalorder %s28, 1
      %p46 = por %p44, %p45
      %p48 = scmp.ne.s32.totalorder %s33, %s47
      %p49 = scmp.eq.s32.totalorder %s28, 0
      %p50 = por %p48, %p49
      %s52 = sadd.s32 %s51, 1
      %p55 = scmp.eq.s32.totalorder %s22, 1
      %p56 = scmp.ne.s32.totalorder %s51, %s53
      %p57 = scmp.eq.s32.totalorder %s22, 0
      %p58 = por %p56, %p57
      %p59 = scmp.ne.s32.totalorder %s51, %s53
      %p60 = scmp.eq.s32.totalorder %s27, 1
      %p61 = por %p59, %p60
      %p62 = scmp.ne.s32.totalorder %s53, %s54
      %p63 = scmp.eq.s32.totalorder %s27, 0
      %p64 = por %p62, %p63
      %p65 = scmp.ne.s32.totalorder %s53, %s54
      %p66 = scmp.eq.s32.totalorder %s28, 1
      %p67 = por %p65, %p66
      %p69 = scmp.ne.s32.totalorder %s54, %s68
      %p70 = scmp.eq.s32.totalorder %s28, 0
      %p71 = por %p69, %p70
      %s73 = sadd.s32 %s72, 1
      %p76 = scmp.eq.s32.totalorder %s22, 1
      %p77 = scmp.ne.s32.totalorder %s72, %s74
      %p78 = scmp.eq.s32.totalorder %s22, 0
      %p79 = por %p77, %p78
      %p80 = scmp.ne.s32.totalorder %s72, %s74
      %p81 = scmp.eq.s32.totalorder %s27, 1
      %p82 = por %p80, %p81
      %p83 = scmp.ne.s32.totalorder %s74, %s75
      %p84 = scmp.eq.s32.totalorder %s27, 0
      %p85 = por %p83, %p84
      %p86 = scmp.ne.s32.totalorder %s74, %s75
      %p87 = scmp.eq.s32.totalorder %s28, 1
      %p88 = por %p86, %p87
      %p90 = scmp.ne.s32.totalorder %s75, %s89
      %p91 = scmp.eq.s32.totalorder %s28, 0
      %p92 = por %p90, %p91
      %s93 = ssub.s32 %s22, %s29
      %p94 = scmp.eq.s32.totalorder %s93, 0
      %s96 = sadd.s32 %s95, 1
      %s97 = scalar_select %p94, %s95, %s96
      %p100 = pneg %p94
      %p101 = scmp.eq.s32.totalorder %s22, 1
      %p102 = por %p100, %p101
      %p103 = scmp.ne.s32.totalorder %s95, %s98
      %p104 = scmp.eq.s32.totalorder %s22, 0
      %p105 = por %p103, %p104
      %p106 = scmp.ne.s32.totalorder %s95, %s98
      %p107 = scmp.eq.s32.totalorder %s27, 1
      %p108 = por %p106, %p107
      %p109 = scmp.ne.s32.totalorder %s98, %s99
      %p110 = scmp.eq.s32.totalorder %s27, 0
      %p111 = por %p109, %p110
      %p112 = scmp.ne.s32.totalorder %s98, %s99
      %p113 = scmp.eq.s32.totalorder %s28, 1
      %p114 = por %p112, %p113
      %p116 = scmp.ne.s32.totalorder %s99, %s115
      %p117 = scmp.eq.s32.totalorder %s28, 0
      %p118 = por %p116, %p117
      %s119 = ssub.s32 %s22, %s29
      %p120 = scmp.eq.s32.totalorder %s119, 0
      %s122 = sadd.s32 %s121, 1
      %s123 = scalar_select %p120, %s121, %s122
      %p126 = pneg %p120
      %p127 = scmp.eq.s32.totalorder %s22, 1
      %p128 = por %p126, %p127
      %p129 = scmp.ne.s32.totalorder %s121, %s124
      %p130 = scmp.eq.s32.totalorder %s22, 0
      %p131 = por %p129, %p130
      %p132 = scmp.ne.s32.totalorder %s121, %s124
      %p133 = scmp.eq.s32.totalorder %s27, 1
      %p134 = por %p132, %p133
      %p135 = scmp.ne.s32.totalorder %s124, %s125
      %p136 = scmp.eq.s32.totalorder %s27, 0
      %p137 = por %p135, %p136
      %p138 = scmp.ne.s32.totalorder %s124, %s125
      %p139 = scmp.eq.s32.totalorder %s28, 1
      %p140 = por %p138, %p139
      %p142 = scmp.ne.s32.totalorder %s125, %s141
      %p143 = scmp.eq.s32.totalorder %s28, 0
      %p144 = por %p142, %p143
      %s146 = sadd.s32 %s145, 1
      %p149 = scmp.eq.s32.totalorder %s22, 1
      %p150 = scmp.ne.s32.totalorder %s145, %s147
      %p151 = scmp.eq.s32.totalorder %s22, 0
      %p152 = por %p150, %p151
      %p153 = scmp.ne.s32.totalorder %s145, %s147
      %p154 = scmp.eq.s32.totalorder %s27, 1
      %p155 = por %p153, %p154
      %p156 = scmp.ne.s32.totalorder %s147, %s148
      %p157 = scmp.eq.s32.totalorder %s27, 0
      %p158 = por %p156, %p157
      %p159 = scmp.ne.s32.totalorder %s147, %s148
      %p160 = scmp.eq.s32.totalorder %s28, 1
      %p161 = por %p159, %p160
      %p163 = scmp.ne.s32.totalorder %s148, %s162
      %p164 = scmp.eq.s32.totalorder %s28, 0
      %p165 = por %p163, %p164
      %s167 = sadd.s32 %s166, 1
      %p170 = scmp.eq.s32.totalorder %s22, 1
      %p171 = scmp.ne.s32.totalorder %s166, %s168
      %p172 = scmp.eq.s32.totalorder %s22, 0
      %p173 = por %p171, %p172
      %p174 = scmp.ne.s32.totalorder %s166, %s168
      %p175 = scmp.eq.s32.totalorder %s27, 1
      %p176 = por %p174, %p175
      %p177 = scmp.ne.s32.totalorder %s168, %s169
      %p178 = scmp.eq.s32.totalorder %s27, 0
      %p179 = por %p177, %p178
      %p180 = scmp.ne.s32.totalorder %s168, %s169
      %p181 = scmp.eq.s32.totalorder %s28, 1
      %p182 = por %p180, %p181
      %p184 = scmp.ne.s32.totalorder %s169, %s183
      %p185 = scmp.eq.s32.totalorder %s28, 0
      %p186 = por %p184, %p185
      %s187 = ssub.s32 %s22, %s29
      %p188 = scmp.eq.s32.totalorder %s187, 0
      %s190 = sadd.s32 %s189, 1
      %s191 = scalar_select %p188, %s189, %s190
      %p194 = pneg %p188
      %p195 = scmp.eq.s32.totalorder %s22, 1
      %p196 = por %p194, %p195
      %p197 = scmp.ne.s32.totalorder %s189, %s192
      %p198 = scmp.eq.s32.totalorder %s22, 0
      %p199 = por %p197, %p198
      %p200 = scmp.ne.s32.totalorder %s189, %s192
      %p201 = scmp.eq.s32.totalorder %s27, 1
      %p202 = por %p200, %p201
      %p203 = scmp.ne.s32.totalorder %s192, %s193
      %p204 = scmp.eq.s32.totalorder %s27, 0
      %p205 = por %p203, %p204
      %p206 = scmp.ne.s32.totalorder %s192, %s193
      %p207 = scmp.eq.s32.totalorder %s28, 1
      %p208 = por %p206, %p207
      %p210 = scmp.ne.s32.totalorder %s193, %s209
      %p211 = scmp.eq.s32.totalorder %s28, 0
      %p212 = por %p210, %p211
      %p213 = scmp.le.s32.totalorder 1, %s22
      %p214 = scmp.lt.s32.totalorder %s22, 3
      %p215 = pnand %p213, %p214
      %p216 = pneg %p215
      // Predicated region
      $region9: #{tpu_custom_call.1} parent=5 // pred_check
        _
      $region10: #{tpu_custom_call.1} parent=5 // pred_check_branch
        %218 = sbr.rel (%p215) target = $region12
      $region11: #{tpu_custom_call.1} parent=5 // pred_region
        %s219 = ssub.s32 %s22, 1
        // Predicated region
        $region13: #{tpu_custom_call.1} parent=11 // pred_check
          %p220 = pneg %p43
        $region14: #{tpu_custom_call.1} parent=11 // pred_check_branch
          %222 = sbr.rel (%p220) target = $region16
        $region15: #{tpu_custom_call.1} parent=11 // pred_region
          %s224 = ssub.s32 128, 128
          %225 = vsyncadd [#allocation3], %s224
          %s227 = sshll.u32 [#allocation2], 4
          %s228 = int_to_ptr.vmem [resolvable:$true] %s227
          %230 = dma.hbm_to_vmem [thread:$0]  %s0, 128, %s228, [#allocation3]
        $region16: #{tpu_custom_call.1} parent=11 // pred_fallthru
          _
        // Predicated region
        $region17: #{tpu_custom_call.1} parent=11 // pred_check
          %p231 = pneg %p64
        $region18: #{tpu_custom_call.1} parent=11 // pred_check_branch
          %233 = sbr.rel (%p231) target = $region20
        $region19: #{tpu_custom_call.1} parent=11 // pred_region
          %s235 = ssub.s32 32768, 32768
          %236 = vsyncadd [#allocation6], %s235
          %s237 = sshll.u32 [#allocation5], 4
          %s238 = int_to_ptr.vmem [resolvable:$true] %s237
          %243 = dma.hbm_to_vmem [thread:$0]  %s1, 32768, %s238, [#allocation6], 512, 512, 32
        $region20: #{tpu_custom_call.1} parent=11 // pred_fallthru
          _
        // Predicated region
        $region21: #{tpu_custom_call.1} parent=11 // pred_check
          %p244 = pneg %p85
        $region22: #{tpu_custom_call.1} parent=11 // pred_check_branch
          %246 = sbr.rel (%p244) target = $region24
        $region23: #{tpu_custom_call.1} parent=11 // pred_region
          %s248 = ssub.s32 128, 128
          %249 = vsyncadd [#allocation6], %s248
          %s251 = sshll.u32 [#allocation7], 4
          %s252 = int_to_ptr.vmem [resolvable:$true] %s251
          %254 = dma.hbm_to_vmem [thread:$0]  %s2, 128, %s252, [#allocation6]
        $region24: #{tpu_custom_call.1} parent=11 // pred_fallthru
          _
        // Predicated region
        $region25: #{tpu_custom_call.1} parent=11 // pred_check
          %p255 = pneg %p158
        $region26: #{tpu_custom_call.1} parent=11 // pred_check_branch
          %257 = sbr.rel (%p255) target = $region28
        $region27: #{tpu_custom_call.1} parent=11 // pred_region
          %s259 = ssub.s32 96, 96
          %260 = vsyncadd [#allocation12], %s259
          %s262 = sshll.u32 [#allocation11], 4
          %s263 = int_to_ptr.vmem [resolvable:$true] %s262
          %265 = dma.hbm_to_vmem [thread:$0]  %s5, 96, %s263, [#allocation12]
        $region28: #{tpu_custom_call.1} parent=11 // pred_fallthru
          _
        // Predicated region
        $region29: #{tpu_custom_call.1} parent=11 // pred_check
          %p266 = pneg %p179
        $region30: #{tpu_custom_call.1} parent=11 // pred_check_branch
          %268 = sbr.rel (%p266) target = $region32
        $region31: #{tpu_custom_call.1} parent=11 // pred_region
          %s270 = ssub.s32 96, 96
          %271 = vsyncadd [#allocation12], %s270
          %s273 = sshll.u32 [#allocation13], 4
          %s274 = int_to_ptr.vmem [resolvable:$true] %s273
          %276 = dma.hbm_to_vmem [thread:$0]  %s6, 96, %s274, [#allocation12]
        $region32: #{tpu_custom_call.1} parent=11 // pred_fallthru
          _
      $region12: #{tpu_custom_call.1} parent=5 // pred_fallthru
        _
      %p277 = scmp.lt.s32.totalorder %s22, 2
      // Predicated region
      $region33: #{tpu_custom_call.1} parent=5 // pred_check
        %p278 = pneg %p277
      $region34: #{tpu_custom_call.1} parent=5 // pred_check_branch
        %280 = sbr.rel (%p278) target = $region36
      $region35: #{tpu_custom_call.1} parent=5 // pred_region
        // Predicated region
        $region37: #{tpu_custom_call.1} parent=35 // pred_check
          %p281 = pneg %p105
        $region38: #{tpu_custom_call.1} parent=35 // pred_check_branch
          %283 = sbr.rel (%p281) target = $region40
        $region39: #{tpu_custom_call.1} parent=35 // pred_region
          %s284 = sand.u32 %s22, 1
          %s285 = scalar_lea.sflag [#allocation9], %s284
          %s286 = sand.u32 %s95, 1
          %s287 = smul.addr %s286, 6144
          %s288 = scalar_lea.vmem [#allocation8], %s287
          %s289 = smul.u32 12, %s22
          %s291 = ssub.s32 98304, 98304
          %292 = vsyncadd %s285, %s291
          %s293 = smul.addr %s289, 64
          %s294 = scalar_lea.hbm %s3, %s293
          %s295 = sshll.u32 %s288, 4
          %s296 = int_to_ptr.vmem [resolvable:$true] %s295
          %301 = dma.hbm_to_vmem [thread:$0]  %s294, 98304, %s296, %s285, 1536, 768, 48
        $region40: #{tpu_custom_call.1} parent=35 // pred_fallthru
          _
        // Predicated region
        $region41: #{tpu_custom_call.1} parent=35 // pred_check
          %p302 = pneg %p131
        $region42: #{tpu_custom_call.1} parent=35 // pred_check_branch
          %304 = sbr.rel (%p302) target = $region44
        $region43: #{tpu_custom_call.1} parent=35 // pred_region
          %s305 = sand.u32 %s22, 1
          %s306 = scalar_lea.sflag [#allocation9], %s305
          %s307 = sand.u32 %s121, 1
          %s308 = smul.addr %s307, 12
          %s309 = scalar_lea.vmem [#allocation10], %s308
          %s310 = smul.u32 12, %s22
          %s312 = ssub.s32 192, 192
          %313 = vsyncadd %s306, %s312
          %s314 = smul.addr %s310, 16
          %s315 = scalar_lea.hbm %s4, %s314
          %s317 = sshll.u32 %s309, 4
          %s318 = int_to_ptr.vmem [resolvable:$true] %s317
          %320 = dma.hbm_to_vmem [thread:$0]  %s315, 192, %s318, %s306
        $region44: #{tpu_custom_call.1} parent=35 // pred_fallthru
          _
      $region36: #{tpu_custom_call.1} parent=5 // pred_fallthru
        _
      %p321 = scmp.le.s32.totalorder 1, %s22
      %p322 = scmp.lt.s32.totalorder %s22, 3
      %p323 = pnand %p321, %p322
      %p324 = pneg %p323
      // Predicated region
      $region45: #{tpu_custom_call.1} parent=5 // pred_check
        _
      $region46: #{tpu_custom_call.1} parent=5 // pred_check_branch
        %326 = sbr.rel (%p323) target = $region48
      $region47: #{tpu_custom_call.1} parent=5 // pred_region
        %s327 = ssub.s32 %s22, 1
        // Predicated region
        $region49: #{tpu_custom_call.1} parent=47 // pred_check
          %p328 = pneg %p43
        $region50: #{tpu_custom_call.1} parent=47 // pred_check_branch
          %330 = sbr.rel (%p328) target = $region52
        $region51: #{tpu_custom_call.1} parent=47 // pred_region
          %331 = dma.done [#allocation3], 128
        $region52: #{tpu_custom_call.1} parent=47 // pred_fallthru
          _
        // Predicated region
        $region53: #{tpu_custom_call.1} parent=47 // pred_check
          %p332 = pneg %p64
        $region54: #{tpu_custom_call.1} parent=47 // pred_check_branch
          %334 = sbr.rel (%p332) target = $region56
        $region55: #{tpu_custom_call.1} parent=47 // pred_region
          %335 = dma.done [#allocation6], 32768
        $region56: #{tpu_custom_call.1} parent=47 // pred_fallthru
          _
        // Predicated region
        $region57: #{tpu_custom_call.1} parent=47 // pred_check
          %p336 = pneg %p85
        $region58: #{tpu_custom_call.1} parent=47 // pred_check_branch
          %338 = sbr.rel (%p336) target = $region60
        $region59: #{tpu_custom_call.1} parent=47 // pred_region
          %339 = dma.done [#allocation6], 128
        $region60: #{tpu_custom_call.1} parent=47 // pred_fallthru
          _
        %s340 = sand.u32 %s27, 1
        %s341 = scalar_lea.sflag [#allocation9], %s340
        %s342 = sand.u32 %s98, 1
        %s343 = smul.addr %s342, 6144
        %s344 = scalar_lea.vmem [#allocation8], %s343
        // Predicated region
        $region61: #{tpu_custom_call.1} parent=47 // pred_check
          %p345 = pneg %p111
        $region62: #{tpu_custom_call.1} parent=47 // pred_check_branch
          %347 = sbr.rel (%p345) target = $region64
        $region63: #{tpu_custom_call.1} parent=47 // pred_region
          %348 = dma.done %s341, 98304
        $region64: #{tpu_custom_call.1} parent=47 // pred_fallthru
          _
        %s349 = sand.u32 %s27, 1
        %s350 = scalar_lea.sflag [#allocation9], %s349
        %s351 = sand.u32 %s124, 1
        %s352 = smul.addr %s351, 12
        %s353 = scalar_lea.vmem [#allocation10], %s352
        // Predicated region
        $region65: #{tpu_custom_call.1} parent=47 // pred_check
          %p354 = pneg %p137
        $region66: #{tpu_custom_call.1} parent=47 // pred_check_branch
          %356 = sbr.rel (%p354) target = $region68
        $region67: #{tpu_custom_call.1} parent=47 // pred_region
          %357 = dma.done %s350, 192
        $region68: #{tpu_custom_call.1} parent=47 // pred_fallthru
          _
        // Predicated region
        $region69: #{tpu_custom_call.1} parent=47 // pred_check
          %p358 = pneg %p158
        $region70: #{tpu_custom_call.1} parent=47 // pred_check_branch
          %360 = sbr.rel (%p358) target = $region72
        $region71: #{tpu_custom_call.1} parent=47 // pred_region
          %361 = dma.done [#allocation12], 96
        $region72: #{tpu_custom_call.1} parent=47 // pred_fallthru
          _
        // Predicated region
        $region73: #{tpu_custom_call.1} parent=47 // pred_check
          %p362 = pneg %p179
        $region74: #{tpu_custom_call.1} parent=47 // pred_check_branch
          %364 = sbr.rel (%p362) target = $region76
        $region75: #{tpu_custom_call.1} parent=47 // pred_region
          %365 = dma.done [#allocation12], 96
        $region76: #{tpu_custom_call.1} parent=47 // pred_fallthru
          _
        %p366 = pneg %p43
        %p367 = pneg %p40
        %p368 = pneg %p64
        %p369 = pneg %p61
        %p370 = pneg %p85
        %p371 = pneg %p82
        %s372 = sand.u32 %s27, 1
        %s373 = scalar_lea.sflag [#allocation9], %s372
        %s374 = sand.u32 %s98, 1
        %s375 = smul.addr %s374, 6144
        %s376 = scalar_lea.vmem [#allocation8], %s375
        %p377 = pneg %p111
        %p378 = pneg %p108
        %s379 = sand.u32 %s27, 1
        %s380 = scalar_lea.sflag [#allocation9], %s379
        %s381 = sand.u32 %s124, 1
        %s382 = smul.addr %s381, 12
        %s383 = scalar_lea.vmem [#allocation10], %s382
        %p384 = pneg %p137
        %p385 = pneg %p134
        %p386 = pneg %p158
        %p387 = pneg %p155
        %p388 = pneg %p179
        %p389 = pneg %p176
        %p390 = pneg %p205
        %p391 = pneg %p202
        %s392 = sand.u32 %s192, 1
        %s393 = scalar_lea.sflag [#allocation4], %s392
        %s394 = sand.u32 %s192, 1
        %s395 = smul.addr %s394, 24
        %s396 = scalar_lea.vmem [#allocation14], %s395
        %s397 = smul.u32 12, %s27
        %s398 = smul.u32 12, %s27
        %s399 = smul.u32 12, %s27
        %v400 = vld [vmem:[#allocation2] sm:$0xff]
        %v402 = vcombine.high %v400, %v400
        %v404 = vunpack.c.l.s4 1983009808
        %v405 = vunpack.c.0.s8 %v404
        %v406 = vlaneseq
        %v407 = vshrl.u32 %v406, 7
        %v408 = vsub.s32 %v405, %v407
        %v409 = vrot.slane %v400, %v408
        %v411 = vunpack.c.l.s4 1983009808
        %v412 = vunpack.c.0.s8 %v411
        %v413 = vlaneseq
        %v414 = vshrl.u32 %v413, 7
        %v415 = vsub.s32 %v412, %v414
        %v416 = vrot.slane %v402, %v415
        %v417 = vcombine.high %v409, %v409
        %v418 = vcombine.high %v416, %v416
        %v423 = vpack.c.bf16 %v409, %v409
        %v424 = vpack.c.bf16 %v417, %v417
        %v425 = vpack.c.bf16 %v416, %v416
        %v426 = vpack.c.bf16 %v418, %v418
        %v427 = vld [vmem:[#allocation5] sm:$0xff]
        %v428 = vld [vmem:[#allocation5 + $0x8] sm:$0xff]
        %v429 = vld [vmem:[#allocation5 + $0x10] sm:$0xff]
        %v430 = vld [vmem:[#allocation5 + $0x18] sm:$0xff]
        %v431 = vld [vmem:[#allocation5 + $0x20] sm:$0xff]
        %v432 = vld [vmem:[#allocation5 + $0x28] sm:$0xff]
        %v433 = vld [vmem:[#allocation5 + $0x30] sm:$0xff]
        %v434 = vld [vmem:[#allocation5 + $0x38] sm:$0xff]
        %v435 = vld [vmem:[#allocation5 + $0x40] sm:$0xff]
        %v436 = vld [vmem:[#allocation5 + $0x48] sm:$0xff]
        %v437 = vld [vmem:[#allocation5 + $0x50] sm:$0xff]
        %v438 = vld [vmem:[#allocation5 + $0x58] sm:$0xff]
        %v439 = vld [vmem:[#allocation5 + $0x60] sm:$0xff]
        %v440 = vld [vmem:[#allocation5 + $0x68] sm:$0xff]
        %v441 = vld [vmem:[#allocation5 + $0x70] sm:$0xff]
        %v442 = vld [vmem:[#allocation5 + $0x78] sm:$0xff]
        %v443 = vld [vmem:[#allocation5 + $0x80] sm:$0xff]
        %v444 = vld [vmem:[#allocation5 + $0x88] sm:$0xff]
        %v445 = vld [vmem:[#allocation5 + $0x90] sm:$0xff]
        %v446 = vld [vmem:[#allocation5 + $0x98] sm:$0xff]
        %v447 = vld [vmem:[#allocation5 + $0xa0] sm:$0xff]
        %v448 = vld [vmem:[#allocation5 + $0xa8] sm:$0xff]
        %v449 = vld [vmem:[#allocation5 + $0xb0] sm:$0xff]
        %v450 = vld [vmem:[#allocation5 + $0xb8] sm:$0xff]
        %v451 = vld [vmem:[#allocation5 + $0xc0] sm:$0xff]
        %v452 = vld [vmem:[#allocation5 + $0xc8] sm:$0xff]
        %v453 = vld [vmem:[#allocation5 + $0xd0] sm:$0xff]
        %v454 = vld [vmem:[#allocation5 + $0xd8] sm:$0xff]
        %v455 = vld [vmem:[#allocation5 + $0xe0] sm:$0xff]
        %v456 = vld [vmem:[#allocation5 + $0xe8] sm:$0xff]
        %v457 = vld [vmem:[#allocation5 + $0xf0] sm:$0xff]
        %v458 = vld [vmem:[#allocation5 + $0xf8] sm:$0xff]
        %v459 = vld [vmem:[#allocation5 + $0x100] sm:$0xff]
        %v460 = vld [vmem:[#allocation5 + $0x108] sm:$0xff]
        %v461 = vld [vmem:[#allocation5 + $0x110] sm:$0xff]
        %v462 = vld [vmem:[#allocation5 + $0x118] sm:$0xff]
        %v463 = vld [vmem:[#allocation5 + $0x120] sm:$0xff]
        %v464 = vld [vmem:[#allocation5 + $0x128] sm:$0xff]
        %v465 = vld [vmem:[#allocation5 + $0x130] sm:$0xff]
        %v466 = vld [vmem:[#allocation5 + $0x138] sm:$0xff]
        %v467 = vld [vmem:[#allocation5 + $0x140] sm:$0xff]
        %v468 = vld [vmem:[#allocation5 + $0x148] sm:$0xff]
        %v469 = vld [vmem:[#allocation5 + $0x150] sm:$0xff]
        %v470 = vld [vmem:[#allocation5 + $0x158] sm:$0xff]
        %v471 = vld [vmem:[#allocation5 + $0x160] sm:$0xff]
        %v472 = vld [vmem:[#allocation5 + $0x168] sm:$0xff]
        %v473 = vld [vmem:[#allocation5 + $0x170] sm:$0xff]
        %v474 = vld [vmem:[#allocation5 + $0x178] sm:$0xff]
        %v475 = vld [vmem:[#allocation5 + $0x180] sm:$0xff]
        %v476 = vld [vmem:[#allocation5 + $0x188] sm:$0xff]
        %v477 = vld [vmem:[#allocation5 + $0x190] sm:$0xff]
        %v478 = vld [vmem:[#allocation5 + $0x198] sm:$0xff]
        %v479 = vld [vmem:[#allocation5 + $0x1a0] sm:$0xff]
        %v480 = vld [vmem:[#allocation5 + $0x1a8] sm:$0xff]
        %v481 = vld [vmem:[#allocation5 + $0x1b0] sm:$0xff]
        %v482 = vld [vmem:[#allocation5 + $0x1b8] sm:$0xff]
        %v483 = vld [vmem:[#allocation5 + $0x1c0] sm:$0xff]
        %v484 = vld [vmem:[#allocation5 + $0x1c8] sm:$0xff]
        %v485 = vld [vmem:[#allocation5 + $0x1d0] sm:$0xff]
        %v486 = vld [vmem:[#allocation5 + $0x1d8] sm:$0xff]
        %v487 = vld [vmem:[#allocation5 + $0x1e0] sm:$0xff]
        %v488 = vld [vmem:[#allocation5 + $0x1e8] sm:$0xff]
        %v489 = vld [vmem:[#allocation5 + $0x1f0] sm:$0xff]
        %v490 = vld [vmem:[#allocation5 + $0x1f8] sm:$0xff]
        %v491 = vld [vmem:[#allocation5 + $0x200] sm:$0xff]
        %v492 = vld [vmem:[#allocation5 + $0x208] sm:$0xff]
        %v493 = vld [vmem:[#allocation5 + $0x210] sm:$0xff]
        %v494 = vld [vmem:[#allocation5 + $0x218] sm:$0xff]
        %v495 = vld [vmem:[#allocation5 + $0x220] sm:$0xff]
        %v496 = vld [vmem:[#allocation5 + $0x228] sm:$0xff]
        %v497 = vld [vmem:[#allocation5 + $0x230] sm:$0xff]
        %v498 = vld [vmem:[#allocation5 + $0x238] sm:$0xff]
        %v499 = vld [vmem:[#allocation5 + $0x240] sm:$0xff]
        %v500 = vld [vmem:[#allocation5 + $0x248] sm:$0xff]
        %v501 = vld [vmem:[#allocation5 + $0x250] sm:$0xff]
        %v502 = vld [vmem:[#allocation5 + $0x258] sm:$0xff]
        %v503 = vld [vmem:[#allocation5 + $0x260] sm:$0xff]
        %v504 = vld [vmem:[#allocation5 + $0x268] sm:$0xff]
        %v505 = vld [vmem:[#allocation5 + $0x270] sm:$0xff]
        %v506 = vld [vmem:[#allocation5 + $0x278] sm:$0xff]
        %v507 = vld [vmem:[#allocation5 + $0x280] sm:$0xff]
        %v508 = vld [vmem:[#allocation5 + $0x288] sm:$0xff]
        %v509 = vld [vmem:[#allocation5 + $0x290] sm:$0xff]
        %v510 = vld [vmem:[#allocation5 + $0x298] sm:$0xff]
        %v511 = vld [vmem:[#allocation5 + $0x2a0] sm:$0xff]
        %v512 = vld [vmem:[#allocation5 + $0x2a8] sm:$0xff]
        %v513 = vld [vmem:[#allocation5 + $0x2b0] sm:$0xff]
        %v514 = vld [vmem:[#allocation5 + $0x2b8] sm:$0xff]
        %v515 = vld [vmem:[#allocation5 + $0x2c0] sm:$0xff]
        %v516 = vld [vmem:[#allocation5 + $0x2c8] sm:$0xff]
        %v517 = vld [vmem:[#allocation5 + $0x2d0] sm:$0xff]
        %v518 = vld [vmem:[#allocation5 + $0x2d8] sm:$0xff]
        %v519 = vld [vmem:[#allocation5 + $0x2e0] sm:$0xff]
        %v520 = vld [vmem:[#allocation5 + $0x2e8] sm:$0xff]
        %v521 = vld [vmem:[#allocation5 + $0x2f0] sm:$0xff]
        %v522 = vld [vmem:[#allocation5 + $0x2f8] sm:$0xff]
        %v523 = vld [vmem:[#allocation5 + $0x300] sm:$0xff]
        %v524 = vld [vmem:[#allocation5 + $0x308] sm:$0xff]
        %v525 = vld [vmem:[#allocation5 + $0x310] sm:$0xff]
        %v526 = vld [vmem:[#allocation5 + $0x318] sm:$0xff]
        %v527 = vld [vmem:[#allocation5 + $0x320] sm:$0xff]
        %v528 = vld [vmem:[#allocation5 + $0x328] sm:$0xff]
        %v529 = vld [vmem:[#allocation5 + $0x330] sm:$0xff]
        %v530 = vld [vmem:[#allocation5 + $0x338] sm:$0xff]
        %v531 = vld [vmem:[#allocation5 + $0x340] sm:$0xff]
        %v532 = vld [vmem:[#allocation5 + $0x348] sm:$0xff]
        %v533 = vld [vmem:[#allocation5 + $0x350] sm:$0xff]
        %v534 = vld [vmem:[#allocation5 + $0x358] sm:$0xff]
        %v535 = vld [vmem:[#allocation5 + $0x360] sm:$0xff]
        %v536 = vld [vmem:[#allocation5 + $0x368] sm:$0xff]
        %v537 = vld [vmem:[#allocation5 + $0x370] sm:$0xff]
        %v538 = vld [vmem:[#allocation5 + $0x378] sm:$0xff]
        %v539 = vld [vmem:[#allocation5 + $0x380] sm:$0xff]
        %v540 = vld [vmem:[#allocation5 + $0x388] sm:$0xff]
        %v541 = vld [vmem:[#allocation5 + $0x390] sm:$0xff]
        %v542 = vld [vmem:[#allocation5 + $0x398] sm:$0xff]
        %v543 = vld [vmem:[#allocation5 + $0x3a0] sm:$0xff]
        %v544 = vld [vmem:[#allocation5 + $0x3a8] sm:$0xff]
        %v545 = vld [vmem:[#allocation5 + $0x3b0] sm:$0xff]
        %v546 = vld [vmem:[#allocation5 + $0x3b8] sm:$0xff]
        %v547 = vld [vmem:[#allocation5 + $0x3c0] sm:$0xff]
        %v548 = vld [vmem:[#allocation5 + $0x3c8] sm:$0xff]
        %v549 = vld [vmem:[#allocation5 + $0x3d0] sm:$0xff]
        %v550 = vld [vmem:[#allocation5 + $0x3d8] sm:$0xff]
        %v551 = vld [vmem:[#allocation5 + $0x3e0] sm:$0xff]
        %v552 = vld [vmem:[#allocation5 + $0x3e8] sm:$0xff]
        %v553 = vld [vmem:[#allocation5 + $0x3f0] sm:$0xff]
        %v554 = vld [vmem:[#allocation5 + $0x3f8] sm:$0xff]
        %v555 = vld [vmem:[#allocation5 + $0x400] sm:$0xff]
        %v556 = vld [vmem:[#allocation5 + $0x408] sm:$0xff]
        %v557 = vld [vmem:[#allocation5 + $0x410] sm:$0xff]
        %v558 = vld [vmem:[#allocation5 + $0x418] sm:$0xff]
        %v559 = vld [vmem:[#allocation5 + $0x420] sm:$0xff]
        %v560 = vld [vmem:[#allocation5 + $0x428] sm:$0xff]
        %v561 = vld [vmem:[#allocation5 + $0x430] sm:$0xff]
        %v562 = vld [vmem:[#allocation5 + $0x438] sm:$0xff]
        %v563 = vld [vmem:[#allocation5 + $0x440] sm:$0xff]
        %v564 = vld [vmem:[#allocation5 + $0x448] sm:$0xff]
        %v565 = vld [vmem:[#allocation5 + $0x450] sm:$0xff]
        %v566 = vld [vmem:[#allocation5 + $0x458] sm:$0xff]
        %v567 = vld [vmem:[#allocation5 + $0x460] sm:$0xff]
        %v568 = vld [vmem:[#allocation5 + $0x468] sm:$0xff]
        %v569 = vld [vmem:[#allocation5 + $0x470] sm:$0xff]
        %v570 = vld [vmem:[#allocation5 + $0x478] sm:$0xff]
        %v571 = vld [vmem:[#allocation5 + $0x480] sm:$0xff]
        %v572 = vld [vmem:[#allocation5 + $0x488] sm:$0xff]
        %v573 = vld [vmem:[#allocation5 + $0x490] sm:$0xff]
        %v574 = vld [vmem:[#allocation5 + $0x498] sm:$0xff]
        %v575 = vld [vmem:[#allocation5 + $0x4a0] sm:$0xff]
        %v576 = vld [vmem:[#allocation5 + $0x4a8] sm:$0xff]
        %v577 = vld [vmem:[#allocation5 + $0x4b0] sm:$0xff]
        %v578 = vld [vmem:[#allocation5 + $0x4b8] sm:$0xff]
        %v579 = vld [vmem:[#allocation5 + $0x4c0] sm:$0xff]
        %v580 = vld [vmem:[#allocation5 + $0x4c8] sm:$0xff]
        %v581 = vld [vmem:[#allocation5 + $0x4d0] sm:$0xff]
        %v582 = vld [vmem:[#allocation5 + $0x4d8] sm:$0xff]
        %v583 = vld [vmem:[#allocation5 + $0x4e0] sm:$0xff]
        %v584 = vld [vmem:[#allocation5 + $0x4e8] sm:$0xff]
        %v585 = vld [vmem:[#allocation5 + $0x4f0] sm:$0xff]
        %v586 = vld [vmem:[#allocation5 + $0x4f8] sm:$0xff]
        %v587 = vld [vmem:[#allocation5 + $0x500] sm:$0xff]
        %v588 = vld [vmem:[#allocation5 + $0x508] sm:$0xff]
        %v589 = vld [vmem:[#allocation5 + $0x510] sm:$0xff]
        %v590 = vld [vmem:[#allocation5 + $0x518] sm:$0xff]
        %v591 = vld [vmem:[#allocation5 + $0x520] sm:$0xff]
        %v592 = vld [vmem:[#allocation5 + $0x528] sm:$0xff]
        %v593 = vld [vmem:[#allocation5 + $0x530] sm:$0xff]
        %v594 = vld [vmem:[#allocation5 + $0x538] sm:$0xff]
        %v595 = vld [vmem:[#allocation5 + $0x540] sm:$0xff]
        %v596 = vld [vmem:[#allocation5 + $0x548] sm:$0xff]
        %v597 = vld [vmem:[#allocation5 + $0x550] sm:$0xff]
        %v598 = vld [vmem:[#allocation5 + $0x558] sm:$0xff]
        %v599 = vld [vmem:[#allocation5 + $0x560] sm:$0xff]
        %v600 = vld [vmem:[#allocation5 + $0x568] sm:$0xff]
        %v601 = vld [vmem:[#allocation5 + $0x570] sm:$0xff]
        %v602 = vld [vmem:[#allocation5 + $0x578] sm:$0xff]
        %v603 = vld [vmem:[#allocation5 + $0x580] sm:$0xff]
        %v604 = vld [vmem:[#allocation5 + $0x588] sm:$0xff]
        %v605 = vld [vmem:[#allocation5 + $0x590] sm:$0xff]
        %v606 = vld [vmem:[#allocation5 + $0x598] sm:$0xff]
        %v607 = vld [vmem:[#allocation5 + $0x5a0] sm:$0xff]
        %v608 = vld [vmem:[#allocation5 + $0x5a8] sm:$0xff]
        %v609 = vld [vmem:[#allocation5 + $0x5b0] sm:$0xff]
        %v610 = vld [vmem:[#allocation5 + $0x5b8] sm:$0xff]
        %v611 = vld [vmem:[#allocation5 + $0x5c0] sm:$0xff]
        %v612 = vld [vmem:[#allocation5 + $0x5c8] sm:$0xff]
        %v613 = vld [vmem:[#allocation5 + $0x5d0] sm:$0xff]
        %v614 = vld [vmem:[#allocation5 + $0x5d8] sm:$0xff]
        %v615 = vld [vmem:[#allocation5 + $0x5e0] sm:$0xff]
        %v616 = vld [vmem:[#allocation5 + $0x5e8] sm:$0xff]
        %v617 = vld [vmem:[#allocation5 + $0x5f0] sm:$0xff]
        %v618 = vld [vmem:[#allocation5 + $0x5f8] sm:$0xff]
        %v619 = vld [vmem:[#allocation5 + $0x600] sm:$0xff]
        %v620 = vld [vmem:[#allocation5 + $0x608] sm:$0xff]
        %v621 = vld [vmem:[#allocation5 + $0x610] sm:$0xff]
        %v622 = vld [vmem:[#allocation5 + $0x618] sm:$0xff]
        %v623 = vld [vmem:[#allocation5 + $0x620] sm:$0xff]
        %v624 = vld [vmem:[#allocation5 + $0x628] sm:$0xff]
        %v625 = vld [vmem:[#allocation5 + $0x630] sm:$0xff]
        %v626 = vld [vmem:[#allocation5 + $0x638] sm:$0xff]
        %v627 = vld [vmem:[#allocation5 + $0x640] sm:$0xff]
        %v628 = vld [vmem:[#allocation5 + $0x648] sm:$0xff]
        %v629 = vld [vmem:[#allocation5 + $0x650] sm:$0xff]
        %v630 = vld [vmem:[#allocation5 + $0x658] sm:$0xff]
        %v631 = vld [vmem:[#allocation5 + $0x660] sm:$0xff]
        %v632 = vld [vmem:[#allocation5 + $0x668] sm:$0xff]
        %v633 = vld [vmem:[#allocation5 + $0x670] sm:$0xff]
        %v634 = vld [vmem:[#allocation5 + $0x678] sm:$0xff]
        %v635 = vld [vmem:[#allocation5 + $0x680] sm:$0xff]
        %v636 = vld [vmem:[#allocation5 + $0x688] sm:$0xff]
        %v637 = vld [vmem:[#allocation5 + $0x690] sm:$0xff]
        %v638 = vld [vmem:[#allocation5 + $0x698] sm:$0xff]
        %v639 = vld [vmem:[#allocation5 + $0x6a0] sm:$0xff]
        %v640 = vld [vmem:[#allocation5 + $0x6a8] sm:$0xff]
        %v641 = vld [vmem:[#allocation5 + $0x6b0] sm:$0xff]
        %v642 = vld [vmem:[#allocation5 + $0x6b8] sm:$0xff]
        %v643 = vld [vmem:[#allocation5 + $0x6c0] sm:$0xff]
        %v644 = vld [vmem:[#allocation5 + $0x6c8] sm:$0xff]
        %v645 = vld [vmem:[#allocation5 + $0x6d0] sm:$0xff]
        %v646 = vld [vmem:[#allocation5 + $0x6d8] sm:$0xff]
        %v647 = vld [vmem:[#allocation5 + $0x6e0] sm:$0xff]
        %v648 = vld [vmem:[#allocation5 + $0x6e8] sm:$0xff]
        %v649 = vld [vmem:[#allocation5 + $0x6f0] sm:$0xff]
        %v650 = vld [vmem:[#allocation5 + $0x6f8] sm:$0xff]
        %v651 = vld [vmem:[#allocation5 + $0x700] sm:$0xff]
        %v652 = vld [vmem:[#allocation5 + $0x708] sm:$0xff]
        %v653 = vld [vmem:[#allocation5 + $0x710] sm:$0xff]
        %v654 = vld [vmem:[#allocation5 + $0x718] sm:$0xff]
        %v655 = vld [vmem:[#allocation5 + $0x720] sm:$0xff]
        %v656 = vld [vmem:[#allocation5 + $0x728] sm:$0xff]
        %v657 = vld [vmem:[#allocation5 + $0x730] sm:$0xff]
        %v658 = vld [vmem:[#allocation5 + $0x738] sm:$0xff]
        %v659 = vld [vmem:[#allocation5 + $0x740] sm:$0xff]
        %v660 = vld [vmem:[#allocation5 + $0x748] sm:$0xff]
        %v661 = vld [vmem:[#allocation5 + $0x750] sm:$0xff]
        %v662 = vld [vmem:[#allocation5 + $0x758] sm:$0xff]
        %v663 = vld [vmem:[#allocation5 + $0x760] sm:$0xff]
        %v664 = vld [vmem:[#allocation5 + $0x768] sm:$0xff]
        %v665 = vld [vmem:[#allocation5 + $0x770] sm:$0xff]
        %v666 = vld [vmem:[#allocation5 + $0x778] sm:$0xff]
        %v667 = vld [vmem:[#allocation5 + $0x780] sm:$0xff]
        %v668 = vld [vmem:[#allocation5 + $0x788] sm:$0xff]
        %v669 = vld [vmem:[#allocation5 + $0x790] sm:$0xff]
        %v670 = vld [vmem:[#allocation5 + $0x798] sm:$0xff]
        %v671 = vld [vmem:[#allocation5 + $0x7a0] sm:$0xff]
        %v672 = vld [vmem:[#allocation5 + $0x7a8] sm:$0xff]
        %v673 = vld [vmem:[#allocation5 + $0x7b0] sm:$0xff]
        %v674 = vld [vmem:[#allocation5 + $0x7b8] sm:$0xff]
        %v675 = vld [vmem:[#allocation5 + $0x7c0] sm:$0xff]
        %v676 = vld [vmem:[#allocation5 + $0x7c8] sm:$0xff]
        %v677 = vld [vmem:[#allocation5 + $0x7d0] sm:$0xff]
        %v678 = vld [vmem:[#allocation5 + $0x7d8] sm:$0xff]
        %v679 = vld [vmem:[#allocation5 + $0x7e0] sm:$0xff]
        %v680 = vld [vmem:[#allocation5 + $0x7e8] sm:$0xff]
        %v681 = vld [vmem:[#allocation5 + $0x7f0] sm:$0xff]
        %v682 = vld [vmem:[#allocation5 + $0x7f8] sm:$0xff]
        %v683 = vld [vmem:[#allocation7] sm:$0xff]
        %v685 = vlaneseq
        %v686 = vshrl.u32 %v685, 7
        %v687 = vsub.s32 0, %v686
        %v688 = vrot.slane %v683, %v687
        %v689 = vlaneseq
        %v690 = vshrl.u32 %v689, 7
        %v691 = vsub.s32 1, %v690
        %v692 = vrot.slane %v683, %v691
        %v693 = vlaneseq
        %v694 = vshrl.u32 %v693, 7
        %v695 = vsub.s32 2, %v694
        %v696 = vrot.slane %v683, %v695
        %v697 = vlaneseq
        %v698 = vshrl.u32 %v697, 7
        %v699 = vsub.s32 3, %v698
        %v700 = vrot.slane %v683, %v699
        %v701 = vlaneseq
        %v702 = vshrl.u32 %v701, 7
        %v703 = vsub.s32 4, %v702
        %v704 = vrot.slane %v683, %v703
        %v705 = vlaneseq
        %v706 = vshrl.u32 %v705, 7
        %v707 = vsub.s32 5, %v706
        %v708 = vrot.slane %v683, %v707
        %v709 = vlaneseq
        %v710 = vshrl.u32 %v709, 7
        %v711 = vsub.s32 6, %v710
        %v712 = vrot.slane %v683, %v711
        %v713 = vlaneseq
        %v714 = vshrl.u32 %v713, 7
        %v715 = vsub.s32 7, %v714
        %v716 = vrot.slane %v683, %v715
        %v981 = vunpack.c.l.b16 %v427
        %v982 = vunpack.c.h.b16 %v427
        %v983 = vunpack.c.l.b16 %v428
        %v984 = vunpack.c.h.b16 %v428
        %v985 = vunpack.c.l.b16 %v429
        %v986 = vunpack.c.h.b16 %v429
        %v987 = vunpack.c.l.b16 %v430
        %v988 = vunpack.c.h.b16 %v430
        %v989 = vunpack.c.l.b16 %v431
        %v990 = vunpack.c.h.b16 %v431
        %v991 = vunpack.c.l.b16 %v432
        %v992 = vunpack.c.h.b16 %v432
        %v993 = vunpack.c.l.b16 %v433
        %v994 = vunpack.c.h.b16 %v433
        %v995 = vunpack.c.l.b16 %v434
        %v996 = vunpack.c.h.b16 %v434
        %v997 = vunpack.c.l.b16 %v435
        %v998 = vunpack.c.h.b16 %v435
        %v999 = vunpack.c.l.b16 %v436
        %v1000 = vunpack.c.h.b16 %v436
        %v1001 = vunpack.c.l.b16 %v437
        %v1002 = vunpack.c.h.b16 %v437
        %v1003 = vunpack.c.l.b16 %v438
        %v1004 = vunpack.c.h.b16 %v438
        %v1005 = vunpack.c.l.b16 %v439
        %v1006 = vunpack.c.h.b16 %v439
        %v1007 = vunpack.c.l.b16 %v440
        %v1008 = vunpack.c.h.b16 %v440
        %v1009 = vunpack.c.l.b16 %v441
        %v1010 = vunpack.c.h.b16 %v441
        %v1011 = vunpack.c.l.b16 %v442
        %v1012 = vunpack.c.h.b16 %v442
        %v1013 = vunpack.c.l.b16 %v443
        %v1014 = vunpack.c.h.b16 %v443
        %v1015 = vunpack.c.l.b16 %v444
        %v1016 = vunpack.c.h.b16 %v444
        %v1017 = vunpack.c.l.b16 %v445
        %v1018 = vunpack.c.h.b16 %v445
        %v1019 = vunpack.c.l.b16 %v446
        %v1020 = vunpack.c.h.b16 %v446
        %v1021 = vunpack.c.l.b16 %v447
        %v1022 = vunpack.c.h.b16 %v447
        %v1023 = vunpack.c.l.b16 %v448
        %v1024 = vunpack.c.h.b16 %v448
        %v1025 = vunpack.c.l.b16 %v449
        %v1026 = vunpack.c.h.b16 %v449
        %v1027 = vunpack.c.l.b16 %v450
        %v1028 = vunpack.c.h.b16 %v450
        %v1029 = vunpack.c.l.b16 %v451
        %v1030 = vunpack.c.h.b16 %v451
        %v1031 = vunpack.c.l.b16 %v452
        %v1032 = vunpack.c.h.b16 %v452
        %v1033 = vunpack.c.l.b16 %v453
        %v1034 = vunpack.c.h.b16 %v453
        %v1035 = vunpack.c.l.b16 %v454
        %v1036 = vunpack.c.h.b16 %v454
        %v1037 = vunpack.c.l.b16 %v455
        %v1038 = vunpack.c.h.b16 %v455
        %v1039 = vunpack.c.l.b16 %v456
        %v1040 = vunpack.c.h.b16 %v456
        %v1041 = vunpack.c.l.b16 %v457
        %v1042 = vunpack.c.h.b16 %v457
        %v1043 = vunpack.c.l.b16 %v458
        %v1044 = vunpack.c.h.b16 %v458
        %v1045 = vunpack.c.l.b16 %v459
        %v1046 = vunpack.c.h.b16 %v459
        %v1047 = vunpack.c.l.b16 %v460
        %v1048 = vunpack.c.h.b16 %v460
        %v1049 = vunpack.c.l.b16 %v461
        %v1050 = vunpack.c.h.b16 %v461
        %v1051 = vunpack.c.l.b16 %v462
        %v1052 = vunpack.c.h.b16 %v462
        %v1053 = vunpack.c.l.b16 %v463
        %v1054 = vunpack.c.h.b16 %v463
        %v1055 = vunpack.c.l.b16 %v464
        %v1056 = vunpack.c.h.b16 %v464
        %v1057 = vunpack.c.l.b16 %v465
        %v1058 = vunpack.c.h.b16 %v465
        %v1059 = vunpack.c.l.b16 %v466
        %v1060 = vunpack.c.h.b16 %v466
        %v1061 = vunpack.c.l.b16 %v467
        %v1062 = vunpack.c.h.b16 %v467
        %v1063 = vunpack.c.l.b16 %v468
        %v1064 = vunpack.c.h.b16 %v468
        %v1065 = vunpack.c.l.b16 %v469
        %v1066 = vunpack.c.h.b16 %v469
        %v1067 = vunpack.c.l.b16 %v470
        %v1068 = vunpack.c.h.b16 %v470
        %v1069 = vunpack.c.l.b16 %v471
        %v1070 = vunpack.c.h.b16 %v471
        %v1071 = vunpack.c.l.b16 %v472
        %v1072 = vunpack.c.h.b16 %v472
        %v1073 = vunpack.c.l.b16 %v473
        %v1074 = vunpack.c.h.b16 %v473
        %v1075 = vunpack.c.l.b16 %v474
        %v1076 = vunpack.c.h.b16 %v474
        %v1077 = vunpack.c.l.b16 %v475
        %v1078 = vunpack.c.h.b16 %v475
        %v1079 = vunpack.c.l.b16 %v476
        %v1080 = vunpack.c.h.b16 %v476
        %v1081 = vunpack.c.l.b16 %v477
        %v1082 = vunpack.c.h.b16 %v477
        %v1083 = vunpack.c.l.b16 %v478
        %v1084 = vunpack.c.h.b16 %v478
        %v1085 = vunpack.c.l.b16 %v479
        %v1086 = vunpack.c.h.b16 %v479
        %v1087 = vunpack.c.l.b16 %v480
        %v1088 = vunpack.c.h.b16 %v480
        %v1089 = vunpack.c.l.b16 %v481
        %v1090 = vunpack.c.h.b16 %v481
        %v1091 = vunpack.c.l.b16 %v482
        %v1092 = vunpack.c.h.b16 %v482
        %v1093 = vunpack.c.l.b16 %v483
        %v1094 = vunpack.c.h.b16 %v483
        %v1095 = vunpack.c.l.b16 %v484
        %v1096 = vunpack.c.h.b16 %v484
        %v1097 = vunpack.c.l.b16 %v485
        %v1098 = vunpack.c.h.b16 %v485
        %v1099 = vunpack.c.l.b16 %v486
        %v1100 = vunpack.c.h.b16 %v486
        %v1101 = vunpack.c.l.b16 %v487
        %v1102 = vunpack.c.h.b16 %v487
        %v1103 = vunpack.c.l.b16 %v488
        %v1104 = vunpack.c.h.b16 %v488
        %v1105 = vunpack.c.l.b16 %v489
        %v1106 = vunpack.c.h.b16 %v489
        %v1107 = vunpack.c.l.b16 %v490
        %v1108 = vunpack.c.h.b16 %v490
        %v1109 = vunpack.c.l.b16 %v491
        %v1110 = vunpack.c.h.b16 %v491
        %v1111 = vunpack.c.l.b16 %v492
        %v1112 = vunpack.c.h.b16 %v492
        %v1113 = vunpack.c.l.b16 %v493
        %v1114 = vunpack.c.h.b16 %v493
        %v1115 = vunpack.c.l.b16 %v494
        %v1116 = vunpack.c.h.b16 %v494
        %v1117 = vunpack.c.l.b16 %v495
        %v1118 = vunpack.c.h.b16 %v495
        %v1119 = vunpack.c.l.b16 %v496
        %v1120 = vunpack.c.h.b16 %v496
        %v1121 = vunpack.c.l.b16 %v497
        %v1122 = vunpack.c.h.b16 %v497
        %v1123 = vunpack.c.l.b16 %v498
        %v1124 = vunpack.c.h.b16 %v498
        %v1125 = vunpack.c.l.b16 %v499
        %v1126 = vunpack.c.h.b16 %v499
        %v1127 = vunpack.c.l.b16 %v500
        %v1128 = vunpack.c.h.b16 %v500
        %v1129 = vunpack.c.l.b16 %v501
        %v1130 = vunpack.c.h.b16 %v501
        %v1131 = vunpack.c.l.b16 %v502
        %v1132 = vunpack.c.h.b16 %v502
        %v1133 = vunpack.c.l.b16 %v503
        %v1134 = vunpack.c.h.b16 %v503
        %v1135 = vunpack.c.l.b16 %v504
        %v1136 = vunpack.c.h.b16 %v504
        %v1137 = vunpack.c.l.b16 %v505
        %v1138 = vunpack.c.h.b16 %v505
        %v1139 = vunpack.c.l.b16 %v506
        %v1140 = vunpack.c.h.b16 %v506
        %v1141 = vunpack.c.l.b16 %v507
        %v1142 = vunpack.c.h.b16 %v507
        %v1143 = vunpack.c.l.b16 %v508
        %v1144 = vunpack.c.h.b16 %v508
        %v1145 = vunpack.c.l.b16 %v509
        %v1146 = vunpack.c.h.b16 %v509
        %v1147 = vunpack.c.l.b16 %v510
        %v1148 = vunpack.c.h.b16 %v510
        %v1149 = vunpack.c.l.b16 %v511
        %v1150 = vunpack.c.h.b16 %v511
        %v1151 = vunpack.c.l.b16 %v512
        %v1152 = vunpack.c.h.b16 %v512
        %v1153 = vunpack.c.l.b16 %v513
        %v1154 = vunpack.c.h.b16 %v513
        %v1155 = vunpack.c.l.b16 %v514
        %v1156 = vunpack.c.h.b16 %v514
        %v1157 = vunpack.c.l.b16 %v515
        %v1158 = vunpack.c.h.b16 %v515
        %v1159 = vunpack.c.l.b16 %v516
        %v1160 = vunpack.c.h.b16 %v516
        %v1161 = vunpack.c.l.b16 %v517
        %v1162 = vunpack.c.h.b16 %v517
        %v1163 = vunpack.c.l.b16 %v518
        %v1164 = vunpack.c.h.b16 %v518
        %v1165 = vunpack.c.l.b16 %v519
        %v1166 = vunpack.c.h.b16 %v519
        %v1167 = vunpack.c.l.b16 %v520
        %v1168 = vunpack.c.h.b16 %v520
        %v1169 = vunpack.c.l.b16 %v521
        %v1170 = vunpack.c.h.b16 %v521
        %v1171 = vunpack.c.l.b16 %v522
        %v1172 = vunpack.c.h.b16 %v522
        %v1173 = vunpack.c.l.b16 %v523
        %v1174 = vunpack.c.h.b16 %v523
        %v1175 = vunpack.c.l.b16 %v524
        %v1176 = vunpack.c.h.b16 %v524
        %v1177 = vunpack.c.l.b16 %v525
        %v1178 = vunpack.c.h.b16 %v525
        %v1179 = vunpack.c.l.b16 %v526
        %v1180 = vunpack.c.h.b16 %v526
        %v1181 = vunpack.c.l.b16 %v527
        %v1182 = vunpack.c.h.b16 %v527
        %v1183 = vunpack.c.l.b16 %v528
        %v1184 = vunpack.c.h.b16 %v528
        %v1185 = vunpack.c.l.b16 %v529
        %v1186 = vunpack.c.h.b16 %v529
        %v1187 = vunpack.c.l.b16 %v530
        %v1188 = vunpack.c.h.b16 %v530
        %v1189 = vunpack.c.l.b16 %v531
        %v1190 = vunpack.c.h.b16 %v531
        %v1191 = vunpack.c.l.b16 %v532
        %v1192 = vunpack.c.h.b16 %v532
        %v1193 = vunpack.c.l.b16 %v533
        %v1194 = vunpack.c.h.b16 %v533
        %v1195 = vunpack.c.l.b16 %v534
        %v1196 = vunpack.c.h.b16 %v534
        %v1197 = vunpack.c.l.b16 %v535
        %v1198 = vunpack.c.h.b16 %v535
        %v1199 = vunpack.c.l.b16 %v536
        %v1200 = vunpack.c.h.b16 %v536
        %v1201 = vunpack.c.l.b16 %v537
        %v1202 = vunpack.c.h.b16 %v537
        %v1203 = vunpack.c.l.b16 %v538
        %v1204 = vunpack.c.h.b16 %v538
        %v1205 = vunpack.c.l.b16 %v539
        %v1206 = vunpack.c.h.b16 %v539
        %v1207 = vunpack.c.l.b16 %v540
        %v1208 = vunpack.c.h.b16 %v540
        %v1209 = vunpack.c.l.b16 %v541
        %v1210 = vunpack.c.h.b16 %v541
        %v1211 = vunpack.c.l.b16 %v542
        %v1212 = vunpack.c.h.b16 %v542
        %v1213 = vunpack.c.l.b16 %v543
        %v1214 = vunpack.c.h.b16 %v543
        %v1215 = vunpack.c.l.b16 %v544
        %v1216 = vunpack.c.h.b16 %v544
        %v1217 = vunpack.c.l.b16 %v545
        %v1218 = vunpack.c.h.b16 %v545
        %v1219 = vunpack.c.l.b16 %v546
        %v1220 = vunpack.c.h.b16 %v546
        %v1221 = vunpack.c.l.b16 %v547
        %v1222 = vunpack.c.h.b16 %v547
        %v1223 = vunpack.c.l.b16 %v548
        %v1224 = vunpack.c.h.b16 %v548
        %v1225 = vunpack.c.l.b16 %v549
        %v1226 = vunpack.c.h.b16 %v549
        %v1227 = vunpack.c.l.b16 %v550
        %v1228 = vunpack.c.h.b16 %v550
        %v1229 = vunpack.c.l.b16 %v551
        %v1230 = vunpack.c.h.b16 %v551
        %v1231 = vunpack.c.l.b16 %v552
        %v1232 = vunpack.c.h.b16 %v552
        %v1233 = vunpack.c.l.b16 %v553
        %v1234 = vunpack.c.h.b16 %v553
        %v1235 = vunpack.c.l.b16 %v554
        %v1236 = vunpack.c.h.b16 %v554
        %v1237 = vunpack.c.l.b16 %v555
        %v1238 = vunpack.c.h.b16 %v555
        %v1239 = vunpack.c.l.b16 %v556
        %v1240 = vunpack.c.h.b16 %v556
        %v1241 = vunpack.c.l.b16 %v557
        %v1242 = vunpack.c.h.b16 %v557
        %v1243 = vunpack.c.l.b16 %v558
        %v1244 = vunpack.c.h.b16 %v558
        %v1245 = vunpack.c.l.b16 %v559
        %v1246 = vunpack.c.h.b16 %v559
        %v1247 = vunpack.c.l.b16 %v560
        %v1248 = vunpack.c.h.b16 %v560
        %v1249 = vunpack.c.l.b16 %v561
        %v1250 = vunpack.c.h.b16 %v561
        %v1251 = vunpack.c.l.b16 %v562
        %v1252 = vunpack.c.h.b16 %v562
        %v1253 = vunpack.c.l.b16 %v563
        %v1254 = vunpack.c.h.b16 %v563
        %v1255 = vunpack.c.l.b16 %v564
        %v1256 = vunpack.c.h.b16 %v564
        %v1257 = vunpack.c.l.b16 %v565
        %v1258 = vunpack.c.h.b16 %v565
        %v1259 = vunpack.c.l.b16 %v566
        %v1260 = vunpack.c.h.b16 %v566
        %v1261 = vunpack.c.l.b16 %v567
        %v1262 = vunpack.c.h.b16 %v567
        %v1263 = vunpack.c.l.b16 %v568
        %v1264 = vunpack.c.h.b16 %v568
        %v1265 = vunpack.c.l.b16 %v569
        %v1266 = vunpack.c.h.b16 %v569
        %v1267 = vunpack.c.l.b16 %v570
        %v1268 = vunpack.c.h.b16 %v570
        %v1269 = vunpack.c.l.b16 %v571
        %v1270 = vunpack.c.h.b16 %v571
        %v1271 = vunpack.c.l.b16 %v572
        %v1272 = vunpack.c.h.b16 %v572
        %v1273 = vunpack.c.l.b16 %v573
        %v1274 = vunpack.c.h.b16 %v573
        %v1275 = vunpack.c.l.b16 %v574
        %v1276 = vunpack.c.h.b16 %v574
        %v1277 = vunpack.c.l.b16 %v575
        %v1278 = vunpack.c.h.b16 %v575
        %v1279 = vunpack.c.l.b16 %v576
        %v1280 = vunpack.c.h.b16 %v576
        %v1281 = vunpack.c.l.b16 %v577
        %v1282 = vunpack.c.h.b16 %v577
        %v1283 = vunpack.c.l.b16 %v578
        %v1284 = vunpack.c.h.b16 %v578
        %v1285 = vunpack.c.l.b16 %v579
        %v1286 = vunpack.c.h.b16 %v579
        %v1287 = vunpack.c.l.b16 %v580
        %v1288 = vunpack.c.h.b16 %v580
        %v1289 = vunpack.c.l.b16 %v581
        %v1290 = vunpack.c.h.b16 %v581
        %v1291 = vunpack.c.l.b16 %v582
        %v1292 = vunpack.c.h.b16 %v582
        %v1293 = vunpack.c.l.b16 %v583
        %v1294 = vunpack.c.h.b16 %v583
        %v1295 = vunpack.c.l.b16 %v584
        %v1296 = vunpack.c.h.b16 %v584
        %v1297 = vunpack.c.l.b16 %v585
        %v1298 = vunpack.c.h.b16 %v585
        %v1299 = vunpack.c.l.b16 %v586
        %v1300 = vunpack.c.h.b16 %v586
        %v1301 = vunpack.c.l.b16 %v587
        %v1302 = vunpack.c.h.b16 %v587
        %v1303 = vunpack.c.l.b16 %v588
        %v1304 = vunpack.c.h.b16 %v588
        %v1305 = vunpack.c.l.b16 %v589
        %v1306 = vunpack.c.h.b16 %v589
        %v1307 = vunpack.c.l.b16 %v590
        %v1308 = vunpack.c.h.b16 %v590
        %v1309 = vunpack.c.l.b16 %v591
        %v1310 = vunpack.c.h.b16 %v591
        %v1311 = vunpack.c.l.b16 %v592
        %v1312 = vunpack.c.h.b16 %v592
        %v1313 = vunpack.c.l.b16 %v593
        %v1314 = vunpack.c.h.b16 %v593
        %v1315 = vunpack.c.l.b16 %v594
        %v1316 = vunpack.c.h.b16 %v594
        %v1317 = vunpack.c.l.b16 %v595
        %v1318 = vunpack.c.h.b16 %v595
        %v1319 = vunpack.c.l.b16 %v596
        %v1320 = vunpack.c.h.b16 %v596
        %v1321 = vunpack.c.l.b16 %v597
        %v1322 = vunpack.c.h.b16 %v597
        %v1323 = vunpack.c.l.b16 %v598
        %v1324 = vunpack.c.h.b16 %v598
        %v1325 = vunpack.c.l.b16 %v599
        %v1326 = vunpack.c.h.b16 %v599
        %v1327 = vunpack.c.l.b16 %v600
        %v1328 = vunpack.c.h.b16 %v600
        %v1329 = vunpack.c.l.b16 %v601
        %v1330 = vunpack.c.h.b16 %v601
        %v1331 = vunpack.c.l.b16 %v602
        %v1332 = vunpack.c.h.b16 %v602
        %v1333 = vunpack.c.l.b16 %v603
        %v1334 = vunpack.c.h.b16 %v603
        %v1335 = vunpack.c.l.b16 %v604
        %v1336 = vunpack.c.h.b16 %v604
        %v1337 = vunpack.c.l.b16 %v605
        %v1338 = vunpack.c.h.b16 %v605
        %v1339 = vunpack.c.l.b16 %v606
        %v1340 = vunpack.c.h.b16 %v606
        %v1341 = vunpack.c.l.b16 %v607
        %v1342 = vunpack.c.h.b16 %v607
        %v1343 = vunpack.c.l.b16 %v608
        %v1344 = vunpack.c.h.b16 %v608
        %v1345 = vunpack.c.l.b16 %v609
        %v1346 = vunpack.c.h.b16 %v609
        %v1347 = vunpack.c.l.b16 %v610
        %v1348 = vunpack.c.h.b16 %v610
        %v1349 = vunpack.c.l.b16 %v611
        %v1350 = vunpack.c.h.b16 %v611
        %v1351 = vunpack.c.l.b16 %v612
        %v1352 = vunpack.c.h.b16 %v612
        %v1353 = vunpack.c.l.b16 %v613
        %v1354 = vunpack.c.h.b16 %v613
        %v1355 = vunpack.c.l.b16 %v614
        %v1356 = vunpack.c.h.b16 %v614
        %v1357 = vunpack.c.l.b16 %v615
        %v1358 = vunpack.c.h.b16 %v615
        %v1359 = vunpack.c.l.b16 %v616
        %v1360 = vunpack.c.h.b16 %v616
        %v1361 = vunpack.c.l.b16 %v617
        %v1362 = vunpack.c.h.b16 %v617
        %v1363 = vunpack.c.l.b16 %v618
        %v1364 = vunpack.c.h.b16 %v618
        %v1365 = vunpack.c.l.b16 %v619
        %v1366 = vunpack.c.h.b16 %v619
        %v1367 = vunpack.c.l.b16 %v620
        %v1368 = vunpack.c.h.b16 %v620
        %v1369 = vunpack.c.l.b16 %v621
        %v1370 = vunpack.c.h.b16 %v621
        %v1371 = vunpack.c.l.b16 %v622
        %v1372 = vunpack.c.h.b16 %v622
        %v1373 = vunpack.c.l.b16 %v623
        %v1374 = vunpack.c.h.b16 %v623
        %v1375 = vunpack.c.l.b16 %v624
        %v1376 = vunpack.c.h.b16 %v624
        %v1377 = vunpack.c.l.b16 %v625
        %v1378 = vunpack.c.h.b16 %v625
        %v1379 = vunpack.c.l.b16 %v626
        %v1380 = vunpack.c.h.b16 %v626
        %v1381 = vunpack.c.l.b16 %v627
        %v1382 = vunpack.c.h.b16 %v627
        %v1383 = vunpack.c.l.b16 %v628
        %v1384 = vunpack.c.h.b16 %v628
        %v1385 = vunpack.c.l.b16 %v629
        %v1386 = vunpack.c.h.b16 %v629
        %v1387 = vunpack.c.l.b16 %v630
        %v1388 = vunpack.c.h.b16 %v630
        %v1389 = vunpack.c.l.b16 %v631
        %v1390 = vunpack.c.h.b16 %v631
        %v1391 = vunpack.c.l.b16 %v632
        %v1392 = vunpack.c.h.b16 %v632
        %v1393 = vunpack.c.l.b16 %v633
        %v1394 = vunpack.c.h.b16 %v633
        %v1395 = vunpack.c.l.b16 %v634
        %v1396 = vunpack.c.h.b16 %v634
        %v1397 = vunpack.c.l.b16 %v635
        %v1398 = vunpack.c.h.b16 %v635
        %v1399 = vunpack.c.l.b16 %v636
        %v1400 = vunpack.c.h.b16 %v636
        %v1401 = vunpack.c.l.b16 %v637
        %v1402 = vunpack.c.h.b16 %v637
        %v1403 = vunpack.c.l.b16 %v638
        %v1404 = vunpack.c.h.b16 %v638
        %v1405 = vunpack.c.l.b16 %v639
        %v1406 = vunpack.c.h.b16 %v639
        %v1407 = vunpack.c.l.b16 %v640
        %v1408 = vunpack.c.h.b16 %v640
        %v1409 = vunpack.c.l.b16 %v641
        %v1410 = vunpack.c.h.b16 %v641
        %v1411 = vunpack.c.l.b16 %v642
        %v1412 = vunpack.c.h.b16 %v642
        %v1413 = vunpack.c.l.b16 %v643
        %v1414 = vunpack.c.h.b16 %v643
        %v1415 = vunpack.c.l.b16 %v644
        %v1416 = vunpack.c.h.b16 %v644
        %v1417 = vunpack.c.l.b16 %v645
        %v1418 = vunpack.c.h.b16 %v645
        %v1419 = vunpack.c.l.b16 %v646
        %v1420 = vunpack.c.h.b16 %v646
        %v1421 = vunpack.c.l.b16 %v647
        %v1422 = vunpack.c.h.b16 %v647
        %v1423 = vunpack.c.l.b16 %v648
        %v1424 = vunpack.c.h.b16 %v648
        %v1425 = vunpack.c.l.b16 %v649
        %v1426 = vunpack.c.h.b16 %v649
        %v1427 = vunpack.c.l.b16 %v650
        %v1428 = vunpack.c.h.b16 %v650
        %v1429 = vunpack.c.l.b16 %v651
        %v1430 = vunpack.c.h.b16 %v651
        %v1431 = vunpack.c.l.b16 %v652
        %v1432 = vunpack.c.h.b16 %v652
        %v1433 = vunpack.c.l.b16 %v653
        %v1434 = vunpack.c.h.b16 %v653
        %v1435 = vunpack.c.l.b16 %v654
        %v1436 = vunpack.c.h.b16 %v654
        %v1437 = vunpack.c.l.b16 %v655
        %v1438 = vunpack.c.h.b16 %v655
        %v1439 = vunpack.c.l.b16 %v656
        %v1440 = vunpack.c.h.b16 %v656
        %v1441 = vunpack.c.l.b16 %v657
        %v1442 = vunpack.c.h.b16 %v657
        %v1443 = vunpack.c.l.b16 %v658
        %v1444 = vunpack.c.h.b16 %v658
        %v1445 = vunpack.c.l.b16 %v659
        %v1446 = vunpack.c.h.b16 %v659
        %v1447 = vunpack.c.l.b16 %v660
        %v1448 = vunpack.c.h.b16 %v660
        %v1449 = vunpack.c.l.b16 %v661
        %v1450 = vunpack.c.h.b16 %v661
        %v1451 = vunpack.c.l.b16 %v662
        %v1452 = vunpack.c.h.b16 %v662
        %v1453 = vunpack.c.l.b16 %v663
        %v1454 = vunpack.c.h.b16 %v663
        %v1455 = vunpack.c.l.b16 %v664
        %v1456 = vunpack.c.h.b16 %v664
        %v1457 = vunpack.c.l.b16 %v665
        %v1458 = vunpack.c.h.b16 %v665
        %v1459 = vunpack.c.l.b16 %v666
        %v1460 = vunpack.c.h.b16 %v666
        %v1461 = vunpack.c.l.b16 %v667
        %v1462 = vunpack.c.h.b16 %v667
        %v1463 = vunpack.c.l.b16 %v668
        %v1464 = vunpack.c.h.b16 %v668
        %v1465 = vunpack.c.l.b16 %v669
        %v1466 = vunpack.c.h.b16 %v669
        %v1467 = vunpack.c.l.b16 %v670
        %v1468 = vunpack.c.h.b16 %v670
        %v1469 = vunpack.c.l.b16 %v671
        %v1470 = vunpack.c.h.b16 %v671
        %v1471 = vunpack.c.l.b16 %v672
        %v1472 = vunpack.c.h.b16 %v672
        %v1473 = vunpack.c.l.b16 %v673
        %v1474 = vunpack.c.h.b16 %v673
        %v1475 = vunpack.c.l.b16 %v674
        %v1476 = vunpack.c.h.b16 %v674
        %v1477 = vunpack.c.l.b16 %v675
        %v1478 = vunpack.c.h.b16 %v675
        %v1479 = vunpack.c.l.b16 %v676
        %v1480 = vunpack.c.h.b16 %v676
        %v1481 = vunpack.c.l.b16 %v677
        %v1482 = vunpack.c.h.b16 %v677
        %v1483 = vunpack.c.l.b16 %v678
        %v1484 = vunpack.c.h.b16 %v678
        %v1485 = vunpack.c.l.b16 %v679
        %v1486 = vunpack.c.h.b16 %v679
        %v1487 = vunpack.c.l.b16 %v680
        %v1488 = vunpack.c.h.b16 %v680
        %v1489 = vunpack.c.l.b16 %v681
        %v1490 = vunpack.c.h.b16 %v681
        %v1491 = vunpack.c.l.b16 %v682
        %v1492 = vunpack.c.h.b16 %v682
        %v1493 = vpack.c.b16 %v989, %v981
        %v1494 = vpack.c.b16 %v990, %v982
        %v1495 = vpack.c.b16 %v991, %v983
        %v1496 = vpack.c.b16 %v992, %v984
        %v1497 = vpack.c.b16 %v993, %v985
        %v1498 = vpack.c.b16 %v994, %v986
        %v1499 = vpack.c.b16 %v995, %v987
        %v1500 = vpack.c.b16 %v996, %v988
        %v1501 = vpack.c.b16 %v1005, %v997
        %v1502 = vpack.c.b16 %v1006, %v998
        %v1503 = vpack.c.b16 %v1007, %v999
        %v1504 = vpack.c.b16 %v1008, %v1000
        %v1505 = vpack.c.b16 %v1009, %v1001
        %v1506 = vpack.c.b16 %v1010, %v1002
        %v1507 = vpack.c.b16 %v1011, %v1003
        %v1508 = vpack.c.b16 %v1012, %v1004
        %v1509 = vpack.c.b16 %v1021, %v1013
        %v1510 = vpack.c.b16 %v1022, %v1014
        %v1511 = vpack.c.b16 %v1023, %v1015
        %v1512 = vpack.c.b16 %v1024, %v1016
        %v1513 = vpack.c.b16 %v1025, %v1017
        %v1514 = vpack.c.b16 %v1026, %v1018
        %v1515 = vpack.c.b16 %v1027, %v1019
        %v1516 = vpack.c.b16 %v1028, %v1020
        %v1517 = vpack.c.b16 %v1037, %v1029
        %v1518 = vpack.c.b16 %v1038, %v1030
        %v1519 = vpack.c.b16 %v1039, %v1031
        %v1520 = vpack.c.b16 %v1040, %v1032
        %v1521 = vpack.c.b16 %v1041, %v1033
        %v1522 = vpack.c.b16 %v1042, %v1034
        %v1523 = vpack.c.b16 %v1043, %v1035
        %v1524 = vpack.c.b16 %v1044, %v1036
        %v1525 = vpack.c.b16 %v1053, %v1045
        %v1526 = vpack.c.b16 %v1054, %v1046
        %v1527 = vpack.c.b16 %v1055, %v1047
        %v1528 = vpack.c.b16 %v1056, %v1048
        %v1529 = vpack.c.b16 %v1057, %v1049
        %v1530 = vpack.c.b16 %v1058, %v1050
        %v1531 = vpack.c.b16 %v1059, %v1051
        %v1532 = vpack.c.b16 %v1060, %v1052
        %v1533 = vpack.c.b16 %v1069, %v1061
        %v1534 = vpack.c.b16 %v1070, %v1062
        %v1535 = vpack.c.b16 %v1071, %v1063
        %v1536 = vpack.c.b16 %v1072, %v1064
        %v1537 = vpack.c.b16 %v1073, %v1065
        %v1538 = vpack.c.b16 %v1074, %v1066
        %v1539 = vpack.c.b16 %v1075, %v1067
        %v1540 = vpack.c.b16 %v1076, %v1068
        %v1541 = vpack.c.b16 %v1085, %v1077
        %v1542 = vpack.c.b16 %v1086, %v1078
        %v1543 = vpack.c.b16 %v1087, %v1079
        %v1544 = vpack.c.b16 %v1088, %v1080
        %v1545 = vpack.c.b16 %v1089, %v1081
        %v1546 = vpack.c.b16 %v1090, %v1082
        %v1547 = vpack.c.b16 %v1091, %v1083
        %v1548 = vpack.c.b16 %v1092, %v1084
        %v1549 = vpack.c.b16 %v1101, %v1093
        %v1550 = vpack.c.b16 %v1102, %v1094
        %v1551 = vpack.c.b16 %v1103, %v1095
        %v1552 = vpack.c.b16 %v1104, %v1096
        %v1553 = vpack.c.b16 %v1105, %v1097
        %v1554 = vpack.c.b16 %v1106, %v1098
        %v1555 = vpack.c.b16 %v1107, %v1099
        %v1556 = vpack.c.b16 %v1108, %v1100
        %v1557 = vpack.c.b16 %v1117, %v1109
        %v1558 = vpack.c.b16 %v1118, %v1110
        %v1559 = vpack.c.b16 %v1119, %v1111
        %v1560 = vpack.c.b16 %v1120, %v1112
        %v1561 = vpack.c.b16 %v1121, %v1113
        %v1562 = vpack.c.b16 %v1122, %v1114
        %v1563 = vpack.c.b16 %v1123, %v1115
        %v1564 = vpack.c.b16 %v1124, %v1116
        %v1565 = vpack.c.b16 %v1133, %v1125
        %v1566 = vpack.c.b16 %v1134, %v1126
        %v1567 = vpack.c.b16 %v1135, %v1127
        %v1568 = vpack.c.b16 %v1136, %v1128
        %v1569 = vpack.c.b16 %v1137, %v1129
        %v1570 = vpack.c.b16 %v1138, %v1130
        %v1571 = vpack.c.b16 %v1139, %v1131
        %v1572 = vpack.c.b16 %v1140, %v1132
        %v1573 = vpack.c.b16 %v1149, %v1141
        %v1574 = vpack.c.b16 %v1150, %v1142
        %v1575 = vpack.c.b16 %v1151, %v1143
        %v1576 = vpack.c.b16 %v1152, %v1144
        %v1577 = vpack.c.b16 %v1153, %v1145
        %v1578 = vpack.c.b16 %v1154, %v1146
        %v1579 = vpack.c.b16 %v1155, %v1147
        %v1580 = vpack.c.b16 %v1156, %v1148
        %v1581 = vpack.c.b16 %v1165, %v1157
        %v1582 = vpack.c.b16 %v1166, %v1158
        %v1583 = vpack.c.b16 %v1167, %v1159
        %v1584 = vpack.c.b16 %v1168, %v1160
        %v1585 = vpack.c.b16 %v1169, %v1161
        %v1586 = vpack.c.b16 %v1170, %v1162
        %v1587 = vpack.c.b16 %v1171, %v1163
        %v1588 = vpack.c.b16 %v1172, %v1164
        %v1589 = vpack.c.b16 %v1181, %v1173
        %v1590 = vpack.c.b16 %v1182, %v1174
        %v1591 = vpack.c.b16 %v1183, %v1175
        %v1592 = vpack.c.b16 %v1184, %v1176
        %v1593 = vpack.c.b16 %v1185, %v1177
        %v1594 = vpack.c.b16 %v1186, %v1178
        %v1595 = vpack.c.b16 %v1187, %v1179
        %v1596 = vpack.c.b16 %v1188, %v1180
        %v1597 = vpack.c.b16 %v1197, %v1189
        %v1598 = vpack.c.b16 %v1198, %v1190
        %v1599 = vpack.c.b16 %v1199, %v1191
        %v1600 = vpack.c.b16 %v1200, %v1192
        %v1601 = vpack.c.b16 %v1201, %v1193
        %v1602 = vpack.c.b16 %v1202, %v1194
        %v1603 = vpack.c.b16 %v1203, %v1195
        %v1604 = vpack.c.b16 %v1204, %v1196
        %v1605 = vpack.c.b16 %v1213, %v1205
        %v1606 = vpack.c.b16 %v1214, %v1206
        %v1607 = vpack.c.b16 %v1215, %v1207
        %v1608 = vpack.c.b16 %v1216, %v1208
        %v1609 = vpack.c.b16 %v1217, %v1209
        %v1610 = vpack.c.b16 %v1218, %v1210
        %v1611 = vpack.c.b16 %v1219, %v1211
        %v1612 = vpack.c.b16 %v1220, %v1212
        %v1613 = vpack.c.b16 %v1229, %v1221
        %v1614 = vpack.c.b16 %v1230, %v1222
        %v1615 = vpack.c.b16 %v1231, %v1223
        %v1616 = vpack.c.b16 %v1232, %v1224
        %v1617 = vpack.c.b16 %v1233, %v1225
        %v1618 = vpack.c.b16 %v1234, %v1226
        %v1619 = vpack.c.b16 %v1235, %v1227
        %v1620 = vpack.c.b16 %v1236, %v1228
        %v1621 = vpack.c.b16 %v1245, %v1237
        %v1622 = vpack.c.b16 %v1246, %v1238
        %v1623 = vpack.c.b16 %v1247, %v1239
        %v1624 = vpack.c.b16 %v1248, %v1240
        %v1625 = vpack.c.b16 %v1249, %v1241
        %v1626 = vpack.c.b16 %v1250, %v1242
        %v1627 = vpack.c.b16 %v1251, %v1243
        %v1628 = vpack.c.b16 %v1252, %v1244
        %v1629 = vpack.c.b16 %v1261, %v1253
        %v1630 = vpack.c.b16 %v1262, %v1254
        %v1631 = vpack.c.b16 %v1263, %v1255
        %v1632 = vpack.c.b16 %v1264, %v1256
        %v1633 = vpack.c.b16 %v1265, %v1257
        %v1634 = vpack.c.b16 %v1266, %v1258
        %v1635 = vpack.c.b16 %v1267, %v1259
        %v1636 = vpack.c.b16 %v1268, %v1260
        %v1637 = vpack.c.b16 %v1277, %v1269
        %v1638 = vpack.c.b16 %v1278, %v1270
        %v1639 = vpack.c.b16 %v1279, %v1271
        %v1640 = vpack.c.b16 %v1280, %v1272
        %v1641 = vpack.c.b16 %v1281, %v1273
        %v1642 = vpack.c.b16 %v1282, %v1274
        %v1643 = vpack.c.b16 %v1283, %v1275
        %v1644 = vpack.c.b16 %v1284, %v1276
        %v1645 = vpack.c.b16 %v1293, %v1285
        %v1646 = vpack.c.b16 %v1294, %v1286
        %v1647 = vpack.c.b16 %v1295, %v1287
        %v1648 = vpack.c.b16 %v1296, %v1288
        %v1649 = vpack.c.b16 %v1297, %v1289
        %v1650 = vpack.c.b16 %v1298, %v1290
        %v1651 = vpack.c.b16 %v1299, %v1291
        %v1652 = vpack.c.b16 %v1300, %v1292
        %v1653 = vpack.c.b16 %v1309, %v1301
        %v1654 = vpack.c.b16 %v1310, %v1302
        %v1655 = vpack.c.b16 %v1311, %v1303
        %v1656 = vpack.c.b16 %v1312, %v1304
        %v1657 = vpack.c.b16 %v1313, %v1305
        %v1658 = vpack.c.b16 %v1314, %v1306
        %v1659 = vpack.c.b16 %v1315, %v1307
        %v1660 = vpack.c.b16 %v1316, %v1308
        %v1661 = vpack.c.b16 %v1325, %v1317
        %v1662 = vpack.c.b16 %v1326, %v1318
        %v1663 = vpack.c.b16 %v1327, %v1319
        %v1664 = vpack.c.b16 %v1328, %v1320
        %v1665 = vpack.c.b16 %v1329, %v1321
        %v1666 = vpack.c.b16 %v1330, %v1322
        %v1667 = vpack.c.b16 %v1331, %v1323
        %v1668 = vpack.c.b16 %v1332, %v1324
        %v1669 = vpack.c.b16 %v1341, %v1333
        %v1670 = vpack.c.b16 %v1342, %v1334
        %v1671 = vpack.c.b16 %v1343, %v1335
        %v1672 = vpack.c.b16 %v1344, %v1336
        %v1673 = vpack.c.b16 %v1345, %v1337
        %v1674 = vpack.c.b16 %v1346, %v1338
        %v1675 = vpack.c.b16 %v1347, %v1339
        %v1676 = vpack.c.b16 %v1348, %v1340
        %v1677 = vpack.c.b16 %v1357, %v1349
        %v1678 = vpack.c.b16 %v1358, %v1350
        %v1679 = vpack.c.b16 %v1359, %v1351
        %v1680 = vpack.c.b16 %v1360, %v1352
        %v1681 = vpack.c.b16 %v1361, %v1353
        %v1682 = vpack.c.b16 %v1362, %v1354
        %v1683 = vpack.c.b16 %v1363, %v1355
        %v1684 = vpack.c.b16 %v1364, %v1356
        %v1685 = vpack.c.b16 %v1373, %v1365
        %v1686 = vpack.c.b16 %v1374, %v1366
        %v1687 = vpack.c.b16 %v1375, %v1367
        %v1688 = vpack.c.b16 %v1376, %v1368
        %v1689 = vpack.c.b16 %v1377, %v1369
        %v1690 = vpack.c.b16 %v1378, %v1370
        %v1691 = vpack.c.b16 %v1379, %v1371
        %v1692 = vpack.c.b16 %v1380, %v1372
        %v1693 = vpack.c.b16 %v1389, %v1381
        %v1694 = vpack.c.b16 %v1390, %v1382
        %v1695 = vpack.c.b16 %v1391, %v1383
        %v1696 = vpack.c.b16 %v1392, %v1384
        %v1697 = vpack.c.b16 %v1393, %v1385
        %v1698 = vpack.c.b16 %v1394, %v1386
        %v1699 = vpack.c.b16 %v1395, %v1387
        %v1700 = vpack.c.b16 %v1396, %v1388
        %v1701 = vpack.c.b16 %v1405, %v1397
        %v1702 = vpack.c.b16 %v1406, %v1398
        %v1703 = vpack.c.b16 %v1407, %v1399
        %v1704 = vpack.c.b16 %v1408, %v1400
        %v1705 = vpack.c.b16 %v1409, %v1401
        %v1706 = vpack.c.b16 %v1410, %v1402
        %v1707 = vpack.c.b16 %v1411, %v1403
        %v1708 = vpack.c.b16 %v1412, %v1404
        %v1709 = vpack.c.b16 %v1421, %v1413
        %v1710 = vpack.c.b16 %v1422, %v1414
        %v1711 = vpack.c.b16 %v1423, %v1415
        %v1712 = vpack.c.b16 %v1424, %v1416
        %v1713 = vpack.c.b16 %v1425, %v1417
        %v1714 = vpack.c.b16 %v1426, %v1418
        %v1715 = vpack.c.b16 %v1427, %v1419
        %v1716 = vpack.c.b16 %v1428, %v1420
        %v1717 = vpack.c.b16 %v1437, %v1429
        %v1718 = vpack.c.b16 %v1438, %v1430
        %v1719 = vpack.c.b16 %v1439, %v1431
        %v1720 = vpack.c.b16 %v1440, %v1432
        %v1721 = vpack.c.b16 %v1441, %v1433
        %v1722 = vpack.c.b16 %v1442, %v1434
        %v1723 = vpack.c.b16 %v1443, %v1435
        %v1724 = vpack.c.b16 %v1444, %v1436
        %v1725 = vpack.c.b16 %v1453, %v1445
        %v1726 = vpack.c.b16 %v1454, %v1446
        %v1727 = vpack.c.b16 %v1455, %v1447
        %v1728 = vpack.c.b16 %v1456, %v1448
        %v1729 = vpack.c.b16 %v1457, %v1449
        %v1730 = vpack.c.b16 %v1458, %v1450
        %v1731 = vpack.c.b16 %v1459, %v1451
        %v1732 = vpack.c.b16 %v1460, %v1452
        %v1733 = vpack.c.b16 %v1469, %v1461
        %v1734 = vpack.c.b16 %v1470, %v1462
        %v1735 = vpack.c.b16 %v1471, %v1463
        %v1736 = vpack.c.b16 %v1472, %v1464
        %v1737 = vpack.c.b16 %v1473, %v1465
        %v1738 = vpack.c.b16 %v1474, %v1466
        %v1739 = vpack.c.b16 %v1475, %v1467
        %v1740 = vpack.c.b16 %v1476, %v1468
        %v1741 = vpack.c.b16 %v1485, %v1477
        %v1742 = vpack.c.b16 %v1486, %v1478
        %v1743 = vpack.c.b16 %v1487, %v1479
        %v1744 = vpack.c.b16 %v1488, %v1480
        %v1745 = vpack.c.b16 %v1489, %v1481
        %v1746 = vpack.c.b16 %v1490, %v1482
        %v1747 = vpack.c.b16 %v1491, %v1483
        %v1748 = vpack.c.b16 %v1492, %v1484
        %2005 = vmatprep.subr.bf16.mxu0 %v1494
        %2006 = vmatpush1.bf16.msra.mxu0 %v1493
        %2007 = vmatprep.subr.bf16.mxu0 %v1502
        %2008 = vmatpush1.bf16.msra.mxu0 %v1501
        %2009 = vmatprep.subr.bf16.mxu0 %v1510
        %2010 = vmatpush1.bf16.msra.mxu0 %v1509
        %2011 = vmatprep.subr.bf16.mxu0 %v1518
        %2012 = vmatpush1.bf16.msra.mxu0 %v1517
        %2013 = vmatprep.subr.bf16.mxu0 %v1526
        %2014 = vmatpush1.bf16.msra.mxu0 %v1525
        %2015 = vmatprep.subr.bf16.mxu0 %v1534
        %2016 = vmatpush1.bf16.msra.mxu0 %v1533
        %2017 = vmatprep.subr.bf16.mxu0 %v1542
        %2018 = vmatpush1.bf16.msra.mxu0 %v1541
        %2019 = vmatprep.subr.bf16.mxu0 %v1550
        %2020 = vmatpush1.bf16.msra.mxu0 %v1549
        %2021 = vmatprep.subr.bf16.mxu0 %v1558
        %2022 = vmatpush1.bf16.msra.mxu0 %v1557
        %2023 = vmatprep.subr.bf16.mxu0 %v1566
        %2024 = vmatpush1.bf16.msra.mxu0 %v1565
        %2025 = vmatprep.subr.bf16.mxu0 %v1574
        %2026 = vmatpush1.bf16.msra.mxu0 %v1573
        %2027 = vmatprep.subr.bf16.mxu0 %v1582
        %2028 = vmatpush1.bf16.msra.mxu0 %v1581
        %2029 = vmatprep.subr.bf16.mxu0 %v1590
        %2030 = vmatpush1.bf16.msra.mxu0 %v1589
        %2031 = vmatprep.subr.bf16.mxu0 %v1598
        %2032 = vmatpush1.bf16.msra.mxu0 %v1597
        %2033 = vmatprep.subr.bf16.mxu0 %v1606
        %2034 = vmatpush1.bf16.msra.mxu0 %v1605
        %2035 = vmatprep.subr.bf16.mxu0 %v1614
        %2036 = vmatpush1.bf16.msra.mxu0 %v1613
        %2037 = vmatprep.mubr.bf16.mxu0 %v424
        %2038 = vmatmul.mubr.bf16.gmra.mrb[0].mxu0 %v423
        %v2039 = vpop.f32.mrb[0].mxu0
        %v2040 = vadd.f32 %v688, %v2039
        %v2041 = vpop.f32.mrb[0].mxu0
        %v2042 = vadd.f32 %v692, %v2041
        %v2043 = vpop.f32.mrb[0].mxu0
        %v2044 = vpop.f32.mrb[0].mxu0
        %2045 = vdwg.mxu0
        %2046 = vmatprep.subr.bf16.mxu0 %v1622
        %2047 = vmatpush1.bf16.msra.mxu0 %v1621
        %2048 = vmatprep.subr.bf16.mxu0 %v1630
        %2049 = vmatpush1.bf16.msra.mxu0 %v1629
        %2050 = vmatprep.subr.bf16.mxu0 %v1638
        %2051 = vmatpush1.bf16.msra.mxu0 %v1637
        %2052 = vmatprep.subr.bf16.mxu0 %v1646
        %2053 = vmatpush1.bf16.msra.mxu0 %v1645
        %2054 = vmatprep.subr.bf16.mxu0 %v1654
        %2055 = vmatpush1.bf16.msra.mxu0 %v1653
        %2056 = vmatprep.subr.bf16.mxu0 %v1662
        %2057 = vmatpush1.bf16.msra.mxu0 %v1661
        %2058 = vmatprep.subr.bf16.mxu0 %v1670
        %2059 = vmatpush1.bf16.msra.mxu0 %v1669
        %2060 = vmatprep.subr.bf16.mxu0 %v1678
        %2061 = vmatpush1.bf16.msra.mxu0 %v1677
        %2062 = vmatprep.subr.bf16.mxu0 %v1686
        %2063 = vmatpush1.bf16.msra.mxu0 %v1685
        %2064 = vmatprep.subr.bf16.mxu0 %v1694
        %2065 = vmatpush1.bf16.msra.mxu0 %v1693
        %2066 = vmatprep.subr.bf16.mxu0 %v1702
        %2067 = vmatpush1.bf16.msra.mxu0 %v1701
        %2068 = vmatprep.subr.bf16.mxu0 %v1710
        %2069 = vmatpush1.bf16.msra.mxu0 %v1709
        %2070 = vmatprep.subr.bf16.mxu0 %v1718
        %2071 = vmatpush1.bf16.msra.mxu0 %v1717
        %2072 = vmatprep.subr.bf16.mxu0 %v1726
        %2073 = vmatpush1.bf16.msra.mxu0 %v1725
        %2074 = vmatprep.subr.bf16.mxu0 %v1734
        %2075 = vmatpush1.bf16.msra.mxu0 %v1733
        %2076 = vmatprep.subr.bf16.mxu0 %v1742
        %2077 = vmatpush1.bf16.msra.mxu0 %v1741
        %2078 = vmatprep.mubr.bf16.mxu0 %v426
        %2079 = vmatmul.mubr.bf16.gmra.mrb[0].mxu0 %v425
        %v2080 = vpop.f32.mrb[0].mxu0
        %v2081 = vadd.f32 %v2040, %v2080
        %v2082 = vpop.f32.mrb[0].mxu0
        %v2083 = vadd.f32 %v2042, %v2082
        %v2084 = vpop.f32.mrb[0].mxu0
        %v2085 = vpop.f32.mrb[0].mxu0
        %2086 = vdwg.mxu0
        %2087 = vmatprep.subr.bf16.mxu0 %v1496
        %2088 = vmatpush1.bf16.msra.mxu0 %v1495
        %2089 = vmatprep.subr.bf16.mxu0 %v1504
        %2090 = vmatpush1.bf16.msra.mxu0 %v1503
        %2091 = vmatprep.subr.bf16.mxu0 %v1512
        %2092 = vmatpush1.bf16.msra.mxu0 %v1511
        %2093 = vmatprep.subr.bf16.mxu0 %v1520
        %2094 = vmatpush1.bf16.msra.mxu0 %v1519
        %2095 = vmatprep.subr.bf16.mxu0 %v1528
        %2096 = vmatpush1.bf16.msra.mxu0 %v1527
        %2097 = vmatprep.subr.bf16.mxu0 %v1536
        %2098 = vmatpush1.bf16.msra.mxu0 %v1535
        %2099 = vmatprep.subr.bf16.mxu0 %v1544
        %2100 = vmatpush1.bf16.msra.mxu0 %v1543
        %2101 = vmatprep.subr.bf16.mxu0 %v1552
        %2102 = vmatpush1.bf16.msra.mxu0 %v1551
        %2103 = vmatprep.subr.bf16.mxu0 %v1560
        %2104 = vmatpush1.bf16.msra.mxu0 %v1559
        %2105 = vmatprep.subr.bf16.mxu0 %v1568
        %2106 = vmatpush1.bf16.msra.mxu0 %v1567
        %2107 = vmatprep.subr.bf16.mxu0 %v1576
        %2108 = vmatpush1.bf16.msra.mxu0 %v1575
        %2109 = vmatprep.subr.bf16.mxu0 %v1584
        %2110 = vmatpush1.bf16.msra.mxu0 %v1583
        %2111 = vmatprep.subr.bf16.mxu0 %v1592
        %2112 = vmatpush1.bf16.msra.mxu0 %v1591
        %2113 = vmatprep.subr.bf16.mxu0 %v1600
        %2114 = vmatpush1.bf16.msra.mxu0 %v1599
        %2115 = vmatprep.subr.bf16.mxu0 %v1608
        %2116 = vmatpush1.bf16.msra.mxu0 %v1607
        %2117 = vmatprep.subr.bf16.mxu0 %v1616
        %2118 = vmatpush1.bf16.msra.mxu0 %v1615
        %2119 = vmatprep.mubr.bf16.mxu0 %v424
        %2120 = vmatmul.mubr.bf16.gmra.mrb[0].mxu0 %v423
        %v2121 = vpop.f32.mrb[0].mxu0
        %v2122 = vadd.f32 %v696, %v2121
        %v2123 = vpop.f32.mrb[0].mxu0
        %v2124 = vadd.f32 %v700, %v2123
        %v2125 = vpop.f32.mrb[0].mxu0
        %v2126 = vpop.f32.mrb[0].mxu0
        %2127 = vdwg.mxu0
        %2128 = vmatprep.subr.bf16.mxu0 %v1624
        %2129 = vmatpush1.bf16.msra.mxu0 %v1623
        %2130 = vmatprep.subr.bf16.mxu0 %v1632
        %2131 = vmatpush1.bf16.msra.mxu0 %v1631
        %2132 = vmatprep.subr.bf16.mxu0 %v1640
        %2133 = vmatpush1.bf16.msra.mxu0 %v1639
        %2134 = vmatprep.subr.bf16.mxu0 %v1648
        %2135 = vmatpush1.bf16.msra.mxu0 %v1647
        %2136 = vmatprep.subr.bf16.mxu0 %v1656
        %2137 = vmatpush1.bf16.msra.mxu0 %v1655
        %2138 = vmatprep.subr.bf16.mxu0 %v1664
        %2139 = vmatpush1.bf16.msra.mxu0 %v1663
        %2140 = vmatprep.subr.bf16.mxu0 %v1672
        %2141 = vmatpush1.bf16.msra.mxu0 %v1671
        %2142 = vmatprep.subr.bf16.mxu0 %v1680
        %2143 = vmatpush1.bf16.msra.mxu0 %v1679
        %2144 = vmatprep.subr.bf16.mxu0 %v1688
        %2145 = vmatpush1.bf16.msra.mxu0 %v1687
        %2146 = vmatprep.subr.bf16.mxu0 %v1696
        %2147 = vmatpush1.bf16.msra.mxu0 %v1695
        %2148 = vmatprep.subr.bf16.mxu0 %v1704
        %2149 = vmatpush1.bf16.msra.mxu0 %v1703
        %2150 = vmatprep.subr.bf16.mxu0 %v1712
        %2151 = vmatpush1.bf16.msra.mxu0 %v1711
        %2152 = vmatprep.subr.bf16.mxu0 %v1720
        %2153 = vmatpush1.bf16.msra.mxu0 %v1719
        %2154 = vmatprep.subr.bf16.mxu0 %v1728
        %2155 = vmatpush1.bf16.msra.mxu0 %v1727
        %2156 = vmatprep.subr.bf16.mxu0 %v1736
        %2157 = vmatpush1.bf16.msra.mxu0 %v1735
        %2158 = vmatprep.subr.bf16.mxu0 %v1744
        %2159 = vmatpush1.bf16.msra.mxu0 %v1743
        %2160 = vmatprep.mubr.bf16.mxu0 %v426
        %2161 = vmatmul.mubr.bf16.gmra.mrb[0].mxu0 %v425
        %v2162 = vpop.f32.mrb[0].mxu0
        %v2163 = vadd.f32 %v2122, %v2162
        %v2164 = vpop.f32.mrb[0].mxu0
        %v2165 = vadd.f32 %v2124, %v2164
        %v2166 = vpop.f32.mrb[0].mxu0
        %v2167 = vpop.f32.mrb[0].mxu0
        %2168 = vdwg.mxu0
        %2169 = vmatprep.subr.bf16.mxu0 %v1498
        %2170 = vmatpush1.bf16.msra.mxu0 %v1497
        %2171 = vmatprep.subr.bf16.mxu0 %v1506
        %2172 = vmatpush1.bf16.msra.mxu0 %v1505
        %2173 = vmatprep.subr.bf16.mxu0 %v1514
        %2174 = vmatpush1.bf16.msra.mxu0 %v1513
        %2175 = vmatprep.subr.bf16.mxu0 %v1522
        %2176 = vmatpush1.bf16.msra.mxu0 %v1521
        %2177 = vmatprep.subr.bf16.mxu0 %v1530
        %2178 = vmatpush1.bf16.msra.mxu0 %v1529
        %2179 = vmatprep.subr.bf16.mxu0 %v1538
        %2180 = vmatpush1.bf16.msra.mxu0 %v1537
        %2181 = vmatprep.subr.bf16.mxu0 %v1546
        %2182 = vmatpush1.bf16.msra.mxu0 %v1545
        %2183 = vmatprep.subr.bf16.mxu0 %v1554
        %2184 = vmatpush1.bf16.msra.mxu0 %v1553
        %2185 = vmatprep.subr.bf16.mxu0 %v1562
        %2186 = vmatpush1.bf16.msra.mxu0 %v1561
        %2187 = vmatprep.subr.bf16.mxu0 %v1570
        %2188 = vmatpush1.bf16.msra.mxu0 %v1569
        %2189 = vmatprep.subr.bf16.mxu0 %v1578
        %2190 = vmatpush1.bf16.msra.mxu0 %v1577
        %2191 = vmatprep.subr.bf16.mxu0 %v1586
        %2192 = vmatpush1.bf16.msra.mxu0 %v1585
        %2193 = vmatprep.subr.bf16.mxu0 %v1594
        %2194 = vmatpush1.bf16.msra.mxu0 %v1593
        %2195 = vmatprep.subr.bf16.mxu0 %v1602
        %2196 = vmatpush1.bf16.msra.mxu0 %v1601
        %2197 = vmatprep.subr.bf16.mxu0 %v1610
        %2198 = vmatpush1.bf16.msra.mxu0 %v1609
        %2199 = vmatprep.subr.bf16.mxu0 %v1618
        %2200 = vmatpush1.bf16.msra.mxu0 %v1617
        %2201 = vmatprep.mubr.bf16.mxu0 %v424
        %2202 = vmatmul.mubr.bf16.gmra.mrb[0].mxu0 %v423
        %v2203 = vpop.f32.mrb[0].mxu0
        %v2204 = vadd.f32 %v704, %v2203
        %v2205 = vpop.f32.mrb[0].mxu0
        %v2206 = vadd.f32 %v708, %v2205
        %v2207 = vpop.f32.mrb[0].mxu0
        %v2208 = vpop.f32.mrb[0].mxu0
        %2209 = vdwg.mxu0
        %2210 = vmatprep.subr.bf16.mxu0 %v1626
        %2211 = vmatpush1.bf16.msra.mxu0 %v1625
        %2212 = vmatprep.subr.bf16.mxu0 %v1634
        %2213 = vmatpush1.bf16.msra.mxu0 %v1633
        %2214 = vmatprep.subr.bf16.mxu0 %v1642
        %2215 = vmatpush1.bf16.msra.mxu0 %v1641
        %2216 = vmatprep.subr.bf16.mxu0 %v1650
        %2217 = vmatpush1.bf16.msra.mxu0 %v1649
        %2218 = vmatprep.subr.bf16.mxu0 %v1658
        %2219 = vmatpush1.bf16.msra.mxu0 %v1657
        %2220 = vmatprep.subr.bf16.mxu0 %v1666
        %2221 = vmatpush1.bf16.msra.mxu0 %v1665
        %2222 = vmatprep.subr.bf16.mxu0 %v1674
        %2223 = vmatpush1.bf16.msra.mxu0 %v1673
        %2224 = vmatprep.subr.bf16.mxu0 %v1682
        %2225 = vmatpush1.bf16.msra.mxu0 %v1681
        %2226 = vmatprep.subr.bf16.mxu0 %v1690
        %2227 = vmatpush1.bf16.msra.mxu0 %v1689
        %2228 = vmatprep.subr.bf16.mxu0 %v1698
        %2229 = vmatpush1.bf16.msra.mxu0 %v1697
        %2230 = vmatprep.subr.bf16.mxu0 %v1706
        %2231 = vmatpush1.bf16.msra.mxu0 %v1705
        %2232 = vmatprep.subr.bf16.mxu0 %v1714
        %2233 = vmatpush1.bf16.msra.mxu0 %v1713
        %2234 = vmatprep.subr.bf16.mxu0 %v1722
        %2235 = vmatpush1.bf16.msra.mxu0 %v1721
        %2236 = vmatprep.subr.bf16.mxu0 %v1730
        %2237 = vmatpush1.bf16.msra.mxu0 %v1729
        %2238 = vmatprep.subr.bf16.mxu0 %v1738
        %2239 = vmatpush1.bf16.msra.mxu0 %v1737
        %2240 = vmatprep.subr.bf16.mxu0 %v1746
        %2241 = vmatpush1.bf16.msra.mxu0 %v1745
        %2242 = vmatprep.mubr.bf16.mxu0 %v426
        %2243 = vmatmul.mubr.bf16.gmra.mrb[0].mxu0 %v425
        %v2244 = vpop.f32.mrb[0].mxu0
        %v2245 = vadd.f32 %v2204, %v2244
        %v2246 = vpop.f32.mrb[0].mxu0
        %v2247 = vadd.f32 %v2206, %v2246
        %v2248 = vpop.f32.mrb[0].mxu0
        %v2249 = vpop.f32.mrb[0].mxu0
        %2250 = vdwg.mxu0
        %2251 = vmatprep.subr.bf16.mxu0 %v1500
        %2252 = vmatpush1.bf16.msra.mxu0 %v1499
        %2253 = vmatprep.subr.bf16.mxu0 %v1508
        %2254 = vmatpush1.bf16.msra.mxu0 %v1507
        %2255 = vmatprep.subr.bf16.mxu0 %v1516
        %2256 = vmatpush1.bf16.msra.mxu0 %v1515
        %2257 = vmatprep.subr.bf16.mxu0 %v1524
        %2258 = vmatpush1.bf16.msra.mxu0 %v1523
        %2259 = vmatprep.subr.bf16.mxu0 %v1532
        %2260 = vmatpush1.bf16.msra.mxu0 %v1531
        %2261 = vmatprep.subr.bf16.mxu0 %v1540
        %2262 = vmatpush1.bf16.msra.mxu0 %v1539
        %2263 = vmatprep.subr.bf16.mxu0 %v1548
        %2264 = vmatpush1.bf16.msra.mxu0 %v1547
        %2265 = vmatprep.subr.bf16.mxu0 %v1556
        %2266 = vmatpush1.bf16.msra.mxu0 %v1555
        %2267 = vmatprep.subr.bf16.mxu0 %v1564
        %2268 = vmatpush1.bf16.msra.mxu0 %v1563
        %2269 = vmatprep.subr.bf16.mxu0 %v1572
        %2270 = vmatpush1.bf16.msra.mxu0 %v1571
        %2271 = vmatprep.subr.bf16.mxu0 %v1580
        %2272 = vmatpush1.bf16.msra.mxu0 %v1579
        %2273 = vmatprep.subr.bf16.mxu0 %v1588
        %2274 = vmatpush1.bf16.msra.mxu0 %v1587
        %2275 = vmatprep.subr.bf16.mxu0 %v1596
        %2276 = vmatpush1.bf16.msra.mxu0 %v1595
        %2277 = vmatprep.subr.bf16.mxu0 %v1604
        %2278 = vmatpush1.bf16.msra.mxu0 %v1603
        %2279 = vmatprep.subr.bf16.mxu0 %v1612
        %2280 = vmatpush1.bf16.msra.mxu0 %v1611
        %2281 = vmatprep.subr.bf16.mxu0 %v1620
        %2282 = vmatpush1.bf16.msra.mxu0 %v1619
        %2283 = vmatprep.mubr.bf16.mxu0 %v424
        %2284 = vmatmul.mubr.bf16.gmra.mrb[0].mxu0 %v423
        %v2285 = vpop.f32.mrb[0].mxu0
        %v2286 = vadd.f32 %v712, %v2285
        %v2287 = vpop.f32.mrb[0].mxu0
        %v2288 = vadd.f32 %v716, %v2287
        %v2289 = vpop.f32.mrb[0].mxu0
        %v2290 = vpop.f32.mrb[0].mxu0
        %2291 = vdwg.mxu0
        %2292 = vmatprep.subr.bf16.mxu0 %v1628
        %2293 = vmatpush1.bf16.msra.mxu0 %v1627
        %2294 = vmatprep.subr.bf16.mxu0 %v1636
        %2295 = vmatpush1.bf16.msra.mxu0 %v1635
        %2296 = vmatprep.subr.bf16.mxu0 %v1644
        %2297 = vmatpush1.bf16.msra.mxu0 %v1643
        %2298 = vmatprep.subr.bf16.mxu0 %v1652
        %2299 = vmatpush1.bf16.msra.mxu0 %v1651
        %2300 = vmatprep.subr.bf16.mxu0 %v1660
        %2301 = vmatpush1.bf16.msra.mxu0 %v1659
        %2302 = vmatprep.subr.bf16.mxu0 %v1668
        %2303 = vmatpush1.bf16.msra.mxu0 %v1667
        %2304 = vmatprep.subr.bf16.mxu0 %v1676
        %2305 = vmatpush1.bf16.msra.mxu0 %v1675
        %2306 = vmatprep.subr.bf16.mxu0 %v1684
        %2307 = vmatpush1.bf16.msra.mxu0 %v1683
        %2308 = vmatprep.subr.bf16.mxu0 %v1692
        %2309 = vmatpush1.bf16.msra.mxu0 %v1691
        %2310 = vmatprep.subr.bf16.mxu0 %v1700
        %2311 = vmatpush1.bf16.msra.mxu0 %v1699
        %2312 = vmatprep.subr.bf16.mxu0 %v1708
        %2313 = vmatpush1.bf16.msra.mxu0 %v1707
        %2314 = vmatprep.subr.bf16.mxu0 %v1716
        %2315 = vmatpush1.bf16.msra.mxu0 %v1715
        %2316 = vmatprep.subr.bf16.mxu0 %v1724
        %2317 = vmatpush1.bf16.msra.mxu0 %v1723
        %2318 = vmatprep.subr.bf16.mxu0 %v1732
        %2319 = vmatpush1.bf16.msra.mxu0 %v1731
        %2320 = vmatprep.subr.bf16.mxu0 %v1740
        %2321 = vmatpush1.bf16.msra.mxu0 %v1739
        %2322 = vmatprep.subr.bf16.mxu0 %v1748
        %2323 = vmatpush1.bf16.msra.mxu0 %v1747
        %2324 = vmatprep.mubr.bf16.mxu0 %v426
        %2325 = vmatmul.mubr.bf16.gmra.mrb[0].mxu0 %v425
        %v2326 = vpop.f32.mrb[0].mxu0
        %v2327 = vadd.f32 %v2286, %v2326
        %v2328 = vpop.f32.mrb[0].mxu0
        %v2329 = vadd.f32 %v2288, %v2328
        %v2330 = vpop.f32.mrb[0].mxu0
        %v2331 = vpop.f32.mrb[0].mxu0
        %2332 = vdwg.mxu0
        %v2333 = vmul.f32 %v2081, 0.5
        %v2334 = vmul.f32 %v2083, 0.5
        %v2335 = vmul.f32 %v2163, 0.5
        %v2336 = vmul.f32 %v2165, 0.5
        %v2337 = vmul.f32 %v2245, 0.5
        %v2338 = vmul.f32 %v2247, 0.5
        %v2339 = vmul.f32 %v2327, 0.5
        %v2340 = vmul.f32 %v2329, 0.5
        %v2341 = vmul.f32 %v2081, 0.70710677
        %v2342 = vmul.f32 %v2083, 0.70710677
        %v2343 = vmul.f32 %v2163, 0.70710677
        %v2344 = vmul.f32 %v2165, 0.70710677
        %v2345 = vmul.f32 %v2245, 0.70710677
        %v2346 = vmul.f32 %v2247, 0.70710677
        %v2347 = vmul.f32 %v2327, 0.70710677
        %v2348 = vmul.f32 %v2329, 0.70710677
        %v2349 = verf.f32.pop %v2341
        %v2350 = verf.f32.pop %v2342
        %v2351 = verf.f32.pop %v2343
        %v2352 = verf.f32.pop %v2344
        %v2353 = verf.f32.pop %v2345
        %v2354 = verf.f32.pop %v2346
        %v2355 = verf.f32.pop %v2347
        %v2356 = verf.f32.pop %v2348
        %v2357 = vadd.f32 %v2349, 1.0
        %v2358 = vadd.f32 %v2350, 1.0
        %v2359 = vadd.f32 %v2351, 1.0
        %v2360 = vadd.f32 %v2352, 1.0
        %v2361 = vadd.f32 %v2353, 1.0
        %v2362 = vadd.f32 %v2354, 1.0
        %v2363 = vadd.f32 %v2355, 1.0
        %v2364 = vadd.f32 %v2356, 1.0
        %v2365 = vmul.f32 %v2333, %v2357
        %v2366 = vmul.f32 %v2334, %v2358
        %v2367 = vmul.f32 %v2335, %v2359
        %v2368 = vmul.f32 %v2336, %v2360
        %v2369 = vmul.f32 %v2337, %v2361
        %v2370 = vmul.f32 %v2338, %v2362
        %v2371 = vmul.f32 %v2339, %v2363
        %v2372 = vmul.f32 %v2340, %v2364
        %v2373 = vpack.c.bf16 %v2365, %v2365
        %v2374 = vpack.c.bf16 %v2366, %v2366
        %v2375 = vpack.c.bf16 %v2367, %v2367
        %v2376 = vpack.c.bf16 %v2368, %v2368
        %v2377 = vpack.c.bf16 %v2369, %v2369
        %v2378 = vpack.c.bf16 %v2370, %v2370
        %v2379 = vpack.c.bf16 %v2371, %v2371
        %v2380 = vpack.c.bf16 %v2372, %v2372
        %v2381 = vld [vmem:[%s344] sm:$0xff]
        %v2382 = vld [vmem:[%s344 + $0x8] sm:$0xff]
        %v2383 = vld [vmem:[%s344 + $0x10] sm:$0xff]
        %v2384 = vld [vmem:[%s344 + $0x18] sm:$0xff]
        %v2385 = vld [vmem:[%s344 + $0x20] sm:$0xff]
        %v2386 = vld [vmem:[%s344 + $0x28] sm:$0xff]
        %v2387 = vld [vmem:[%s344 + $0x30] sm:$0xff]
        %v2388 = vld [vmem:[%s344 + $0x38] sm:$0xff]
        %v2389 = vld [vmem:[%s344 + $0x40] sm:$0xff]
        %v2390 = vld [vmem:[%s344 + $0x48] sm:$0xff]
        %v2391 = vld [vmem:[%s344 + $0x50] sm:$0xff]
        %v2392 = vld [vmem:[%s344 + $0x58] sm:$0xff]
        %v2393 = vld [vmem:[%s344 + $0x60] sm:$0xff]
        %v2394 = vld [vmem:[%s344 + $0x68] sm:$0xff]
        %v2395 = vld [vmem:[%s344 + $0x70] sm:$0xff]
        %v2396 = vld [vmem:[%s344 + $0x78] sm:$0xff]
        %v2397 = vld [vmem:[%s344 + $0x80] sm:$0xff]
        %v2398 = vld [vmem:[%s344 + $0x88] sm:$0xff]
        %v2399 = vld [vmem:[%s344 + $0x90] sm:$0xff]
        %v2400 = vld [vmem:[%s344 + $0x98] sm:$0xff]
        %v2401 = vld [vmem:[%s344 + $0xa0] sm:$0xff]
        %v2402 = vld [vmem:[%s344 + $0xa8] sm:$0xff]
        %v2403 = vld [vmem:[%s344 + $0xb0] sm:$0xff]
        %v2404 = vld [vmem:[%s344 + $0xb8] sm:$0xff]
        %v2405 = vld [vmem:[%s344 + $0xc0] sm:$0xff]
        %v2406 = vld [vmem:[%s344 + $0xc8] sm:$0xff]
        %v2407 = vld [vmem:[%s344 + $0xd0] sm:$0xff]
        %v2408 = vld [vmem:[%s344 + $0xd8] sm:$0xff]
        %v2409 = vld [vmem:[%s344 + $0xe0] sm:$0xff]
        %v2410 = vld [vmem:[%s344 + $0xe8] sm:$0xff]
        %v2411 = vld [vmem:[%s344 + $0xf0] sm:$0xff]
        %v2412 = vld [vmem:[%s344 + $0xf8] sm:$0xff]
        %v2413 = vld [vmem:[%s344 + $0x100] sm:$0xff]
        %v2414 = vld [vmem:[%s344 + $0x108] sm:$0xff]
        %v2415 = vld [vmem:[%s344 + $0x110] sm:$0xff]
        %v2416 = vld [vmem:[%s344 + $0x118] sm:$0xff]
        %v2417 = vld [vmem:[%s344 + $0x120] sm:$0xff]
        %v2418 = vld [vmem:[%s344 + $0x128] sm:$0xff]
        %v2419 = vld [vmem:[%s344 + $0x130] sm:$0xff]
        %v2420 = vld [vmem:[%s344 + $0x138] sm:$0xff]
        %v2421 = vld [vmem:[%s344 + $0x140] sm:$0xff]
        %v2422 = vld [vmem:[%s344 + $0x148] sm:$0xff]
        %v2423 = vld [vmem:[%s344 + $0x150] sm:$0xff]
        %v2424 = vld [vmem:[%s344 + $0x158] sm:$0xff]
        %v2425 = vld [vmem:[%s344 + $0x160] sm:$0xff]
        %v2426 = vld [vmem:[%s344 + $0x168] sm:$0xff]
        %v2427 = vld [vmem:[%s344 + $0x170] sm:$0xff]
        %v2428 = vld [vmem:[%s344 + $0x178] sm:$0xff]
        %v2429 = vld [vmem:[%s344 + $0x180] sm:$0xff]
        %v2430 = vld [vmem:[%s344 + $0x188] sm:$0xff]
        %v2431 = vld [vmem:[%s344 + $0x190] sm:$0xff]
        %v2432 = vld [vmem:[%s344 + $0x198] sm:$0xff]
        %v2433 = vld [vmem:[%s344 + $0x1a0] sm:$0xff]
        %v2434 = vld [vmem:[%s344 + $0x1a8] sm:$0xff]
        %v2435 = vld [vmem:[%s344 + $0x1b0] sm:$0xff]
        %v2436 = vld [vmem:[%s344 + $0x1b8] sm:$0xff]
        %v2437 = vld [vmem:[%s344 + $0x1c0] sm:$0xff]
        %v2438 = vld [vmem:[%s344 + $0x1c8] sm:$0xff]
        %v2439 = vld [vmem:[%s344 + $0x1d0] sm:$0xff]
        %v2440 = vld [vmem:[%s344 + $0x1d8] sm:$0xff]
        %v2441 = vld [vmem:[%s344 + $0x1e0] sm:$0xff]
        %v2442 = vld [vmem:[%s344 + $0x1e8] sm:$0xff]
        %v2443 = vld [vmem:[%s344 + $0x1f0] sm:$0xff]
        %v2444 = vld [vmem:[%s344 + $0x1f8] sm:$0xff]
        %v2445 = vld [vmem:[%s344 + $0x200] sm:$0xff]
        %v2446 = vld [vmem:[%s344 + $0x208] sm:$0xff]
        %v2447 = vld [vmem:[%s344 + $0x210] sm:$0xff]
        %v2448 = vld [vmem:[%s344 + $0x218] sm:$0xff]
        %v2449 = vld [vmem:[%s344 + $0x220] sm:$0xff]
        %v2450 = vld [vmem:[%s344 + $0x228] sm:$0xff]
        %v2451 = vld [vmem:[%s344 + $0x230] sm:$0xff]
        %v2452 = vld [vmem:[%s344 + $0x238] sm:$0xff]
        %v2453 = vld [vmem:[%s344 + $0x240] sm:$0xff]
        %v2454 = vld [vmem:[%s344 + $0x248] sm:$0xff]
        %v2455 = vld [vmem:[%s344 + $0x250] sm:$0xff]
        %v2456 = vld [vmem:[%s344 + $0x258] sm:$0xff]
        %v2457 = vld [vmem:[%s344 + $0x260] sm:$0xff]
        %v2458 = vld [vmem:[%s344 + $0x268] sm:$0xff]
        %v2459 = vld [vmem:[%s344 + $0x270] sm:$0xff]
        %v2460 = vld [vmem:[%s344 + $0x278] sm:$0xff]
        %v2461 = vld [vmem:[%s344 + $0x280] sm:$0xff]
        %v2462 = vld [vmem:[%s344 + $0x288] sm:$0xff]
        %v2463 = vld [vmem:[%s344 + $0x290] sm:$0xff]
        %v2464 = vld [vmem:[%s344 + $0x298] sm:$0xff]
        %v2465 = vld [vmem:[%s344 + $0x2a0] sm:$0xff]
        %v2466 = vld [vmem:[%s344 + $0x2a8] sm:$0xff]
        %v2467 = vld [vmem:[%s344 + $0x2b0] sm:$0xff]
        %v2468 = vld [vmem:[%s344 + $0x2b8] sm:$0xff]
        %v2469 = vld [vmem:[%s344 + $0x2c0] sm:$0xff]
        %v2470 = vld [vmem:[%s344 + $0x2c8] sm:$0xff]
        %v2471 = vld [vmem:[%s344 + $0x2d0] sm:$0xff]
        %v2472 = vld [vmem:[%s344 + $0x2d8] sm:$0xff]
        %v2473 = vld [vmem:[%s344 + $0x2e0] sm:$0xff]
        %v2474 = vld [vmem:[%s344 + $0x2e8] sm:$0xff]
        %v2475 = vld [vmem:[%s344 + $0x2f0] sm:$0xff]
        %v2476 = vld [vmem:[%s344 + $0x2f8] sm:$0xff]
        %v2477 = vld [vmem:[%s344 + $0x300] sm:$0xff]
        %v2478 = vld [vmem:[%s344 + $0x308] sm:$0xff]
        %v2479 = vld [vmem:[%s344 + $0x310] sm:$0xff]
        %v2480 = vld [vmem:[%s344 + $0x318] sm:$0xff]
        %v2481 = vld [vmem:[%s344 + $0x320] sm:$0xff]
        %v2482 = vld [vmem:[%s344 + $0x328] sm:$0xff]
        %v2483 = vld [vmem:[%s344 + $0x330] sm:$0xff]
        %v2484 = vld [vmem:[%s344 + $0x338] sm:$0xff]
        %v2485 = vld [vmem:[%s344 + $0x340] sm:$0xff]
        %v2486 = vld [vmem:[%s344 + $0x348] sm:$0xff]
        %v2487 = vld [vmem:[%s344 + $0x350] sm:$0xff]
        %v2488 = vld [vmem:[%s344 + $0x358] sm:$0xff]
        %v2489 = vld [vmem:[%s344 + $0x360] sm:$0xff]
        %v2490 = vld [vmem:[%s344 + $0x368] sm:$0xff]
        %v2491 = vld [vmem:[%s344 + $0x370] sm:$0xff]
        %v2492 = vld [vmem:[%s344 + $0x378] sm:$0xff]
        %v2493 = vld [vmem:[%s344 + $0x380] sm:$0xff]
        %v2494 = vld [vmem:[%s344 + $0x388] sm:$0xff]
        %v2495 = vld [vmem:[%s344 + $0x390] sm:$0xff]
        %v2496 = vld [vmem:[%s344 + $0x398] sm:$0xff]
        %v2497 = vld [vmem:[%s344 + $0x3a0] sm:$0xff]
        %v2498 = vld [vmem:[%s344 + $0x3a8] sm:$0xff]
        %v2499 = vld [vmem:[%s344 + $0x3b0] sm:$0xff]
        %v2500 = vld [vmem:[%s344 + $0x3b8] sm:$0xff]
        %v2501 = vld [vmem:[%s344 + $0x3c0] sm:$0xff]
        %v2502 = vld [vmem:[%s344 + $0x3c8] sm:$0xff]
        %v2503 = vld [vmem:[%s344 + $0x3d0] sm:$0xff]
        %v2504 = vld [vmem:[%s344 + $0x3d8] sm:$0xff]
        %v2505 = vld [vmem:[%s344 + $0x3e0] sm:$0xff]
        %v2506 = vld [vmem:[%s344 + $0x3e8] sm:$0xff]
        %v2507 = vld [vmem:[%s344 + $0x3f0] sm:$0xff]
        %v2508 = vld [vmem:[%s344 + $0x3f8] sm:$0xff]
        %v2509 = vld [vmem:[%s344 + $0x400] sm:$0xff]
        %v2510 = vld [vmem:[%s344 + $0x408] sm:$0xff]
        %v2511 = vld [vmem:[%s344 + $0x410] sm:$0xff]
        %v2512 = vld [vmem:[%s344 + $0x418] sm:$0xff]
        %v2513 = vld [vmem:[%s344 + $0x420] sm:$0xff]
        %v2514 = vld [vmem:[%s344 + $0x428] sm:$0xff]
        %v2515 = vld [vmem:[%s344 + $0x430] sm:$0xff]
        %v2516 = vld [vmem:[%s344 + $0x438] sm:$0xff]
        %v2517 = vld [vmem:[%s344 + $0x440] sm:$0xff]
        %v2518 = vld [vmem:[%s344 + $0x448] sm:$0xff]
        %v2519 = vld [vmem:[%s344 + $0x450] sm:$0xff]
        %v2520 = vld [vmem:[%s344 + $0x458] sm:$0xff]
        %v2521 = vld [vmem:[%s344 + $0x460] sm:$0xff]
        %v2522 = vld [vmem:[%s344 + $0x468] sm:$0xff]
        %v2523 = vld [vmem:[%s344 + $0x470] sm:$0xff]
        %v2524 = vld [vmem:[%s344 + $0x478] sm:$0xff]
        %v2525 = vld [vmem:[%s344 + $0x480] sm:$0xff]
        %v2526 = vld [vmem:[%s344 + $0x488] sm:$0xff]
        %v2527 = vld [vmem:[%s344 + $0x490] sm:$0xff]
        %v2528 = vld [vmem:[%s344 + $0x498] sm:$0xff]
        %v2529 = vld [vmem:[%s344 + $0x4a0] sm:$0xff]
        %v2530 = vld [vmem:[%s344 + $0x4a8] sm:$0xff]
        %v2531 = vld [vmem:[%s344 + $0x4b0] sm:$0xff]
        %v2532 = vld [vmem:[%s344 + $0x4b8] sm:$0xff]
        %v2533 = vld [vmem:[%s344 + $0x4c0] sm:$0xff]
        %v2534 = vld [vmem:[%s344 + $0x4c8] sm:$0xff]
        %v2535 = vld [vmem:[%s344 + $0x4d0] sm:$0xff]
        %v2536 = vld [vmem:[%s344 + $0x4d8] sm:$0xff]
        %v2537 = vld [vmem:[%s344 + $0x4e0] sm:$0xff]
        %v2538 = vld [vmem:[%s344 + $0x4e8] sm:$0xff]
        %v2539 = vld [vmem:[%s344 + $0x4f0] sm:$0xff]
        %v2540 = vld [vmem:[%s344 + $0x4f8] sm:$0xff]
        %v2541 = vld [vmem:[%s344 + $0x500] sm:$0xff]
        %v2542 = vld [vmem:[%s344 + $0x508] sm:$0xff]
        %v2543 = vld [vmem:[%s344 + $0x510] sm:$0xff]
        %v2544 = vld [vmem:[%s344 + $0x518] sm:$0xff]
        %v2545 = vld [vmem:[%s344 + $0x520] sm:$0xff]
        %v2546 = vld [vmem:[%s344 + $0x528] sm:$0xff]
        %v2547 = vld [vmem:[%s344 + $0x530] sm:$0xff]
        %v2548 = vld [vmem:[%s344 + $0x538] sm:$0xff]
        %v2549 = vld [vmem:[%s344 + $0x540] sm:$0xff]
        %v2550 = vld [vmem:[%s344 + $0x548] sm:$0xff]
        %v2551 = vld [vmem:[%s344 + $0x550] sm:$0xff]
        %v2552 = vld [vmem:[%s344 + $0x558] sm:$0xff]
        %v2553 = vld [vmem:[%s344 + $0x560] sm:$0xff]
        %v2554 = vld [vmem:[%s344 + $0x568] sm:$0xff]
        %v2555 = vld [vmem:[%s344 + $0x570] sm:$0xff]
        %v2556 = vld [vmem:[%s344 + $0x578] sm:$0xff]
        %v2557 = vld [vmem:[%s344 + $0x580] sm:$0xff]
        %v2558 = vld [vmem:[%s344 + $0x588] sm:$0xff]
        %v2559 = vld [vmem:[%s344 + $0x590] sm:$0xff]
        %v2560 = vld [vmem:[%s344 + $0x598] sm:$0xff]
        %v2561 = vld [vmem:[%s344 + $0x5a0] sm:$0xff]
        %v2562 = vld [vmem:[%s344 + $0x5a8] sm:$0xff]
        %v2563 = vld [vmem:[%s344 + $0x5b0] sm:$0xff]
        %v2564 = vld [vmem:[%s344 + $0x5b8] sm:$0xff]
        %v2565 = vld [vmem:[%s344 + $0x5c0] sm:$0xff]
        %v2566 = vld [vmem:[%s344 + $0x5c8] sm:$0xff]
        %v2567 = vld [vmem:[%s344 + $0x5d0] sm:$0xff]
        %v2568 = vld [vmem:[%s344 + $0x5d8] sm:$0xff]
        %v2569 = vld [vmem:[%s344 + $0x5e0] sm:$0xff]
        %v2570 = vld [vmem:[%s344 + $0x5e8] sm:$0xff]
        %v2571 = vld [vmem:[%s344 + $0x5f0] sm:$0xff]
        %v2572 = vld [vmem:[%s344 + $0x5f8] sm:$0xff]
        %v2573 = vld [vmem:[%s344 + $0x600] sm:$0xff]
        %v2574 = vld [vmem:[%s344 + $0x608] sm:$0xff]
        %v2575 = vld [vmem:[%s344 + $0x610] sm:$0xff]
        %v2576 = vld [vmem:[%s344 + $0x618] sm:$0xff]
        %v2577 = vld [vmem:[%s344 + $0x620] sm:$0xff]
        %v2578 = vld [vmem:[%s344 + $0x628] sm:$0xff]
        %v2579 = vld [vmem:[%s344 + $0x630] sm:$0xff]
        %v2580 = vld [vmem:[%s344 + $0x638] sm:$0xff]
        %v2581 = vld [vmem:[%s344 + $0x640] sm:$0xff]
        %v2582 = vld [vmem:[%s344 + $0x648] sm:$0xff]
        %v2583 = vld [vmem:[%s344 + $0x650] sm:$0xff]
        %v2584 = vld [vmem:[%s344 + $0x658] sm:$0xff]
        %v2585 = vld [vmem:[%s344 + $0x660] sm:$0xff]
        %v2586 = vld [vmem:[%s344 + $0x668] sm:$0xff]
        %v2587 = vld [vmem:[%s344 + $0x670] sm:$0xff]
        %v2588 = vld [vmem:[%s344 + $0x678] sm:$0xff]
        %v2589 = vld [vmem:[%s344 + $0x680] sm:$0xff]
        %v2590 = vld [vmem:[%s344 + $0x688] sm:$0xff]
        %v2591 = vld [vmem:[%s344 + $0x690] sm:$0xff]
        %v2592 = vld [vmem:[%s344 + $0x698] sm:$0xff]
        %v2593 = vld [vmem:[%s344 + $0x6a0] sm:$0xff]
        %v2594 = vld [vmem:[%s344 + $0x6a8] sm:$0xff]
        %v2595 = vld [vmem:[%s344 + $0x6b0] sm:$0xff]
        %v2596 = vld [vmem:[%s344 + $0x6b8] sm:$0xff]
        %v2597 = vld [vmem:[%s344 + $0x6c0] sm:$0xff]
        %v2598 = vld [vmem:[%s344 + $0x6c8] sm:$0xff]
        %v2599 = vld [vmem:[%s344 + $0x6d0] sm:$0xff]
        %v2600 = vld [vmem:[%s344 + $0x6d8] sm:$0xff]
        %v2601 = vld [vmem:[%s344 + $0x6e0] sm:$0xff]
        %v2602 = vld [vmem:[%s344 + $0x6e8] sm:$0xff]
        %v2603 = vld [vmem:[%s344 + $0x6f0] sm:$0xff]
        %v2604 = vld [vmem:[%s344 + $0x6f8] sm:$0xff]
        %v2605 = vld [vmem:[%s344 + $0x700] sm:$0xff]
        %v2606 = vld [vmem:[%s344 + $0x708] sm:$0xff]
        %v2607 = vld [vmem:[%s344 + $0x710] sm:$0xff]
        %v2608 = vld [vmem:[%s344 + $0x718] sm:$0xff]
        %v2609 = vld [vmem:[%s344 + $0x720] sm:$0xff]
        %v2610 = vld [vmem:[%s344 + $0x728] sm:$0xff]
        %v2611 = vld [vmem:[%s344 + $0x730] sm:$0xff]
        %v2612 = vld [vmem:[%s344 + $0x738] sm:$0xff]
        %v2613 = vld [vmem:[%s344 + $0x740] sm:$0xff]
        %v2614 = vld [vmem:[%s344 + $0x748] sm:$0xff]
        %v2615 = vld [vmem:[%s344 + $0x750] sm:$0xff]
        %v2616 = vld [vmem:[%s344 + $0x758] sm:$0xff]
        %v2617 = vld [vmem:[%s344 + $0x760] sm:$0xff]
        %v2618 = vld [vmem:[%s344 + $0x768] sm:$0xff]
        %v2619 = vld [vmem:[%s344 + $0x770] sm:$0xff]
        %v2620 = vld [vmem:[%s344 + $0x778] sm:$0xff]
        %v2621 = vld [vmem:[%s344 + $0x780] sm:$0xff]
        %v2622 = vld [vmem:[%s344 + $0x788] sm:$0xff]
        %v2623 = vld [vmem:[%s344 + $0x790] sm:$0xff]
        %v2624 = vld [vmem:[%s344 + $0x798] sm:$0xff]
        %v2625 = vld [vmem:[%s344 + $0x7a0] sm:$0xff]
        %v2626 = vld [vmem:[%s344 + $0x7a8] sm:$0xff]
        %v2627 = vld [vmem:[%s344 + $0x7b0] sm:$0xff]
        %v2628 = vld [vmem:[%s344 + $0x7b8] sm:$0xff]
        %v2629 = vld [vmem:[%s344 + $0x7c0] sm:$0xff]
        %v2630 = vld [vmem:[%s344 + $0x7c8] sm:$0xff]
        %v2631 = vld [vmem:[%s344 + $0x7d0] sm:$0xff]
        %v2632 = vld [vmem:[%s344 + $0x7d8] sm:$0xff]
        %v2633 = vld [vmem:[%s344 + $0x7e0] sm:$0xff]
        %v2634 = vld [vmem:[%s344 + $0x7e8] sm:$0xff]
        %v2635 = vld [vmem:[%s344 + $0x7f0] sm:$0xff]
        %v2636 = vld [vmem:[%s344 + $0x7f8] sm:$0xff]
        %v2637 = vld [vmem:[%s344 + $0x800] sm:$0xff]
        %v2638 = vld [vmem:[%s344 + $0x808] sm:$0xff]
        %v2639 = vld [vmem:[%s344 + $0x810] sm:$0xff]
        %v2640 = vld [vmem:[%s344 + $0x818] sm:$0xff]
        %v2641 = vld [vmem:[%s344 + $0x820] sm:$0xff]
        %v2642 = vld [vmem:[%s344 + $0x828] sm:$0xff]
        %v2643 = vld [vmem:[%s344 + $0x830] sm:$0xff]
        %v2644 = vld [vmem:[%s344 + $0x838] sm:$0xff]
        %v2645 = vld [vmem:[%s344 + $0x840] sm:$0xff]
        %v2646 = vld [vmem:[%s344 + $0x848] sm:$0xff]
        %v2647 = vld [vmem:[%s344 + $0x850] sm:$0xff]
        %v2648 = vld [vmem:[%s344 + $0x858] sm:$0xff]
        %v2649 = vld [vmem:[%s344 + $0x860] sm:$0xff]
        %v2650 = vld [vmem:[%s344 + $0x868] sm:$0xff]
        %v2651 = vld [vmem:[%s344 + $0x870] sm:$0xff]
        %v2652 = vld [vmem:[%s344 + $0x878] sm:$0xff]
        %v2653 = vld [vmem:[%s344 + $0x880] sm:$0xff]
        %v2654 = vld [vmem:[%s344 + $0x888] sm:$0xff]
        %v2655 = vld [vmem:[%s344 + $0x890] sm:$0xff]
        %v2656 = vld [vmem:[%s344 + $0x898] sm:$0xff]
        %v2657 = vld [vmem:[%s344 + $0x8a0] sm:$0xff]
        %v2658 = vld [vmem:[%s344 + $0x8a8] sm:$0xff]
        %v2659 = vld [vmem:[%s344 + $0x8b0] sm:$0xff]
        %v2660 = vld [vmem:[%s344 + $0x8b8] sm:$0xff]
        %v2661 = vld [vmem:[%s344 + $0x8c0] sm:$0xff]
        %v2662 = vld [vmem:[%s344 + $0x8c8] sm:$0xff]
        %v2663 = vld [vmem:[%s344 + $0x8d0] sm:$0xff]
        %v2664 = vld [vmem:[%s344 + $0x8d8] sm:$0xff]
        %v2665 = vld [vmem:[%s344 + $0x8e0] sm:$0xff]
        %v2666 = vld [vmem:[%s344 + $0x8e8] sm:$0xff]
        %v2667 = vld [vmem:[%s344 + $0x8f0] sm:$0xff]
        %v2668 = vld [vmem:[%s344 + $0x8f8] sm:$0xff]
        %v2669 = vld [vmem:[%s344 + $0x900] sm:$0xff]
        %v2670 = vld [vmem:[%s344 + $0x908] sm:$0xff]
        %v2671 = vld [vmem:[%s344 + $0x910] sm:$0xff]
        %v2672 = vld [vmem:[%s344 + $0x918] sm:$0xff]
        %v2673 = vld [vmem:[%s344 + $0x920] sm:$0xff]
        %v2674 = vld [vmem:[%s344 + $0x928] sm:$0xff]
        %v2675 = vld [vmem:[%s344 + $0x930] sm:$0xff]
        %v2676 = vld [vmem:[%s344 + $0x938] sm:$0xff]
        %v2677 = vld [vmem:[%s344 + $0x940] sm:$0xff]
        %v2678 = vld [vmem:[%s344 + $0x948] sm:$0xff]
        %v2679 = vld [vmem:[%s344 + $0x950] sm:$0xff]
        %v2680 = vld [vmem:[%s344 + $0x958] sm:$0xff]
        %v2681 = vld [vmem:[%s344 + $0x960] sm:$0xff]
        %v2682 = vld [vmem:[%s344 + $0x968] sm:$0xff]
        %v2683 = vld [vmem:[%s344 + $0x970] sm:$0xff]
        %v2684 = vld [vmem:[%s344 + $0x978] sm:$0xff]
        %v2685 = vld [vmem:[%s344 + $0x980] sm:$0xff]
        %v2686 = vld [vmem:[%s344 + $0x988] sm:$0xff]
        %v2687 = vld [vmem:[%s344 + $0x990] sm:$0xff]
        %v2688 = vld [vmem:[%s344 + $0x998] sm:$0xff]
        %v2689 = vld [vmem:[%s344 + $0x9a0] sm:$0xff]
        %v2690 = vld [vmem:[%s344 + $0x9a8] sm:$0xff]
        %v2691 = vld [vmem:[%s344 + $0x9b0] sm:$0xff]
        %v2692 = vld [vmem:[%s344 + $0x9b8] sm:$0xff]
        %v2693 = vld [vmem:[%s344 + $0x9c0] sm:$0xff]
        %v2694 = vld [vmem:[%s344 + $0x9c8] sm:$0xff]
        %v2695 = vld [vmem:[%s344 + $0x9d0] sm:$0xff]
        %v2696 = vld [vmem:[%s344 + $0x9d8] sm:$0xff]
        %v2697 = vld [vmem:[%s344 + $0x9e0] sm:$0xff]
        %v2698 = vld [vmem:[%s344 + $0x9e8] sm:$0xff]
        %v2699 = vld [vmem:[%s344 + $0x9f0] sm:$0xff]
        %v2700 = vld [vmem:[%s344 + $0x9f8] sm:$0xff]
        %v2701 = vld [vmem:[%s344 + $0xa00] sm:$0xff]
        %v2702 = vld [vmem:[%s344 + $0xa08] sm:$0xff]
        %v2703 = vld [vmem:[%s344 + $0xa10] sm:$0xff]
        %v2704 = vld [vmem:[%s344 + $0xa18] sm:$0xff]
        %v2705 = vld [vmem:[%s344 + $0xa20] sm:$0xff]
        %v2706 = vld [vmem:[%s344 + $0xa28] sm:$0xff]
        %v2707 = vld [vmem:[%s344 + $0xa30] sm:$0xff]
        %v2708 = vld [vmem:[%s344 + $0xa38] sm:$0xff]
        %v2709 = vld [vmem:[%s344 + $0xa40] sm:$0xff]
        %v2710 = vld [vmem:[%s344 + $0xa48] sm:$0xff]
        %v2711 = vld [vmem:[%s344 + $0xa50] sm:$0xff]
        %v2712 = vld [vmem:[%s344 + $0xa58] sm:$0xff]
        %v2713 = vld [vmem:[%s344 + $0xa60] sm:$0xff]
        %v2714 = vld [vmem:[%s344 + $0xa68] sm:$0xff]
        %v2715 = vld [vmem:[%s344 + $0xa70] sm:$0xff]
        %v2716 = vld [vmem:[%s344 + $0xa78] sm:$0xff]
        %v2717 = vld [vmem:[%s344 + $0xa80] sm:$0xff]
        %v2718 = vld [vmem:[%s344 + $0xa88] sm:$0xff]
        %v2719 = vld [vmem:[%s344 + $0xa90] sm:$0xff]
        %v2720 = vld [vmem:[%s344 + $0xa98] sm:$0xff]
        %v2721 = vld [vmem:[%s344 + $0xaa0] sm:$0xff]
        %v2722 = vld [vmem:[%s344 + $0xaa8] sm:$0xff]
        %v2723 = vld [vmem:[%s344 + $0xab0] sm:$0xff]
        %v2724 = vld [vmem:[%s344 + $0xab8] sm:$0xff]
        %v2725 = vld [vmem:[%s344 + $0xac0] sm:$0xff]
        %v2726 = vld [vmem:[%s344 + $0xac8] sm:$0xff]
        %v2727 = vld [vmem:[%s344 + $0xad0] sm:$0xff]
        %v2728 = vld [vmem:[%s344 + $0xad8] sm:$0xff]
        %v2729 = vld [vmem:[%s344 + $0xae0] sm:$0xff]
        %v2730 = vld [vmem:[%s344 + $0xae8] sm:$0xff]
        %v2731 = vld [vmem:[%s344 + $0xaf0] sm:$0xff]
        %v2732 = vld [vmem:[%s344 + $0xaf8] sm:$0xff]
        %v2733 = vld [vmem:[%s344 + $0xb00] sm:$0xff]
        %v2734 = vld [vmem:[%s344 + $0xb08] sm:$0xff]
        %v2735 = vld [vmem:[%s344 + $0xb10] sm:$0xff]
        %v2736 = vld [vmem:[%s344 + $0xb18] sm:$0xff]
        %v2737 = vld [vmem:[%s344 + $0xb20] sm:$0xff]
        %v2738 = vld [vmem:[%s344 + $0xb28] sm:$0xff]
        %v2739 = vld [vmem:[%s344 + $0xb30] sm:$0xff]
        %v2740 = vld [vmem:[%s344 + $0xb38] sm:$0xff]
        %v2741 = vld [vmem:[%s344 + $0xb40] sm:$0xff]
        %v2742 = vld [vmem:[%s344 + $0xb48] sm:$0xff]
        %v2743 = vld [vmem:[%s344 + $0xb50] sm:$0xff]
        %v2744 = vld [vmem:[%s344 + $0xb58] sm:$0xff]
        %v2745 = vld [vmem:[%s344 + $0xb60] sm:$0xff]
        %v2746 = vld [vmem:[%s344 + $0xb68] sm:$0xff]
        %v2747 = vld [vmem:[%s344 + $0xb70] sm:$0xff]
        %v2748 = vld [vmem:[%s344 + $0xb78] sm:$0xff]
        %v2749 = vld [vmem:[%s344 + $0xb80] sm:$0xff]
        %v2750 = vld [vmem:[%s344 + $0xb88] sm:$0xff]
        %v2751 = vld [vmem:[%s344 + $0xb90] sm:$0xff]
        %v2752 = vld [vmem:[%s344 + $0xb98] sm:$0xff]
        %v2753 = vld [vmem:[%s344 + $0xba0] sm:$0xff]
        %v2754 = vld [vmem:[%s344 + $0xba8] sm:$0xff]
        %v2755 = vld [vmem:[%s344 + $0xbb0] sm:$0xff]
        %v2756 = vld [vmem:[%s344 + $0xbb8] sm:$0xff]
        %v2757 = vld [vmem:[%s344 + $0xbc0] sm:$0xff]
        %v2758 = vld [vmem:[%s344 + $0xbc8] sm:$0xff]
        %v2759 = vld [vmem:[%s344 + $0xbd0] sm:$0xff]
        %v2760 = vld [vmem:[%s344 + $0xbd8] sm:$0xff]
        %v2761 = vld [vmem:[%s344 + $0xbe0] sm:$0xff]
        %v2762 = vld [vmem:[%s344 + $0xbe8] sm:$0xff]
        %v2763 = vld [vmem:[%s344 + $0xbf0] sm:$0xff]
        %v2764 = vld [vmem:[%s344 + $0xbf8] sm:$0xff]
        %v2765 = vld [vmem:[%s344 + $0xc00] sm:$0xff]
        %v2766 = vld [vmem:[%s344 + $0xc08] sm:$0xff]
        %v2767 = vld [vmem:[%s344 + $0xc10] sm:$0xff]
        %v2768 = vld [vmem:[%s344 + $0xc18] sm:$0xff]
        %v2769 = vld [vmem:[%s344 + $0xc20] sm:$0xff]
        %v2770 = vld [vmem:[%s344 + $0xc28] sm:$0xff]
        %v2771 = vld [vmem:[%s344 + $0xc30] sm:$0xff]
        %v2772 = vld [vmem:[%s344 + $0xc38] sm:$0xff]
        %v2773 = vld [vmem:[%s344 + $0xc40] sm:$0xff]
        %v2774 = vld [vmem:[%s344 + $0xc48] sm:$0xff]
        %v2775 = vld [vmem:[%s344 + $0xc50] sm:$0xff]
        %v2776 = vld [vmem:[%s344 + $0xc58] sm:$0xff]
        %v2777 = vld [vmem:[%s344 + $0xc60] sm:$0xff]
        %v2778 = vld [vmem:[%s344 + $0xc68] sm:$0xff]
        %v2779 = vld [vmem:[%s344 + $0xc70] sm:$0xff]
        %v2780 = vld [vmem:[%s344 + $0xc78] sm:$0xff]
        %v2781 = vld [vmem:[%s344 + $0xc80] sm:$0xff]
        %v2782 = vld [vmem:[%s344 + $0xc88] sm:$0xff]
        %v2783 = vld [vmem:[%s344 + $0xc90] sm:$0xff]
        %v2784 = vld [vmem:[%s344 + $0xc98] sm:$0xff]
        %v2785 = vld [vmem:[%s344 + $0xca0] sm:$0xff]
        %v2786 = vld [vmem:[%s344 + $0xca8] sm:$0xff]
        %v2787 = vld [vmem:[%s344 + $0xcb0] sm:$0xff]
        %v2788 = vld [vmem:[%s344 + $0xcb8] sm:$0xff]
        %v2789 = vld [vmem:[%s344 + $0xcc0] sm:$0xff]
        %v2790 = vld [vmem:[%s344 + $0xcc8] sm:$0xff]
        %v2791 = vld [vmem:[%s344 + $0xcd0] sm:$0xff]
        %v2792 = vld [vmem:[%s344 + $0xcd8] sm:$0xff]
        %v2793 = vld [vmem:[%s344 + $0xce0] sm:$0xff]
        %v2794 = vld [vmem:[%s344 + $0xce8] sm:$0xff]
        %v2795 = vld [vmem:[%s344 + $0xcf0] sm:$0xff]
        %v2796 = vld [vmem:[%s344 + $0xcf8] sm:$0xff]
        %v2797 = vld [vmem:[%s344 + $0xd00] sm:$0xff]
        %v2798 = vld [vmem:[%s344 + $0xd08] sm:$0xff]
        %v2799 = vld [vmem:[%s344 + $0xd10] sm:$0xff]
        %v2800 = vld [vmem:[%s344 + $0xd18] sm:$0xff]
        %v2801 = vld [vmem:[%s344 + $0xd20] sm:$0xff]
        %v2802 = vld [vmem:[%s344 + $0xd28] sm:$0xff]
        %v2803 = vld [vmem:[%s344 + $0xd30] sm:$0xff]
        %v2804 = vld [vmem:[%s344 + $0xd38] sm:$0xff]
        %v2805 = vld [vmem:[%s344 + $0xd40] sm:$0xff]
        %v2806 = vld [vmem:[%s344 + $0xd48] sm:$0xff]
        %v2807 = vld [vmem:[%s344 + $0xd50] sm:$0xff]
        %v2808 = vld [vmem:[%s344 + $0xd58] sm:$0xff]
        %v2809 = vld [vmem:[%s344 + $0xd60] sm:$0xff]
        %v2810 = vld [vmem:[%s344 + $0xd68] sm:$0xff]
        %v2811 = vld [vmem:[%s344 + $0xd70] sm:$0xff]
        %v2812 = vld [vmem:[%s344 + $0xd78] sm:$0xff]
        %v2813 = vld [vmem:[%s344 + $0xd80] sm:$0xff]
        %v2814 = vld [vmem:[%s344 + $0xd88] sm:$0xff]
        %v2815 = vld [vmem:[%s344 + $0xd90] sm:$0xff]
        %v2816 = vld [vmem:[%s344 + $0xd98] sm:$0xff]
        %v2817 = vld [vmem:[%s344 + $0xda0] sm:$0xff]
        %v2818 = vld [vmem:[%s344 + $0xda8] sm:$0xff]
        %v2819 = vld [vmem:[%s344 + $0xdb0] sm:$0xff]
        %v2820 = vld [vmem:[%s344 + $0xdb8] sm:$0xff]
        %v2821 = vld [vmem:[%s344 + $0xdc0] sm:$0xff]
        %v2822 = vld [vmem:[%s344 + $0xdc8] sm:$0xff]
        %v2823 = vld [vmem:[%s344 + $0xdd0] sm:$0xff]
        %v2824 = vld [vmem:[%s344 + $0xdd8] sm:$0xff]
        %v2825 = vld [vmem:[%s344 + $0xde0] sm:$0xff]
        %v2826 = vld [vmem:[%s344 + $0xde8] sm:$0xff]
        %v2827 = vld [vmem:[%s344 + $0xdf0] sm:$0xff]
        %v2828 = vld [vmem:[%s344 + $0xdf8] sm:$0xff]
        %v2829 = vld [vmem:[%s344 + $0xe00] sm:$0xff]
        %v2830 = vld [vmem:[%s344 + $0xe08] sm:$0xff]
        %v2831 = vld [vmem:[%s344 + $0xe10] sm:$0xff]
        %v2832 = vld [vmem:[%s344 + $0xe18] sm:$0xff]
        %v2833 = vld [vmem:[%s344 + $0xe20] sm:$0xff]
        %v2834 = vld [vmem:[%s344 + $0xe28] sm:$0xff]
        %v2835 = vld [vmem:[%s344 + $0xe30] sm:$0xff]
        %v2836 = vld [vmem:[%s344 + $0xe38] sm:$0xff]
        %v2837 = vld [vmem:[%s344 + $0xe40] sm:$0xff]
        %v2838 = vld [vmem:[%s344 + $0xe48] sm:$0xff]
        %v2839 = vld [vmem:[%s344 + $0xe50] sm:$0xff]
        %v2840 = vld [vmem:[%s344 + $0xe58] sm:$0xff]
        %v2841 = vld [vmem:[%s344 + $0xe60] sm:$0xff]
        %v2842 = vld [vmem:[%s344 + $0xe68] sm:$0xff]
        %v2843 = vld [vmem:[%s344 + $0xe70] sm:$0xff]
        %v2844 = vld [vmem:[%s344 + $0xe78] sm:$0xff]
        %v2845 = vld [vmem:[%s344 + $0xe80] sm:$0xff]
        %v2846 = vld [vmem:[%s344 + $0xe88] sm:$0xff]
        %v2847 = vld [vmem:[%s344 + $0xe90] sm:$0xff]
        %v2848 = vld [vmem:[%s344 + $0xe98] sm:$0xff]
        %v2849 = vld [vmem:[%s344 + $0xea0] sm:$0xff]
        %v2850 = vld [vmem:[%s344 + $0xea8] sm:$0xff]
        %v2851 = vld [vmem:[%s344 + $0xeb0] sm:$0xff]
        %v2852 = vld [vmem:[%s344 + $0xeb8] sm:$0xff]
        %v2853 = vld [vmem:[%s344 + $0xec0] sm:$0xff]
        %v2854 = vld [vmem:[%s344 + $0xec8] sm:$0xff]
        %v2855 = vld [vmem:[%s344 + $0xed0] sm:$0xff]
        %v2856 = vld [vmem:[%s344 + $0xed8] sm:$0xff]
        %v2857 = vld [vmem:[%s344 + $0xee0] sm:$0xff]
        %v2858 = vld [vmem:[%s344 + $0xee8] sm:$0xff]
        %v2859 = vld [vmem:[%s344 + $0xef0] sm:$0xff]
        %v2860 = vld [vmem:[%s344 + $0xef8] sm:$0xff]
        %v2861 = vld [vmem:[%s344 + $0xf00] sm:$0xff]
        %v2862 = vld [vmem:[%s344 + $0xf08] sm:$0xff]
        %v2863 = vld [vmem:[%s344 + $0xf10] sm:$0xff]
        %v2864 = vld [vmem:[%s344 + $0xf18] sm:$0xff]
        %v2865 = vld [vmem:[%s344 + $0xf20] sm:$0xff]
        %v2866 = vld [vmem:[%s344 + $0xf28] sm:$0xff]
        %v2867 = vld [vmem:[%s344 + $0xf30] sm:$0xff]
        %v2868 = vld [vmem:[%s344 + $0xf38] sm:$0xff]
        %v2869 = vld [vmem:[%s344 + $0xf40] sm:$0xff]
        %v2870 = vld [vmem:[%s344 + $0xf48] sm:$0xff]
        %v2871 = vld [vmem:[%s344 + $0xf50] sm:$0xff]
        %v2872 = vld [vmem:[%s344 + $0xf58] sm:$0xff]
        %v2873 = vld [vmem:[%s344 + $0xf60] sm:$0xff]
        %v2874 = vld [vmem:[%s344 + $0xf68] sm:$0xff]
        %v2875 = vld [vmem:[%s344 + $0xf70] sm:$0xff]
        %v2876 = vld [vmem:[%s344 + $0xf78] sm:$0xff]
        %v2877 = vld [vmem:[%s344 + $0xf80] sm:$0xff]
        %v2878 = vld [vmem:[%s344 + $0xf88] sm:$0xff]
        %v2879 = vld [vmem:[%s344 + $0xf90] sm:$0xff]
        %v2880 = vld [vmem:[%s344 + $0xf98] sm:$0xff]
        %v2881 = vld [vmem:[%s344 + $0xfa0] sm:$0xff]
        %v2882 = vld [vmem:[%s344 + $0xfa8] sm:$0xff]
        %v2883 = vld [vmem:[%s344 + $0xfb0] sm:$0xff]
        %v2884 = vld [vmem:[%s344 + $0xfb8] sm:$0xff]
        %v2885 = vld [vmem:[%s344 + $0xfc0] sm:$0xff]
        %v2886 = vld [vmem:[%s344 + $0xfc8] sm:$0xff]
        %v2887 = vld [vmem:[%s344 + $0xfd0] sm:$0xff]
        %v2888 = vld [vmem:[%s344 + $0xfd8] sm:$0xff]
        %v2889 = vld [vmem:[%s344 + $0xfe0] sm:$0xff]
        %v2890 = vld [vmem:[%s344 + $0xfe8] sm:$0xff]
        %v2891 = vld [vmem:[%s344 + $0xff0] sm:$0xff]
        %v2892 = vld [vmem:[%s344 + $0xff8] sm:$0xff]
        %v2893 = vld [vmem:[%s344 + $0x1000] sm:$0xff]
        %v2894 = vld [vmem:[%s344 + $0x1008] sm:$0xff]
        %v2895 = vld [vmem:[%s344 + $0x1010] sm:$0xff]
        %v2896 = vld [vmem:[%s344 + $0x1018] sm:$0xff]
        %v2897 = vld [vmem:[%s344 + $0x1020] sm:$0xff]
        %v2898 = vld [vmem:[%s344 + $0x1028] sm:$0xff]
        %v2899 = vld [vmem:[%s344 + $0x1030] sm:$0xff]
        %v2900 = vld [vmem:[%s344 + $0x1038] sm:$0xff]
        %v2901 = vld [vmem:[%s344 + $0x1040] sm:$0xff]
        %v2902 = vld [vmem:[%s344 + $0x1048] sm:$0xff]
        %v2903 = vld [vmem:[%s344 + $0x1050] sm:$0xff]
        %v2904 = vld [vmem:[%s344 + $0x1058] sm:$0xff]
        %v2905 = vld [vmem:[%s344 + $0x1060] sm:$0xff]
        %v2906 = vld [vmem:[%s344 + $0x1068] sm:$0xff]
        %v2907 = vld [vmem:[%s344 + $0x1070] sm:$0xff]
        %v2908 = vld [vmem:[%s344 + $0x1078] sm:$0xff]
        %v2909 = vld [vmem:[%s344 + $0x1080] sm:$0xff]
        %v2910 = vld [vmem:[%s344 + $0x1088] sm:$0xff]
        %v2911 = vld [vmem:[%s344 + $0x1090] sm:$0xff]
        %v2912 = vld [vmem:[%s344 + $0x1098] sm:$0xff]
        %v2913 = vld [vmem:[%s344 + $0x10a0] sm:$0xff]
        %v2914 = vld [vmem:[%s344 + $0x10a8] sm:$0xff]
        %v2915 = vld [vmem:[%s344 + $0x10b0] sm:$0xff]
        %v2916 = vld [vmem:[%s344 + $0x10b8] sm:$0xff]
        %v2917 = vld [vmem:[%s344 + $0x10c0] sm:$0xff]
        %v2918 = vld [vmem:[%s344 + $0x10c8] sm:$0xff]
        %v2919 = vld [vmem:[%s344 + $0x10d0] sm:$0xff]
        %v2920 = vld [vmem:[%s344 + $0x10d8] sm:$0xff]
        %v2921 = vld [vmem:[%s344 + $0x10e0] sm:$0xff]
        %v2922 = vld [vmem:[%s344 + $0x10e8] sm:$0xff]
        %v2923 = vld [vmem:[%s344 + $0x10f0] sm:$0xff]
        %v2924 = vld [vmem:[%s344 + $0x10f8] sm:$0xff]
        %v2925 = vld [vmem:[%s344 + $0x1100] sm:$0xff]
        %v2926 = vld [vmem:[%s344 + $0x1108] sm:$0xff]
        %v2927 = vld [vmem:[%s344 + $0x1110] sm:$0xff]
        %v2928 = vld [vmem:[%s344 + $0x1118] sm:$0xff]
        %v2929 = vld [vmem:[%s344 + $0x1120] sm:$0xff]
        %v2930 = vld [vmem:[%s344 + $0x1128] sm:$0xff]
        %v2931 = vld [vmem:[%s344 + $0x1130] sm:$0xff]
        %v2932 = vld [vmem:[%s344 + $0x1138] sm:$0xff]
        %v2933 = vld [vmem:[%s344 + $0x1140] sm:$0xff]
        %v2934 = vld [vmem:[%s344 + $0x1148] sm:$0xff]
        %v2935 = vld [vmem:[%s344 + $0x1150] sm:$0xff]
        %v2936 = vld [vmem:[%s344 + $0x1158] sm:$0xff]
        %v2937 = vld [vmem:[%s344 + $0x1160] sm:$0xff]
        %v2938 = vld [vmem:[%s344 + $0x1168] sm:$0xff]
        %v2939 = vld [vmem:[%s344 + $0x1170] sm:$0xff]
        %v2940 = vld [vmem:[%s344 + $0x1178] sm:$0xff]
        %v2941 = vld [vmem:[%s344 + $0x1180] sm:$0xff]
        %v2942 = vld [vmem:[%s344 + $0x1188] sm:$0xff]
        %v2943 = vld [vmem:[%s344 + $0x1190] sm:$0xff]
        %v2944 = vld [vmem:[%s344 + $0x1198] sm:$0xff]
        %v2945 = vld [vmem:[%s344 + $0x11a0] sm:$0xff]
        %v2946 = vld [vmem:[%s344 + $0x11a8] sm:$0xff]
        %v2947 = vld [vmem:[%s344 + $0x11b0] sm:$0xff]
        %v2948 = vld [vmem:[%s344 + $0x11b8] sm:$0xff]
        %v2949 = vld [vmem:[%s344 + $0x11c0] sm:$0xff]
        %v2950 = vld [vmem:[%s344 + $0x11c8] sm:$0xff]
        %v2951 = vld [vmem:[%s344 + $0x11d0] sm:$0xff]
        %v2952 = vld [vmem:[%s344 + $0x11d8] sm:$0xff]
        %v2953 = vld [vmem:[%s344 + $0x11e0] sm:$0xff]
        %v2954 = vld [vmem:[%s344 + $0x11e8] sm:$0xff]
        %v2955 = vld [vmem:[%s344 + $0x11f0] sm:$0xff]
        %v2956 = vld [vmem:[%s344 + $0x11f8] sm:$0xff]
        %v2957 = vld [vmem:[%s344 + $0x1200] sm:$0xff]
        %v2958 = vld [vmem:[%s344 + $0x1208] sm:$0xff]
        %v2959 = vld [vmem:[%s344 + $0x1210] sm:$0xff]
        %v2960 = vld [vmem:[%s344 + $0x1218] sm:$0xff]
        %v2961 = vld [vmem:[%s344 + $0x1220] sm:$0xff]
        %v2962 = vld [vmem:[%s344 + $0x1228] sm:$0xff]
        %v2963 = vld [vmem:[%s344 + $0x1230] sm:$0xff]
        %v2964 = vld [vmem:[%s344 + $0x1238] sm:$0xff]
        %v2965 = vld [vmem:[%s344 + $0x1240] sm:$0xff]
        %v2966 = vld [vmem:[%s344 + $0x1248] sm:$0xff]
        %v2967 = vld [vmem:[%s344 + $0x1250] sm:$0xff]
        %v2968 = vld [vmem:[%s344 + $0x1258] sm:$0xff]
        %v2969 = vld [vmem:[%s344 + $0x1260] sm:$0xff]
        %v2970 = vld [vmem:[%s344 + $0x1268] sm:$0xff]
        %v2971 = vld [vmem:[%s344 + $0x1270] sm:$0xff]
        %v2972 = vld [vmem:[%s344 + $0x1278] sm:$0xff]
        %v2973 = vld [vmem:[%s344 + $0x1280] sm:$0xff]
        %v2974 = vld [vmem:[%s344 + $0x1288] sm:$0xff]
        %v2975 = vld [vmem:[%s344 + $0x1290] sm:$0xff]
        %v2976 = vld [vmem:[%s344 + $0x1298] sm:$0xff]
        %v2977 = vld [vmem:[%s344 + $0x12a0] sm:$0xff]
        %v2978 = vld [vmem:[%s344 + $0x12a8] sm:$0xff]
        %v2979 = vld [vmem:[%s344 + $0x12b0] sm:$0xff]
        %v2980 = vld [vmem:[%s344 + $0x12b8] sm:$0xff]
        %v2981 = vld [vmem:[%s344 + $0x12c0] sm:$0xff]
        %v2982 = vld [vmem:[%s344 + $0x12c8] sm:$0xff]
        %v2983 = vld [vmem:[%s344 + $0x12d0] sm:$0xff]
        %v2984 = vld [vmem:[%s344 + $0x12d8] sm:$0xff]
        %v2985 = vld [vmem:[%s344 + $0x12e0] sm:$0xff]
        %v2986 = vld [vmem:[%s344 + $0x12e8] sm:$0xff]
        %v2987 = vld [vmem:[%s344 + $0x12f0] sm:$0xff]
        %v2988 = vld [vmem:[%s344 + $0x12f8] sm:$0xff]
        %v2989 = vld [vmem:[%s344 + $0x1300] sm:$0xff]
        %v2990 = vld [vmem:[%s344 + $0x1308] sm:$0xff]
        %v2991 = vld [vmem:[%s344 + $0x1310] sm:$0xff]
        %v2992 = vld [vmem:[%s344 + $0x1318] sm:$0xff]
        %v2993 = vld [vmem:[%s344 + $0x1320] sm:$0xff]
        %v2994 = vld [vmem:[%s344 + $0x1328] sm:$0xff]
        %v2995 = vld [vmem:[%s344 + $0x1330] sm:$0xff]
        %v2996 = vld [vmem:[%s344 + $0x1338] sm:$0xff]
        %v2997 = vld [vmem:[%s344 + $0x1340] sm:$0xff]
        %v2998 = vld [vmem:[%s344 + $0x1348] sm:$0xff]
        %v2999 = vld [vmem:[%s344 + $0x1350] sm:$0xff]
        %v3000 = vld [vmem:[%s344 + $0x1358] sm:$0xff]
        %v3001 = vld [vmem:[%s344 + $0x1360] sm:$0xff]
        %v3002 = vld [vmem:[%s344 + $0x1368] sm:$0xff]
        %v3003 = vld [vmem:[%s344 + $0x1370] sm:$0xff]
        %v3004 = vld [vmem:[%s344 + $0x1378] sm:$0xff]
        %v3005 = vld [vmem:[%s344 + $0x1380] sm:$0xff]
        %v3006 = vld [vmem:[%s344 + $0x1388] sm:$0xff]
        %v3007 = vld [vmem:[%s344 + $0x1390] sm:$0xff]
        %v3008 = vld [vmem:[%s344 + $0x1398] sm:$0xff]
        %v3009 = vld [vmem:[%s344 + $0x13a0] sm:$0xff]
        %v3010 = vld [vmem:[%s344 + $0x13a8] sm:$0xff]
        %v3011 = vld [vmem:[%s344 + $0x13b0] sm:$0xff]
        %v3012 = vld [vmem:[%s344 + $0x13b8] sm:$0xff]
        %v3013 = vld [vmem:[%s344 + $0x13c0] sm:$0xff]
        %v3014 = vld [vmem:[%s344 + $0x13c8] sm:$0xff]
        %v3015 = vld [vmem:[%s344 + $0x13d0] sm:$0xff]
        %v3016 = vld [vmem:[%s344 + $0x13d8] sm:$0xff]
        %v3017 = vld [vmem:[%s344 + $0x13e0] sm:$0xff]
        %v3018 = vld [vmem:[%s344 + $0x13e8] sm:$0xff]
        %v3019 = vld [vmem:[%s344 + $0x13f0] sm:$0xff]
        %v3020 = vld [vmem:[%s344 + $0x13f8] sm:$0xff]
        %v3021 = vld [vmem:[%s344 + $0x1400] sm:$0xff]
        %v3022 = vld [vmem:[%s344 + $0x1408] sm:$0xff]
        %v3023 = vld [vmem:[%s344 + $0x1410] sm:$0xff]
        %v3024 = vld [vmem:[%s344 + $0x1418] sm:$0xff]
        %v3025 = vld [vmem:[%s344 + $0x1420] sm:$0xff]
        %v3026 = vld [vmem:[%s344 + $0x1428] sm:$0xff]
        %v3027 = vld [vmem:[%s344 + $0x1430] sm:$0xff]
        %v3028 = vld [vmem:[%s344 + $0x1438] sm:$0xff]
        %v3029 = vld [vmem:[%s344 + $0x1440] sm:$0xff]
        %v3030 = vld [vmem:[%s344 + $0x1448] sm:$0xff]
        %v3031 = vld [vmem:[%s344 + $0x1450] sm:$0xff]
        %v3032 = vld [vmem:[%s344 + $0x1458] sm:$0xff]
        %v3033 = vld [vmem:[%s344 + $0x1460] sm:$0xff]
        %v3034 = vld [vmem:[%s344 + $0x1468] sm:$0xff]
        %v3035 = vld [vmem:[%s344 + $0x1470] sm:$0xff]
        %v3036 = vld [vmem:[%s344 + $0x1478] sm:$0xff]
        %v3037 = vld [vmem:[%s344 + $0x1480] sm:$0xff]
        %v3038 = vld [vmem:[%s344 + $0x1488] sm:$0xff]
        %v3039 = vld [vmem:[%s344 + $0x1490] sm:$0xff]
        %v3040 = vld [vmem:[%s344 + $0x1498] sm:$0xff]
        %v3041 = vld [vmem:[%s344 + $0x14a0] sm:$0xff]
        %v3042 = vld [vmem:[%s344 + $0x14a8] sm:$0xff]
        %v3043 = vld [vmem:[%s344 + $0x14b0] sm:$0xff]
        %v3044 = vld [vmem:[%s344 + $0x14b8] sm:$0xff]
        %v3045 = vld [vmem:[%s344 + $0x14c0] sm:$0xff]
        %v3046 = vld [vmem:[%s344 + $0x14c8] sm:$0xff]
        %v3047 = vld [vmem:[%s344 + $0x14d0] sm:$0xff]
        %v3048 = vld [vmem:[%s344 + $0x14d8] sm:$0xff]
        %v3049 = vld [vmem:[%s344 + $0x14e0] sm:$0xff]
        %v3050 = vld [vmem:[%s344 + $0x14e8] sm:$0xff]
        %v3051 = vld [vmem:[%s344 + $0x14f0] sm:$0xff]
        %v3052 = vld [vmem:[%s344 + $0x14f8] sm:$0xff]
        %v3053 = vld [vmem:[%s344 + $0x1500] sm:$0xff]
        %v3054 = vld [vmem:[%s344 + $0x1508] sm:$0xff]
        %v3055 = vld [vmem:[%s344 + $0x1510] sm:$0xff]
        %v3056 = vld [vmem:[%s344 + $0x1518] sm:$0xff]
        %v3057 = vld [vmem:[%s344 + $0x1520] sm:$0xff]
        %v3058 = vld [vmem:[%s344 + $0x1528] sm:$0xff]
        %v3059 = vld [vmem:[%s344 + $0x1530] sm:$0xff]
        %v3060 = vld [vmem:[%s344 + $0x1538] sm:$0xff]
        %v3061 = vld [vmem:[%s344 + $0x1540] sm:$0xff]
        %v3062 = vld [vmem:[%s344 + $0x1548] sm:$0xff]
        %v3063 = vld [vmem:[%s344 + $0x1550] sm:$0xff]
        %v3064 = vld [vmem:[%s344 + $0x1558] sm:$0xff]
        %v3065 = vld [vmem:[%s344 + $0x1560] sm:$0xff]
        %v3066 = vld [vmem:[%s344 + $0x1568] sm:$0xff]
        %v3067 = vld [vmem:[%s344 + $0x1570] sm:$0xff]
        %v3068 = vld [vmem:[%s344 + $0x1578] sm:$0xff]
        %v3069 = vld [vmem:[%s344 + $0x1580] sm:$0xff]
        %v3070 = vld [vmem:[%s344 + $0x1588] sm:$0xff]
        %v3071 = vld [vmem:[%s344 + $0x1590] sm:$0xff]
        %v3072 = vld [vmem:[%s344 + $0x1598] sm:$0xff]
        %v3073 = vld [vmem:[%s344 + $0x15a0] sm:$0xff]
        %v3074 = vld [vmem:[%s344 + $0x15a8] sm:$0xff]
        %v3075 = vld [vmem:[%s344 + $0x15b0] sm:$0xff]
        %v3076 = vld [vmem:[%s344 + $0x15b8] sm:$0xff]
        %v3077 = vld [vmem:[%s344 + $0x15c0] sm:$0xff]
        %v3078 = vld [vmem:[%s344 + $0x15c8] sm:$0xff]
        %v3079 = vld [vmem:[%s344 + $0x15d0] sm:$0xff]
        %v3080 = vld [vmem:[%s344 + $0x15d8] sm:$0xff]
        %v3081 = vld [vmem:[%s344 + $0x15e0] sm:$0xff]
        %v3082 = vld [vmem:[%s344 + $0x15e8] sm:$0xff]
        %v3083 = vld [vmem:[%s344 + $0x15f0] sm:$0xff]
        %v3084 = vld [vmem:[%s344 + $0x15f8] sm:$0xff]
        %v3085 = vld [vmem:[%s344 + $0x1600] sm:$0xff]
        %v3086 = vld [vmem:[%s344 + $0x1608] sm:$0xff]
        %v3087 = vld [vmem:[%s344 + $0x1610] sm:$0xff]
        %v3088 = vld [vmem:[%s344 + $0x1618] sm:$0xff]
        %v3089 = vld [vmem:[%s344 + $0x1620] sm:$0xff]
        %v3090 = vld [vmem:[%s344 + $0x1628] sm:$0xff]
        %v3091 = vld [vmem:[%s344 + $0x1630] sm:$0xff]
        %v3092 = vld [vmem:[%s344 + $0x1638] sm:$0xff]
        %v3093 = vld [vmem:[%s344 + $0x1640] sm:$0xff]
        %v3094 = vld [vmem:[%s344 + $0x1648] sm:$0xff]
        %v3095 = vld [vmem:[%s344 + $0x1650] sm:$0xff]
        %v3096 = vld [vmem:[%s344 + $0x1658] sm:$0xff]
        %v3097 = vld [vmem:[%s344 + $0x1660] sm:$0xff]
        %v3098 = vld [vmem:[%s344 + $0x1668] sm:$0xff]
        %v3099 = vld [vmem:[%s344 + $0x1670] sm:$0xff]
        %v3100 = vld [vmem:[%s344 + $0x1678] sm:$0xff]
        %v3101 = vld [vmem:[%s344 + $0x1680] sm:$0xff]
        %v3102 = vld [vmem:[%s344 + $0x1688] sm:$0xff]
        %v3103 = vld [vmem:[%s344 + $0x1690] sm:$0xff]
        %v3104 = vld [vmem:[%s344 + $0x1698] sm:$0xff]
        %v3105 = vld [vmem:[%s344 + $0x16a0] sm:$0xff]
        %v3106 = vld [vmem:[%s344 + $0x16a8] sm:$0xff]
        %v3107 = vld [vmem:[%s344 + $0x16b0] sm:$0xff]
        %v3108 = vld [vmem:[%s344 + $0x16b8] sm:$0xff]
        %v3109 = vld [vmem:[%s344 + $0x16c0] sm:$0xff]
        %v3110 = vld [vmem:[%s344 + $0x16c8] sm:$0xff]
        %v3111 = vld [vmem:[%s344 + $0x16d0] sm:$0xff]
        %v3112 = vld [vmem:[%s344 + $0x16d8] sm:$0xff]
        %v3113 = vld [vmem:[%s344 + $0x16e0] sm:$0xff]
        %v3114 = vld [vmem:[%s344 + $0x16e8] sm:$0xff]
        %v3115 = vld [vmem:[%s344 + $0x16f0] sm:$0xff]
        %v3116 = vld [vmem:[%s344 + $0x16f8] sm:$0xff]
        %v3117 = vld [vmem:[%s344 + $0x1700] sm:$0xff]
        %v3118 = vld [vmem:[%s344 + $0x1708] sm:$0xff]
        %v3119 = vld [vmem:[%s344 + $0x1710] sm:$0xff]
        %v3120 = vld [vmem:[%s344 + $0x1718] sm:$0xff]
        %v3121 = vld [vmem:[%s344 + $0x1720] sm:$0xff]
        %v3122 = vld [vmem:[%s344 + $0x1728] sm:$0xff]
        %v3123 = vld [vmem:[%s344 + $0x1730] sm:$0xff]
        %v3124 = vld [vmem:[%s344 + $0x1738] sm:$0xff]
        %v3125 = vld [vmem:[%s344 + $0x1740] sm:$0xff]
        %v3126 = vld [vmem:[%s344 + $0x1748] sm:$0xff]
        %v3127 = vld [vmem:[%s344 + $0x1750] sm:$0xff]
        %v3128 = vld [vmem:[%s344 + $0x1758] sm:$0xff]
        %v3129 = vld [vmem:[%s344 + $0x1760] sm:$0xff]
        %v3130 = vld [vmem:[%s344 + $0x1768] sm:$0xff]
        %v3131 = vld [vmem:[%s344 + $0x1770] sm:$0xff]
        %v3132 = vld [vmem:[%s344 + $0x1778] sm:$0xff]
        %v3133 = vld [vmem:[%s344 + $0x1780] sm:$0xff]
        %v3134 = vld [vmem:[%s344 + $0x1788] sm:$0xff]
        %v3135 = vld [vmem:[%s344 + $0x1790] sm:$0xff]
        %v3136 = vld [vmem:[%s344 + $0x1798] sm:$0xff]
        %v3137 = vld [vmem:[%s344 + $0x17a0] sm:$0xff]
        %v3138 = vld [vmem:[%s344 + $0x17a8] sm:$0xff]
        %v3139 = vld [vmem:[%s344 + $0x17b0] sm:$0xff]
        %v3140 = vld [vmem:[%s344 + $0x17b8] sm:$0xff]
        %v3141 = vld [vmem:[%s344 + $0x17c0] sm:$0xff]
        %v3142 = vld [vmem:[%s344 + $0x17c8] sm:$0xff]
        %v3143 = vld [vmem:[%s344 + $0x17d0] sm:$0xff]
        %v3144 = vld [vmem:[%s344 + $0x17d8] sm:$0xff]
        %v3145 = vld [vmem:[%s344 + $0x17e0] sm:$0xff]
        %v3146 = vld [vmem:[%s344 + $0x17e8] sm:$0xff]
        %v3147 = vld [vmem:[%s344 + $0x17f0] sm:$0xff]
        %v3148 = vld [vmem:[%s344 + $0x17f8] sm:$0xff]
        %v3149 = vld [vmem:[%s353] sm:$0xff]
        %v3150 = vld [vmem:[%s353 + $0x8] sm:$0xf]
        %v3153 = vlaneseq
        %v3154 = vshrl.u32 %v3153, 7
        %v3155 = vsub.s32 0, %v3154
        %v3156 = vrot.slane %v3149, %v3155
        %v3157 = vlaneseq
        %v3158 = vshrl.u32 %v3157, 7
        %v3159 = vsub.s32 1, %v3158
        %v3160 = vrot.slane %v3149, %v3159
        %v3161 = vlaneseq
        %v3162 = vshrl.u32 %v3161, 7
        %v3163 = vsub.s32 2, %v3162
        %v3164 = vrot.slane %v3149, %v3163
        %v3165 = vlaneseq
        %v3166 = vshrl.u32 %v3165, 7
        %v3167 = vsub.s32 3, %v3166
        %v3168 = vrot.slane %v3149, %v3167
        %v3169 = vlaneseq
        %v3170 = vshrl.u32 %v3169, 7
        %v3171 = vsub.s32 4, %v3170
        %v3172 = vrot.slane %v3149, %v3171
        %v3173 = vlaneseq
        %v3174 = vshrl.u32 %v3173, 7
        %v3175 = vsub.s32 5, %v3174
        %v3176 = vrot.slane %v3149, %v3175
        %v3177 = vlaneseq
        %v3178 = vshrl.u32 %v3177, 7
        %v3179 = vsub.s32 6, %v3178
        %v3180 = vrot.slane %v3149, %v3179
        %v3181 = vlaneseq
        %v3182 = vshrl.u32 %v3181, 7
        %v3183 = vsub.s32 7, %v3182
        %v3184 = vrot.slane %v3149, %v3183
        %v3185 = vlaneseq
        %v3186 = vshrl.u32 %v3185, 7
        %v3187 = vsub.s32 0, %v3186
        %v3188 = vrot.slane %v3150, %v3187
        %v3189 = vlaneseq
        %v3190 = vshrl.u32 %v3189, 7
        %v3191 = vsub.s32 1, %v3190
        %v3192 = vrot.slane %v3150, %v3191
        %v3193 = vlaneseq
        %v3194 = vshrl.u32 %v3193, 7
        %v3195 = vsub.s32 2, %v3194
        %v3196 = vrot.slane %v3150, %v3195
        %v3197 = vlaneseq
        %v3198 = vshrl.u32 %v3197, 7
        %v3199 = vsub.s32 3, %v3198
        %v3200 = vrot.slane %v3150, %v3199
        %v3981 = vunpack.c.l.b16 %v2381
        %v3982 = vunpack.c.h.b16 %v2381
        %v3983 = vunpack.c.l.b16 %v2382
        %v3984 = vunpack.c.h.b16 %v2382
        %v3985 = vunpack.c.l.b16 %v2383
        %v3986 = vunpack.c.h.b16 %v2383
        %v3987 = vunpack.c.l.b16 %v2384
        %v3988 = vunpack.c.h.b16 %v2384
        %v3989 = vunpack.c.l.b16 %v2385
        %v3990 = vunpack.c.h.b16 %v2385
        %v3991 = vunpack.c.l.b16 %v2386
        %v3992 = vunpack.c.h.b16 %v2386
        %v3993 = vunpack.c.l.b16 %v2387
        %v3994 = vunpack.c.h.b16 %v2387
        %v3995 = vunpack.c.l.b16 %v2388
        %v3996 = vunpack.c.h.b16 %v2388
        %v3997 = vunpack.c.l.b16 %v2389
        %v3998 = vunpack.c.h.b16 %v2389
        %v3999 = vunpack.c.l.b16 %v2390
        %v4000 = vunpack.c.h.b16 %v2390
        %v4001 = vunpack.c.l.b16 %v2391
        %v4002 = vunpack.c.h.b16 %v2391
        %v4003 = vunpack.c.l.b16 %v2392
        %v4004 = vunpack.c.h.b16 %v2392
        %v4005 = vunpack.c.l.b16 %v2393
        %v4006 = vunpack.c.h.b16 %v2393
        %v4007 = vunpack.c.l.b16 %v2394
        %v4008 = vunpack.c.h.b16 %v2394
        %v4009 = vunpack.c.l.b16 %v2395
        %v4010 = vunpack.c.h.b16 %v2395
        %v4011 = vunpack.c.l.b16 %v2396
        %v4012 = vunpack.c.h.b16 %v2396
        %v4013 = vunpack.c.l.b16 %v2397
        %v4014 = vunpack.c.h.b16 %v2397
        %v4015 = vunpack.c.l.b16 %v2398
        %v4016 = vunpack.c.h.b16 %v2398
        %v4017 = vunpack.c.l.b16 %v2399
        %v4018 = vunpack.c.h.b16 %v2399
        %v4019 = vunpack.c.l.b16 %v2400
        %v4020 = vunpack.c.h.b16 %v2400
        %v4021 = vunpack.c.l.b16 %v2401
        %v4022 = vunpack.c.h.b16 %v2401
        %v4023 = vunpack.c.l.b16 %v2402
        %v4024 = vunpack.c.h.b16 %v2402
        %v4025 = vunpack.c.l.b16 %v2403
        %v4026 = vunpack.c.h.b16 %v2403
        %v4027 = vunpack.c.l.b16 %v2404
        %v4028 = vunpack.c.h.b16 %v2404
        %v4029 = vunpack.c.l.b16 %v2405
        %v4030 = vunpack.c.h.b16 %v2405
        %v4031 = vunpack.c.l.b16 %v2406
        %v4032 = vunpack.c.h.b16 %v2406
        %v4033 = vunpack.c.l.b16 %v2407
        %v4034 = vunpack.c.h.b16 %v2407
        %v4035 = vunpack.c.l.b16 %v2408
        %v4036 = vunpack.c.h.b16 %v2408
        %v4037 = vunpack.c.l.b16 %v2409
        %v4038 = vunpack.c.h.b16 %v2409
        %v4039 = vunpack.c.l.b16 %v2410
        %v4040 = vunpack.c.h.b16 %v2410
        %v4041 = vunpack.c.l.b16 %v2411
        %v4042 = vunpack.c.h.b16 %v2411
        %v4043 = vunpack.c.l.b16 %v2412
        %v4044 = vunpack.c.h.b16 %v2412
        %v4045 = vunpack.c.l.b16 %v2413
        %v4046 = vunpack.c.h.b16 %v2413
        %v4047 = vunpack.c.l.b16 %v2414
        %v4048 = vunpack.c.h.b16 %v2414
        %v4049 = vunpack.c.l.b16 %v2415
        %v4050 = vunpack.c.h.b16 %v2415
        %v4051 = vunpack.c.l.b16 %v2416
        %v4052 = vunpack.c.h.b16 %v2416
        %v4053 = vunpack.c.l.b16 %v2417
        %v4054 = vunpack.c.h.b16 %v2417
        %v4055 = vunpack.c.l.b16 %v2418
        %v4056 = vunpack.c.h.b16 %v2418
        %v4057 = vunpack.c.l.b16 %v2419
        %v4058 = vunpack.c.h.b16 %v2419
        %v4059 = vunpack.c.l.b16 %v2420
        %v4060 = vunpack.c.h.b16 %v2420
        %v4061 = vunpack.c.l.b16 %v2421
        %v4062 = vunpack.c.h.b16 %v2421
        %v4063 = vunpack.c.l.b16 %v2422
        %v4064 = vunpack.c.h.b16 %v2422
        %v4065 = vunpack.c.l.b16 %v2423
        %v4066 = vunpack.c.h.b16 %v2423
        %v4067 = vunpack.c.l.b16 %v2424
        %v4068 = vunpack.c.h.b16 %v2424
        %v4069 = vunpack.c.l.b16 %v2425
        %v4070 = vunpack.c.h.b16 %v2425
        %v4071 = vunpack.c.l.b16 %v2426
        %v4072 = vunpack.c.h.b16 %v2426
        %v4073 = vunpack.c.l.b16 %v2427
        %v4074 = vunpack.c.h.b16 %v2427
        %v4075 = vunpack.c.l.b16 %v2428
        %v4076 = vunpack.c.h.b16 %v2428
        %v4077 = vunpack.c.l.b16 %v2429
        %v4078 = vunpack.c.h.b16 %v2429
        %v4079 = vunpack.c.l.b16 %v2430
        %v4080 = vunpack.c.h.b16 %v2430
        %v4081 = vunpack.c.l.b16 %v2431
        %v4082 = vunpack.c.h.b16 %v2431
        %v4083 = vunpack.c.l.b16 %v2432
        %v4084 = vunpack.c.h.b16 %v2432
        %v4085 = vunpack.c.l.b16 %v2433
        %v4086 = vunpack.c.h.b16 %v2433
        %v4087 = vunpack.c.l.b16 %v2434
        %v4088 = vunpack.c.h.b16 %v2434
        %v4089 = vunpack.c.l.b16 %v2435
        %v4090 = vunpack.c.h.b16 %v2435
        %v4091 = vunpack.c.l.b16 %v2436
        %v4092 = vunpack.c.h.b16 %v2436
        %v4093 = vunpack.c.l.b16 %v2437
        %v4094 = vunpack.c.h.b16 %v2437
        %v4095 = vunpack.c.l.b16 %v2438
        %v4096 = vunpack.c.h.b16 %v2438
        %v4097 = vunpack.c.l.b16 %v2439
        %v4098 = vunpack.c.h.b16 %v2439
        %v4099 = vunpack.c.l.b16 %v2440
        %v4100 = vunpack.c.h.b16 %v2440
        %v4101 = vunpack.c.l.b16 %v2441
        %v4102 = vunpack.c.h.b16 %v2441
        %v4103 = vunpack.c.l.b16 %v2442
        %v4104 = vunpack.c.h.b16 %v2442
        %v4105 = vunpack.c.l.b16 %v2443
        %v4106 = vunpack.c.h.b16 %v2443
        %v4107 = vunpack.c.l.b16 %v2444
        %v4108 = vunpack.c.h.b16 %v2444
        %v4109 = vunpack.c.l.b16 %v2445
        %v4110 = vunpack.c.h.b16 %v2445
        %v4111 = vunpack.c.l.b16 %v2446
        %v4112 = vunpack.c.h.b16 %v2446
        %v4113 = vunpack.c.l.b16 %v2447
        %v4114 = vunpack.c.h.b16 %v2447
        %v4115 = vunpack.c.l.b16 %v2448
        %v4116 = vunpack.c.h.b16 %v2448
        %v4117 = vunpack.c.l.b16 %v2449
        %v4118 = vunpack.c.h.b16 %v2449
        %v4119 = vunpack.c.l.b16 %v2450
        %v4120 = vunpack.c.h.b16 %v2450
        %v4121 = vunpack.c.l.b16 %v2451
        %v4122 = vunpack.c.h.b16 %v2451
        %v4123 = vunpack.c.l.b16 %v2452
        %v4124 = vunpack.c.h.b16 %v2452
        %v4125 = vunpack.c.l.b16 %v2453
        %v4126 = vunpack.c.h.b16 %v2453
        %v4127 = vunpack.c.l.b16 %v2454
        %v4128 = vunpack.c.h.b16 %v2454
        %v4129 = vunpack.c.l.b16 %v2455
        %v4130 = vunpack.c.h.b16 %v2455
        %v4131 = vunpack.c.l.b16 %v2456
        %v4132 = vunpack.c.h.b16 %v2456
        %v4133 = vunpack.c.l.b16 %v2457
        %v4134 = vunpack.c.h.b16 %v2457
        %v4135 = vunpack.c.l.b16 %v2458
        %v4136 = vunpack.c.h.b16 %v2458
        %v4137 = vunpack.c.l.b16 %v2459
        %v4138 = vunpack.c.h.b16 %v2459
        %v4139 = vunpack.c.l.b16 %v2460
        %v4140 = vunpack.c.h.b16 %v2460
        %v4141 = vunpack.c.l.b16 %v2461
        %v4142 = vunpack.c.h.b16 %v2461
        %v4143 = vunpack.c.l.b16 %v2462
        %v4144 = vunpack.c.h.b16 %v2462
        %v4145 = vunpack.c.l.b16 %v2463
        %v4146 = vunpack.c.h.b16 %v2463
        %v4147 = vunpack.c.l.b16 %v2464
        %v4148 = vunpack.c.h.b16 %v2464
        %v4149 = vunpack.c.l.b16 %v2465
        %v4150 = vunpack.c.h.b16 %v2465
        %v4151 = vunpack.c.l.b16 %v2466
        %v4152 = vunpack.c.h.b16 %v2466
        %v4153 = vunpack.c.l.b16 %v2467
        %v4154 = vunpack.c.h.b16 %v2467
        %v4155 = vunpack.c.l.b16 %v2468
        %v4156 = vunpack.c.h.b16 %v2468
        %v4157 = vunpack.c.l.b16 %v2469
        %v4158 = vunpack.c.h.b16 %v2469
        %v4159 = vunpack.c.l.b16 %v2470
        %v4160 = vunpack.c.h.b16 %v2470
        %v4161 = vunpack.c.l.b16 %v2471
        %v4162 = vunpack.c.h.b16 %v2471
        %v4163 = vunpack.c.l.b16 %v2472
        %v4164 = vunpack.c.h.b16 %v2472
        %v4165 = vunpack.c.l.b16 %v2473
        %v4166 = vunpack.c.h.b16 %v2473
        %v4167 = vunpack.c.l.b16 %v2474
        %v4168 = vunpack.c.h.b16 %v2474
        %v4169 = vunpack.c.l.b16 %v2475
        %v4170 = vunpack.c.h.b16 %v2475
        %v4171 = vunpack.c.l.b16 %v2476
        %v4172 = vunpack.c.h.b16 %v2476
        %v4173 = vunpack.c.l.b16 %v2477
        %v4174 = vunpack.c.h.b16 %v2477
        %v4175 = vunpack.c.l.b16 %v2478
        %v4176 = vunpack.c.h.b16 %v2478
        %v4177 = vunpack.c.l.b16 %v2479
        %v4178 = vunpack.c.h.b16 %v2479
        %v4179 = vunpack.c.l.b16 %v2480
        %v4180 = vunpack.c.h.b16 %v2480
        %v4181 = vunpack.c.l.b16 %v2481
        %v4182 = vunpack.c.h.b16 %v2481
        %v4183 = vunpack.c.l.b16 %v2482
        %v4184 = vunpack.c.h.b16 %v2482
        %v4185 = vunpack.c.l.b16 %v2483
        %v4186 = vunpack.c.h.b16 %v2483
        %v4187 = vunpack.c.l.b16 %v2484
        %v4188 = vunpack.c.h.b16 %v2484
        %v4189 = vunpack.c.l.b16 %v2485
        %v4190 = vunpack.c.h.b16 %v2485
        %v4191 = vunpack.c.l.b16 %v2486
        %v4192 = vunpack.c.h.b16 %v2486
        %v4193 = vunpack.c.l.b16 %v2487
        %v4194 = vunpack.c.h.b16 %v2487
        %v4195 = vunpack.c.l.b16 %v2488
        %v4196 = vunpack.c.h.b16 %v2488
        %v4197 = vunpack.c.l.b16 %v2489
        %v4198 = vunpack.c.h.b16 %v2489
        %v4199 = vunpack.c.l.b16 %v2490
        %v4200 = vunpack.c.h.b16 %v2490
        %v4201 = vunpack.c.l.b16 %v2491
        %v4202 = vunpack.c.h.b16 %v2491
        %v4203 = vunpack.c.l.b16 %v2492
        %v4204 = vunpack.c.h.b16 %v2492
        %v4205 = vunpack.c.l.b16 %v2493
        %v4206 = vunpack.c.h.b16 %v2493
        %v4207 = vunpack.c.l.b16 %v2494
        %v4208 = vunpack.c.h.b16 %v2494
        %v4209 = vunpack.c.l.b16 %v2495
        %v4210 = vunpack.c.h.b16 %v2495
        %v4211 = vunpack.c.l.b16 %v2496
        %v4212 = vunpack.c.h.b16 %v2496
        %v4213 = vunpack.c.l.b16 %v2497
        %v4214 = vunpack.c.h.b16 %v2497
        %v4215 = vunpack.c.l.b16 %v2498
        %v4216 = vunpack.c.h.b16 %v2498
        %v4217 = vunpack.c.l.b16 %v2499
        %v4218 = vunpack.c.h.b16 %v2499
        %v4219 = vunpack.c.l.b16 %v2500
        %v4220 = vunpack.c.h.b16 %v2500
        %v4221 = vunpack.c.l.b16 %v2501
        %v4222 = vunpack.c.h.b16 %v2501
        %v4223 = vunpack.c.l.b16 %v2502
        %v4224 = vunpack.c.h.b16 %v2502
        %v4225 = vunpack.c.l.b16 %v2503
        %v4226 = vunpack.c.h.b16 %v2503
        %v4227 = vunpack.c.l.b16 %v2504
        %v4228 = vunpack.c.h.b16 %v2504
        %v4229 = vunpack.c.l.b16 %v2505
        %v4230 = vunpack.c.h.b16 %v2505
        %v4231 = vunpack.c.l.b16 %v2506
        %v4232 = vunpack.c.h.b16 %v2506
        %v4233 = vunpack.c.l.b16 %v2507
        %v4234 = vunpack.c.h.b16 %v2507
        %v4235 = vunpack.c.l.b16 %v2508
        %v4236 = vunpack.c.h.b16 %v2508
        %v4237 = vunpack.c.l.b16 %v2509
        %v4238 = vunpack.c.h.b16 %v2509
        %v4239 = vunpack.c.l.b16 %v2510
        %v4240 = vunpack.c.h.b16 %v2510
        %v4241 = vunpack.c.l.b16 %v2511
        %v4242 = vunpack.c.h.b16 %v2511
        %v4243 = vunpack.c.l.b16 %v2512
        %v4244 = vunpack.c.h.b16 %v2512
        %v4245 = vunpack.c.l.b16 %v2513
        %v4246 = vunpack.c.h.b16 %v2513
        %v4247 = vunpack.c.l.b16 %v2514
        %v4248 = vunpack.c.h.b16 %v2514
        %v4249 = vunpack.c.l.b16 %v2515
        %v4250 = vunpack.c.h.b16 %v2515
        %v4251 = vunpack.c.l.b16 %v2516
        %v4252 = vunpack.c.h.b16 %v2516
        %v4253 = vunpack.c.l.b16 %v2517
        %v4254 = vunpack.c.h.b16 %v2517
        %v4255 = vunpack.c.l.b16 %v2518
        %v4256 = vunpack.c.h.b16 %v2518
        %v4257 = vunpack.c.l.b16 %v2519
        %v4258 = vunpack.c.h.b16 %v2519
        %v4259 = vunpack.c.l.b16 %v2520
        %v4260 = vunpack.c.h.b16 %v2520
        %v4261 = vunpack.c.l.b16 %v2521
        %v4262 = vunpack.c.h.b16 %v2521
        %v4263 = vunpack.c.l.b16 %v2522
        %v4264 = vunpack.c.h.b16 %v2522
        %v4265 = vunpack.c.l.b16 %v2523
        %v4266 = vunpack.c.h.b16 %v2523
        %v4267 = vunpack.c.l.b16 %v2524
        %v4268 = vunpack.c.h.b16 %v2524
        %v4269 = vunpack.c.l.b16 %v2525
        %v4270 = vunpack.c.h.b16 %v2525
        %v4271 = vunpack.c.l.b16 %v2526
        %v4272 = vunpack.c.h.b16 %v2526
        %v4273 = vunpack.c.l.b16 %v2527
        %v4274 = vunpack.c.h.b16 %v2527
        %v4275 = vunpack.c.l.b16 %v2528
        %v4276 = vunpack.c.h.b16 %v2528
        %v4277 = vunpack.c.l.b16 %v2529
        %v4278 = vunpack.c.h.b16 %v2529
        %v4279 = vunpack.c.l.b16 %v2530
        %v4280 = vunpack.c.h.b16 %v2530
        %v4281 = vunpack.c.l.b16 %v2531
        %v4282 = vunpack.c.h.b16 %v2531
        %v4283 = vunpack.c.l.b16 %v2532
        %v4284 = vunpack.c.h.b16 %v2532
        %v4285 = vunpack.c.l.b16 %v2533
        %v4286 = vunpack.c.h.b16 %v2533
        %v4287 = vunpack.c.l.b16 %v2534
        %v4288 = vunpack.c.h.b16 %v2534
        %v4289 = vunpack.c.l.b16 %v2535
        %v4290 = vunpack.c.h.b16 %v2535
        %v4291 = vunpack.c.l.b16 %v2536
        %v4292 = vunpack.c.h.b16 %v2536
        %v4293 = vunpack.c.l.b16 %v2537
        %v4294 = vunpack.c.h.b16 %v2537
        %v4295 = vunpack.c.l.b16 %v2538
        %v4296 = vunpack.c.h.b16 %v2538
        %v4297 = vunpack.c.l.b16 %v2539
        %v4298 = vunpack.c.h.b16 %v2539
        %v4299 = vunpack.c.l.b16 %v2540
        %v4300 = vunpack.c.h.b16 %v2540
        %v4301 = vunpack.c.l.b16 %v2541
        %v4302 = vunpack.c.h.b16 %v2541
        %v4303 = vunpack.c.l.b16 %v2542
        %v4304 = vunpack.c.h.b16 %v2542
        %v4305 = vunpack.c.l.b16 %v2543
        %v4306 = vunpack.c.h.b16 %v2543
        %v4307 = vunpack.c.l.b16 %v2544
        %v4308 = vunpack.c.h.b16 %v2544
        %v4309 = vunpack.c.l.b16 %v2545
        %v4310 = vunpack.c.h.b16 %v2545
        %v4311 = vunpack.c.l.b16 %v2546
        %v4312 = vunpack.c.h.b16 %v2546
        %v4313 = vunpack.c.l.b16 %v2547
        %v4314 = vunpack.c.h.b16 %v2547
        %v4315 = vunpack.c.l.b16 %v2548
        %v4316 = vunpack.c.h.b16 %v2548
        %v4317 = vunpack.c.l.b16 %v2549
        %v4318 = vunpack.c.h.b16 %v2549
        %v4319 = vunpack.c.l.b16 %v2550
        %v4320 = vunpack.c.h.b16 %v2550
        %v4321 = vunpack.c.l.b16 %v2551
        %v4322 = vunpack.c.h.b16 %v2551
        %v4323 = vunpack.c.l.b16 %v2552
        %v4324 = vunpack.c.h.b16 %v2552
        %v4325 = vunpack.c.l.b16 %v2553
        %v4326 = vunpack.c.h.b16 %v2553
        %v4327 = vunpack.c.l.b16 %v2554
        %v4328 = vunpack.c.h.b16 %v2554
        %v4329 = vunpack.c.l.b16 %v2555
        %v4330 = vunpack.c.h.b16 %v2555
        %v4331 = vunpack.c.l.b16 %v2556
        %v4332 = vunpack.c.h.b16 %v2556
        %v4333 = vunpack.c.l.b16 %v2557
        %v4334 = vunpack.c.h.b16 %v2557
        %v4335 = vunpack.c.l.b16 %v2558
        %v4336 = vunpack.c.h.b16 %v2558
        %v4337 = vunpack.c.l.b16 %v2559
        %v4338 = vunpack.c.h.b16 %v2559
        %v4339 = vunpack.c.l.b16 %v2560
        %v4340 = vunpack.c.h.b16 %v2560
        %v4341 = vunpack.c.l.b16 %v2561
        %v4342 = vunpack.c.h.b16 %v2561
        %v4343 = vunpack.c.l.b16 %v2562
        %v4344 = vunpack.c.h.b16 %v2562
        %v4345 = vunpack.c.l.b16 %v2563
        %v4346 = vunpack.c.h.b16 %v2563
        %v4347 = vunpack.c.l.b16 %v2564
        %v4348 = vunpack.c.h.b16 %v2564
        %v4349 = vunpack.c.l.b16 %v2565
        %v4350 = vunpack.c.h.b16 %v2565
        %v4351 = vunpack.c.l.b16 %v2566
        %v4352 = vunpack.c.h.b16 %v2566
        %v4353 = vunpack.c.l.b16 %v2567
        %v4354 = vunpack.c.h.b16 %v2567
        %v4355 = vunpack.c.l.b16 %v2568
        %v4356 = vunpack.c.h.b16 %v2568
        %v4357 = vunpack.c.l.b16 %v2569
        %v4358 = vunpack.c.h.b16 %v2569
        %v4359 = vunpack.c.l.b16 %v2570
        %v4360 = vunpack.c.h.b16 %v2570
        %v4361 = vunpack.c.l.b16 %v2571
        %v4362 = vunpack.c.h.b16 %v2571
        %v4363 = vunpack.c.l.b16 %v2572
        %v4364 = vunpack.c.h.b16 %v2572
        %v4365 = vunpack.c.l.b16 %v2573
        %v4366 = vunpack.c.h.b16 %v2573
        %v4367 = vunpack.c.l.b16 %v2574
        %v4368 = vunpack.c.h.b16 %v2574
        %v4369 = vunpack.c.l.b16 %v2575
        %v4370 = vunpack.c.h.b16 %v2575
        %v4371 = vunpack.c.l.b16 %v2576
        %v4372 = vunpack.c.h.b16 %v2576
        %v4373 = vunpack.c.l.b16 %v2577
        %v4374 = vunpack.c.h.b16 %v2577
        %v4375 = vunpack.c.l.b16 %v2578
        %v4376 = vunpack.c.h.b16 %v2578
        %v4377 = vunpack.c.l.b16 %v2579
        %v4378 = vunpack.c.h.b16 %v2579
        %v4379 = vunpack.c.l.b16 %v2580
        %v4380 = vunpack.c.h.b16 %v2580
        %v4381 = vunpack.c.l.b16 %v2581
        %v4382 = vunpack.c.h.b16 %v2581
        %v4383 = vunpack.c.l.b16 %v2582
        %v4384 = vunpack.c.h.b16 %v2582
        %v4385 = vunpack.c.l.b16 %v2583
        %v4386 = vunpack.c.h.b16 %v2583
        %v4387 = vunpack.c.l.b16 %v2584
        %v4388 = vunpack.c.h.b16 %v2584
        %v4389 = vunpack.c.l.b16 %v2585
        %v4390 = vunpack.c.h.b16 %v2585
        %v4391 = vunpack.c.l.b16 %v2586
        %v4392 = vunpack.c.h.b16 %v2586
        %v4393 = vunpack.c.l.b16 %v2587
        %v4394 = vunpack.c.h.b16 %v2587
        %v4395 = vunpack.c.l.b16 %v2588
        %v4396 = vunpack.c.h.b16 %v2588
        %v4397 = vunpack.c.l.b16 %v2589
        %v4398 = vunpack.c.h.b16 %v2589
        %v4399 = vunpack.c.l.b16 %v2590
        %v4400 = vunpack.c.h.b16 %v2590
        %v4401 = vunpack.c.l.b16 %v2591
        %v4402 = vunpack.c.h.b16 %v2591
        %v4403 = vunpack.c.l.b16 %v2592
        %v4404 = vunpack.c.h.b16 %v2592
        %v4405 = vunpack.c.l.b16 %v2593
        %v4406 = vunpack.c.h.b16 %v2593
        %v4407 = vunpack.c.l.b16 %v2594
        %v4408 = vunpack.c.h.b16 %v2594
        %v4409 = vunpack.c.l.b16 %v2595
        %v4410 = vunpack.c.h.b16 %v2595
        %v4411 = vunpack.c.l.b16 %v2596
        %v4412 = vunpack.c.h.b16 %v2596
        %v4413 = vunpack.c.l.b16 %v2597
        %v4414 = vunpack.c.h.b16 %v2597
        %v4415 = vunpack.c.l.b16 %v2598
        %v4416 = vunpack.c.h.b16 %v2598
        %v4417 = vunpack.c.l.b16 %v2599
        %v4418 = vunpack.c.h.b16 %v2599
        %v4419 = vunpack.c.l.b16 %v2600
        %v4420 = vunpack.c.h.b16 %v2600
        %v4421 = vunpack.c.l.b16 %v2601
        %v4422 = vunpack.c.h.b16 %v2601
        %v4423 = vunpack.c.l.b16 %v2602
        %v4424 = vunpack.c.h.b16 %v2602
        %v4425 = vunpack.c.l.b16 %v2603
        %v4426 = vunpack.c.h.b16 %v2603
        %v4427 = vunpack.c.l.b16 %v2604
        %v4428 = vunpack.c.h.b16 %v2604
        %v4429 = vunpack.c.l.b16 %v2605
        %v4430 = vunpack.c.h.b16 %v2605
        %v4431 = vunpack.c.l.b16 %v2606
        %v4432 = vunpack.c.h.b16 %v2606
        %v4433 = vunpack.c.l.b16 %v2607
        %v4434 = vunpack.c.h.b16 %v2607
        %v4435 = vunpack.c.l.b16 %v2608
        %v4436 = vunpack.c.h.b16 %v2608
        %v4437 = vunpack.c.l.b16 %v2609
        %v4438 = vunpack.c.h.b16 %v2609
        %v4439 = vunpack.c.l.b16 %v2610
        %v4440 = vunpack.c.h.b16 %v2610
        %v4441 = vunpack.c.l.b16 %v2611
        %v4442 = vunpack.c.h.b16 %v2611
        %v4443 = vunpack.c.l.b16 %v2612
        %v4444 = vunpack.c.h.b16 %v2612
        %v4445 = vunpack.c.l.b16 %v2613
        %v4446 = vunpack.c.h.b16 %v2613
        %v4447 = vunpack.c.l.b16 %v2614
        %v4448 = vunpack.c.h.b16 %v2614
        %v4449 = vunpack.c.l.b16 %v2615
        %v4450 = vunpack.c.h.b16 %v2615
        %v4451 = vunpack.c.l.b16 %v2616
        %v4452 = vunpack.c.h.b16 %v2616
        %v4453 = vunpack.c.l.b16 %v2617
        %v4454 = vunpack.c.h.b16 %v2617
        %v4455 = vunpack.c.l.b16 %v2618
        %v4456 = vunpack.c.h.b16 %v2618
        %v4457 = vunpack.c.l.b16 %v2619
        %v4458 = vunpack.c.h.b16 %v2619
        %v4459 = vunpack.c.l.b16 %v2620
        %v4460 = vunpack.c.h.b16 %v2620
        %v4461 = vunpack.c.l.b16 %v2621
        %v4462 = vunpack.c.h.b16 %v2621
        %v4463 = vunpack.c.l.b16 %v2622
        %v4464 = vunpack.c.h.b16 %v2622
        %v4465 = vunpack.c.l.b16 %v2623
        %v4466 = vunpack.c.h.b16 %v2623
        %v4467 = vunpack.c.l.b16 %v2624
        %v4468 = vunpack.c.h.b16 %v2624
        %v4469 = vunpack.c.l.b16 %v2625
        %v4470 = vunpack.c.h.b16 %v2625
        %v4471 = vunpack.c.l.b16 %v2626
        %v4472 = vunpack.c.h.b16 %v2626
        %v4473 = vunpack.c.l.b16 %v2627
        %v4474 = vunpack.c.h.b16 %v2627
        %v4475 = vunpack.c.l.b16 %v2628
        %v4476 = vunpack.c.h.b16 %v2628
        %v4477 = vunpack.c.l.b16 %v2629
        %v4478 = vunpack.c.h.b16 %v2629
        %v4479 = vunpack.c.l.b16 %v2630
        %v4480 = vunpack.c.h.b16 %v2630
        %v4481 = vunpack.c.l.b16 %v2631
        %v4482 = vunpack.c.h.b16 %v2631
        %v4483 = vunpack.c.l.b16 %v2632
        %v4484 = vunpack.c.h.b16 %v2632
        %v4485 = vunpack.c.l.b16 %v2633
        %v4486 = vunpack.c.h.b16 %v2633
        %v4487 = vunpack.c.l.b16 %v2634
        %v4488 = vunpack.c.h.b16 %v2634
        %v4489 = vunpack.c.l.b16 %v2635
        %v4490 = vunpack.c.h.b16 %v2635
        %v4491 = vunpack.c.l.b16 %v2636
        %v4492 = vunpack.c.h.b16 %v2636
        %v4493 = vunpack.c.l.b16 %v2637
        %v4494 = vunpack.c.h.b16 %v2637
        %v4495 = vunpack.c.l.b16 %v2638
        %v4496 = vunpack.c.h.b16 %v2638
        %v4497 = vunpack.c.l.b16 %v2639
        %v4498 = vunpack.c.h.b16 %v2639
        %v4499 = vunpack.c.l.b16 %v2640
        %v4500 = vunpack.c.h.b16 %v2640
        %v4501 = vunpack.c.l.b16 %v2641
        %v4502 = vunpack.c.h.b16 %v2641
        %v4503 = vunpack.c.l.b16 %v2642
        %v4504 = vunpack.c.h.b16 %v2642
        %v4505 = vunpack.c.l.b16 %v2643
        %v4506 = vunpack.c.h.b16 %v2643
        %v4507 = vunpack.c.l.b16 %v2644
        %v4508 = vunpack.c.h.b16 %v2644
        %v4509 = vunpack.c.l.b16 %v2645
        %v4510 = vunpack.c.h.b16 %v2645
        %v4511 = vunpack.c.l.b16 %v2646
        %v4512 = vunpack.c.h.b16 %v2646
        %v4513 = vunpack.c.l.b16 %v2647
        %v4514 = vunpack.c.h.b16 %v2647
        %v4515 = vunpack.c.l.b16 %v2648
        %v4516 = vunpack.c.h.b16 %v2648
        %v4517 = vunpack.c.l.b16 %v2649
        %v4518 = vunpack.c.h.b16 %v2649
        %v4519 = vunpack.c.l.b16 %v2650
        %v4520 = vunpack.c.h.b16 %v2650
        %v4521 = vunpack.c.l.b16 %v2651
        %v4522 = vunpack.c.h.b16 %v2651
        %v4523 = vunpack.c.l.b16 %v2652
        %v4524 = vunpack.c.h.b16 %v2652
        %v4525 = vunpack.c.l.b16 %v2653
        %v4526 = vunpack.c.h.b16 %v2653
        %v4527 = vunpack.c.l.b16 %v2654
        %v4528 = vunpack.c.h.b16 %v2654
        %v4529 = vunpack.c.l.b16 %v2655
        %v4530 = vunpack.c.h.b16 %v2655
        %v4531 = vunpack.c.l.b16 %v2656
        %v4532 = vunpack.c.h.b16 %v2656
        %v4533 = vunpack.c.l.b16 %v2657
        %v4534 = vunpack.c.h.b16 %v2657
        %v4535 = vunpack.c.l.b16 %v2658
        %v4536 = vunpack.c.h.b16 %v2658
        %v4537 = vunpack.c.l.b16 %v2659
        %v4538 = vunpack.c.h.b16 %v2659
        %v4539 = vunpack.c.l.b16 %v2660
        %v4540 = vunpack.c.h.b16 %v2660
        %v4541 = vunpack.c.l.b16 %v2661
        %v4542 = vunpack.c.h.b16 %v2661
        %v4543 = vunpack.c.l.b16 %v2662
        %v4544 = vunpack.c.h.b16 %v2662
        %v4545 = vunpack.c.l.b16 %v2663
        %v4546 = vunpack.c.h.b16 %v2663
        %v4547 = vunpack.c.l.b16 %v2664
        %v4548 = vunpack.c.h.b16 %v2664
        %v4549 = vunpack.c.l.b16 %v2665
        %v4550 = vunpack.c.h.b16 %v2665
        %v4551 = vunpack.c.l.b16 %v2666
        %v4552 = vunpack.c.h.b16 %v2666
        %v4553 = vunpack.c.l.b16 %v2667
        %v4554 = vunpack.c.h.b16 %v2667
        %v4555 = vunpack.c.l.b16 %v2668
        %v4556 = vunpack.c.h.b16 %v2668
        %v4557 = vunpack.c.l.b16 %v2669
        %v4558 = vunpack.c.h.b16 %v2669
        %v4559 = vunpack.c.l.b16 %v2670
        %v4560 = vunpack.c.h.b16 %v2670
        %v4561 = vunpack.c.l.b16 %v2671
        %v4562 = vunpack.c.h.b16 %v2671
        %v4563 = vunpack.c.l.b16 %v2672
        %v4564 = vunpack.c.h.b16 %v2672
        %v4565 = vunpack.c.l.b16 %v2673
        %v4566 = vunpack.c.h.b16 %v2673
        %v4567 = vunpack.c.l.b16 %v2674
        %v4568 = vunpack.c.h.b16 %v2674
        %v4569 = vunpack.c.l.b16 %v2675
        %v4570 = vunpack.c.h.b16 %v2675
        %v4571 = vunpack.c.l.b16 %v2676
        %v4572 = vunpack.c.h.b16 %v2676
        %v4573 = vunpack.c.l.b16 %v2677
        %v4574 = vunpack.c.h.b16 %v2677
        %v4575 = vunpack.c.l.b16 %v2678
        %v4576 = vunpack.c.h.b16 %v2678
        %v4577 = vunpack.c.l.b16 %v2679
        %v4578 = vunpack.c.h.b16 %v2679
        %v4579 = vunpack.c.l.b16 %v2680
        %v4580 = vunpack.c.h.b16 %v2680
        %v4581 = vunpack.c.l.b16 %v2681
        %v4582 = vunpack.c.h.b16 %v2681
        %v4583 = vunpack.c.l.b16 %v2682
        %v4584 = vunpack.c.h.b16 %v2682
        %v4585 = vunpack.c.l.b16 %v2683
        %v4586 = vunpack.c.h.b16 %v2683
        %v4587 = vunpack.c.l.b16 %v2684
        %v4588 = vunpack.c.h.b16 %v2684
        %v4589 = vunpack.c.l.b16 %v2685
        %v4590 = vunpack.c.h.b16 %v2685
        %v4591 = vunpack.c.l.b16 %v2686
        %v4592 = vunpack.c.h.b16 %v2686
        %v4593 = vunpack.c.l.b16 %v2687
        %v4594 = vunpack.c.h.b16 %v2687
        %v4595 = vunpack.c.l.b16 %v2688
        %v4596 = vunpack.c.h.b16 %v2688
        %v4597 = vunpack.c.l.b16 %v2689
        %v4598 = vunpack.c.h.b16 %v2689
        %v4599 = vunpack.c.l.b16 %v2690
        %v4600 = vunpack.c.h.b16 %v2690
        %v4601 = vunpack.c.l.b16 %v2691
        %v4602 = vunpack.c.h.b16 %v2691
        %v4603 = vunpack.c.l.b16 %v2692
        %v4604 = vunpack.c.h.b16 %v2692
        %v4605 = vunpack.c.l.b16 %v2693
        %v4606 = vunpack.c.h.b16 %v2693
        %v4607 = vunpack.c.l.b16 %v2694
        %v4608 = vunpack.c.h.b16 %v2694
        %v4609 = vunpack.c.l.b16 %v2695
        %v4610 = vunpack.c.h.b16 %v2695
        %v4611 = vunpack.c.l.b16 %v2696
        %v4612 = vunpack.c.h.b16 %v2696
        %v4613 = vunpack.c.l.b16 %v2697
        %v4614 = vunpack.c.h.b16 %v2697
        %v4615 = vunpack.c.l.b16 %v2698
        %v4616 = vunpack.c.h.b16 %v2698
        %v4617 = vunpack.c.l.b16 %v2699
        %v4618 = vunpack.c.h.b16 %v2699
        %v4619 = vunpack.c.l.b16 %v2700
        %v4620 = vunpack.c.h.b16 %v2700
        %v4621 = vunpack.c.l.b16 %v2701
        %v4622 = vunpack.c.h.b16 %v2701
        %v4623 = vunpack.c.l.b16 %v2702
        %v4624 = vunpack.c.h.b16 %v2702
        %v4625 = vunpack.c.l.b16 %v2703
        %v4626 = vunpack.c.h.b16 %v2703
        %v4627 = vunpack.c.l.b16 %v2704
        %v4628 = vunpack.c.h.b16 %v2704
        %v4629 = vunpack.c.l.b16 %v2705
        %v4630 = vunpack.c.h.b16 %v2705
        %v4631 = vunpack.c.l.b16 %v2706
        %v4632 = vunpack.c.h.b16 %v2706
        %v4633 = vunpack.c.l.b16 %v2707
        %v4634 = vunpack.c.h.b16 %v2707
        %v4635 = vunpack.c.l.b16 %v2708
        %v4636 = vunpack.c.h.b16 %v2708
        %v4637 = vunpack.c.l.b16 %v2709
        %v4638 = vunpack.c.h.b16 %v2709
        %v4639 = vunpack.c.l.b16 %v2710
        %v4640 = vunpack.c.h.b16 %v2710
        %v4641 = vunpack.c.l.b16 %v2711
        %v4642 = vunpack.c.h.b16 %v2711
        %v4643 = vunpack.c.l.b16 %v2712
        %v4644 = vunpack.c.h.b16 %v2712
        %v4645 = vunpack.c.l.b16 %v2713
        %v4646 = vunpack.c.h.b16 %v2713
        %v4647 = vunpack.c.l.b16 %v2714
        %v4648 = vunpack.c.h.b16 %v2714
        %v4649 = vunpack.c.l.b16 %v2715
        %v4650 = vunpack.c.h.b16 %v2715
        %v4651 = vunpack.c.l.b16 %v2716
        %v4652 = vunpack.c.h.b16 %v2716
        %v4653 = vunpack.c.l.b16 %v2717
        %v4654 = vunpack.c.h.b16 %v2717
        %v4655 = vunpack.c.l.b16 %v2718
        %v4656 = vunpack.c.h.b16 %v2718
        %v4657 = vunpack.c.l.b16 %v2719
        %v4658 = vunpack.c.h.b16 %v2719
        %v4659 = vunpack.c.l.b16 %v2720
        %v4660 = vunpack.c.h.b16 %v2720
        %v4661 = vunpack.c.l.b16 %v2721
        %v4662 = vunpack.c.h.b16 %v2721
        %v4663 = vunpack.c.l.b16 %v2722
        %v4664 = vunpack.c.h.b16 %v2722
        %v4665 = vunpack.c.l.b16 %v2723
        %v4666 = vunpack.c.h.b16 %v2723
        %v4667 = vunpack.c.l.b16 %v2724
        %v4668 = vunpack.c.h.b16 %v2724
        %v4669 = vunpack.c.l.b16 %v2725
        %v4670 = vunpack.c.h.b16 %v2725
        %v4671 = vunpack.c.l.b16 %v2726
        %v4672 = vunpack.c.h.b16 %v2726
        %v4673 = vunpack.c.l.b16 %v2727
        %v4674 = vunpack.c.h.b16 %v2727
        %v4675 = vunpack.c.l.b16 %v2728
        %v4676 = vunpack.c.h.b16 %v2728
        %v4677 = vunpack.c.l.b16 %v2729
        %v4678 = vunpack.c.h.b16 %v2729
        %v4679 = vunpack.c.l.b16 %v2730
        %v4680 = vunpack.c.h.b16 %v2730
        %v4681 = vunpack.c.l.b16 %v2731
        %v4682 = vunpack.c.h.b16 %v2731
        %v4683 = vunpack.c.l.b16 %v2732
        %v4684 = vunpack.c.h.b16 %v2732
        %v4685 = vunpack.c.l.b16 %v2733
        %v4686 = vunpack.c.h.b16 %v2733
        %v4687 = vunpack.c.l.b16 %v2734
        %v4688 = vunpack.c.h.b16 %v2734
        %v4689 = vunpack.c.l.b16 %v2735
        %v4690 = vunpack.c.h.b16 %v2735
        %v4691 = vunpack.c.l.b16 %v2736
        %v4692 = vunpack.c.h.b16 %v2736
        %v4693 = vunpack.c.l.b16 %v2737
        %v4694 = vunpack.c.h.b16 %v2737
        %v4695 = vunpack.c.l.b16 %v2738
        %v4696 = vunpack.c.h.b16 %v2738
        %v4697 = vunpack.c.l.b16 %v2739
        %v4698 = vunpack.c.h.b16 %v2739
        %v4699 = vunpack.c.l.b16 %v2740
        %v4700 = vunpack.c.h.b16 %v2740
        %v4701 = vunpack.c.l.b16 %v2741
        %v4702 = vunpack.c.h.b16 %v2741
        %v4703 = vunpack.c.l.b16 %v2742
        %v4704 = vunpack.c.h.b16 %v2742
        %v4705 = vunpack.c.l.b16 %v2743
        %v4706 = vunpack.c.h.b16 %v2743
        %v4707 = vunpack.c.l.b16 %v2744
        %v4708 = vunpack.c.h.b16 %v2744
        %v4709 = vunpack.c.l.b16 %v2745
        %v4710 = vunpack.c.h.b16 %v2745
        %v4711 = vunpack.c.l.b16 %v2746
        %v4712 = vunpack.c.h.b16 %v2746
        %v4713 = vunpack.c.l.b16 %v2747
        %v4714 = vunpack.c.h.b16 %v2747
        %v4715 = vunpack.c.l.b16 %v2748
        %v4716 = vunpack.c.h.b16 %v2748
        %v4717 = vunpack.c.l.b16 %v2749
        %v4718 = vunpack.c.h.b16 %v2749
        %v4719 = vunpack.c.l.b16 %v2750
        %v4720 = vunpack.c.h.b16 %v2750
        %v4721 = vunpack.c.l.b16 %v2751
        %v4722 = vunpack.c.h.b16 %v2751
        %v4723 = vunpack.c.l.b16 %v2752
        %v4724 = vunpack.c.h.b16 %v2752
        %v4725 = vunpack.c.l.b16 %v2753
        %v4726 = vunpack.c.h.b16 %v2753
        %v4727 = vunpack.c.l.b16 %v2754
        %v4728 = vunpack.c.h.b16 %v2754
        %v4729 = vunpack.c.l.b16 %v2755
        %v4730 = vunpack.c.h.b16 %v2755
        %v4731 = vunpack.c.l.b16 %v2756
        %v4732 = vunpack.c.h.b16 %v2756
        %v4733 = vunpack.c.l.b16 %v2757
        %v4734 = vunpack.c.h.b16 %v2757
        %v4735 = vunpack.c.l.b16 %v2758
        %v4736 = vunpack.c.h.b16 %v2758
        %v4737 = vunpack.c.l.b16 %v2759
        %v4738 = vunpack.c.h.b16 %v2759
        %v4739 = vunpack.c.l.b16 %v2760
        %v4740 = vunpack.c.h.b16 %v2760
        %v4741 = vunpack.c.l.b16 %v2761
        %v4742 = vunpack.c.h.b16 %v2761
        %v4743 = vunpack.c.l.b16 %v2762
        %v4744 = vunpack.c.h.b16 %v2762
        %v4745 = vunpack.c.l.b16 %v2763
        %v4746 = vunpack.c.h.b16 %v2763
        %v4747 = vunpack.c.l.b16 %v2764
        %v4748 = vunpack.c.h.b16 %v2764
        %v4749 = vunpack.c.l.b16 %v2765
        %v4750 = vunpack.c.h.b16 %v2765
        %v4751 = vunpack.c.l.b16 %v2766
        %v4752 = vunpack.c.h.b16 %v2766
        %v4753 = vunpack.c.l.b16 %v2767
        %v4754 = vunpack.c.h.b16 %v2767
        %v4755 = vunpack.c.l.b16 %v2768
        %v4756 = vunpack.c.h.b16 %v2768
        %v4757 = vunpack.c.l.b16 %v2769
        %v4758 = vunpack.c.h.b16 %v2769
        %v4759 = vunpack.c.l.b16 %v2770
        %v4760 = vunpack.c.h.b16 %v2770
        %v4761 = vunpack.c.l.b16 %v2771
        %v4762 = vunpack.c.h.b16 %v2771
        %v4763 = vunpack.c.l.b16 %v2772
        %v4764 = vunpack.c.h.b16 %v2772
        %v4765 = vunpack.c.l.b16 %v2773
        %v4766 = vunpack.c.h.b16 %v2773
        %v4767 = vunpack.c.l.b16 %v2774
        %v4768 = vunpack.c.h.b16 %v2774
        %v4769 = vunpack.c.l.b16 %v2775
        %v4770 = vunpack.c.h.b16 %v2775
        %v4771 = vunpack.c.l.b16 %v2776
        %v4772 = vunpack.c.h.b16 %v2776
        %v4773 = vunpack.c.l.b16 %v2777
        %v4774 = vunpack.c.h.b16 %v2777
        %v4775 = vunpack.c.l.b16 %v2778
        %v4776 = vunpack.c.h.b16 %v2778
        %v4777 = vunpack.c.l.b16 %v2779
        %v4778 = vunpack.c.h.b16 %v2779
        %v4779 = vunpack.c.l.b16 %v2780
        %v4780 = vunpack.c.h.b16 %v2780
        %v4781 = vunpack.c.l.b16 %v2781
        %v4782 = vunpack.c.h.b16 %v2781
        %v4783 = vunpack.c.l.b16 %v2782
        %v4784 = vunpack.c.h.b16 %v2782
        %v4785 = vunpack.c.l.b16 %v2783
        %v4786 = vunpack.c.h.b16 %v2783
        %v4787 = vunpack.c.l.b16 %v2784
        %v4788 = vunpack.c.h.b16 %v2784
        %v4789 = vunpack.c.l.b16 %v2785
        %v4790 = vunpack.c.h.b16 %v2785
        %v4791 = vunpack.c.l.b16 %v2786
        %v4792 = vunpack.c.h.b16 %v2786
        %v4793 = vunpack.c.l.b16 %v2787
        %v4794 = vunpack.c.h.b16 %v2787
        %v4795 = vunpack.c.l.b16 %v2788
        %v4796 = vunpack.c.h.b16 %v2788
        %v4797 = vunpack.c.l.b16 %v2789
        %v4798 = vunpack.c.h.b16 %v2789
        %v4799 = vunpack.c.l.b16 %v2790
        %v4800 = vunpack.c.h.b16 %v2790
        %v4801 = vunpack.c.l.b16 %v2791
        %v4802 = vunpack.c.h.b16 %v2791
        %v4803 = vunpack.c.l.b16 %v2792
        %v4804 = vunpack.c.h.b16 %v2792
        %v4805 = vunpack.c.l.b16 %v2793
        %v4806 = vunpack.c.h.b16 %v2793
        %v4807 = vunpack.c.l.b16 %v2794
        %v4808 = vunpack.c.h.b16 %v2794
        %v4809 = vunpack.c.l.b16 %v2795
        %v4810 = vunpack.c.h.b16 %v2795
        %v4811 = vunpack.c.l.b16 %v2796
        %v4812 = vunpack.c.h.b16 %v2796
        %v4813 = vunpack.c.l.b16 %v2797
        %v4814 = vunpack.c.h.b16 %v2797
        %v4815 = vunpack.c.l.b16 %v2798
        %v4816 = vunpack.c.h.b16 %v2798
        %v4817 = vunpack.c.l.b16 %v2799
        %v4818 = vunpack.c.h.b16 %v2799
        %v4819 = vunpack.c.l.b16 %v2800
        %v4820 = vunpack.c.h.b16 %v2800
        %v4821 = vunpack.c.l.b16 %v2801
        %v4822 = vunpack.c.h.b16 %v2801
        %v4823 = vunpack.c.l.b16 %v2802
        %v4824 = vunpack.c.h.b16 %v2802
        %v4825 = vunpack.c.l.b16 %v2803
        %v4826 = vunpack.c.h.b16 %v2803
        %v4827 = vunpack.c.l.b16 %v2804
        %v4828 = vunpack.c.h.b16 %v2804
        %v4829 = vunpack.c.l.b16 %v2805
        %v4830 = vunpack.c.h.b16 %v2805
        %v4831 = vunpack.c.l.b16 %v2806
        %v4832 = vunpack.c.h.b16 %v2806
        %v4833 = vunpack.c.l.b16 %v2807
        %v4834 = vunpack.c.h.b16 %v2807
        %v4835 = vunpack.c.l.b16 %v2808
        %v4836 = vunpack.c.h.b16 %v2808
        %v4837 = vunpack.c.l.b16 %v2809
        %v4838 = vunpack.c.h.b16 %v2809
        %v4839 = vunpack.c.l.b16 %v2810
        %v4840 = vunpack.c.h.b16 %v2810
        %v4841 = vunpack.c.l.b16 %v2811
        %v4842 = vunpack.c.h.b16 %v2811
        %v4843 = vunpack.c.l.b16 %v2812
        %v4844 = vunpack.c.h.b16 %v2812
        %v4845 = vunpack.c.l.b16 %v2813
        %v4846 = vunpack.c.h.b16 %v2813
        %v4847 = vunpack.c.l.b16 %v2814
        %v4848 = vunpack.c.h.b16 %v2814
        %v4849 = vunpack.c.l.b16 %v2815
        %v4850 = vunpack.c.h.b16 %v2815
        %v4851 = vunpack.c.l.b16 %v2816
        %v4852 = vunpack.c.h.b16 %v2816
        %v4853 = vunpack.c.l.b16 %v2817
        %v4854 = vunpack.c.h.b16 %v2817
        %v4855 = vunpack.c.l.b16 %v2818
        %v4856 = vunpack.c.h.b16 %v2818
        %v4857 = vunpack.c.l.b16 %v2819
        %v4858 = vunpack.c.h.b16 %v2819
        %v4859 = vunpack.c.l.b16 %v2820
        %v4860 = vunpack.c.h.b16 %v2820
        %v4861 = vunpack.c.l.b16 %v2821
        %v4862 = vunpack.c.h.b16 %v2821
        %v4863 = vunpack.c.l.b16 %v2822
        %v4864 = vunpack.c.h.b16 %v2822
        %v4865 = vunpack.c.l.b16 %v2823
        %v4866 = vunpack.c.h.b16 %v2823
        %v4867 = vunpack.c.l.b16 %v2824
        %v4868 = vunpack.c.h.b16 %v2824
        %v4869 = vunpack.c.l.b16 %v2825
        %v4870 = vunpack.c.h.b16 %v2825
        %v4871 = vunpack.c.l.b16 %v2826
        %v4872 = vunpack.c.h.b16 %v2826
        %v4873 = vunpack.c.l.b16 %v2827
        %v4874 = vunpack.c.h.b16 %v2827
        %v4875 = vunpack.c.l.b16 %v2828
        %v4876 = vunpack.c.h.b16 %v2828
        %v4877 = vunpack.c.l.b16 %v2829
        %v4878 = vunpack.c.h.b16 %v2829
        %v4879 = vunpack.c.l.b16 %v2830
        %v4880 = vunpack.c.h.b16 %v2830
        %v4881 = vunpack.c.l.b16 %v2831
        %v4882 = vunpack.c.h.b16 %v2831
        %v4883 = vunpack.c.l.b16 %v2832
        %v4884 = vunpack.c.h.b16 %v2832
        %v4885 = vunpack.c.l.b16 %v2833
        %v4886 = vunpack.c.h.b16 %v2833
        %v4887 = vunpack.c.l.b16 %v2834
        %v4888 = vunpack.c.h.b16 %v2834
        %v4889 = vunpack.c.l.b16 %v2835
        %v4890 = vunpack.c.h.b16 %v2835
        %v4891 = vunpack.c.l.b16 %v2836
        %v4892 = vunpack.c.h.b16 %v2836
        %v4893 = vunpack.c.l.b16 %v2837
        %v4894 = vunpack.c.h.b16 %v2837
        %v4895 = vunpack.c.l.b16 %v2838
        %v4896 = vunpack.c.h.b16 %v2838
        %v4897 = vunpack.c.l.b16 %v2839
        %v4898 = vunpack.c.h.b16 %v2839
        %v4899 = vunpack.c.l.b16 %v2840
        %v4900 = vunpack.c.h.b16 %v2840
        %v4901 = vunpack.c.l.b16 %v2841
        %v4902 = vunpack.c.h.b16 %v2841
        %v4903 = vunpack.c.l.b16 %v2842
        %v4904 = vunpack.c.h.b16 %v2842
        %v4905 = vunpack.c.l.b16 %v2843
        %v4906 = vunpack.c.h.b16 %v2843
        %v4907 = vunpack.c.l.b16 %v2844
        %v4908 = vunpack.c.h.b16 %v2844
        %v4909 = vunpack.c.l.b16 %v2845
        %v4910 = vunpack.c.h.b16 %v2845
        %v4911 = vunpack.c.l.b16 %v2846
        %v4912 = vunpack.c.h.b16 %v2846
        %v4913 = vunpack.c.l.b16 %v2847
        %v4914 = vunpack.c.h.b16 %v2847
        %v4915 = vunpack.c.l.b16 %v2848
        %v4916 = vunpack.c.h.b16 %v2848
        %v4917 = vunpack.c.l.b16 %v2849
        %v4918 = vunpack.c.h.b16 %v2849
        %v4919 = vunpack.c.l.b16 %v2850
        %v4920 = vunpack.c.h.b16 %v2850
        %v4921 = vunpack.c.l.b16 %v2851
        %v4922 = vunpack.c.h.b16 %v2851
        %v4923 = vunpack.c.l.b16 %v2852
        %v4924 = vunpack.c.h.b16 %v2852
        %v4925 = vunpack.c.l.b16 %v2853
        %v4926 = vunpack.c.h.b16 %v2853
        %v4927 = vunpack.c.l.b16 %v2854
        %v4928 = vunpack.c.h.b16 %v2854
        %v4929 = vunpack.c.l.b16 %v2855
        %v4930 = vunpack.c.h.b16 %v2855
        %v4931 = vunpack.c.l.b16 %v2856
        %v4932 = vunpack.c.h.b16 %v2856
        %v4933 = vunpack.c.l.b16 %v2857
        %v4934 = vunpack.c.h.b16 %v2857
        %v4935 = vunpack.c.l.b16 %v2858
        %v4936 = vunpack.c.h.b16 %v2858
        %v4937 = vunpack.c.l.b16 %v2859
        %v4938 = vunpack.c.h.b16 %v2859
        %v4939 = vunpack.c.l.b16 %v2860
        %v4940 = vunpack.c.h.b16 %v2860
        %v4941 = vunpack.c.l.b16 %v2861
        %v4942 = vunpack.c.h.b16 %v2861
        %v4943 = vunpack.c.l.b16 %v2862
        %v4944 = vunpack.c.h.b16 %v2862
        %v4945 = vunpack.c.l.b16 %v2863
        %v4946 = vunpack.c.h.b16 %v2863
        %v4947 = vunpack.c.l.b16 %v2864
        %v4948 = vunpack.c.h.b16 %v2864
        %v4949 = vunpack.c.l.b16 %v2865
        %v4950 = vunpack.c.h.b16 %v2865
        %v4951 = vunpack.c.l.b16 %v2866
        %v4952 = vunpack.c.h.b16 %v2866
        %v4953 = vunpack.c.l.b16 %v2867
        %v4954 = vunpack.c.h.b16 %v2867
        %v4955 = vunpack.c.l.b16 %v2868
        %v4956 = vunpack.c.h.b16 %v2868
        %v4957 = vunpack.c.l.b16 %v2869
        %v4958 = vunpack.c.h.b16 %v2869
        %v4959 = vunpack.c.l.b16 %v2870
        %v4960 = vunpack.c.h.b16 %v2870
        %v4961 = vunpack.c.l.b16 %v2871
        %v4962 = vunpack.c.h.b16 %v2871
        %v4963 = vunpack.c.l.b16 %v2872
        %v4964 = vunpack.c.h.b16 %v2872
        %v4965 = vunpack.c.l.b16 %v2873
        %v4966 = vunpack.c.h.b16 %v2873
        %v4967 = vunpack.c.l.b16 %v2874
        %v4968 = vunpack.c.h.b16 %v2874
        %v4969 = vunpack.c.l.b16 %v2875
        %v4970 = vunpack.c.h.b16 %v2875
        %v4971 = vunpack.c.l.b16 %v2876
        %v4972 = vunpack.c.h.b16 %v2876
        %v4973 = vunpack.c.l.b16 %v2877
        %v4974 = vunpack.c.h.b16 %v2877
        %v4975 = vunpack.c.l.b16 %v2878
        %v4976 = vunpack.c.h.b16 %v2878
        %v4977 = vunpack.c.l.b16 %v2879
        %v4978 = vunpack.c.h.b16 %v2879
        %v4979 = vunpack.c.l.b16 %v2880
        %v4980 = vunpack.c.h.b16 %v2880
        %v4981 = vunpack.c.l.b16 %v2881
        %v4982 = vunpack.c.h.b16 %v2881
        %v4983 = vunpack.c.l.b16 %v2882
        %v4984 = vunpack.c.h.b16 %v2882
        %v4985 = vunpack.c.l.b16 %v2883
        %v4986 = vunpack.c.h.b16 %v2883
        %v4987 = vunpack.c.l.b16 %v2884
        %v4988 = vunpack.c.h.b16 %v2884
        %v4989 = vunpack.c.l.b16 %v2885
        %v4990 = vunpack.c.h.b16 %v2885
        %v4991 = vunpack.c.l.b16 %v2886
        %v4992 = vunpack.c.h.b16 %v2886
        %v4993 = vunpack.c.l.b16 %v2887
        %v4994 = vunpack.c.h.b16 %v2887
        %v4995 = vunpack.c.l.b16 %v2888
        %v4996 = vunpack.c.h.b16 %v2888
        %v4997 = vunpack.c.l.b16 %v2889
        %v4998 = vunpack.c.h.b16 %v2889
        %v4999 = vunpack.c.l.b16 %v2890
        %v5000 = vunpack.c.h.b16 %v2890
        %v5001 = vunpack.c.l.b16 %v2891
        %v5002 = vunpack.c.h.b16 %v2891
        %v5003 = vunpack.c.l.b16 %v2892
        %v5004 = vunpack.c.h.b16 %v2892
        %v5005 = vunpack.c.l.b16 %v2893
        %v5006 = vunpack.c.h.b16 %v2893
        %v5007 = vunpack.c.l.b16 %v2894
        %v5008 = vunpack.c.h.b16 %v2894
        %v5009 = vunpack.c.l.b16 %v2895
        %v5010 = vunpack.c.h.b16 %v2895
        %v5011 = vunpack.c.l.b16 %v2896
        %v5012 = vunpack.c.h.b16 %v2896
        %v5013 = vunpack.c.l.b16 %v2897
        %v5014 = vunpack.c.h.b16 %v2897
        %v5015 = vunpack.c.l.b16 %v2898
        %v5016 = vunpack.c.h.b16 %v2898
        %v5017 = vunpack.c.l.b16 %v2899
        %v5018 = vunpack.c.h.b16 %v2899
        %v5019 = vunpack.c.l.b16 %v2900
        %v5020 = vunpack.c.h.b16 %v2900
        %v5021 = vunpack.c.l.b16 %v2901
        %v5022 = vunpack.c.h.b16 %v2901
        %v5023 = vunpack.c.l.b16 %v2902
        %v5024 = vunpack.c.h.b16 %v2902
        %v5025 = vunpack.c.l.b16 %v2903
        %v5026 = vunpack.c.h.b16 %v2903
        %v5027 = vunpack.c.l.b16 %v2904
        %v5028 = vunpack.c.h.b16 %v2904
        %v5029 = vunpack.c.l.b16 %v2905
        %v5030 = vunpack.c.h.b16 %v2905
        %v5031 = vunpack.c.l.b16 %v2906
        %v5032 = vunpack.c.h.b16 %v2906
        %v5033 = vunpack.c.l.b16 %v2907
        %v5034 = vunpack.c.h.b16 %v2907
        %v5035 = vunpack.c.l.b16 %v2908
        %v5036 = vunpack.c.h.b16 %v2908
        %v5037 = vunpack.c.l.b16 %v2909
        %v5038 = vunpack.c.h.b16 %v2909
        %v5039 = vunpack.c.l.b16 %v2910
        %v5040 = vunpack.c.h.b16 %v2910
        %v5041 = vunpack.c.l.b16 %v2911
        %v5042 = vunpack.c.h.b16 %v2911
        %v5043 = vunpack.c.l.b16 %v2912
        %v5044 = vunpack.c.h.b16 %v2912
        %v5045 = vunpack.c.l.b16 %v2913
        %v5046 = vunpack.c.h.b16 %v2913
        %v5047 = vunpack.c.l.b16 %v2914
        %v5048 = vunpack.c.h.b16 %v2914
        %v5049 = vunpack.c.l.b16 %v2915
        %v5050 = vunpack.c.h.b16 %v2915
        %v5051 = vunpack.c.l.b16 %v2916
        %v5052 = vunpack.c.h.b16 %v2916
        %v5053 = vunpack.c.l.b16 %v2917
        %v5054 = vunpack.c.h.b16 %v2917
        %v5055 = vunpack.c.l.b16 %v2918
        %v5056 = vunpack.c.h.b16 %v2918
        %v5057 = vunpack.c.l.b16 %v2919
        %v5058 = vunpack.c.h.b16 %v2919
        %v5059 = vunpack.c.l.b16 %v2920
        %v5060 = vunpack.c.h.b16 %v2920
        %v5061 = vunpack.c.l.b16 %v2921
        %v5062 = vunpack.c.h.b16 %v2921
        %v5063 = vunpack.c.l.b16 %v2922
        %v5064 = vunpack.c.h.b16 %v2922
        %v5065 = vunpack.c.l.b16 %v2923
        %v5066 = vunpack.c.h.b16 %v2923
        %v5067 = vunpack.c.l.b16 %v2924
        %v5068 = vunpack.c.h.b16 %v2924
        %v5069 = vunpack.c.l.b16 %v2925
        %v5070 = vunpack.c.h.b16 %v2925
        %v5071 = vunpack.c.l.b16 %v2926
        %v5072 = vunpack.c.h.b16 %v2926
        %v5073 = vunpack.c.l.b16 %v2927
        %v5074 = vunpack.c.h.b16 %v2927
        %v5075 = vunpack.c.l.b16 %v2928
        %v5076 = vunpack.c.h.b16 %v2928
        %v5077 = vunpack.c.l.b16 %v2929
        %v5078 = vunpack.c.h.b16 %v2929
        %v5079 = vunpack.c.l.b16 %v2930
        %v5080 = vunpack.c.h.b16 %v2930
        %v5081 = vunpack.c.l.b16 %v2931
        %v5082 = vunpack.c.h.b16 %v2931
        %v5083 = vunpack.c.l.b16 %v2932
        %v5084 = vunpack.c.h.b16 %v2932
        %v5085 = vunpack.c.l.b16 %v2933
        %v5086 = vunpack.c.h.b16 %v2933
        %v5087 = vunpack.c.l.b16 %v2934
        %v5088 = vunpack.c.h.b16 %v2934
        %v5089 = vunpack.c.l.b16 %v2935
        %v5090 = vunpack.c.h.b16 %v2935
        %v5091 = vunpack.c.l.b16 %v2936
        %v5092 = vunpack.c.h.b16 %v2936
        %v5093 = vunpack.c.l.b16 %v2937
        %v5094 = vunpack.c.h.b16 %v2937
        %v5095 = vunpack.c.l.b16 %v2938
        %v5096 = vunpack.c.h.b16 %v2938
        %v5097 = vunpack.c.l.b16 %v2939
        %v5098 = vunpack.c.h.b16 %v2939
        %v5099 = vunpack.c.l.b16 %v2940
        %v5100 = vunpack.c.h.b16 %v2940
        %v5101 = vunpack.c.l.b16 %v2941
        %v5102 = vunpack.c.h.b16 %v2941
        %v5103 = vunpack.c.l.b16 %v2942
        %v5104 = vunpack.c.h.b16 %v2942
        %v5105 = vunpack.c.l.b16 %v2943
        %v5106 = vunpack.c.h.b16 %v2943
        %v5107 = vunpack.c.l.b16 %v2944
        %v5108 = vunpack.c.h.b16 %v2944
        %v5109 = vunpack.c.l.b16 %v2945
        %v5110 = vunpack.c.h.b16 %v2945
        %v5111 = vunpack.c.l.b16 %v2946
        %v5112 = vunpack.c.h.b16 %v2946
        %v5113 = vunpack.c.l.b16 %v2947
        %v5114 = vunpack.c.h.b16 %v2947
        %v5115 = vunpack.c.l.b16 %v2948
        %v5116 = vunpack.c.h.b16 %v2948
        %v5117 = vunpack.c.l.b16 %v2949
        %v5118 = vunpack.c.h.b16 %v2949
        %v5119 = vunpack.c.l.b16 %v2950
        %v5120 = vunpack.c.h.b16 %v2950
        %v5121 = vunpack.c.l.b16 %v2951
        %v5122 = vunpack.c.h.b16 %v2951
        %v5123 = vunpack.c.l.b16 %v2952
        %v5124 = vunpack.c.h.b16 %v2952
        %v5125 = vunpack.c.l.b16 %v2953
        %v5126 = vunpack.c.h.b16 %v2953
        %v5127 = vunpack.c.l.b16 %v2954
        %v5128 = vunpack.c.h.b16 %v2954
        %v5129 = vunpack.c.l.b16 %v2955
        %v5130 = vunpack.c.h.b16 %v2955
        %v5131 = vunpack.c.l.b16 %v2956
        %v5132 = vunpack.c.h.b16 %v2956
        %v5133 = vunpack.c.l.b16 %v2957
        %v5134 = vunpack.c.h.b16 %v2957
        %v5135 = vunpack.c.l.b16 %v2958
        %v5136 = vunpack.c.h.b16 %v2958
        %v5137 = vunpack.c.l.b16 %v2959
        %v5138 = vunpack.c.h.b16 %v2959
        %v5139 = vunpack.c.l.b16 %v2960
        %v5140 = vunpack.c.h.b16 %v2960
        %v5141 = vunpack.c.l.b16 %v2961
        %v5142 = vunpack.c.h.b16 %v2961
        %v5143 = vunpack.c.l.b16 %v2962
        %v5144 = vunpack.c.h.b16 %v2962
        %v5145 = vunpack.c.l.b16 %v2963
        %v5146 = vunpack.c.h.b16 %v2963
        %v5147 = vunpack.c.l.b16 %v2964
        %v5148 = vunpack.c.h.b16 %v2964
        %v5149 = vunpack.c.l.b16 %v2965
        %v5150 = vunpack.c.h.b16 %v2965
        %v5151 = vunpack.c.l.b16 %v2966
        %v5152 = vunpack.c.h.b16 %v2966
        %v5153 = vunpack.c.l.b16 %v2967
        %v5154 = vunpack.c.h.b16 %v2967
        %v5155 = vunpack.c.l.b16 %v2968
        %v5156 = vunpack.c.h.b16 %v2968
        %v5157 = vunpack.c.l.b16 %v2969
        %v5158 = vunpack.c.h.b16 %v2969
        %v5159 = vunpack.c.l.b16 %v2970
        %v5160 = vunpack.c.h.b16 %v2970
        %v5161 = vunpack.c.l.b16 %v2971
        %v5162 = vunpack.c.h.b16 %v2971
        %v5163 = vunpack.c.l.b16 %v2972
        %v5164 = vunpack.c.h.b16 %v2972
        %v5165 = vunpack.c.l.b16 %v2973
        %v5166 = vunpack.c.h.b16 %v2973
        %v5167 = vunpack.c.l.b16 %v2974
        %v5168 = vunpack.c.h.b16 %v2974
        %v5169 = vunpack.c.l.b16 %v2975
        %v5170 = vunpack.c.h.b16 %v2975
        %v5171 = vunpack.c.l.b16 %v2976
        %v5172 = vunpack.c.h.b16 %v2976
        %v5173 = vunpack.c.l.b16 %v2977
        %v5174 = vunpack.c.h.b16 %v2977
        %v5175 = vunpack.c.l.b16 %v2978
        %v5176 = vunpack.c.h.b16 %v2978
        %v5177 = vunpack.c.l.b16 %v2979
        %v5178 = vunpack.c.h.b16 %v2979
        %v5179 = vunpack.c.l.b16 %v2980
        %v5180 = vunpack.c.h.b16 %v2980
        %v5181 = vunpack.c.l.b16 %v2981
        %v5182 = vunpack.c.h.b16 %v2981
        %v5183 = vunpack.c.l.b16 %v2982
        %v5184 = vunpack.c.h.b16 %v2982
        %v5185 = vunpack.c.l.b16 %v2983
        %v5186 = vunpack.c.h.b16 %v2983
        %v5187 = vunpack.c.l.b16 %v2984
        %v5188 = vunpack.c.h.b16 %v2984
        %v5189 = vunpack.c.l.b16 %v2985
        %v5190 = vunpack.c.h.b16 %v2985
        %v5191 = vunpack.c.l.b16 %v2986
        %v5192 = vunpack.c.h.b16 %v2986
        %v5193 = vunpack.c.l.b16 %v2987
        %v5194 = vunpack.c.h.b16 %v2987
        %v5195 = vunpack.c.l.b16 %v2988
        %v5196 = vunpack.c.h.b16 %v2988
        %v5197 = vunpack.c.l.b16 %v2989
        %v5198 = vunpack.c.h.b16 %v2989
        %v5199 = vunpack.c.l.b16 %v2990
        %v5200 = vunpack.c.h.b16 %v2990
        %v5201 = vunpack.c.l.b16 %v2991
        %v5202 = vunpack.c.h.b16 %v2991
        %v5203 = vunpack.c.l.b16 %v2992
        %v5204 = vunpack.c.h.b16 %v2992
        %v5205 = vunpack.c.l.b16 %v2993
        %v5206 = vunpack.c.h.b16 %v2993
        %v5207 = vunpack.c.l.b16 %v2994
        %v5208 = vunpack.c.h.b16 %v2994
        %v5209 = vunpack.c.l.b16 %v2995
        %v5210 = vunpack.c.h.b16 %v2995
        %v5211 = vunpack.c.l.b16 %v2996
        %v5212 = vunpack.c.h.b16 %v2996
        %v5213 = vunpack.c.l.b16 %v2997
        %v5214 = vunpack.c.h.b16 %v2997
        %v5215 = vunpack.c.l.b16 %v2998
        %v5216 = vunpack.c.h.b16 %v2998
        %v5217 = vunpack.c.l.b16 %v2999
        %v5218 = vunpack.c.h.b16 %v2999
        %v5219 = vunpack.c.l.b16 %v3000
        %v5220 = vunpack.c.h.b16 %v3000
        %v5221 = vunpack.c.l.b16 %v3001
        %v5222 = vunpack.c.h.b16 %v3001
        %v5223 = vunpack.c.l.b16 %v3002
        %v5224 = vunpack.c.h.b16 %v3002
        %v5225 = vunpack.c.l.b16 %v3003
        %v5226 = vunpack.c.h.b16 %v3003
        %v5227 = vunpack.c.l.b16 %v3004
        %v5228 = vunpack.c.h.b16 %v3004
        %v5229 = vunpack.c.l.b16 %v3005
        %v5230 = vunpack.c.h.b16 %v3005
        %v5231 = vunpack.c.l.b16 %v3006
        %v5232 = vunpack.c.h.b16 %v3006
        %v5233 = vunpack.c.l.b16 %v3007
        %v5234 = vunpack.c.h.b16 %v3007
        %v5235 = vunpack.c.l.b16 %v3008
        %v5236 = vunpack.c.h.b16 %v3008
        %v5237 = vunpack.c.l.b16 %v3009
        %v5238 = vunpack.c.h.b16 %v3009
        %v5239 = vunpack.c.l.b16 %v3010
        %v5240 = vunpack.c.h.b16 %v3010
        %v5241 = vunpack.c.l.b16 %v3011
        %v5242 = vunpack.c.h.b16 %v3011
        %v5243 = vunpack.c.l.b16 %v3012
        %v5244 = vunpack.c.h.b16 %v3012
        %v5245 = vunpack.c.l.b16 %v3013
        %v5246 = vunpack.c.h.b16 %v3013
        %v5247 = vunpack.c.l.b16 %v3014
        %v5248 = vunpack.c.h.b16 %v3014
        %v5249 = vunpack.c.l.b16 %v3015
        %v5250 = vunpack.c.h.b16 %v3015
        %v5251 = vunpack.c.l.b16 %v3016
        %v5252 = vunpack.c.h.b16 %v3016
        %v5253 = vunpack.c.l.b16 %v3017
        %v5254 = vunpack.c.h.b16 %v3017
        %v5255 = vunpack.c.l.b16 %v3018
        %v5256 = vunpack.c.h.b16 %v3018
        %v5257 = vunpack.c.l.b16 %v3019
        %v5258 = vunpack.c.h.b16 %v3019
        %v5259 = vunpack.c.l.b16 %v3020
        %v5260 = vunpack.c.h.b16 %v3020
        %v5261 = vunpack.c.l.b16 %v3021
        %v5262 = vunpack.c.h.b16 %v3021
        %v5263 = vunpack.c.l.b16 %v3022
        %v5264 = vunpack.c.h.b16 %v3022
        %v5265 = vunpack.c.l.b16 %v3023
        %v5266 = vunpack.c.h.b16 %v3023
        %v5267 = vunpack.c.l.b16 %v3024
        %v5268 = vunpack.c.h.b16 %v3024
        %v5269 = vunpack.c.l.b16 %v3025
        %v5270 = vunpack.c.h.b16 %v3025
        %v5271 = vunpack.c.l.b16 %v3026
        %v5272 = vunpack.c.h.b16 %v3026
        %v5273 = vunpack.c.l.b16 %v3027
        %v5274 = vunpack.c.h.b16 %v3027
        %v5275 = vunpack.c.l.b16 %v3028
        %v5276 = vunpack.c.h.b16 %v3028
        %v5277 = vunpack.c.l.b16 %v3029
        %v5278 = vunpack.c.h.b16 %v3029
        %v5279 = vunpack.c.l.b16 %v3030
        %v5280 = vunpack.c.h.b16 %v3030
        %v5281 = vunpack.c.l.b16 %v3031
        %v5282 = vunpack.c.h.b16 %v3031
        %v5283 = vunpack.c.l.b16 %v3032
        %v5284 = vunpack.c.h.b16 %v3032
        %v5285 = vunpack.c.l.b16 %v3033
        %v5286 = vunpack.c.h.b16 %v3033
        %v5287 = vunpack.c.l.b16 %v3034
        %v5288 = vunpack.c.h.b16 %v3034
        %v5289 = vunpack.c.l.b16 %v3035
        %v5290 = vunpack.c.h.b16 %v3035
        %v5291 = vunpack.c.l.b16 %v3036
        %v5292 = vunpack.c.h.b16 %v3036
        %v5293 = vunpack.c.l.b16 %v3037
        %v5294 = vunpack.c.h.b16 %v3037
        %v5295 = vunpack.c.l.b16 %v3038
        %v5296 = vunpack.c.h.b16 %v3038
        %v5297 = vunpack.c.l.b16 %v3039
        %v5298 = vunpack.c.h.b16 %v3039
        %v5299 = vunpack.c.l.b16 %v3040
        %v5300 = vunpack.c.h.b16 %v3040
        %v5301 = vunpack.c.l.b16 %v3041
        %v5302 = vunpack.c.h.b16 %v3041
        %v5303 = vunpack.c.l.b16 %v3042
        %v5304 = vunpack.c.h.b16 %v3042
        %v5305 = vunpack.c.l.b16 %v3043
        %v5306 = vunpack.c.h.b16 %v3043
        %v5307 = vunpack.c.l.b16 %v3044
        %v5308 = vunpack.c.h.b16 %v3044
        %v5309 = vunpack.c.l.b16 %v3045
        %v5310 = vunpack.c.h.b16 %v3045
        %v5311 = vunpack.c.l.b16 %v3046
        %v5312 = vunpack.c.h.b16 %v3046
        %v5313 = vunpack.c.l.b16 %v3047
        %v5314 = vunpack.c.h.b16 %v3047
        %v5315 = vunpack.c.l.b16 %v3048
        %v5316 = vunpack.c.h.b16 %v3048
        %v5317 = vunpack.c.l.b16 %v3049
        %v5318 = vunpack.c.h.b16 %v3049
        %v5319 = vunpack.c.l.b16 %v3050
        %v5320 = vunpack.c.h.b16 %v3050
        %v5321 = vunpack.c.l.b16 %v3051
        %v5322 = vunpack.c.h.b16 %v3051
        %v5323 = vunpack.c.l.b16 %v3052
        %v5324 = vunpack.c.h.b16 %v3052
        %v5325 = vunpack.c.l.b16 %v3053
        %v5326 = vunpack.c.h.b16 %v3053
        %v5327 = vunpack.c.l.b16 %v3054
        %v5328 = vunpack.c.h.b16 %v3054
        %v5329 = vunpack.c.l.b16 %v3055
        %v5330 = vunpack.c.h.b16 %v3055
        %v5331 = vunpack.c.l.b16 %v3056
        %v5332 = vunpack.c.h.b16 %v3056
        %v5333 = vunpack.c.l.b16 %v3057
        %v5334 = vunpack.c.h.b16 %v3057
        %v5335 = vunpack.c.l.b16 %v3058
        %v5336 = vunpack.c.h.b16 %v3058
        %v5337 = vunpack.c.l.b16 %v3059
        %v5338 = vunpack.c.h.b16 %v3059
        %v5339 = vunpack.c.l.b16 %v3060
        %v5340 = vunpack.c.h.b16 %v3060
        %v5341 = vunpack.c.l.b16 %v3061
        %v5342 = vunpack.c.h.b16 %v3061
        %v5343 = vunpack.c.l.b16 %v3062
        %v5344 = vunpack.c.h.b16 %v3062
        %v5345 = vunpack.c.l.b16 %v3063
        %v5346 = vunpack.c.h.b16 %v3063
        %v5347 = vunpack.c.l.b16 %v3064
        %v5348 = vunpack.c.h.b16 %v3064
        %v5349 = vunpack.c.l.b16 %v3065
        %v5350 = vunpack.c.h.b16 %v3065
        %v5351 = vunpack.c.l.b16 %v3066
        %v5352 = vunpack.c.h.b16 %v3066
        %v5353 = vunpack.c.l.b16 %v3067
        %v5354 = vunpack.c.h.b16 %v3067
        %v5355 = vunpack.c.l.b16 %v3068
        %v5356 = vunpack.c.h.b16 %v3068
        %v5357 = vunpack.c.l.b16 %v3069
        %v5358 = vunpack.c.h.b16 %v3069
        %v5359 = vunpack.c.l.b16 %v3070
        %v5360 = vunpack.c.h.b16 %v3070
        %v5361 = vunpack.c.l.b16 %v3071
        %v5362 = vunpack.c.h.b16 %v3071
        %v5363 = vunpack.c.l.b16 %v3072
        %v5364 = vunpack.c.h.b16 %v3072
        %v5365 = vunpack.c.l.b16 %v3073
        %v5366 = vunpack.c.h.b16 %v3073
        %v5367 = vunpack.c.l.b16 %v3074
        %v5368 = vunpack.c.h.b16 %v3074
        %v5369 = vunpack.c.l.b16 %v3075
        %v5370 = vunpack.c.h.b16 %v3075
        %v5371 = vunpack.c.l.b16 %v3076
        %v5372 = vunpack.c.h.b16 %v3076
        %v5373 = vunpack.c.l.b16 %v3077
        %v5374 = vunpack.c.h.b16 %v3077
        %v5375 = vunpack.c.l.b16 %v3078
        %v5376 = vunpack.c.h.b16 %v3078
        %v5377 = vunpack.c.l.b16 %v3079
        %v5378 = vunpack.c.h.b16 %v3079
        %v5379 = vunpack.c.l.b16 %v3080
        %v5380 = vunpack.c.h.b16 %v3080
        %v5381 = vunpack.c.l.b16 %v3081
        %v5382 = vunpack.c.h.b16 %v3081
        %v5383 = vunpack.c.l.b16 %v3082
        %v5384 = vunpack.c.h.b16 %v3082
        %v5385 = vunpack.c.l.b16 %v3083
        %v5386 = vunpack.c.h.b16 %v3083
        %v5387 = vunpack.c.l.b16 %v3084
        %v5388 = vunpack.c.h.b16 %v3084
        %v5389 = vunpack.c.l.b16 %v3085
        %v5390 = vunpack.c.h.b16 %v3085
        %v5391 = vunpack.c.l.b16 %v3086
        %v5392 = vunpack.c.h.b16 %v3086
        %v5393 = vunpack.c.l.b16 %v3087
        %v5394 = vunpack.c.h.b16 %v3087
        %v5395 = vunpack.c.l.b16 %v3088
        %v5396 = vunpack.c.h.b16 %v3088
        %v5397 = vunpack.c.l.b16 %v3089
        %v5398 = vunpack.c.h.b16 %v3089
        %v5399 = vunpack.c.l.b16 %v3090
        %v5400 = vunpack.c.h.b16 %v3090
        %v5401 = vunpack.c.l.b16 %v3091
        %v5402 = vunpack.c.h.b16 %v3091
        %v5403 = vunpack.c.l.b16 %v3092
        %v5404 = vunpack.c.h.b16 %v3092
        %v5405 = vunpack.c.l.b16 %v3093
        %v5406 = vunpack.c.h.b16 %v3093
        %v5407 = vunpack.c.l.b16 %v3094
        %v5408 = vunpack.c.h.b16 %v3094
        %v5409 = vunpack.c.l.b16 %v3095
        %v5410 = vunpack.c.h.b16 %v3095
        %v5411 = vunpack.c.l.b16 %v3096
        %v5412 = vunpack.c.h.b16 %v3096
        %v5413 = vunpack.c.l.b16 %v3097
        %v5414 = vunpack.c.h.b16 %v3097
        %v5415 = vunpack.c.l.b16 %v3098
        %v5416 = vunpack.c.h.b16 %v3098
        %v5417 = vunpack.c.l.b16 %v3099
        %v5418 = vunpack.c.h.b16 %v3099
        %v5419 = vunpack.c.l.b16 %v3100
        %v5420 = vunpack.c.h.b16 %v3100
        %v5421 = vunpack.c.l.b16 %v3101
        %v5422 = vunpack.c.h.b16 %v3101
        %v5423 = vunpack.c.l.b16 %v3102
        %v5424 = vunpack.c.h.b16 %v3102
        %v5425 = vunpack.c.l.b16 %v3103
        %v5426 = vunpack.c.h.b16 %v3103
        %v5427 = vunpack.c.l.b16 %v3104
        %v5428 = vunpack.c.h.b16 %v3104
        %v5429 = vunpack.c.l.b16 %v3105
        %v5430 = vunpack.c.h.b16 %v3105
        %v5431 = vunpack.c.l.b16 %v3106
        %v5432 = vunpack.c.h.b16 %v3106
        %v5433 = vunpack.c.l.b16 %v3107
        %v5434 = vunpack.c.h.b16 %v3107
        %v5435 = vunpack.c.l.b16 %v3108
        %v5436 = vunpack.c.h.b16 %v3108
        %v5437 = vunpack.c.l.b16 %v3109
        %v5438 = vunpack.c.h.b16 %v3109
        %v5439 = vunpack.c.l.b16 %v3110
        %v5440 = vunpack.c.h.b16 %v3110
        %v5441 = vunpack.c.l.b16 %v3111
        %v5442 = vunpack.c.h.b16 %v3111
        %v5443 = vunpack.c.l.b16 %v3112
        %v5444 = vunpack.c.h.b16 %v3112
        %v5445 = vunpack.c.l.b16 %v3113
        %v5446 = vunpack.c.h.b16 %v3113
        %v5447 = vunpack.c.l.b16 %v3114
        %v5448 = vunpack.c.h.b16 %v3114
        %v5449 = vunpack.c.l.b16 %v3115
        %v5450 = vunpack.c.h.b16 %v3115
        %v5451 = vunpack.c.l.b16 %v3116
        %v5452 = vunpack.c.h.b16 %v3116
        %v5453 = vunpack.c.l.b16 %v3117
        %v5454 = vunpack.c.h.b16 %v3117
        %v5455 = vunpack.c.l.b16 %v3118
        %v5456 = vunpack.c.h.b16 %v3118
        %v5457 = vunpack.c.l.b16 %v3119
        %v5458 = vunpack.c.h.b16 %v3119
        %v5459 = vunpack.c.l.b16 %v3120
        %v5460 = vunpack.c.h.b16 %v3120
        %v5461 = vunpack.c.l.b16 %v3121
        %v5462 = vunpack.c.h.b16 %v3121
        %v5463 = vunpack.c.l.b16 %v3122
        %v5464 = vunpack.c.h.b16 %v3122
        %v5465 = vunpack.c.l.b16 %v3123
        %v5466 = vunpack.c.h.b16 %v3123
        %v5467 = vunpack.c.l.b16 %v3124
        %v5468 = vunpack.c.h.b16 %v3124
        %v5469 = vunpack.c.l.b16 %v3125
        %v5470 = vunpack.c.h.b16 %v3125
        %v5471 = vunpack.c.l.b16 %v3126
        %v5472 = vunpack.c.h.b16 %v3126
        %v5473 = vunpack.c.l.b16 %v3127
        %v5474 = vunpack.c.h.b16 %v3127
        %v5475 = vunpack.c.l.b16 %v3128
        %v5476 = vunpack.c.h.b16 %v3128
        %v5477 = vunpack.c.l.b16 %v3129
        %v5478 = vunpack.c.h.b16 %v3129
        %v5479 = vunpack.c.l.b16 %v3130
        %v5480 = vunpack.c.h.b16 %v3130
        %v5481 = vunpack.c.l.b16 %v3131
        %v5482 = vunpack.c.h.b16 %v3131
        %v5483 = vunpack.c.l.b16 %v3132
        %v5484 = vunpack.c.h.b16 %v3132
        %v5485 = vunpack.c.l.b16 %v3133
        %v5486 = vunpack.c.h.b16 %v3133
        %v5487 = vunpack.c.l.b16 %v3134
        %v5488 = vunpack.c.h.b16 %v3134
        %v5489 = vunpack.c.l.b16 %v3135
        %v5490 = vunpack.c.h.b16 %v3135
        %v5491 = vunpack.c.l.b16 %v3136
        %v5492 = vunpack.c.h.b16 %v3136
        %v5493 = vunpack.c.l.b16 %v3137
        %v5494 = vunpack.c.h.b16 %v3137
        %v5495 = vunpack.c.l.b16 %v3138
        %v5496 = vunpack.c.h.b16 %v3138
        %v5497 = vunpack.c.l.b16 %v3139
        %v5498 = vunpack.c.h.b16 %v3139
        %v5499 = vunpack.c.l.b16 %v3140
        %v5500 = vunpack.c.h.b16 %v3140
        %v5501 = vunpack.c.l.b16 %v3141
        %v5502 = vunpack.c.h.b16 %v3141
        %v5503 = vunpack.c.l.b16 %v3142
        %v5504 = vunpack.c.h.b16 %v3142
        %v5505 = vunpack.c.l.b16 %v3143
        %v5506 = vunpack.c.h.b16 %v3143
        %v5507 = vunpack.c.l.b16 %v3144
        %v5508 = vunpack.c.h.b16 %v3144
        %v5509 = vunpack.c.l.b16 %v3145
        %v5510 = vunpack.c.h.b16 %v3145
        %v5511 = vunpack.c.l.b16 %v3146
        %v5512 = vunpack.c.h.b16 %v3146
        %v5513 = vunpack.c.l.b16 %v3147
        %v5514 = vunpack.c.h.b16 %v3147
        %v5515 = vunpack.c.l.b16 %v3148
        %v5516 = vunpack.c.h.b16 %v3148
        %v5517 = vpack.c.b16 %v3993, %v3981
        %v5518 = vpack.c.b16 %v3994, %v3982
        %v5519 = vpack.c.b16 %v3995, %v3983
        %v5520 = vpack.c.b16 %v3996, %v3984
        %v5521 = vpack.c.b16 %v3997, %v3985
        %v5522 = vpack.c.b16 %v3998, %v3986
        %v5523 = vpack.c.b16 %v3999, %v3987
        %v5524 = vpack.c.b16 %v4000, %v3988
        %v5525 = vpack.c.b16 %v4001, %v3989
        %v5526 = vpack.c.b16 %v4002, %v3990
        %v5527 = vpack.c.b16 %v4003, %v3991
        %v5528 = vpack.c.b16 %v4004, %v3992
        %v5529 = vpack.c.b16 %v4017, %v4005
        %v5530 = vpack.c.b16 %v4018, %v4006
        %v5531 = vpack.c.b16 %v4019, %v4007
        %v5532 = vpack.c.b16 %v4020, %v4008
        %v5533 = vpack.c.b16 %v4021, %v4009
        %v5534 = vpack.c.b16 %v4022, %v4010
        %v5535 = vpack.c.b16 %v4023, %v4011
        %v5536 = vpack.c.b16 %v4024, %v4012
        %v5537 = vpack.c.b16 %v4025, %v4013
        %v5538 = vpack.c.b16 %v4026, %v4014
        %v5539 = vpack.c.b16 %v4027, %v4015
        %v5540 = vpack.c.b16 %v4028, %v4016
        %v5541 = vpack.c.b16 %v4041, %v4029
        %v5542 = vpack.c.b16 %v4042, %v4030
        %v5543 = vpack.c.b16 %v4043, %v4031
        %v5544 = vpack.c.b16 %v4044, %v4032
        %v5545 = vpack.c.b16 %v4045, %v4033
        %v5546 = vpack.c.b16 %v4046, %v4034
        %v5547 = vpack.c.b16 %v4047, %v4035
        %v5548 = vpack.c.b16 %v4048, %v4036
        %v5549 = vpack.c.b16 %v4049, %v4037
        %v5550 = vpack.c.b16 %v4050, %v4038
        %v5551 = vpack.c.b16 %v4051, %v4039
        %v5552 = vpack.c.b16 %v4052, %v4040
        %v5553 = vpack.c.b16 %v4065, %v4053
        %v5554 = vpack.c.b16 %v4066, %v4054
        %v5555 = vpack.c.b16 %v4067, %v4055
        %v5556 = vpack.c.b16 %v4068, %v4056
        %v5557 = vpack.c.b16 %v4069, %v4057
        %v5558 = vpack.c.b16 %v4070, %v4058
        %v5559 = vpack.c.b16 %v4071, %v4059
        %v5560 = vpack.c.b16 %v4072, %v4060
        %v5561 = vpack.c.b16 %v4073, %v4061
        %v5562 = vpack.c.b16 %v4074, %v4062
        %v5563 = vpack.c.b16 %v4075, %v4063
        %v5564 = vpack.c.b16 %v4076, %v4064
        %v5565 = vpack.c.b16 %v4089, %v4077
        %v5566 = vpack.c.b16 %v4090, %v4078
        %v5567 = vpack.c.b16 %v4091, %v4079
        %v5568 = vpack.c.b16 %v4092, %v4080
        %v5569 = vpack.c.b16 %v4093, %v4081
        %v5570 = vpack.c.b16 %v4094, %v4082
        %v5571 = vpack.c.b16 %v4095, %v4083
        %v5572 = vpack.c.b16 %v4096, %v4084
        %v5573 = vpack.c.b16 %v4097, %v4085
        %v5574 = vpack.c.b16 %v4098, %v4086
        %v5575 = vpack.c.b16 %v4099, %v4087
        %v5576 = vpack.c.b16 %v4100, %v4088
        %v5577 = vpack.c.b16 %v4113, %v4101
        %v5578 = vpack.c.b16 %v4114, %v4102
        %v5579 = vpack.c.b16 %v4115, %v4103
        %v5580 = vpack.c.b16 %v4116, %v4104
        %v5581 = vpack.c.b16 %v4117, %v4105
        %v5582 = vpack.c.b16 %v4118, %v4106
        %v5583 = vpack.c.b16 %v4119, %v4107
        %v5584 = vpack.c.b16 %v4120, %v4108
        %v5585 = vpack.c.b16 %v4121, %v4109
        %v5586 = vpack.c.b16 %v4122, %v4110
        %v5587 = vpack.c.b16 %v4123, %v4111
        %v5588 = vpack.c.b16 %v4124, %v4112
        %v5589 = vpack.c.b16 %v4137, %v4125
        %v5590 = vpack.c.b16 %v4138, %v4126
        %v5591 = vpack.c.b16 %v4139, %v4127
        %v5592 = vpack.c.b16 %v4140, %v4128
        %v5593 = vpack.c.b16 %v4141, %v4129
        %v5594 = vpack.c.b16 %v4142, %v4130
        %v5595 = vpack.c.b16 %v4143, %v4131
        %v5596 = vpack.c.b16 %v4144, %v4132
        %v5597 = vpack.c.b16 %v4145, %v4133
        %v5598 = vpack.c.b16 %v4146, %v4134
        %v5599 = vpack.c.b16 %v4147, %v4135
        %v5600 = vpack.c.b16 %v4148, %v4136
        %v5601 = vpack.c.b16 %v4161, %v4149
        %v5602 = vpack.c.b16 %v4162, %v4150
        %v5603 = vpack.c.b16 %v4163, %v4151
        %v5604 = vpack.c.b16 %v4164, %v4152
        %v5605 = vpack.c.b16 %v4165, %v4153
        %v5606 = vpack.c.b16 %v4166, %v4154
        %v5607 = vpack.c.b16 %v4167, %v4155
        %v5608 = vpack.c.b16 %v4168, %v4156
        %v5609 = vpack.c.b16 %v4169, %v4157
        %v5610 = vpack.c.b16 %v4170, %v4158
        %v5611 = vpack.c.b16 %v4171, %v4159
        %v5612 = vpack.c.b16 %v4172, %v4160
        %v5613 = vpack.c.b16 %v4185, %v4173
        %v5614 = vpack.c.b16 %v4186, %v4174
        %v5615 = vpack.c.b16 %v4187, %v4175
        %v5616 = vpack.c.b16 %v4188, %v4176
        %v5617 = vpack.c.b16 %v4189, %v4177
        %v5618 = vpack.c.b16 %v4190, %v4178
        %v5619 = vpack.c.b16 %v4191, %v4179
        %v5620 = vpack.c.b16 %v4192, %v4180
        %v5621 = vpack.c.b16 %v4193, %v4181
        %v5622 = vpack.c.b16 %v4194, %v4182
        %v5623 = vpack.c.b16 %v4195, %v4183
        %v5624 = vpack.c.b16 %v4196, %v4184
        %v5625 = vpack.c.b16 %v4209, %v4197
        %v5626 = vpack.c.b16 %v4210, %v4198
        %v5627 = vpack.c.b16 %v4211, %v4199
        %v5628 = vpack.c.b16 %v4212, %v4200
        %v5629 = vpack.c.b16 %v4213, %v4201
        %v5630 = vpack.c.b16 %v4214, %v4202
        %v5631 = vpack.c.b16 %v4215, %v4203
        %v5632 = vpack.c.b16 %v4216, %v4204
        %v5633 = vpack.c.b16 %v4217, %v4205
        %v5634 = vpack.c.b16 %v4218, %v4206
        %v5635 = vpack.c.b16 %v4219, %v4207
        %v5636 = vpack.c.b16 %v4220, %v4208
        %v5637 = vpack.c.b16 %v4233, %v4221
        %v5638 = vpack.c.b16 %v4234, %v4222
        %v5639 = vpack.c.b16 %v4235, %v4223
        %v5640 = vpack.c.b16 %v4236, %v4224
        %v5641 = vpack.c.b16 %v4237, %v4225
        %v5642 = vpack.c.b16 %v4238, %v4226
        %v5643 = vpack.c.b16 %v4239, %v4227
        %v5644 = vpack.c.b16 %v4240, %v4228
        %v5645 = vpack.c.b16 %v4241, %v4229
        %v5646 = vpack.c.b16 %v4242, %v4230
        %v5647 = vpack.c.b16 %v4243, %v4231
        %v5648 = vpack.c.b16 %v4244, %v4232
        %v5649 = vpack.c.b16 %v4257, %v4245
        %v5650 = vpack.c.b16 %v4258, %v4246
        %v5651 = vpack.c.b16 %v4259, %v4247
        %v5652 = vpack.c.b16 %v4260, %v4248
        %v5653 = vpack.c.b16 %v4261, %v4249
        %v5654 = vpack.c.b16 %v4262, %v4250
        %v5655 = vpack.c.b16 %v4263, %v4251
        %v5656 = vpack.c.b16 %v4264, %v4252
        %v5657 = vpack.c.b16 %v4265, %v4253
        %v5658 = vpack.c.b16 %v4266, %v4254
        %v5659 = vpack.c.b16 %v4267, %v4255
        %v5660 = vpack.c.b16 %v4268, %v4256
        %v5661 = vpack.c.b16 %v4281, %v4269
        %v5662 = vpack.c.b16 %v4282, %v4270
        %v5663 = vpack.c.b16 %v4283, %v4271
        %v5664 = vpack.c.b16 %v4284, %v4272
        %v5665 = vpack.c.b16 %v4285, %v4273
        %v5666 = vpack.c.b16 %v4286, %v4274
        %v5667 = vpack.c.b16 %v4287, %v4275
        %v5668 = vpack.c.b16 %v4288, %v4276
        %v5669 = vpack.c.b16 %v4289, %v4277
        %v5670 = vpack.c.b16 %v4290, %v4278
        %v5671 = vpack.c.b16 %v4291, %v4279
        %v5672 = vpack.c.b16 %v4292, %v4280
        %v5673 = vpack.c.b16 %v4305, %v4293
        %v5674 = vpack.c.b16 %v4306, %v4294
        %v5675 = vpack.c.b16 %v4307, %v4295
        %v5676 = vpack.c.b16 %v4308, %v4296
        %v5677 = vpack.c.b16 %v4309, %v4297
        %v5678 = vpack.c.b16 %v4310, %v4298
        %v5679 = vpack.c.b16 %v4311, %v4299
        %v5680 = vpack.c.b16 %v4312, %v4300
        %v5681 = vpack.c.b16 %v4313, %v4301
        %v5682 = vpack.c.b16 %v4314, %v4302
        %v5683 = vpack.c.b16 %v4315, %v4303
        %v5684 = vpack.c.b16 %v4316, %v4304
        %v5685 = vpack.c.b16 %v4329, %v4317
        %v5686 = vpack.c.b16 %v4330, %v4318
        %v5687 = vpack.c.b16 %v4331, %v4319
        %v5688 = vpack.c.b16 %v4332, %v4320
        %v5689 = vpack.c.b16 %v4333, %v4321
        %v5690 = vpack.c.b16 %v4334, %v4322
        %v5691 = vpack.c.b16 %v4335, %v4323
        %v5692 = vpack.c.b16 %v4336, %v4324
        %v5693 = vpack.c.b16 %v4337, %v4325
        %v5694 = vpack.c.b16 %v4338, %v4326
        %v5695 = vpack.c.b16 %v4339, %v4327
        %v5696 = vpack.c.b16 %v4340, %v4328
        %v5697 = vpack.c.b16 %v4353, %v4341
        %v5698 = vpack.c.b16 %v4354, %v4342
        %v5699 = vpack.c.b16 %v4355, %v4343
        %v5700 = vpack.c.b16 %v4356, %v4344
        %v5701 = vpack.c.b16 %v4357, %v4345
        %v5702 = vpack.c.b16 %v4358, %v4346
        %v5703 = vpack.c.b16 %v4359, %v4347
        %v5704 = vpack.c.b16 %v4360, %v4348
        %v5705 = vpack.c.b16 %v4361, %v4349
        %v5706 = vpack.c.b16 %v4362, %v4350
        %v5707 = vpack.c.b16 %v4363, %v4351
        %v5708 = vpack.c.b16 %v4364, %v4352
        %v5709 = vpack.c.b16 %v4377, %v4365
        %v5710 = vpack.c.b16 %v4378, %v4366
        %v5711 = vpack.c.b16 %v4379, %v4367
        %v5712 = vpack.c.b16 %v4380, %v4368
        %v5713 = vpack.c.b16 %v4381, %v4369
        %v5714 = vpack.c.b16 %v4382, %v4370
        %v5715 = vpack.c.b16 %v4383, %v4371
        %v5716 = vpack.c.b16 %v4384, %v4372
        %v5717 = vpack.c.b16 %v4385, %v4373
        %v5718 = vpack.c.b16 %v4386, %v4374
        %v5719 = vpack.c.b16 %v4387, %v4375
        %v5720 = vpack.c.b16 %v4388, %v4376
        %v5721 = vpack.c.b16 %v4401, %v4389
        %v5722 = vpack.c.b16 %v4402, %v4390
        %v5723 = vpack.c.b16 %v4403, %v4391
        %v5724 = vpack.c.b16 %v4404, %v4392
        %v5725 = vpack.c.b16 %v4405, %v4393
        %v5726 = vpack.c.b16 %v4406, %v4394
        %v5727 = vpack.c.b16 %v4407, %v4395
        %v5728 = vpack.c.b16 %v4408, %v4396
        %v5729 = vpack.c.b16 %v4409, %v4397
        %v5730 = vpack.c.b16 %v4410, %v4398
        %v5731 = vpack.c.b16 %v4411, %v4399
        %v5732 = vpack.c.b16 %v4412, %v4400
        %v5733 = vpack.c.b16 %v4425, %v4413
        %v5734 = vpack.c.b16 %v4426, %v4414
        %v5735 = vpack.c.b16 %v4427, %v4415
        %v5736 = vpack.c.b16 %v4428, %v4416
        %v5737 = vpack.c.b16 %v4429, %v4417
        %v5738 = vpack.c.b16 %v4430, %v4418
        %v5739 = vpack.c.b16 %v4431, %v4419
        %v5740 = vpack.c.b16 %v4432, %v4420
        %v5741 = vpack.c.b16 %v4433, %v4421
        %v5742 = vpack.c.b16 %v4434, %v4422
        %v5743 = vpack.c.b16 %v4435, %v4423
        %v5744 = vpack.c.b16 %v4436, %v4424
        %v5745 = vpack.c.b16 %v4449, %v4437
        %v5746 = vpack.c.b16 %v4450, %v4438
        %v5747 = vpack.c.b16 %v4451, %v4439
        %v5748 = vpack.c.b16 %v4452, %v4440
        %v5749 = vpack.c.b16 %v4453, %v4441
        %v5750 = vpack.c.b16 %v4454, %v4442
        %v5751 = vpack.c.b16 %v4455, %v4443
        %v5752 = vpack.c.b16 %v4456, %v4444
        %v5753 = vpack.c.b16 %v4457, %v4445
        %v5754 = vpack.c.b16 %v4458, %v4446
        %v5755 = vpack.c.b16 %v4459, %v4447
        %v5756 = vpack.c.b16 %v4460, %v4448
        %v5757 = vpack.c.b16 %v4473, %v4461
        %v5758 = vpack.c.b16 %v4474, %v4462
        %v5759 = vpack.c.b16 %v4475, %v4463
        %v5760 = vpack.c.b16 %v4476, %v4464
        %v5761 = vpack.c.b16 %v4477, %v4465
        %v5762 = vpack.c.b16 %v4478, %v4466
        %v5763 = vpack.c.b16 %v4479, %v4467
        %v5764 = vpack.c.b16 %v4480, %v4468
        %v5765 = vpack.c.b16 %v4481, %v4469
        %v5766 = vpack.c.b16 %v4482, %v4470
        %v5767 = vpack.c.b16 %v4483, %v4471
        %v5768 = vpack.c.b16 %v4484, %v4472
        %v5769 = vpack.c.b16 %v4497, %v4485
        %v5770 = vpack.c.b16 %v4498, %v4486
        %v5771 = vpack.c.b16 %v4499, %v4487
        %v5772 = vpack.c.b16 %v4500, %v4488
        %v5773 = vpack.c.b16 %v4501, %v4489
        %v5774 = vpack.c.b16 %v4502, %v4490
        %v5775 = vpack.c.b16 %v4503, %v4491
        %v5776 = vpack.c.b16 %v4504, %v4492
        %v5777 = vpack.c.b16 %v4505, %v4493
        %v5778 = vpack.c.b16 %v4506, %v4494
        %v5779 = vpack.c.b16 %v4507, %v4495
        %v5780 = vpack.c.b16 %v4508, %v4496
        %v5781 = vpack.c.b16 %v4521, %v4509
        %v5782 = vpack.c.b16 %v4522, %v4510
        %v5783 = vpack.c.b16 %v4523, %v4511
        %v5784 = vpack.c.b16 %v4524, %v4512
        %v5785 = vpack.c.b16 %v4525, %v4513
        %v5786 = vpack.c.b16 %v4526, %v4514
        %v5787 = vpack.c.b16 %v4527, %v4515
        %v5788 = vpack.c.b16 %v4528, %v4516
        %v5789 = vpack.c.b16 %v4529, %v4517
        %v5790 = vpack.c.b16 %v4530, %v4518
        %v5791 = vpack.c.b16 %v4531, %v4519
        %v5792 = vpack.c.b16 %v4532, %v4520
        %v5793 = vpack.c.b16 %v4545, %v4533
        %v5794 = vpack.c.b16 %v4546, %v4534
        %v5795 = vpack.c.b16 %v4547, %v4535
        %v5796 = vpack.c.b16 %v4548, %v4536
        %v5797 = vpack.c.b16 %v4549, %v4537
        %v5798 = vpack.c.b16 %v4550, %v4538
        %v5799 = vpack.c.b16 %v4551, %v4539
        %v5800 = vpack.c.b16 %v4552, %v4540
        %v5801 = vpack.c.b16 %v4553, %v4541
        %v5802 = vpack.c.b16 %v4554, %v4542
        %v5803 = vpack.c.b16 %v4555, %v4543
        %v5804 = vpack.c.b16 %v4556, %v4544
        %v5805 = vpack.c.b16 %v4569, %v4557
        %v5806 = vpack.c.b16 %v4570, %v4558
        %v5807 = vpack.c.b16 %v4571, %v4559
        %v5808 = vpack.c.b16 %v4572, %v4560
        %v5809 = vpack.c.b16 %v4573, %v4561
        %v5810 = vpack.c.b16 %v4574, %v4562
        %v5811 = vpack.c.b16 %v4575, %v4563
        %v5812 = vpack.c.b16 %v4576, %v4564
        %v5813 = vpack.c.b16 %v4577, %v4565
        %v5814 = vpack.c.b16 %v4578, %v4566
        %v5815 = vpack.c.b16 %v4579, %v4567
        %v5816 = vpack.c.b16 %v4580, %v4568
        %v5817 = vpack.c.b16 %v4593, %v4581
        %v5818 = vpack.c.b16 %v4594, %v4582
        %v5819 = vpack.c.b16 %v4595, %v4583
        %v5820 = vpack.c.b16 %v4596, %v4584
        %v5821 = vpack.c.b16 %v4597, %v4585
        %v5822 = vpack.c.b16 %v4598, %v4586
        %v5823 = vpack.c.b16 %v4599, %v4587
        %v5824 = vpack.c.b16 %v4600, %v4588
        %v5825 = vpack.c.b16 %v4601, %v4589
        %v5826 = vpack.c.b16 %v4602, %v4590
        %v5827 = vpack.c.b16 %v4603, %v4591
        %v5828 = vpack.c.b16 %v4604, %v4592
        %v5829 = vpack.c.b16 %v4617, %v4605
        %v5830 = vpack.c.b16 %v4618, %v4606
        %v5831 = vpack.c.b16 %v4619, %v4607
        %v5832 = vpack.c.b16 %v4620, %v4608
        %v5833 = vpack.c.b16 %v4621, %v4609
        %v5834 = vpack.c.b16 %v4622, %v4610
        %v5835 = vpack.c.b16 %v4623, %v4611
        %v5836 = vpack.c.b16 %v4624, %v4612
        %v5837 = vpack.c.b16 %v4625, %v4613
        %v5838 = vpack.c.b16 %v4626, %v4614
        %v5839 = vpack.c.b16 %v4627, %v4615
        %v5840 = vpack.c.b16 %v4628, %v4616
        %v5841 = vpack.c.b16 %v4641, %v4629
        %v5842 = vpack.c.b16 %v4642, %v4630
        %v5843 = vpack.c.b16 %v4643, %v4631
        %v5844 = vpack.c.b16 %v4644, %v4632
        %v5845 = vpack.c.b16 %v4645, %v4633
        %v5846 = vpack.c.b16 %v4646, %v4634
        %v5847 = vpack.c.b16 %v4647, %v4635
        %v5848 = vpack.c.b16 %v4648, %v4636
        %v5849 = vpack.c.b16 %v4649, %v4637
        %v5850 = vpack.c.b16 %v4650, %v4638
        %v5851 = vpack.c.b16 %v4651, %v4639
        %v5852 = vpack.c.b16 %v4652, %v4640
        %v5853 = vpack.c.b16 %v4665, %v4653
        %v5854 = vpack.c.b16 %v4666, %v4654
        %v5855 = vpack.c.b16 %v4667, %v4655
        %v5856 = vpack.c.b16 %v4668, %v4656
        %v5857 = vpack.c.b16 %v4669, %v4657
        %v5858 = vpack.c.b16 %v4670, %v4658
        %v5859 = vpack.c.b16 %v4671, %v4659
        %v5860 = vpack.c.b16 %v4672, %v4660
        %v5861 = vpack.c.b16 %v4673, %v4661
        %v5862 = vpack.c.b16 %v4674, %v4662
        %v5863 = vpack.c.b16 %v4675, %v4663
        %v5864 = vpack.c.b16 %v4676, %v4664
        %v5865 = vpack.c.b16 %v4689, %v4677
        %v5866 = vpack.c.b16 %v4690, %v4678
        %v5867 = vpack.c.b16 %v4691, %v4679
        %v5868 = vpack.c.b16 %v4692, %v4680
        %v5869 = vpack.c.b16 %v4693, %v4681
        %v5870 = vpack.c.b16 %v4694, %v4682
        %v5871 = vpack.c.b16 %v4695, %v4683
        %v5872 = vpack.c.b16 %v4696, %v4684
        %v5873 = vpack.c.b16 %v4697, %v4685
        %v5874 = vpack.c.b16 %v4698, %v4686
        %v5875 = vpack.c.b16 %v4699, %v4687
        %v5876 = vpack.c.b16 %v4700, %v4688
        %v5877 = vpack.c.b16 %v4713, %v4701
        %v5878 = vpack.c.b16 %v4714, %v4702
        %v5879 = vpack.c.b16 %v4715, %v4703
        %v5880 = vpack.c.b16 %v4716, %v4704
        %v5881 = vpack.c.b16 %v4717, %v4705
        %v5882 = vpack.c.b16 %v4718, %v4706
        %v5883 = vpack.c.b16 %v4719, %v4707
        %v5884 = vpack.c.b16 %v4720, %v4708
        %v5885 = vpack.c.b16 %v4721, %v4709
        %v5886 = vpack.c.b16 %v4722, %v4710
        %v5887 = vpack.c.b16 %v4723, %v4711
        %v5888 = vpack.c.b16 %v4724, %v4712
        %v5889 = vpack.c.b16 %v4737, %v4725
        %v5890 = vpack.c.b16 %v4738, %v4726
        %v5891 = vpack.c.b16 %v4739, %v4727
        %v5892 = vpack.c.b16 %v4740, %v4728
        %v5893 = vpack.c.b16 %v4741, %v4729
        %v5894 = vpack.c.b16 %v4742, %v4730
        %v5895 = vpack.c.b16 %v4743, %v4731
        %v5896 = vpack.c.b16 %v4744, %v4732
        %v5897 = vpack.c.b16 %v4745, %v4733
        %v5898 = vpack.c.b16 %v4746, %v4734
        %v5899 = vpack.c.b16 %v4747, %v4735
        %v5900 = vpack.c.b16 %v4748, %v4736
        %v5901 = vpack.c.b16 %v4761, %v4749
        %v5902 = vpack.c.b16 %v4762, %v4750
        %v5903 = vpack.c.b16 %v4763, %v4751
        %v5904 = vpack.c.b16 %v4764, %v4752
        %v5905 = vpack.c.b16 %v4765, %v4753
        %v5906 = vpack.c.b16 %v4766, %v4754
        %v5907 = vpack.c.b16 %v4767, %v4755
        %v5908 = vpack.c.b16 %v4768, %v4756
        %v5909 = vpack.c.b16 %v4769, %v4757
        %v5910 = vpack.c.b16 %v4770, %v4758
        %v5911 = vpack.c.b16 %v4771, %v4759
        %v5912 = vpack.c.b16 %v4772, %v4760
        %v5913 = vpack.c.b16 %v4785, %v4773
        %v5914 = vpack.c.b16 %v4786, %v4774
        %v5915 = vpack.c.b16 %v4787, %v4775
        %v5916 = vpack.c.b16 %v4788, %v4776
        %v5917 = vpack.c.b16 %v4789, %v4777
        %v5918 = vpack.c.b16 %v4790, %v4778
        %v5919 = vpack.c.b16 %v4791, %v4779
        %v5920 = vpack.c.b16 %v4792, %v4780
        %v5921 = vpack.c.b16 %v4793, %v4781
        %v5922 = vpack.c.b16 %v4794, %v4782
        %v5923 = vpack.c.b16 %v4795, %v4783
        %v5924 = vpack.c.b16 %v4796, %v4784
        %v5925 = vpack.c.b16 %v4809, %v4797
        %v5926 = vpack.c.b16 %v4810, %v4798
        %v5927 = vpack.c.b16 %v4811, %v4799
        %v5928 = vpack.c.b16 %v4812, %v4800
        %v5929 = vpack.c.b16 %v4813, %v4801
        %v5930 = vpack.c.b16 %v4814, %v4802
        %v5931 = vpack.c.b16 %v4815, %v4803
        %v5932 = vpack.c.b16 %v4816, %v4804
        %v5933 = vpack.c.b16 %v4817, %v4805
        %v5934 = vpack.c.b16 %v4818, %v4806
        %v5935 = vpack.c.b16 %v4819, %v4807
        %v5936 = vpack.c.b16 %v4820, %v4808
        %v5937 = vpack.c.b16 %v4833, %v4821
        %v5938 = vpack.c.b16 %v4834, %v4822
        %v5939 = vpack.c.b16 %v4835, %v4823
        %v5940 = vpack.c.b16 %v4836, %v4824
        %v5941 = vpack.c.b16 %v4837, %v4825
        %v5942 = vpack.c.b16 %v4838, %v4826
        %v5943 = vpack.c.b16 %v4839, %v4827
        %v5944 = vpack.c.b16 %v4840, %v4828
        %v5945 = vpack.c.b16 %v4841, %v4829
        %v5946 = vpack.c.b16 %v4842, %v4830
        %v5947 = vpack.c.b16 %v4843, %v4831
        %v5948 = vpack.c.b16 %v4844, %v4832
        %v5949 = vpack.c.b16 %v4857, %v4845
        %v5950 = vpack.c.b16 %v4858, %v4846
        %v5951 = vpack.c.b16 %v4859, %v4847
        %v5952 = vpack.c.b16 %v4860, %v4848
        %v5953 = vpack.c.b16 %v4861, %v4849
        %v5954 = vpack.c.b16 %v4862, %v4850
        %v5955 = vpack.c.b16 %v4863, %v4851
        %v5956 = vpack.c.b16 %v4864, %v4852
        %v5957 = vpack.c.b16 %v4865, %v4853
        %v5958 = vpack.c.b16 %v4866, %v4854
        %v5959 = vpack.c.b16 %v4867, %v4855
        %v5960 = vpack.c.b16 %v4868, %v4856
        %v5961 = vpack.c.b16 %v4881, %v4869
        %v5962 = vpack.c.b16 %v4882, %v4870
        %v5963 = vpack.c.b16 %v4883, %v4871
        %v5964 = vpack.c.b16 %v4884, %v4872
        %v5965 = vpack.c.b16 %v4885, %v4873
        %v5966 = vpack.c.b16 %v4886, %v4874
        %v5967 = vpack.c.b16 %v4887, %v4875
        %v5968 = vpack.c.b16 %v4888, %v4876
        %v5969 = vpack.c.b16 %v4889, %v4877
        %v5970 = vpack.c.b16 %v4890, %v4878
        %v5971 = vpack.c.b16 %v4891, %v4879
        %v5972 = vpack.c.b16 %v4892, %v4880
        %v5973 = vpack.c.b16 %v4905, %v4893
        %v5974 = vpack.c.b16 %v4906, %v4894
        %v5975 = vpack.c.b16 %v4907, %v4895
        %v5976 = vpack.c.b16 %v4908, %v4896
        %v5977 = vpack.c.b16 %v4909, %v4897
        %v5978 = vpack.c.b16 %v4910, %v4898
        %v5979 = vpack.c.b16 %v4911, %v4899
        %v5980 = vpack.c.b16 %v4912, %v4900
        %v5981 = vpack.c.b16 %v4913, %v4901
        %v5982 = vpack.c.b16 %v4914, %v4902
        %v5983 = vpack.c.b16 %v4915, %v4903
        %v5984 = vpack.c.b16 %v4916, %v4904
        %v5985 = vpack.c.b16 %v4929, %v4917
        %v5986 = vpack.c.b16 %v4930, %v4918
        %v5987 = vpack.c.b16 %v4931, %v4919
        %v5988 = vpack.c.b16 %v4932, %v4920
        %v5989 = vpack.c.b16 %v4933, %v4921
        %v5990 = vpack.c.b16 %v4934, %v4922
        %v5991 = vpack.c.b16 %v4935, %v4923
        %v5992 = vpack.c.b16 %v4936, %v4924
        %v5993 = vpack.c.b16 %v4937, %v4925
        %v5994 = vpack.c.b16 %v4938, %v4926
        %v5995 = vpack.c.b16 %v4939, %v4927
        %v5996 = vpack.c.b16 %v4940, %v4928
        %v5997 = vpack.c.b16 %v4953, %v4941
        %v5998 = vpack.c.b16 %v4954, %v4942
        %v5999 = vpack.c.b16 %v4955, %v4943
        %v6000 = vpack.c.b16 %v4956, %v4944
        %v6001 = vpack.c.b16 %v4957, %v4945
        %v6002 = vpack.c.b16 %v4958, %v4946
        %v6003 = vpack.c.b16 %v4959, %v4947
        %v6004 = vpack.c.b16 %v4960, %v4948
        %v6005 = vpack.c.b16 %v4961, %v4949
        %v6006 = vpack.c.b16 %v4962, %v4950
        %v6007 = vpack.c.b16 %v4963, %v4951
        %v6008 = vpack.c.b16 %v4964, %v4952
        %v6009 = vpack.c.b16 %v4977, %v4965
        %v6010 = vpack.c.b16 %v4978, %v4966
        %v6011 = vpack.c.b16 %v4979, %v4967
        %v6012 = vpack.c.b16 %v4980, %v4968
        %v6013 = vpack.c.b16 %v4981, %v4969
        %v6014 = vpack.c.b16 %v4982, %v4970
        %v6015 = vpack.c.b16 %v4983, %v4971
        %v6016 = vpack.c.b16 %v4984, %v4972
        %v6017 = vpack.c.b16 %v4985, %v4973
        %v6018 = vpack.c.b16 %v4986, %v4974
        %v6019 = vpack.c.b16 %v4987, %v4975
        %v6020 = vpack.c.b16 %v4988, %v4976
        %v6021 = vpack.c.b16 %v5001, %v4989
        %v6022 = vpack.c.b16 %v5002, %v4990
        %v6023 = vpack.c.b16 %v5003, %v4991
        %v6024 = vpack.c.b16 %v5004, %v4992
        %v6025 = vpack.c.b16 %v5005, %v4993
        %v6026 = vpack.c.b16 %v5006, %v4994
        %v6027 = vpack.c.b16 %v5007, %v4995
        %v6028 = vpack.c.b16 %v5008, %v4996
        %v6029 = vpack.c.b16 %v5009, %v4997
        %v6030 = vpack.c.b16 %v5010, %v4998
        %v6031 = vpack.c.b16 %v5011, %v4999
        %v6032 = vpack.c.b16 %v5012, %v5000
        %v6033 = vpack.c.b16 %v5025, %v5013
        %v6034 = vpack.c.b16 %v5026, %v5014
        %v6035 = vpack.c.b16 %v5027, %v5015
        %v6036 = vpack.c.b16 %v5028, %v5016
        %v6037 = vpack.c.b16 %v5029, %v5017
        %v6038 = vpack.c.b16 %v5030, %v5018
        %v6039 = vpack.c.b16 %v5031, %v5019
        %v6040 = vpack.c.b16 %v5032, %v5020
        %v6041 = vpack.c.b16 %v5033, %v5021
        %v6042 = vpack.c.b16 %v5034, %v5022
        %v6043 = vpack.c.b16 %v5035, %v5023
        %v6044 = vpack.c.b16 %v5036, %v5024
        %v6045 = vpack.c.b16 %v5049, %v5037
        %v6046 = vpack.c.b16 %v5050, %v5038
        %v6047 = vpack.c.b16 %v5051, %v5039
        %v6048 = vpack.c.b16 %v5052, %v5040
        %v6049 = vpack.c.b16 %v5053, %v5041
        %v6050 = vpack.c.b16 %v5054, %v5042
        %v6051 = vpack.c.b16 %v5055, %v5043
        %v6052 = vpack.c.b16 %v5056, %v5044
        %v6053 = vpack.c.b16 %v5057, %v5045
        %v6054 = vpack.c.b16 %v5058, %v5046
        %v6055 = vpack.c.b16 %v5059, %v5047
        %v6056 = vpack.c.b16 %v5060, %v5048
        %v6057 = vpack.c.b16 %v5073, %v5061
        %v6058 = vpack.c.b16 %v5074, %v5062
        %v6059 = vpack.c.b16 %v5075, %v5063
        %v6060 = vpack.c.b16 %v5076, %v5064
        %v6061 = vpack.c.b16 %v5077, %v5065
        %v6062 = vpack.c.b16 %v5078, %v5066
        %v6063 = vpack.c.b16 %v5079, %v5067
        %v6064 = vpack.c.b16 %v5080, %v5068
        %v6065 = vpack.c.b16 %v5081, %v5069
        %v6066 = vpack.c.b16 %v5082, %v5070
        %v6067 = vpack.c.b16 %v5083, %v5071
        %v6068 = vpack.c.b16 %v5084, %v5072
        %v6069 = vpack.c.b16 %v5097, %v5085
        %v6070 = vpack.c.b16 %v5098, %v5086
        %v6071 = vpack.c.b16 %v5099, %v5087
        %v6072 = vpack.c.b16 %v5100, %v5088
        %v6073 = vpack.c.b16 %v5101, %v5089
        %v6074 = vpack.c.b16 %v5102, %v5090
        %v6075 = vpack.c.b16 %v5103, %v5091
        %v6076 = vpack.c.b16 %v5104, %v5092
        %v6077 = vpack.c.b16 %v5105, %v5093
        %v6078 = vpack.c.b16 %v5106, %v5094
        %v6079 = vpack.c.b16 %v5107, %v5095
        %v6080 = vpack.c.b16 %v5108, %v5096
        %v6081 = vpack.c.b16 %v5121, %v5109
        %v6082 = vpack.c.b16 %v5122, %v5110
        %v6083 = vpack.c.b16 %v5123, %v5111
        %v6084 = vpack.c.b16 %v5124, %v5112
        %v6085 = vpack.c.b16 %v5125, %v5113
        %v6086 = vpack.c.b16 %v5126, %v5114
        %v6087 = vpack.c.b16 %v5127, %v5115
        %v6088 = vpack.c.b16 %v5128, %v5116
        %v6089 = vpack.c.b16 %v5129, %v5117
        %v6090 = vpack.c.b16 %v5130, %v5118
        %v6091 = vpack.c.b16 %v5131, %v5119
        %v6092 = vpack.c.b16 %v5132, %v5120
        %v6093 = vpack.c.b16 %v5145, %v5133
        %v6094 = vpack.c.b16 %v5146, %v5134
        %v6095 = vpack.c.b16 %v5147, %v5135
        %v6096 = vpack.c.b16 %v5148, %v5136
        %v6097 = vpack.c.b16 %v5149, %v5137
        %v6098 = vpack.c.b16 %v5150, %v5138
        %v6099 = vpack.c.b16 %v5151, %v5139
        %v6100 = vpack.c.b16 %v5152, %v5140
        %v6101 = vpack.c.b16 %v5153, %v5141
        %v6102 = vpack.c.b16 %v5154, %v5142
        %v6103 = vpack.c.b16 %v5155, %v5143
        %v6104 = vpack.c.b16 %v5156, %v5144
        %v6105 = vpack.c.b16 %v5169, %v5157
        %v6106 = vpack.c.b16 %v5170, %v5158
        %v6107 = vpack.c.b16 %v5171, %v5159
        %v6108 = vpack.c.b16 %v5172, %v5160
        %v6109 = vpack.c.b16 %v5173, %v5161
        %v6110 = vpack.c.b16 %v5174, %v5162
        %v6111 = vpack.c.b16 %v5175, %v5163
        %v6112 = vpack.c.b16 %v5176, %v5164
        %v6113 = vpack.c.b16 %v5177, %v5165
        %v6114 = vpack.c.b16 %v5178, %v5166
        %v6115 = vpack.c.b16 %v5179, %v5167
        %v6116 = vpack.c.b16 %v5180, %v5168
        %v6117 = vpack.c.b16 %v5193, %v5181
        %v6118 = vpack.c.b16 %v5194, %v5182
        %v6119 = vpack.c.b16 %v5195, %v5183
        %v6120 = vpack.c.b16 %v5196, %v5184
        %v6121 = vpack.c.b16 %v5197, %v5185
        %v6122 = vpack.c.b16 %v5198, %v5186
        %v6123 = vpack.c.b16 %v5199, %v5187
        %v6124 = vpack.c.b16 %v5200, %v5188
        %v6125 = vpack.c.b16 %v5201, %v5189
        %v6126 = vpack.c.b16 %v5202, %v5190
        %v6127 = vpack.c.b16 %v5203, %v5191
        %v6128 = vpack.c.b16 %v5204, %v5192
        %v6129 = vpack.c.b16 %v5217, %v5205
        %v6130 = vpack.c.b16 %v5218, %v5206
        %v6131 = vpack.c.b16 %v5219, %v5207
        %v6132 = vpack.c.b16 %v5220, %v5208
        %v6133 = vpack.c.b16 %v5221, %v5209
        %v6134 = vpack.c.b16 %v5222, %v5210
        %v6135 = vpack.c.b16 %v5223, %v5211
        %v6136 = vpack.c.b16 %v5224, %v5212
        %v6137 = vpack.c.b16 %v5225, %v5213
        %v6138 = vpack.c.b16 %v5226, %v5214
        %v6139 = vpack.c.b16 %v5227, %v5215
        %v6140 = vpack.c.b16 %v5228, %v5216
        %v6141 = vpack.c.b16 %v5241, %v5229
        %v6142 = vpack.c.b16 %v5242, %v5230
        %v6143 = vpack.c.b16 %v5243, %v5231
        %v6144 = vpack.c.b16 %v5244, %v5232
        %v6145 = vpack.c.b16 %v5245, %v5233
        %v6146 = vpack.c.b16 %v5246, %v5234
        %v6147 = vpack.c.b16 %v5247, %v5235
        %v6148 = vpack.c.b16 %v5248, %v5236
        %v6149 = vpack.c.b16 %v5249, %v5237
        %v6150 = vpack.c.b16 %v5250, %v5238
        %v6151 = vpack.c.b16 %v5251, %v5239
        %v6152 = vpack.c.b16 %v5252, %v5240
        %v6153 = vpack.c.b16 %v5265, %v5253
        %v6154 = vpack.c.b16 %v5266, %v5254
        %v6155 = vpack.c.b16 %v5267, %v5255
        %v6156 = vpack.c.b16 %v5268, %v5256
        %v6157 = vpack.c.b16 %v5269, %v5257
        %v6158 = vpack.c.b16 %v5270, %v5258
        %v6159 = vpack.c.b16 %v5271, %v5259
        %v6160 = vpack.c.b16 %v5272, %v5260
        %v6161 = vpack.c.b16 %v5273, %v5261
        %v6162 = vpack.c.b16 %v5274, %v5262
        %v6163 = vpack.c.b16 %v5275, %v5263
        %v6164 = vpack.c.b16 %v5276, %v5264
        %v6165 = vpack.c.b16 %v5289, %v5277
        %v6166 = vpack.c.b16 %v5290, %v5278
        %v6167 = vpack.c.b16 %v5291, %v5279
        %v6168 = vpack.c.b16 %v5292, %v5280
        %v6169 = vpack.c.b16 %v5293, %v5281
        %v6170 = vpack.c.b16 %v5294, %v5282
        %v6171 = vpack.c.b16 %v5295, %v5283
        %v6172 = vpack.c.b16 %v5296, %v5284
        %v6173 = vpack.c.b16 %v5297, %v5285
        %v6174 = vpack.c.b16 %v5298, %v5286
        %v6175 = vpack.c.b16 %v5299, %v5287
        %v6176 = vpack.c.b16 %v5300, %v5288
        %v6177 = vpack.c.b16 %v5313, %v5301
        %v6178 = vpack.c.b16 %v5314, %v5302
        %v6179 = vpack.c.b16 %v5315, %v5303
        %v6180 = vpack.c.b16 %v5316, %v5304
        %v6181 = vpack.c.b16 %v5317, %v5305
        %v6182 = vpack.c.b16 %v5318, %v5306
        %v6183 = vpack.c.b16 %v5319, %v5307
        %v6184 = vpack.c.b16 %v5320, %v5308
        %v6185 = vpack.c.b16 %v5321, %v5309
        %v6186 = vpack.c.b16 %v5322, %v5310
        %v6187 = vpack.c.b16 %v5323, %v5311
        %v6188 = vpack.c.b16 %v5324, %v5312
        %v6189 = vpack.c.b16 %v5337, %v5325
        %v6190 = vpack.c.b16 %v5338, %v5326
        %v6191 = vpack.c.b16 %v5339, %v5327
        %v6192 = vpack.c.b16 %v5340, %v5328
        %v6193 = vpack.c.b16 %v5341, %v5329
        %v6194 = vpack.c.b16 %v5342, %v5330
        %v6195 = vpack.c.b16 %v5343, %v5331
        %v6196 = vpack.c.b16 %v5344, %v5332
        %v6197 = vpack.c.b16 %v5345, %v5333
        %v6198 = vpack.c.b16 %v5346, %v5334
        %v6199 = vpack.c.b16 %v5347, %v5335
        %v6200 = vpack.c.b16 %v5348, %v5336
        %v6201 = vpack.c.b16 %v5361, %v5349
        %v6202 = vpack.c.b16 %v5362, %v5350
        %v6203 = vpack.c.b16 %v5363, %v5351
        %v6204 = vpack.c.b16 %v5364, %v5352
        %v6205 = vpack.c.b16 %v5365, %v5353
        %v6206 = vpack.c.b16 %v5366, %v5354
        %v6207 = vpack.c.b16 %v5367, %v5355
        %v6208 = vpack.c.b16 %v5368, %v5356
        %v6209 = vpack.c.b16 %v5369, %v5357
        %v6210 = vpack.c.b16 %v5370, %v5358
        %v6211 = vpack.c.b16 %v5371, %v5359
        %v6212 = vpack.c.b16 %v5372, %v5360
        %v6213 = vpack.c.b16 %v5385, %v5373
        %v6214 = vpack.c.b16 %v5386, %v5374
        %v6215 = vpack.c.b16 %v5387, %v5375
        %v6216 = vpack.c.b16 %v5388, %v5376
        %v6217 = vpack.c.b16 %v5389, %v5377
        %v6218 = vpack.c.b16 %v5390, %v5378
        %v6219 = vpack.c.b16 %v5391, %v5379
        %v6220 = vpack.c.b16 %v5392, %v5380
        %v6221 = vpack.c.b16 %v5393, %v5381
        %v6222 = vpack.c.b16 %v5394, %v5382
        %v6223 = vpack.c.b16 %v5395, %v5383
        %v6224 = vpack.c.b16 %v5396, %v5384
        %v6225 = vpack.c.b16 %v5409, %v5397
        %v6226 = vpack.c.b16 %v5410, %v5398
        %v6227 = vpack.c.b16 %v5411, %v5399
        %v6228 = vpack.c.b16 %v5412, %v5400
        %v6229 = vpack.c.b16 %v5413, %v5401
        %v6230 = vpack.c.b16 %v5414, %v5402
        %v6231 = vpack.c.b16 %v5415, %v5403
        %v6232 = vpack.c.b16 %v5416, %v5404
        %v6233 = vpack.c.b16 %v5417, %v5405
        %v6234 = vpack.c.b16 %v5418, %v5406
        %v6235 = vpack.c.b16 %v5419, %v5407
        %v6236 = vpack.c.b16 %v5420, %v5408
        %v6237 = vpack.c.b16 %v5433, %v5421
        %v6238 = vpack.c.b16 %v5434, %v5422
        %v6239 = vpack.c.b16 %v5435, %v5423
        %v6240 = vpack.c.b16 %v5436, %v5424
        %v6241 = vpack.c.b16 %v5437, %v5425
        %v6242 = vpack.c.b16 %v5438, %v5426
        %v6243 = vpack.c.b16 %v5439, %v5427
        %v6244 = vpack.c.b16 %v5440, %v5428
        %v6245 = vpack.c.b16 %v5441, %v5429
        %v6246 = vpack.c.b16 %v5442, %v5430
        %v6247 = vpack.c.b16 %v5443, %v5431
        %v6248 = vpack.c.b16 %v5444, %v5432
        %v6249 = vpack.c.b16 %v5457, %v5445
        %v6250 = vpack.c.b16 %v5458, %v5446
        %v6251 = vpack.c.b16 %v5459, %v5447
        %v6252 = vpack.c.b16 %v5460, %v5448
        %v6253 = vpack.c.b16 %v5461, %v5449
        %v6254 = vpack.c.b16 %v5462, %v5450
        %v6255 = vpack.c.b16 %v5463, %v5451
        %v6256 = vpack.c.b16 %v5464, %v5452
        %v6257 = vpack.c.b16 %v5465, %v5453
        %v6258 = vpack.c.b16 %v5466, %v5454
        %v6259 = vpack.c.b16 %v5467, %v5455
        %v6260 = vpack.c.b16 %v5468, %v5456
        %v6261 = vpack.c.b16 %v5481, %v5469
        %v6262 = vpack.c.b16 %v5482, %v5470
        %v6263 = vpack.c.b16 %v5483, %v5471
        %v6264 = vpack.c.b16 %v5484, %v5472
        %v6265 = vpack.c.b16 %v5485, %v5473
        %v6266 = vpack.c.b16 %v5486, %v5474
        %v6267 = vpack.c.b16 %v5487, %v5475
        %v6268 = vpack.c.b16 %v5488, %v5476
        %v6269 = vpack.c.b16 %v5489, %v5477
        %v6270 = vpack.c.b16 %v5490, %v5478
        %v6271 = vpack.c.b16 %v5491, %v5479
        %v6272 = vpack.c.b16 %v5492, %v5480
        %v6273 = vpack.c.b16 %v5505, %v5493
        %v6274 = vpack.c.b16 %v5506, %v5494
        %v6275 = vpack.c.b16 %v5507, %v5495
        %v6276 = vpack.c.b16 %v5508, %v5496
        %v6277 = vpack.c.b16 %v5509, %v5497
        %v6278 = vpack.c.b16 %v5510, %v5498
        %v6279 = vpack.c.b16 %v5511, %v5499
        %v6280 = vpack.c.b16 %v5512, %v5500
        %v6281 = vpack.c.b16 %v5513, %v5501
        %v6282 = vpack.c.b16 %v5514, %v5502
        %v6283 = vpack.c.b16 %v5515, %v5503
        %v6284 = vpack.c.b16 %v5516, %v5504
        %7053 = vmatprep.subr.bf16.mxu0 %v5518
        %7054 = vmatpush1.bf16.msra.mxu0 %v5517
        %7055 = vmatprep.subr.bf16.mxu0 %v5530
        %7056 = vmatpush1.bf16.msra.mxu0 %v5529
        %7057 = vmatprep.subr.bf16.mxu0 %v5542
        %7058 = vmatpush1.bf16.msra.mxu0 %v5541
        %7059 = vmatprep.subr.bf16.mxu0 %v5554
        %7060 = vmatpush1.bf16.msra.mxu0 %v5553
        %7061 = vmatprep.subr.bf16.mxu0 %v5566
        %7062 = vmatpush1.bf16.msra.mxu0 %v5565
        %7063 = vmatprep.subr.bf16.mxu0 %v5578
        %7064 = vmatpush1.bf16.msra.mxu0 %v5577
        %7065 = vmatprep.subr.bf16.mxu0 %v5590
        %7066 = vmatpush1.bf16.msra.mxu0 %v5589
        %7067 = vmatprep.subr.bf16.mxu0 %v5602
        %7068 = vmatpush1.bf16.msra.mxu0 %v5601
        %7069 = vmatprep.subr.bf16.mxu0 %v5614
        %7070 = vmatpush1.bf16.msra.mxu0 %v5613
        %7071 = vmatprep.subr.bf16.mxu0 %v5626
        %7072 = vmatpush1.bf16.msra.mxu0 %v5625
        %7073 = vmatprep.subr.bf16.mxu0 %v5638
        %7074 = vmatpush1.bf16.msra.mxu0 %v5637
        %7075 = vmatprep.subr.bf16.mxu0 %v5650
        %7076 = vmatpush1.bf16.msra.mxu0 %v5649
        %7077 = vmatprep.subr.bf16.mxu0 %v5662
        %7078 = vmatpush1.bf16.msra.mxu0 %v5661
        %7079 = vmatprep.subr.bf16.mxu0 %v5674
        %7080 = vmatpush1.bf16.msra.mxu0 %v5673
        %7081 = vmatprep.subr.bf16.mxu0 %v5686
        %7082 = vmatpush1.bf16.msra.mxu0 %v5685
        %7083 = vmatprep.subr.bf16.mxu0 %v5698
        %7084 = vmatpush1.bf16.msra.mxu0 %v5697
        %7085 = vmatprep.mubr.bf16.mxu0 %v2374
        %7086 = vmatmul.mubr.bf16.gmra.mrb[0].mxu0 %v2373
        %v7087 = vpop.f32.mrb[0].mxu0
        %v7088 = vadd.f32 %v3156, %v7087
        %v7089 = vpop.f32.mrb[0].mxu0
        %v7090 = vadd.f32 %v3160, %v7089
        %v7091 = vpop.f32.mrb[0].mxu0
        %v7092 = vpop.f32.mrb[0].mxu0
        %7093 = vdwg.mxu0
        %7094 = vmatprep.subr.bf16.mxu0 %v5710
        %7095 = vmatpush1.bf16.msra.mxu0 %v5709
        %7096 = vmatprep.subr.bf16.mxu0 %v5722
        %7097 = vmatpush1.bf16.msra.mxu0 %v5721
        %7098 = vmatprep.subr.bf16.mxu0 %v5734
        %7099 = vmatpush1.bf16.msra.mxu0 %v5733
        %7100 = vmatprep.subr.bf16.mxu0 %v5746
        %7101 = vmatpush1.bf16.msra.mxu0 %v5745
        %7102 = vmatprep.subr.bf16.mxu0 %v5758
        %7103 = vmatpush1.bf16.msra.mxu0 %v5757
        %7104 = vmatprep.subr.bf16.mxu0 %v5770
        %7105 = vmatpush1.bf16.msra.mxu0 %v5769
        %7106 = vmatprep.subr.bf16.mxu0 %v5782
        %7107 = vmatpush1.bf16.msra.mxu0 %v5781
        %7108 = vmatprep.subr.bf16.mxu0 %v5794
        %7109 = vmatpush1.bf16.msra.mxu0 %v5793
        %7110 = vmatprep.subr.bf16.mxu0 %v5806
        %7111 = vmatpush1.bf16.msra.mxu0 %v5805
        %7112 = vmatprep.subr.bf16.mxu0 %v5818
        %7113 = vmatpush1.bf16.msra.mxu0 %v5817
        %7114 = vmatprep.subr.bf16.mxu0 %v5830
        %7115 = vmatpush1.bf16.msra.mxu0 %v5829
        %7116 = vmatprep.subr.bf16.mxu0 %v5842
        %7117 = vmatpush1.bf16.msra.mxu0 %v5841
        %7118 = vmatprep.subr.bf16.mxu0 %v5854
        %7119 = vmatpush1.bf16.msra.mxu0 %v5853
        %7120 = vmatprep.subr.bf16.mxu0 %v5866
        %7121 = vmatpush1.bf16.msra.mxu0 %v5865
        %7122 = vmatprep.subr.bf16.mxu0 %v5878
        %7123 = vmatpush1.bf16.msra.mxu0 %v5877
        %7124 = vmatprep.subr.bf16.mxu0 %v5890
        %7125 = vmatpush1.bf16.msra.mxu0 %v5889
        %7126 = vmatprep.mubr.bf16.mxu0 %v2376
        %7127 = vmatmul.mubr.bf16.gmra.mrb[0].mxu0 %v2375
        %v7128 = vpop.f32.mrb[0].mxu0
        %v7129 = vadd.f32 %v7088, %v7128
        %v7130 = vpop.f32.mrb[0].mxu0
        %v7131 = vadd.f32 %v7090, %v7130
        %v7132 = vpop.f32.mrb[0].mxu0
        %v7133 = vpop.f32.mrb[0].mxu0
        %7134 = vdwg.mxu0
        %7135 = vmatprep.subr.bf16.mxu0 %v5902
        %7136 = vmatpush1.bf16.msra.mxu0 %v5901
        %7137 = vmatprep.subr.bf16.mxu0 %v5914
        %7138 = vmatpush1.bf16.msra.mxu0 %v5913
        %7139 = vmatprep.subr.bf16.mxu0 %v5926
        %7140 = vmatpush1.bf16.msra.mxu0 %v5925
        %7141 = vmatprep.subr.bf16.mxu0 %v5938
        %7142 = vmatpush1.bf16.msra.mxu0 %v5937
        %7143 = vmatprep.subr.bf16.mxu0 %v5950
        %7144 = vmatpush1.bf16.msra.mxu0 %v5949
        %7145 = vmatprep.subr.bf16.mxu0 %v5962
        %7146 = vmatpush1.bf16.msra.mxu0 %v5961
        %7147 = vmatprep.subr.bf16.mxu0 %v5974
        %7148 = vmatpush1.bf16.msra.mxu0 %v5973
        %7149 = vmatprep.subr.bf16.mxu0 %v5986
        %7150 = vmatpush1.bf16.msra.mxu0 %v5985
        %7151 = vmatprep.subr.bf16.mxu0 %v5998
        %7152 = vmatpush1.bf16.msra.mxu0 %v5997
        %7153 = vmatprep.subr.bf16.mxu0 %v6010
        %7154 = vmatpush1.bf16.msra.mxu0 %v6009
        %7155 = vmatprep.subr.bf16.mxu0 %v6022
        %7156 = vmatpush1.bf16.msra.mxu0 %v6021
        %7157 = vmatprep.subr.bf16.mxu0 %v6034
        %7158 = vmatpush1.bf16.msra.mxu0 %v6033
        %7159 = vmatprep.subr.bf16.mxu0 %v6046
        %7160 = vmatpush1.bf16.msra.mxu0 %v6045
        %7161 = vmatprep.subr.bf16.mxu0 %v6058
        %7162 = vmatpush1.bf16.msra.mxu0 %v6057
        %7163 = vmatprep.subr.bf16.mxu0 %v6070
        %7164 = vmatpush1.bf16.msra.mxu0 %v6069
        %7165 = vmatprep.subr.bf16.mxu0 %v6082
        %7166 = vmatpush1.bf16.msra.mxu0 %v6081
        %7167 = vmatprep.mubr.bf16.mxu0 %v2378
        %7168 = vmatmul.mubr.bf16.gmra.mrb[0].mxu0 %v2377
        %v7169 = vpop.f32.mrb[0].mxu0
        %v7170 = vadd.f32 %v7129, %v7169
        %v7171 = vpop.f32.mrb[0].mxu0
        %v7172 = vadd.f32 %v7131, %v7171
        %v7173 = vpop.f32.mrb[0].mxu0
        %v7174 = vpop.f32.mrb[0].mxu0
        %7175 = vdwg.mxu0
        %7176 = vmatprep.subr.bf16.mxu0 %v6094
        %7177 = vmatpush1.bf16.msra.mxu0 %v6093
        %7178 = vmatprep.subr.bf16.mxu0 %v6106
        %7179 = vmatpush1.bf16.msra.mxu0 %v6105
        %7180 = vmatprep.subr.bf16.mxu0 %v6118
        %7181 = vmatpush1.bf16.msra.mxu0 %v6117
        %7182 = vmatprep.subr.bf16.mxu0 %v6130
        %7183 = vmatpush1.bf16.msra.mxu0 %v6129
        %7184 = vmatprep.subr.bf16.mxu0 %v6142
        %7185 = vmatpush1.bf16.msra.mxu0 %v6141
        %7186 = vmatprep.subr.bf16.mxu0 %v6154
        %7187 = vmatpush1.bf16.msra.mxu0 %v6153
        %7188 = vmatprep.subr.bf16.mxu0 %v6166
        %7189 = vmatpush1.bf16.msra.mxu0 %v6165
        %7190 = vmatprep.subr.bf16.mxu0 %v6178
        %7191 = vmatpush1.bf16.msra.mxu0 %v6177
        %7192 = vmatprep.subr.bf16.mxu0 %v6190
        %7193 = vmatpush1.bf16.msra.mxu0 %v6189
        %7194 = vmatprep.subr.bf16.mxu0 %v6202
        %7195 = vmatpush1.bf16.msra.mxu0 %v6201
        %7196 = vmatprep.subr.bf16.mxu0 %v6214
        %7197 = vmatpush1.bf16.msra.mxu0 %v6213
        %7198 = vmatprep.subr.bf16.mxu0 %v6226
        %7199 = vmatpush1.bf16.msra.mxu0 %v6225
        %7200 = vmatprep.subr.bf16.mxu0 %v6238
        %7201 = vmatpush1.bf16.msra.mxu0 %v6237
        %7202 = vmatprep.subr.bf16.mxu0 %v6250
        %7203 = vmatpush1.bf16.msra.mxu0 %v6249
        %7204 = vmatprep.subr.bf16.mxu0 %v6262
        %7205 = vmatpush1.bf16.msra.mxu0 %v6261
        %7206 = vmatprep.subr.bf16.mxu0 %v6274
        %7207 = vmatpush1.bf16.msra.mxu0 %v6273
        %7208 = vmatprep.mubr.bf16.mxu0 %v2380
        %7209 = vmatmul.mubr.bf16.gmra.mrb[0].mxu0 %v2379
        %v7210 = vpop.f32.mrb[0].mxu0
        %v7211 = vadd.f32 %v7170, %v7210
        %v7212 = vpop.f32.mrb[0].mxu0
        %v7213 = vadd.f32 %v7172, %v7212
        %v7214 = vpop.f32.mrb[0].mxu0
        %v7215 = vpop.f32.mrb[0].mxu0
        %7216 = vdwg.mxu0
        %7217 = vmatprep.subr.bf16.mxu0 %v5520
        %7218 = vmatpush1.bf16.msra.mxu0 %v5519
        %7219 = vmatprep.subr.bf16.mxu0 %v5532
        %7220 = vmatpush1.bf16.msra.mxu0 %v5531
        %7221 = vmatprep.subr.bf16.mxu0 %v5544
        %7222 = vmatpush1.bf16.msra.mxu0 %v5543
        %7223 = vmatprep.subr.bf16.mxu0 %v5556
        %7224 = vmatpush1.bf16.msra.mxu0 %v5555
        %7225 = vmatprep.subr.bf16.mxu0 %v5568
        %7226 = vmatpush1.bf16.msra.mxu0 %v5567
        %7227 = vmatprep.subr.bf16.mxu0 %v5580
        %7228 = vmatpush1.bf16.msra.mxu0 %v5579
        %7229 = vmatprep.subr.bf16.mxu0 %v5592
        %7230 = vmatpush1.bf16.msra.mxu0 %v5591
        %7231 = vmatprep.subr.bf16.mxu0 %v5604
        %7232 = vmatpush1.bf16.msra.mxu0 %v5603
        %7233 = vmatprep.subr.bf16.mxu0 %v5616
        %7234 = vmatpush1.bf16.msra.mxu0 %v5615
        %7235 = vmatprep.subr.bf16.mxu0 %v5628
        %7236 = vmatpush1.bf16.msra.mxu0 %v5627
        %7237 = vmatprep.subr.bf16.mxu0 %v5640
        %7238 = vmatpush1.bf16.msra.mxu0 %v5639
        %7239 = vmatprep.subr.bf16.mxu0 %v5652
        %7240 = vmatpush1.bf16.msra.mxu0 %v5651
        %7241 = vmatprep.subr.bf16.mxu0 %v5664
        %7242 = vmatpush1.bf16.msra.mxu0 %v5663
        %7243 = vmatprep.subr.bf16.mxu0 %v5676
        %7244 = vmatpush1.bf16.msra.mxu0 %v5675
        %7245 = vmatprep.subr.bf16.mxu0 %v5688
        %7246 = vmatpush1.bf16.msra.mxu0 %v5687
        %7247 = vmatprep.subr.bf16.mxu0 %v5700
        %7248 = vmatpush1.bf16.msra.mxu0 %v5699
        %7249 = vmatprep.mubr.bf16.mxu0 %v2374
        %7250 = vmatmul.mubr.bf16.gmra.mrb[0].mxu0 %v2373
        %v7251 = vpop.f32.mrb[0].mxu0
        %v7252 = vadd.f32 %v3164, %v7251
        %v7253 = vpop.f32.mrb[0].mxu0
        %v7254 = vadd.f32 %v3168, %v7253
        %v7255 = vpop.f32.mrb[0].mxu0
        %v7256 = vpop.f32.mrb[0].mxu0
        %7257 = vdwg.mxu0
        %7258 = vmatprep.subr.bf16.mxu0 %v5712
        %7259 = vmatpush1.bf16.msra.mxu0 %v5711
        %7260 = vmatprep.subr.bf16.mxu0 %v5724
        %7261 = vmatpush1.bf16.msra.mxu0 %v5723
        %7262 = vmatprep.subr.bf16.mxu0 %v5736
        %7263 = vmatpush1.bf16.msra.mxu0 %v5735
        %7264 = vmatprep.subr.bf16.mxu0 %v5748
        %7265 = vmatpush1.bf16.msra.mxu0 %v5747
        %7266 = vmatprep.subr.bf16.mxu0 %v5760
        %7267 = vmatpush1.bf16.msra.mxu0 %v5759
        %7268 = vmatprep.subr.bf16.mxu0 %v5772
        %7269 = vmatpush1.bf16.msra.mxu0 %v5771
        %7270 = vmatprep.subr.bf16.mxu0 %v5784
        %7271 = vmatpush1.bf16.msra.mxu0 %v5783
        %7272 = vmatprep.subr.bf16.mxu0 %v5796
        %7273 = vmatpush1.bf16.msra.mxu0 %v5795
        %7274 = vmatprep.subr.bf16.mxu0 %v5808
        %7275 = vmatpush1.bf16.msra.mxu0 %v5807
        %7276 = vmatprep.subr.bf16.mxu0 %v5820
        %7277 = vmatpush1.bf16.msra.mxu0 %v5819
        %7278 = vmatprep.subr.bf16.mxu0 %v5832
        %7279 = vmatpush1.bf16.msra.mxu0 %v5831
        %7280 = vmatprep.subr.bf16.mxu0 %v5844
        %7281 = vmatpush1.bf16.msra.mxu0 %v5843
        %7282 = vmatprep.subr.bf16.mxu0 %v5856
        %7283 = vmatpush1.bf16.msra.mxu0 %v5855
        %7284 = vmatprep.subr.bf16.mxu0 %v5868
        %7285 = vmatpush1.bf16.msra.mxu0 %v5867
        %7286 = vmatprep.subr.bf16.mxu0 %v5880
        %7287 = vmatpush1.bf16.msra.mxu0 %v5879
        %7288 = vmatprep.subr.bf16.mxu0 %v5892
        %7289 = vmatpush1.bf16.msra.mxu0 %v5891
        %7290 = vmatprep.mubr.bf16.mxu0 %v2376
        %7291 = vmatmul.mubr.bf16.gmra.mrb[0].mxu0 %v2375
        %v7292 = vpop.f32.mrb[0].mxu0
        %v7293 = vadd.f32 %v7252, %v7292
        %v7294 = vpop.f32.mrb[0].mxu0
        %v7295 = vadd.f32 %v7254, %v7294
        %v7296 = vpop.f32.mrb[0].mxu0
        %v7297 = vpop.f32.mrb[0].mxu0
        %7298 = vdwg.mxu0
        %7299 = vmatprep.subr.bf16.mxu0 %v5904
        %7300 = vmatpush1.bf16.msra.mxu0 %v5903
        %7301 = vmatprep.subr.bf16.mxu0 %v5916
        %7302 = vmatpush1.bf16.msra.mxu0 %v5915
        %7303 = vmatprep.subr.bf16.mxu0 %v5928
        %7304 = vmatpush1.bf16.msra.mxu0 %v5927
        %7305 = vmatprep.subr.bf16.mxu0 %v5940
        %7306 = vmatpush1.bf16.msra.mxu0 %v5939
        %7307 = vmatprep.subr.bf16.mxu0 %v5952
        %7308 = vmatpush1.bf16.msra.mxu0 %v5951
        %7309 = vmatprep.subr.bf16.mxu0 %v5964
        %7310 = vmatpush1.bf16.msra.mxu0 %v5963
        %7311 = vmatprep.subr.bf16.mxu0 %v5976
        %7312 = vmatpush1.bf16.msra.mxu0 %v5975
        %7313 = vmatprep.subr.bf16.mxu0 %v5988
        %7314 = vmatpush1.bf16.msra.mxu0 %v5987
        %7315 = vmatprep.subr.bf16.mxu0 %v6000
        %7316 = vmatpush1.bf16.msra.mxu0 %v5999
        %7317 = vmatprep.subr.bf16.mxu0 %v6012
        %7318 = vmatpush1.bf16.msra.mxu0 %v6011
        %7319 = vmatprep.subr.bf16.mxu0 %v6024
        %7320 = vmatpush1.bf16.msra.mxu0 %v6023
        %7321 = vmatprep.subr.bf16.mxu0 %v6036
        %7322 = vmatpush1.bf16.msra.mxu0 %v6035
        %7323 = vmatprep.subr.bf16.mxu0 %v6048
        %7324 = vmatpush1.bf16.msra.mxu0 %v6047
        %7325 = vmatprep.subr.bf16.mxu0 %v6060
        %7326 = vmatpush1.bf16.msra.mxu0 %v6059
        %7327 = vmatprep.subr.bf16.mxu0 %v6072
        %7328 = vmatpush1.bf16.msra.mxu0 %v6071
        %7329 = vmatprep.subr.bf16.mxu0 %v6084
        %7330 = vmatpush1.bf16.msra.mxu0 %v6083
        %7331 = vmatprep.mubr.bf16.mxu0 %v2378
        %7332 = vmatmul.mubr.bf16.gmra.mrb[0].mxu0 %v2377
        %v7333 = vpop.f32.mrb[0].mxu0
        %v7334 = vadd.f32 %v7293, %v7333
        %v7335 = vpop.f32.mrb[0].mxu0
        %v7336 = vadd.f32 %v7295, %v7335
        %v7337 = vpop.f32.mrb[0].mxu0
        %v7338 = vpop.f32.mrb[0].mxu0
        %7339 = vdwg.mxu0
        %7340 = vmatprep.subr.bf16.mxu0 %v6096
        %7341 = vmatpush1.bf16.msra.mxu0 %v6095
        %7342 = vmatprep.subr.bf16.mxu0 %v6108
        %7343 = vmatpush1.bf16.msra.mxu0 %v6107
        %7344 = vmatprep.subr.bf16.mxu0 %v6120
        %7345 = vmatpush1.bf16.msra.mxu0 %v6119
        %7346 = vmatprep.subr.bf16.mxu0 %v6132
        %7347 = vmatpush1.bf16.msra.mxu0 %v6131
        %7348 = vmatprep.subr.bf16.mxu0 %v6144
        %7349 = vmatpush1.bf16.msra.mxu0 %v6143
        %7350 = vmatprep.subr.bf16.mxu0 %v6156
        %7351 = vmatpush1.bf16.msra.mxu0 %v6155
        %7352 = vmatprep.subr.bf16.mxu0 %v6168
        %7353 = vmatpush1.bf16.msra.mxu0 %v6167
        %7354 = vmatprep.subr.bf16.mxu0 %v6180
        %7355 = vmatpush1.bf16.msra.mxu0 %v6179
        %7356 = vmatprep.subr.bf16.mxu0 %v6192
        %7357 = vmatpush1.bf16.msra.mxu0 %v6191
        %7358 = vmatprep.subr.bf16.mxu0 %v6204
        %7359 = vmatpush1.bf16.msra.mxu0 %v6203
        %7360 = vmatprep.subr.bf16.mxu0 %v6216
        %7361 = vmatpush1.bf16.msra.mxu0 %v6215
        %7362 = vmatprep.subr.bf16.mxu0 %v6228
        %7363 = vmatpush1.bf16.msra.mxu0 %v6227
        %7364 = vmatprep.subr.bf16.mxu0 %v6240
        %7365 = vmatpush1.bf16.msra.mxu0 %v6239
        %7366 = vmatprep.subr.bf16.mxu0 %v6252
        %7367 = vmatpush1.bf16.msra.mxu0 %v6251
        %7368 = vmatprep.subr.bf16.mxu0 %v6264
        %7369 = vmatpush1.bf16.msra.mxu0 %v6263
        %7370 = vmatprep.subr.bf16.mxu0 %v6276
        %7371 = vmatpush1.bf16.msra.mxu0 %v6275
        %7372 = vmatprep.mubr.bf16.mxu0 %v2380
        %7373 = vmatmul.mubr.bf16.gmra.mrb[0].mxu0 %v2379
        %v7374 = vpop.f32.mrb[0].mxu0
        %v7375 = vadd.f32 %v7334, %v7374
        %v7376 = vpop.f32.mrb[0].mxu0
        %v7377 = vadd.f32 %v7336, %v7376
        %v7378 = vpop.f32.mrb[0].mxu0
        %v7379 = vpop.f32.mrb[0].mxu0
        %7380 = vdwg.mxu0
        %7381 = vmatprep.subr.bf16.mxu0 %v5522
        %7382 = vmatpush1.bf16.msra.mxu0 %v5521
        %7383 = vmatprep.subr.bf16.mxu0 %v5534
        %7384 = vmatpush1.bf16.msra.mxu0 %v5533
        %7385 = vmatprep.subr.bf16.mxu0 %v5546
        %7386 = vmatpush1.bf16.msra.mxu0 %v5545
        %7387 = vmatprep.subr.bf16.mxu0 %v5558
        %7388 = vmatpush1.bf16.msra.mxu0 %v5557
        %7389 = vmatprep.subr.bf16.mxu0 %v5570
        %7390 = vmatpush1.bf16.msra.mxu0 %v5569
        %7391 = vmatprep.subr.bf16.mxu0 %v5582
        %7392 = vmatpush1.bf16.msra.mxu0 %v5581
        %7393 = vmatprep.subr.bf16.mxu0 %v5594
        %7394 = vmatpush1.bf16.msra.mxu0 %v5593
        %7395 = vmatprep.subr.bf16.mxu0 %v5606
        %7396 = vmatpush1.bf16.msra.mxu0 %v5605
        %7397 = vmatprep.subr.bf16.mxu0 %v5618
        %7398 = vmatpush1.bf16.msra.mxu0 %v5617
        %7399 = vmatprep.subr.bf16.mxu0 %v5630
        %7400 = vmatpush1.bf16.msra.mxu0 %v5629
        %7401 = vmatprep.subr.bf16.mxu0 %v5642
        %7402 = vmatpush1.bf16.msra.mxu0 %v5641
        %7403 = vmatprep.subr.bf16.mxu0 %v5654
        %7404 = vmatpush1.bf16.msra.mxu0 %v5653
        %7405 = vmatprep.subr.bf16.mxu0 %v5666
        %7406 = vmatpush1.bf16.msra.mxu0 %v5665
        %7407 = vmatprep.subr.bf16.mxu0 %v5678
        %7408 = vmatpush1.bf16.msra.mxu0 %v5677
        %7409 = vmatprep.subr.bf16.mxu0 %v5690
        %7410 = vmatpush1.bf16.msra.mxu0 %v5689
        %7411 = vmatprep.subr.bf16.mxu0 %v5702
        %7412 = vmatpush1.bf16.msra.mxu0 %v5701
        %7413 = vmatprep.mubr.bf16.mxu0 %v2374
        %7414 = vmatmul.mubr.bf16.gmra.mrb[0].mxu0 %v2373
        %v7415 = vpop.f32.mrb[0].mxu0
        %v7416 = vadd.f32 %v3172, %v7415
        %v7417 = vpop.f32.mrb[0].mxu0
        %v7418 = vadd.f32 %v3176, %v7417
        %v7419 = vpop.f32.mrb[0].mxu0
        %v7420 = vpop.f32.mrb[0].mxu0
        %7421 = vdwg.mxu0
        %7422 = vmatprep.subr.bf16.mxu0 %v5714
        %7423 = vmatpush1.bf16.msra.mxu0 %v5713
        %7424 = vmatprep.subr.bf16.mxu0 %v5726
        %7425 = vmatpush1.bf16.msra.mxu0 %v5725
        %7426 = vmatprep.subr.bf16.mxu0 %v5738
        %7427 = vmatpush1.bf16.msra.mxu0 %v5737
        %7428 = vmatprep.subr.bf16.mxu0 %v5750
        %7429 = vmatpush1.bf16.msra.mxu0 %v5749
        %7430 = vmatprep.subr.bf16.mxu0 %v5762
        %7431 = vmatpush1.bf16.msra.mxu0 %v5761
        %7432 = vmatprep.subr.bf16.mxu0 %v5774
        %7433 = vmatpush1.bf16.msra.mxu0 %v5773
        %7434 = vmatprep.subr.bf16.mxu0 %v5786
        %7435 = vmatpush1.bf16.msra.mxu0 %v5785
        %7436 = vmatprep.subr.bf16.mxu0 %v5798
        %7437 = vmatpush1.bf16.msra.mxu0 %v5797
        %7438 = vmatprep.subr.bf16.mxu0 %v5810
        %7439 = vmatpush1.bf16.msra.mxu0 %v5809
        %7440 = vmatprep.subr.bf16.mxu0 %v5822
        %7441 = vmatpush1.bf16.msra.mxu0 %v5821
        %7442 = vmatprep.subr.bf16.mxu0 %v5834
        %7443 = vmatpush1.bf16.msra.mxu0 %v5833
        %7444 = vmatprep.subr.bf16.mxu0 %v5846
        %7445 = vmatpush1.bf16.msra.mxu0 %v5845
        %7446 = vmatprep.subr.bf16.mxu0 %v5858
        %7447 = vmatpush1.bf16.msra.mxu0 %v5857
        %7448 = vmatprep.subr.bf16.mxu0 %v5870
        %7449 = vmatpush1.bf16.msra.mxu0 %v5869
        %7450 = vmatprep.subr.bf16.mxu0 %v5882
        %7451 = vmatpush1.bf16.msra.mxu0 %v5881
        %7452 = vmatprep.subr.bf16.mxu0 %v5894
        %7453 = vmatpush1.bf16.msra.mxu0 %v5893
        %7454 = vmatprep.mubr.bf16.mxu0 %v2376
        %7455 = vmatmul.mubr.bf16.gmra.mrb[0].mxu0 %v2375
        %v7456 = vpop.f32.mrb[0].mxu0
        %v7457 = vadd.f32 %v7416, %v7456
        %v7458 = vpop.f32.mrb[0].mxu0
        %v7459 = vadd.f32 %v7418, %v7458
        %v7460 = vpop.f32.mrb[0].mxu0
        %v7461 = vpop.f32.mrb[0].mxu0
        %7462 = vdwg.mxu0
        %7463 = vmatprep.subr.bf16.mxu0 %v5906
        %7464 = vmatpush1.bf16.msra.mxu0 %v5905
        %7465 = vmatprep.subr.bf16.mxu0 %v5918
        %7466 = vmatpush1.bf16.msra.mxu0 %v5917
        %7467 = vmatprep.subr.bf16.mxu0 %v5930
        %7468 = vmatpush1.bf16.msra.mxu0 %v5929
        %7469 = vmatprep.subr.bf16.mxu0 %v5942
        %7470 = vmatpush1.bf16.msra.mxu0 %v5941
        %7471 = vmatprep.subr.bf16.mxu0 %v5954
        %7472 = vmatpush1.bf16.msra.mxu0 %v5953
        %7473 = vmatprep.subr.bf16.mxu0 %v5966
        %7474 = vmatpush1.bf16.msra.mxu0 %v5965
        %7475 = vmatprep.subr.bf16.mxu0 %v5978
        %7476 = vmatpush1.bf16.msra.mxu0 %v5977
        %7477 = vmatprep.subr.bf16.mxu0 %v5990
        %7478 = vmatpush1.bf16.msra.mxu0 %v5989
        %7479 = vmatprep.subr.bf16.mxu0 %v6002
        %7480 = vmatpush1.bf16.msra.mxu0 %v6001
        %7481 = vmatprep.subr.bf16.mxu0 %v6014
        %7482 = vmatpush1.bf16.msra.mxu0 %v6013
        %7483 = vmatprep.subr.bf16.mxu0 %v6026
        %7484 = vmatpush1.bf16.msra.mxu0 %v6025
        %7485 = vmatprep.subr.bf16.mxu0 %v6038
        %7486 = vmatpush1.bf16.msra.mxu0 %v6037
        %7487 = vmatprep.subr.bf16.mxu0 %v6050
        %7488 = vmatpush1.bf16.msra.mxu0 %v6049
        %7489 = vmatprep.subr.bf16.mxu0 %v6062
        %7490 = vmatpush1.bf16.msra.mxu0 %v6061
        %7491 = vmatprep.subr.bf16.mxu0 %v6074
        %7492 = vmatpush1.bf16.msra.mxu0 %v6073
        %7493 = vmatprep.subr.bf16.mxu0 %v6086
        %7494 = vmatpush1.bf16.msra.mxu0 %v6085
        %7495 = vmatprep.mubr.bf16.mxu0 %v2378
        %7496 = vmatmul.mubr.bf16.gmra.mrb[0].mxu0 %v2377
        %v7497 = vpop.f32.mrb[0].mxu0
        %v7498 = vadd.f32 %v7457, %v7497
        %v7499 = vpop.f32.mrb[0].mxu0
        %v7500 = vadd.f32 %v7459, %v7499
        %v7501 = vpop.f32.mrb[0].mxu0
        %v7502 = vpop.f32.mrb[0].mxu0
        %7503 = vdwg.mxu0
        %7504 = vmatprep.subr.bf16.mxu0 %v6098
        %7505 = vmatpush1.bf16.msra.mxu0 %v6097
        %7506 = vmatprep.subr.bf16.mxu0 %v6110
        %7507 = vmatpush1.bf16.msra.mxu0 %v6109
        %7508 = vmatprep.subr.bf16.mxu0 %v6122
        %7509 = vmatpush1.bf16.msra.mxu0 %v6121
        %7510 = vmatprep.subr.bf16.mxu0 %v6134
        %7511 = vmatpush1.bf16.msra.mxu0 %v6133
        %7512 = vmatprep.subr.bf16.mxu0 %v6146
        %7513 = vmatpush1.bf16.msra.mxu0 %v6145
        %7514 = vmatprep.subr.bf16.mxu0 %v6158
        %7515 = vmatpush1.bf16.msra.mxu0 %v6157
        %7516 = vmatprep.subr.bf16.mxu0 %v6170
        %7517 = vmatpush1.bf16.msra.mxu0 %v6169
        %7518 = vmatprep.subr.bf16.mxu0 %v6182
        %7519 = vmatpush1.bf16.msra.mxu0 %v6181
        %7520 = vmatprep.subr.bf16.mxu0 %v6194
        %7521 = vmatpush1.bf16.msra.mxu0 %v6193
        %7522 = vmatprep.subr.bf16.mxu0 %v6206
        %7523 = vmatpush1.bf16.msra.mxu0 %v6205
        %7524 = vmatprep.subr.bf16.mxu0 %v6218
        %7525 = vmatpush1.bf16.msra.mxu0 %v6217
        %7526 = vmatprep.subr.bf16.mxu0 %v6230
        %7527 = vmatpush1.bf16.msra.mxu0 %v6229
        %7528 = vmatprep.subr.bf16.mxu0 %v6242
        %7529 = vmatpush1.bf16.msra.mxu0 %v6241
        %7530 = vmatprep.subr.bf16.mxu0 %v6254
        %7531 = vmatpush1.bf16.msra.mxu0 %v6253
        %7532 = vmatprep.subr.bf16.mxu0 %v6266
        %7533 = vmatpush1.bf16.msra.mxu0 %v6265
        %7534 = vmatprep.subr.bf16.mxu0 %v6278
        %7535 = vmatpush1.bf16.msra.mxu0 %v6277
        %7536 = vmatprep.mubr.bf16.mxu0 %v2380
        %7537 = vmatmul.mubr.bf16.gmra.mrb[0].mxu0 %v2379
        %v7538 = vpop.f32.mrb[0].mxu0
        %v7539 = vadd.f32 %v7498, %v7538
        %v7540 = vpop.f32.mrb[0].mxu0
        %v7541 = vadd.f32 %v7500, %v7540
        %v7542 = vpop.f32.mrb[0].mxu0
        %v7543 = vpop.f32.mrb[0].mxu0
        %7544 = vdwg.mxu0
        %7545 = vmatprep.subr.bf16.mxu0 %v5524
        %7546 = vmatpush1.bf16.msra.mxu0 %v5523
        %7547 = vmatprep.subr.bf16.mxu0 %v5536
        %7548 = vmatpush1.bf16.msra.mxu0 %v5535
        %7549 = vmatprep.subr.bf16.mxu0 %v5548
        %7550 = vmatpush1.bf16.msra.mxu0 %v5547
        %7551 = vmatprep.subr.bf16.mxu0 %v5560
        %7552 = vmatpush1.bf16.msra.mxu0 %v5559
        %7553 = vmatprep.subr.bf16.mxu0 %v5572
        %7554 = vmatpush1.bf16.msra.mxu0 %v5571
        %7555 = vmatprep.subr.bf16.mxu0 %v5584
        %7556 = vmatpush1.bf16.msra.mxu0 %v5583
        %7557 = vmatprep.subr.bf16.mxu0 %v5596
        %7558 = vmatpush1.bf16.msra.mxu0 %v5595
        %7559 = vmatprep.subr.bf16.mxu0 %v5608
        %7560 = vmatpush1.bf16.msra.mxu0 %v5607
        %7561 = vmatprep.subr.bf16.mxu0 %v5620
        %7562 = vmatpush1.bf16.msra.mxu0 %v5619
        %7563 = vmatprep.subr.bf16.mxu0 %v5632
        %7564 = vmatpush1.bf16.msra.mxu0 %v5631
        %7565 = vmatprep.subr.bf16.mxu0 %v5644
        %7566 = vmatpush1.bf16.msra.mxu0 %v5643
        %7567 = vmatprep.subr.bf16.mxu0 %v5656
        %7568 = vmatpush1.bf16.msra.mxu0 %v5655
        %7569 = vmatprep.subr.bf16.mxu0 %v5668
        %7570 = vmatpush1.bf16.msra.mxu0 %v5667
        %7571 = vmatprep.subr.bf16.mxu0 %v5680
        %7572 = vmatpush1.bf16.msra.mxu0 %v5679
        %7573 = vmatprep.subr.bf16.mxu0 %v5692
        %7574 = vmatpush1.bf16.msra.mxu0 %v5691
        %7575 = vmatprep.subr.bf16.mxu0 %v5704
        %7576 = vmatpush1.bf16.msra.mxu0 %v5703
        %7577 = vmatprep.mubr.bf16.mxu0 %v2374
        %7578 = vmatmul.mubr.bf16.gmra.mrb[0].mxu0 %v2373
        %v7579 = vpop.f32.mrb[0].mxu0
        %v7580 = vadd.f32 %v3180, %v7579
        %v7581 = vpop.f32.mrb[0].mxu0
        %v7582 = vadd.f32 %v3184, %v7581
        %v7583 = vpop.f32.mrb[0].mxu0
        %v7584 = vpop.f32.mrb[0].mxu0
        %7585 = vdwg.mxu0
        %7586 = vmatprep.subr.bf16.mxu0 %v5716
        %7587 = vmatpush1.bf16.msra.mxu0 %v5715
        %7588 = vmatprep.subr.bf16.mxu0 %v5728
        %7589 = vmatpush1.bf16.msra.mxu0 %v5727
        %7590 = vmatprep.subr.bf16.mxu0 %v5740
        %7591 = vmatpush1.bf16.msra.mxu0 %v5739
        %7592 = vmatprep.subr.bf16.mxu0 %v5752
        %7593 = vmatpush1.bf16.msra.mxu0 %v5751
        %7594 = vmatprep.subr.bf16.mxu0 %v5764
        %7595 = vmatpush1.bf16.msra.mxu0 %v5763
        %7596 = vmatprep.subr.bf16.mxu0 %v5776
        %7597 = vmatpush1.bf16.msra.mxu0 %v5775
        %7598 = vmatprep.subr.bf16.mxu0 %v5788
        %7599 = vmatpush1.bf16.msra.mxu0 %v5787
        %7600 = vmatprep.subr.bf16.mxu0 %v5800
        %7601 = vmatpush1.bf16.msra.mxu0 %v5799
        %7602 = vmatprep.subr.bf16.mxu0 %v5812
        %7603 = vmatpush1.bf16.msra.mxu0 %v5811
        %7604 = vmatprep.subr.bf16.mxu0 %v5824
        %7605 = vmatpush1.bf16.msra.mxu0 %v5823
        %7606 = vmatprep.subr.bf16.mxu0 %v5836
        %7607 = vmatpush1.bf16.msra.mxu0 %v5835
        %7608 = vmatprep.subr.bf16.mxu0 %v5848
        %7609 = vmatpush1.bf16.msra.mxu0 %v5847
        %7610 = vmatprep.subr.bf16.mxu0 %v5860
        %7611 = vmatpush1.bf16.msra.mxu0 %v5859
        %7612 = vmatprep.subr.bf16.mxu0 %v5872
        %7613 = vmatpush1.bf16.msra.mxu0 %v5871
        %7614 = vmatprep.subr.bf16.mxu0 %v5884
        %7615 = vmatpush1.bf16.msra.mxu0 %v5883
        %7616 = vmatprep.subr.bf16.mxu0 %v5896
        %7617 = vmatpush1.bf16.msra.mxu0 %v5895
        %7618 = vmatprep.mubr.bf16.mxu0 %v2376
        %7619 = vmatmul.mubr.bf16.gmra.mrb[0].mxu0 %v2375
        %v7620 = vpop.f32.mrb[0].mxu0
        %v7621 = vadd.f32 %v7580, %v7620
        %v7622 = vpop.f32.mrb[0].mxu0
        %v7623 = vadd.f32 %v7582, %v7622
        %v7624 = vpop.f32.mrb[0].mxu0
        %v7625 = vpop.f32.mrb[0].mxu0
        %7626 = vdwg.mxu0
        %7627 = vmatprep.subr.bf16.mxu0 %v5908
        %7628 = vmatpush1.bf16.msra.mxu0 %v5907
        %7629 = vmatprep.subr.bf16.mxu0 %v5920
        %7630 = vmatpush1.bf16.msra.mxu0 %v5919
        %7631 = vmatprep.subr.bf16.mxu0 %v5932
        %7632 = vmatpush1.bf16.msra.mxu0 %v5931
        %7633 = vmatprep.subr.bf16.mxu0 %v5944
        %7634 = vmatpush1.bf16.msra.mxu0 %v5943
        %7635 = vmatprep.subr.bf16.mxu0 %v5956
        %7636 = vmatpush1.bf16.msra.mxu0 %v5955
        %7637 = vmatprep.subr.bf16.mxu0 %v5968
        %7638 = vmatpush1.bf16.msra.mxu0 %v5967
        %7639 = vmatprep.subr.bf16.mxu0 %v5980
        %7640 = vmatpush1.bf16.msra.mxu0 %v5979
        %7641 = vmatprep.subr.bf16.mxu0 %v5992
        %7642 = vmatpush1.bf16.msra.mxu0 %v5991
        %7643 = vmatprep.subr.bf16.mxu0 %v6004
        %7644 = vmatpush1.bf16.msra.mxu0 %v6003
        %7645 = vmatprep.subr.bf16.mxu0 %v6016
        %7646 = vmatpush1.bf16.msra.mxu0 %v6015
        %7647 = vmatprep.subr.bf16.mxu0 %v6028
        %7648 = vmatpush1.bf16.msra.mxu0 %v6027
        %7649 = vmatprep.subr.bf16.mxu0 %v6040
        %7650 = vmatpush1.bf16.msra.mxu0 %v6039
        %7651 = vmatprep.subr.bf16.mxu0 %v6052
        %7652 = vmatpush1.bf16.msra.mxu0 %v6051
        %7653 = vmatprep.subr.bf16.mxu0 %v6064
        %7654 = vmatpush1.bf16.msra.mxu0 %v6063
        %7655 = vmatprep.subr.bf16.mxu0 %v6076
        %7656 = vmatpush1.bf16.msra.mxu0 %v6075
        %7657 = vmatprep.subr.bf16.mxu0 %v6088
        %7658 = vmatpush1.bf16.msra.mxu0 %v6087
        %7659 = vmatprep.mubr.bf16.mxu0 %v2378
        %7660 = vmatmul.mubr.bf16.gmra.mrb[0].mxu0 %v2377
        %v7661 = vpop.f32.mrb[0].mxu0
        %v7662 = vadd.f32 %v7621, %v7661
        %v7663 = vpop.f32.mrb[0].mxu0
        %v7664 = vadd.f32 %v7623, %v7663
        %v7665 = vpop.f32.mrb[0].mxu0
        %v7666 = vpop.f32.mrb[0].mxu0
        %7667 = vdwg.mxu0
        %7668 = vmatprep.subr.bf16.mxu0 %v6100
        %7669 = vmatpush1.bf16.msra.mxu0 %v6099
        %7670 = vmatprep.subr.bf16.mxu0 %v6112
        %7671 = vmatpush1.bf16.msra.mxu0 %v6111
        %7672 = vmatprep.subr.bf16.mxu0 %v6124
        %7673 = vmatpush1.bf16.msra.mxu0 %v6123
        %7674 = vmatprep.subr.bf16.mxu0 %v6136
        %7675 = vmatpush1.bf16.msra.mxu0 %v6135
        %7676 = vmatprep.subr.bf16.mxu0 %v6148
        %7677 = vmatpush1.bf16.msra.mxu0 %v6147
        %7678 = vmatprep.subr.bf16.mxu0 %v6160
        %7679 = vmatpush1.bf16.msra.mxu0 %v6159
        %7680 = vmatprep.subr.bf16.mxu0 %v6172
        %7681 = vmatpush1.bf16.msra.mxu0 %v6171
        %7682 = vmatprep.subr.bf16.mxu0 %v6184
        %7683 = vmatpush1.bf16.msra.mxu0 %v6183
        %7684 = vmatprep.subr.bf16.mxu0 %v6196
        %7685 = vmatpush1.bf16.msra.mxu0 %v6195
        %7686 = vmatprep.subr.bf16.mxu0 %v6208
        %7687 = vmatpush1.bf16.msra.mxu0 %v6207
        %7688 = vmatprep.subr.bf16.mxu0 %v6220
        %7689 = vmatpush1.bf16.msra.mxu0 %v6219
        %7690 = vmatprep.subr.bf16.mxu0 %v6232
        %7691 = vmatpush1.bf16.msra.mxu0 %v6231
        %7692 = vmatprep.subr.bf16.mxu0 %v6244
        %7693 = vmatpush1.bf16.msra.mxu0 %v6243
        %7694 = vmatprep.subr.bf16.mxu0 %v6256
        %7695 = vmatpush1.bf16.msra.mxu0 %v6255
        %7696 = vmatprep.subr.bf16.mxu0 %v6268
        %7697 = vmatpush1.bf16.msra.mxu0 %v6267
        %7698 = vmatprep.subr.bf16.mxu0 %v6280
        %7699 = vmatpush1.bf16.msra.mxu0 %v6279
        %7700 = vmatprep.mubr.bf16.mxu0 %v2380
        %7701 = vmatmul.mubr.bf16.gmra.mrb[0].mxu0 %v2379
        %v7702 = vpop.f32.mrb[0].mxu0
        %v7703 = vadd.f32 %v7662, %v7702
        %v7704 = vpop.f32.mrb[0].mxu0
        %v7705 = vadd.f32 %v7664, %v7704
        %v7706 = vpop.f32.mrb[0].mxu0
        %v7707 = vpop.f32.mrb[0].mxu0
        %7708 = vdwg.mxu0
        %7709 = vmatprep.subr.bf16.mxu0 %v5526
        %7710 = vmatpush1.bf16.msra.mxu0 %v5525
        %7711 = vmatprep.subr.bf16.mxu0 %v5538
        %7712 = vmatpush1.bf16.msra.mxu0 %v5537
        %7713 = vmatprep.subr.bf16.mxu0 %v5550
        %7714 = vmatpush1.bf16.msra.mxu0 %v5549
        %7715 = vmatprep.subr.bf16.mxu0 %v5562
        %7716 = vmatpush1.bf16.msra.mxu0 %v5561
        %7717 = vmatprep.subr.bf16.mxu0 %v5574
        %7718 = vmatpush1.bf16.msra.mxu0 %v5573
        %7719 = vmatprep.subr.bf16.mxu0 %v5586
        %7720 = vmatpush1.bf16.msra.mxu0 %v5585
        %7721 = vmatprep.subr.bf16.mxu0 %v5598
        %7722 = vmatpush1.bf16.msra.mxu0 %v5597
        %7723 = vmatprep.subr.bf16.mxu0 %v5610
        %7724 = vmatpush1.bf16.msra.mxu0 %v5609
        %7725 = vmatprep.subr.bf16.mxu0 %v5622
        %7726 = vmatpush1.bf16.msra.mxu0 %v5621
        %7727 = vmatprep.subr.bf16.mxu0 %v5634
        %7728 = vmatpush1.bf16.msra.mxu0 %v5633
        %7729 = vmatprep.subr.bf16.mxu0 %v5646
        %7730 = vmatpush1.bf16.msra.mxu0 %v5645
        %7731 = vmatprep.subr.bf16.mxu0 %v5658
        %7732 = vmatpush1.bf16.msra.mxu0 %v5657
        %7733 = vmatprep.subr.bf16.mxu0 %v5670
        %7734 = vmatpush1.bf16.msra.mxu0 %v5669
        %7735 = vmatprep.subr.bf16.mxu0 %v5682
        %7736 = vmatpush1.bf16.msra.mxu0 %v5681
        %7737 = vmatprep.subr.bf16.mxu0 %v5694
        %7738 = vmatpush1.bf16.msra.mxu0 %v5693
        %7739 = vmatprep.subr.bf16.mxu0 %v5706
        %7740 = vmatpush1.bf16.msra.mxu0 %v5705
        %7741 = vmatprep.mubr.bf16.mxu0 %v2374
        %7742 = vmatmul.mubr.bf16.gmra.mrb[0].mxu0 %v2373
        %v7743 = vpop.f32.mrb[0].mxu0
        %v7744 = vadd.f32 %v3188, %v7743
        %v7745 = vpop.f32.mrb[0].mxu0
        %v7746 = vadd.f32 %v3192, %v7745
        %v7747 = vpop.f32.mrb[0].mxu0
        %v7748 = vpop.f32.mrb[0].mxu0
        %7749 = vdwg.mxu0
        %7750 = vmatprep.subr.bf16.mxu0 %v5718
        %7751 = vmatpush1.bf16.msra.mxu0 %v5717
        %7752 = vmatprep.subr.bf16.mxu0 %v5730
        %7753 = vmatpush1.bf16.msra.mxu0 %v5729
        %7754 = vmatprep.subr.bf16.mxu0 %v5742
        %7755 = vmatpush1.bf16.msra.mxu0 %v5741
        %7756 = vmatprep.subr.bf16.mxu0 %v5754
        %7757 = vmatpush1.bf16.msra.mxu0 %v5753
        %7758 = vmatprep.subr.bf16.mxu0 %v5766
        %7759 = vmatpush1.bf16.msra.mxu0 %v5765
        %7760 = vmatprep.subr.bf16.mxu0 %v5778
        %7761 = vmatpush1.bf16.msra.mxu0 %v5777
        %7762 = vmatprep.subr.bf16.mxu0 %v5790
        %7763 = vmatpush1.bf16.msra.mxu0 %v5789
        %7764 = vmatprep.subr.bf16.mxu0 %v5802
        %7765 = vmatpush1.bf16.msra.mxu0 %v5801
        %7766 = vmatprep.subr.bf16.mxu0 %v5814
        %7767 = vmatpush1.bf16.msra.mxu0 %v5813
        %7768 = vmatprep.subr.bf16.mxu0 %v5826
        %7769 = vmatpush1.bf16.msra.mxu0 %v5825
        %7770 = vmatprep.subr.bf16.mxu0 %v5838
        %7771 = vmatpush1.bf16.msra.mxu0 %v5837
        %7772 = vmatprep.subr.bf16.mxu0 %v5850
        %7773 = vmatpush1.bf16.msra.mxu0 %v5849
        %7774 = vmatprep.subr.bf16.mxu0 %v5862
        %7775 = vmatpush1.bf16.msra.mxu0 %v5861
        %7776 = vmatprep.subr.bf16.mxu0 %v5874
        %7777 = vmatpush1.bf16.msra.mxu0 %v5873
        %7778 = vmatprep.subr.bf16.mxu0 %v5886
        %7779 = vmatpush1.bf16.msra.mxu0 %v5885
        %7780 = vmatprep.subr.bf16.mxu0 %v5898
        %7781 = vmatpush1.bf16.msra.mxu0 %v5897
        %7782 = vmatprep.mubr.bf16.mxu0 %v2376
        %7783 = vmatmul.mubr.bf16.gmra.mrb[0].mxu0 %v2375
        %v7784 = vpop.f32.mrb[0].mxu0
        %v7785 = vadd.f32 %v7744, %v7784
        %v7786 = vpop.f32.mrb[0].mxu0
        %v7787 = vadd.f32 %v7746, %v7786
        %v7788 = vpop.f32.mrb[0].mxu0
        %v7789 = vpop.f32.mrb[0].mxu0
        %7790 = vdwg.mxu0
        %7791 = vmatprep.subr.bf16.mxu0 %v5910
        %7792 = vmatpush1.bf16.msra.mxu0 %v5909
        %7793 = vmatprep.subr.bf16.mxu0 %v5922
        %7794 = vmatpush1.bf16.msra.mxu0 %v5921
        %7795 = vmatprep.subr.bf16.mxu0 %v5934
        %7796 = vmatpush1.bf16.msra.mxu0 %v5933
        %7797 = vmatprep.subr.bf16.mxu0 %v5946
        %7798 = vmatpush1.bf16.msra.mxu0 %v5945
        %7799 = vmatprep.subr.bf16.mxu0 %v5958
        %7800 = vmatpush1.bf16.msra.mxu0 %v5957
        %7801 = vmatprep.subr.bf16.mxu0 %v5970
        %7802 = vmatpush1.bf16.msra.mxu0 %v5969
        %7803 = vmatprep.subr.bf16.mxu0 %v5982
        %7804 = vmatpush1.bf16.msra.mxu0 %v5981
        %7805 = vmatprep.subr.bf16.mxu0 %v5994
        %7806 = vmatpush1.bf16.msra.mxu0 %v5993
        %7807 = vmatprep.subr.bf16.mxu0 %v6006
        %7808 = vmatpush1.bf16.msra.mxu0 %v6005
        %7809 = vmatprep.subr.bf16.mxu0 %v6018
        %7810 = vmatpush1.bf16.msra.mxu0 %v6017
        %7811 = vmatprep.subr.bf16.mxu0 %v6030
        %7812 = vmatpush1.bf16.msra.mxu0 %v6029
        %7813 = vmatprep.subr.bf16.mxu0 %v6042
        %7814 = vmatpush1.bf16.msra.mxu0 %v6041
        %7815 = vmatprep.subr.bf16.mxu0 %v6054
        %7816 = vmatpush1.bf16.msra.mxu0 %v6053
        %7817 = vmatprep.subr.bf16.mxu0 %v6066
        %7818 = vmatpush1.bf16.msra.mxu0 %v6065
        %7819 = vmatprep.subr.bf16.mxu0 %v6078
        %7820 = vmatpush1.bf16.msra.mxu0 %v6077
        %7821 = vmatprep.subr.bf16.mxu0 %v6090
        %7822 = vmatpush1.bf16.msra.mxu0 %v6089
        %7823 = vmatprep.mubr.bf16.mxu0 %v2378
        %7824 = vmatmul.mubr.bf16.gmra.mrb[0].mxu0 %v2377
        %v7825 = vpop.f32.mrb[0].mxu0
        %v7826 = vadd.f32 %v7785, %v7825
        %v7827 = vpop.f32.mrb[0].mxu0
        %v7828 = vadd.f32 %v7787, %v7827
        %v7829 = vpop.f32.mrb[0].mxu0
        %v7830 = vpop.f32.mrb[0].mxu0
        %7831 = vdwg.mxu0
        %7832 = vmatprep.subr.bf16.mxu0 %v6102
        %7833 = vmatpush1.bf16.msra.mxu0 %v6101
        %7834 = vmatprep.subr.bf16.mxu0 %v6114
        %7835 = vmatpush1.bf16.msra.mxu0 %v6113
        %7836 = vmatprep.subr.bf16.mxu0 %v6126
        %7837 = vmatpush1.bf16.msra.mxu0 %v6125
        %7838 = vmatprep.subr.bf16.mxu0 %v6138
        %7839 = vmatpush1.bf16.msra.mxu0 %v6137
        %7840 = vmatprep.subr.bf16.mxu0 %v6150
        %7841 = vmatpush1.bf16.msra.mxu0 %v6149
        %7842 = vmatprep.subr.bf16.mxu0 %v6162
        %7843 = vmatpush1.bf16.msra.mxu0 %v6161
        %7844 = vmatprep.subr.bf16.mxu0 %v6174
        %7845 = vmatpush1.bf16.msra.mxu0 %v6173
        %7846 = vmatprep.subr.bf16.mxu0 %v6186
        %7847 = vmatpush1.bf16.msra.mxu0 %v6185
        %7848 = vmatprep.subr.bf16.mxu0 %v6198
        %7849 = vmatpush1.bf16.msra.mxu0 %v6197
        %7850 = vmatprep.subr.bf16.mxu0 %v6210
        %7851 = vmatpush1.bf16.msra.mxu0 %v6209
        %7852 = vmatprep.subr.bf16.mxu0 %v6222
        %7853 = vmatpush1.bf16.msra.mxu0 %v6221
        %7854 = vmatprep.subr.bf16.mxu0 %v6234
        %7855 = vmatpush1.bf16.msra.mxu0 %v6233
        %7856 = vmatprep.subr.bf16.mxu0 %v6246
        %7857 = vmatpush1.bf16.msra.mxu0 %v6245
        %7858 = vmatprep.subr.bf16.mxu0 %v6258
        %7859 = vmatpush1.bf16.msra.mxu0 %v6257
        %7860 = vmatprep.subr.bf16.mxu0 %v6270
        %7861 = vmatpush1.bf16.msra.mxu0 %v6269
        %7862 = vmatprep.subr.bf16.mxu0 %v6282
        %7863 = vmatpush1.bf16.msra.mxu0 %v6281
        %7864 = vmatprep.mubr.bf16.mxu0 %v2380
        %7865 = vmatmul.mubr.bf16.gmra.mrb[0].mxu0 %v2379
        %v7866 = vpop.f32.mrb[0].mxu0
        %v7867 = vadd.f32 %v7826, %v7866
        %v7868 = vpop.f32.mrb[0].mxu0
        %v7869 = vadd.f32 %v7828, %v7868
        %v7870 = vpop.f32.mrb[0].mxu0
        %v7871 = vpop.f32.mrb[0].mxu0
        %7872 = vdwg.mxu0
        %7873 = vmatprep.subr.bf16.mxu0 %v5528
        %7874 = vmatpush1.bf16.msra.mxu0 %v5527
        %7875 = vmatprep.subr.bf16.mxu0 %v5540
        %7876 = vmatpush1.bf16.msra.mxu0 %v5539
        %7877 = vmatprep.subr.bf16.mxu0 %v5552
        %7878 = vmatpush1.bf16.msra.mxu0 %v5551
        %7879 = vmatprep.subr.bf16.mxu0 %v5564
        %7880 = vmatpush1.bf16.msra.mxu0 %v5563
        %7881 = vmatprep.subr.bf16.mxu0 %v5576
        %7882 = vmatpush1.bf16.msra.mxu0 %v5575
        %7883 = vmatprep.subr.bf16.mxu0 %v5588
        %7884 = vmatpush1.bf16.msra.mxu0 %v5587
        %7885 = vmatprep.subr.bf16.mxu0 %v5600
        %7886 = vmatpush1.bf16.msra.mxu0 %v5599
        %7887 = vmatprep.subr.bf16.mxu0 %v5612
        %7888 = vmatpush1.bf16.msra.mxu0 %v5611
        %7889 = vmatprep.subr.bf16.mxu0 %v5624
        %7890 = vmatpush1.bf16.msra.mxu0 %v5623
        %7891 = vmatprep.subr.bf16.mxu0 %v5636
        %7892 = vmatpush1.bf16.msra.mxu0 %v5635
        %7893 = vmatprep.subr.bf16.mxu0 %v5648
        %7894 = vmatpush1.bf16.msra.mxu0 %v5647
        %7895 = vmatprep.subr.bf16.mxu0 %v5660
        %7896 = vmatpush1.bf16.msra.mxu0 %v5659
        %7897 = vmatprep.subr.bf16.mxu0 %v5672
        %7898 = vmatpush1.bf16.msra.mxu0 %v5671
        %7899 = vmatprep.subr.bf16.mxu0 %v5684
        %7900 = vmatpush1.bf16.msra.mxu0 %v5683
        %7901 = vmatprep.subr.bf16.mxu0 %v5696
        %7902 = vmatpush1.bf16.msra.mxu0 %v5695
        %7903 = vmatprep.subr.bf16.mxu0 %v5708
        %7904 = vmatpush1.bf16.msra.mxu0 %v5707
        %7905 = vmatprep.mubr.bf16.mxu0 %v2374
        %7906 = vmatmul.mubr.bf16.gmra.mrb[0].mxu0 %v2373
        %v7907 = vpop.f32.mrb[0].mxu0
        %v7908 = vadd.f32 %v3196, %v7907
        %v7909 = vpop.f32.mrb[0].mxu0
        %v7910 = vadd.f32 %v3200, %v7909
        %v7911 = vpop.f32.mrb[0].mxu0
        %v7912 = vpop.f32.mrb[0].mxu0
        %7913 = vdwg.mxu0
        %7914 = vmatprep.subr.bf16.mxu0 %v5720
        %7915 = vmatpush1.bf16.msra.mxu0 %v5719
        %7916 = vmatprep.subr.bf16.mxu0 %v5732
        %7917 = vmatpush1.bf16.msra.mxu0 %v5731
        %7918 = vmatprep.subr.bf16.mxu0 %v5744
        %7919 = vmatpush1.bf16.msra.mxu0 %v5743
        %7920 = vmatprep.subr.bf16.mxu0 %v5756
        %7921 = vmatpush1.bf16.msra.mxu0 %v5755
        %7922 = vmatprep.subr.bf16.mxu0 %v5768
        %7923 = vmatpush1.bf16.msra.mxu0 %v5767
        %7924 = vmatprep.subr.bf16.mxu0 %v5780
        %7925 = vmatpush1.bf16.msra.mxu0 %v5779
        %7926 = vmatprep.subr.bf16.mxu0 %v5792
        %7927 = vmatpush1.bf16.msra.mxu0 %v5791
        %7928 = vmatprep.subr.bf16.mxu0 %v5804
        %7929 = vmatpush1.bf16.msra.mxu0 %v5803
        %7930 = vmatprep.subr.bf16.mxu0 %v5816
        %7931 = vmatpush1.bf16.msra.mxu0 %v5815
        %7932 = vmatprep.subr.bf16.mxu0 %v5828
        %7933 = vmatpush1.bf16.msra.mxu0 %v5827
        %7934 = vmatprep.subr.bf16.mxu0 %v5840
        %7935 = vmatpush1.bf16.msra.mxu0 %v5839
        %7936 = vmatprep.subr.bf16.mxu0 %v5852
        %7937 = vmatpush1.bf16.msra.mxu0 %v5851
        %7938 = vmatprep.subr.bf16.mxu0 %v5864
        %7939 = vmatpush1.bf16.msra.mxu0 %v5863
        %7940 = vmatprep.subr.bf16.mxu0 %v5876
        %7941 = vmatpush1.bf16.msra.mxu0 %v5875
        %7942 = vmatprep.subr.bf16.mxu0 %v5888
        %7943 = vmatpush1.bf16.msra.mxu0 %v5887
        %7944 = vmatprep.subr.bf16.mxu0 %v5900
        %7945 = vmatpush1.bf16.msra.mxu0 %v5899
        %7946 = vmatprep.mubr.bf16.mxu0 %v2376
        %7947 = vmatmul.mubr.bf16.gmra.mrb[0].mxu0 %v2375
        %v7948 = vpop.f32.mrb[0].mxu0
        %v7949 = vadd.f32 %v7908, %v7948
        %v7950 = vpop.f32.mrb[0].mxu0
        %v7951 = vadd.f32 %v7910, %v7950
        %v7952 = vpop.f32.mrb[0].mxu0
        %v7953 = vpop.f32.mrb[0].mxu0
        %7954 = vdwg.mxu0
        %7955 = vmatprep.subr.bf16.mxu0 %v5912
        %7956 = vmatpush1.bf16.msra.mxu0 %v5911
        %7957 = vmatprep.subr.bf16.mxu0 %v5924
        %7958 = vmatpush1.bf16.msra.mxu0 %v5923
        %7959 = vmatprep.subr.bf16.mxu0 %v5936
        %7960 = vmatpush1.bf16.msra.mxu0 %v5935
        %7961 = vmatprep.subr.bf16.mxu0 %v5948
        %7962 = vmatpush1.bf16.msra.mxu0 %v5947
        %7963 = vmatprep.subr.bf16.mxu0 %v5960
        %7964 = vmatpush1.bf16.msra.mxu0 %v5959
        %7965 = vmatprep.subr.bf16.mxu0 %v5972
        %7966 = vmatpush1.bf16.msra.mxu0 %v5971
        %7967 = vmatprep.subr.bf16.mxu0 %v5984
        %7968 = vmatpush1.bf16.msra.mxu0 %v5983
        %7969 = vmatprep.subr.bf16.mxu0 %v5996
        %7970 = vmatpush1.bf16.msra.mxu0 %v5995
        %7971 = vmatprep.subr.bf16.mxu0 %v6008
        %7972 = vmatpush1.bf16.msra.mxu0 %v6007
        %7973 = vmatprep.subr.bf16.mxu0 %v6020
        %7974 = vmatpush1.bf16.msra.mxu0 %v6019
        %7975 = vmatprep.subr.bf16.mxu0 %v6032
        %7976 = vmatpush1.bf16.msra.mxu0 %v6031
        %7977 = vmatprep.subr.bf16.mxu0 %v6044
        %7978 = vmatpush1.bf16.msra.mxu0 %v6043
        %7979 = vmatprep.subr.bf16.mxu0 %v6056
        %7980 = vmatpush1.bf16.msra.mxu0 %v6055
        %7981 = vmatprep.subr.bf16.mxu0 %v6068
        %7982 = vmatpush1.bf16.msra.mxu0 %v6067
        %7983 = vmatprep.subr.bf16.mxu0 %v6080
        %7984 = vmatpush1.bf16.msra.mxu0 %v6079
        %7985 = vmatprep.subr.bf16.mxu0 %v6092
        %7986 = vmatpush1.bf16.msra.mxu0 %v6091
        %7987 = vmatprep.mubr.bf16.mxu0 %v2378
        %7988 = vmatmul.mubr.bf16.gmra.mrb[0].mxu0 %v2377
        %v7989 = vpop.f32.mrb[0].mxu0
        %v7990 = vadd.f32 %v7949, %v7989
        %v7991 = vpop.f32.mrb[0].mxu0
        %v7992 = vadd.f32 %v7951, %v7991
        %v7993 = vpop.f32.mrb[0].mxu0
        %v7994 = vpop.f32.mrb[0].mxu0
        %7995 = vdwg.mxu0
        %7996 = vmatprep.subr.bf16.mxu0 %v6104
        %7997 = vmatpush1.bf16.msra.mxu0 %v6103
        %7998 = vmatprep.subr.bf16.mxu0 %v6116
        %7999 = vmatpush1.bf16.msra.mxu0 %v6115
        %8000 = vmatprep.subr.bf16.mxu0 %v6128
        %8001 = vmatpush1.bf16.msra.mxu0 %v6127
        %8002 = vmatprep.subr.bf16.mxu0 %v6140
        %8003 = vmatpush1.bf16.msra.mxu0 %v6139
        %8004 = vmatprep.subr.bf16.mxu0 %v6152
        %8005 = vmatpush1.bf16.msra.mxu0 %v6151
        %8006 = vmatprep.subr.bf16.mxu0 %v6164
        %8007 = vmatpush1.bf16.msra.mxu0 %v6163
        %8008 = vmatprep.subr.bf16.mxu0 %v6176
        %8009 = vmatpush1.bf16.msra.mxu0 %v6175
        %8010 = vmatprep.subr.bf16.mxu0 %v6188
        %8011 = vmatpush1.bf16.msra.mxu0 %v6187
        %8012 = vmatprep.subr.bf16.mxu0 %v6200
        %8013 = vmatpush1.bf16.msra.mxu0 %v6199
        %8014 = vmatprep.subr.bf16.mxu0 %v6212
        %8015 = vmatpush1.bf16.msra.mxu0 %v6211
        %8016 = vmatprep.subr.bf16.mxu0 %v6224
        %8017 = vmatpush1.bf16.msra.mxu0 %v6223
        %8018 = vmatprep.subr.bf16.mxu0 %v6236
        %8019 = vmatpush1.bf16.msra.mxu0 %v6235
        %8020 = vmatprep.subr.bf16.mxu0 %v6248
        %8021 = vmatpush1.bf16.msra.mxu0 %v6247
        %8022 = vmatprep.subr.bf16.mxu0 %v6260
        %8023 = vmatpush1.bf16.msra.mxu0 %v6259
        %8024 = vmatprep.subr.bf16.mxu0 %v6272
        %8025 = vmatpush1.bf16.msra.mxu0 %v6271
        %8026 = vmatprep.subr.bf16.mxu0 %v6284
        %8027 = vmatpush1.bf16.msra.mxu0 %v6283
        %8028 = vmatprep.mubr.bf16.mxu0 %v2380
        %8029 = vmatmul.mubr.bf16.gmra.mrb[0].mxu0 %v2379
        %v8030 = vpop.f32.mrb[0].mxu0
        %v8031 = vadd.f32 %v7990, %v8030
        %v8032 = vpop.f32.mrb[0].mxu0
        %v8033 = vadd.f32 %v7992, %v8032
        %v8034 = vpop.f32.mrb[0].mxu0
        %v8035 = vpop.f32.mrb[0].mxu0
        %8036 = vdwg.mxu0
        %v8037 = vld [vmem:[#allocation11] sm:$0x3f]
        %v8038 = vld [vmem:[#allocation13] sm:$0x3f]
        %vm8039 = vcmask 1041408
        %v8040 = vsel %vm8039, %v7211, 0.0
        %v8041 = vsel %vm8039, %v7213, 0.0
        %v8042 = vadd.f32 %v8040, %v8041
        %v8043 = vsel %vm8039, %v7375, 0.0
        %v8044 = vadd.f32 %v8042, %v8043
        %v8045 = vsel %vm8039, %v7377, 0.0
        %v8046 = vadd.f32 %v8044, %v8045
        %v8047 = vsel %vm8039, %v7539, 0.0
        %v8048 = vadd.f32 %v8046, %v8047
        %v8049 = vsel %vm8039, %v7541, 0.0
        %v8050 = vadd.f32 %v8048, %v8049
        %8051 = vadd.xlane.f32.xlu0 %v8050
        %v8052 = vpop.xlane.xlu0 %8051
        %v8053 = vrcp.pop 768.0
        %v8054 = vmul.f32 %v8052, %v8053
        %v8055 = vsub.f32 %v7211, %v8054
        %v8056 = vsub.f32 %v7213, %v8054
        %v8057 = vsub.f32 %v7375, %v8054
        %v8058 = vsub.f32 %v7377, %v8054
        %v8059 = vsub.f32 %v7539, %v8054
        %v8060 = vsub.f32 %v7541, %v8054
        %v8061 = vmul.f32 %v8055, %v8055
        %v8062 = vmul.f32 %v8056, %v8056
        %v8063 = vmul.f32 %v8057, %v8057
        %v8064 = vmul.f32 %v8058, %v8058
        %v8065 = vmul.f32 %v8059, %v8059
        %v8066 = vmul.f32 %v8060, %v8060
        %v8067 = vsel %vm8039, %v8061, 0.0
        %v8068 = vsel %vm8039, %v8062, 0.0
        %v8069 = vadd.f32 %v8067, %v8068
        %v8070 = vsel %vm8039, %v8063, 0.0
        %v8071 = vadd.f32 %v8069, %v8070
        %v8072 = vsel %vm8039, %v8064, 0.0
        %v8073 = vadd.f32 %v8071, %v8072
        %v8074 = vsel %vm8039, %v8065, 0.0
        %v8075 = vadd.f32 %v8073, %v8074
        %v8076 = vsel %vm8039, %v8066, 0.0
        %v8077 = vadd.f32 %v8075, %v8076
        %8078 = vadd.xlane.f32.xlu0 %v8077
        %v8079 = vpop.xlane.xlu0 %8078
        %v8080 = vmul.f32 %v8079, %v8053
        %v8081 = vadd.f32 %v8080, 1e-05
        %v8082 = vrsqrt.pop %v8081
        %v8083 = vmul.f32 %v8055, %v8082
        %v8084 = vmul.f32 %v8056, %v8082
        %v8085 = vmul.f32 %v8057, %v8082
        %v8086 = vmul.f32 %v8058, %v8082
        %v8087 = vmul.f32 %v8059, %v8082
        %v8088 = vmul.f32 %v8060, %v8082
        %v8090 = vlaneseq
        %v8091 = vshrl.u32 %v8090, 7
        %v8092 = vsub.s32 0, %v8091
        %v8093 = vrot.slane %v8037, %v8092
        %v8094 = vlaneseq
        %v8095 = vshrl.u32 %v8094, 7
        %v8096 = vsub.s32 1, %v8095
        %v8097 = vrot.slane %v8037, %v8096
        %v8098 = vlaneseq
        %v8099 = vshrl.u32 %v8098, 7
        %v8100 = vsub.s32 2, %v8099
        %v8101 = vrot.slane %v8037, %v8100
        %v8102 = vlaneseq
        %v8103 = vshrl.u32 %v8102, 7
        %v8104 = vsub.s32 3, %v8103
        %v8105 = vrot.slane %v8037, %v8104
        %v8106 = vlaneseq
        %v8107 = vshrl.u32 %v8106, 7
        %v8108 = vsub.s32 4, %v8107
        %v8109 = vrot.slane %v8037, %v8108
        %v8110 = vlaneseq
        %v8111 = vshrl.u32 %v8110, 7
        %v8112 = vsub.s32 5, %v8111
        %v8113 = vrot.slane %v8037, %v8112
        %v8120 = vmul.f32 %v8083, %v8093
        %v8121 = vmul.f32 %v8084, %v8097
        %v8122 = vmul.f32 %v8085, %v8101
        %v8123 = vmul.f32 %v8086, %v8105
        %v8124 = vmul.f32 %v8087, %v8109
        %v8125 = vmul.f32 %v8088, %v8113
        %v8127 = vlaneseq
        %v8128 = vshrl.u32 %v8127, 7
        %v8129 = vsub.s32 0, %v8128
        %v8130 = vrot.slane %v8038, %v8129
        %v8131 = vlaneseq
        %v8132 = vshrl.u32 %v8131, 7
        %v8133 = vsub.s32 1, %v8132
        %v8134 = vrot.slane %v8038, %v8133
        %v8135 = vlaneseq
        %v8136 = vshrl.u32 %v8135, 7
        %v8137 = vsub.s32 2, %v8136
        %v8138 = vrot.slane %v8038, %v8137
        %v8139 = vlaneseq
        %v8140 = vshrl.u32 %v8139, 7
        %v8141 = vsub.s32 3, %v8140
        %v8142 = vrot.slane %v8038, %v8141
        %v8143 = vlaneseq
        %v8144 = vshrl.u32 %v8143, 7
        %v8145 = vsub.s32 4, %v8144
        %v8146 = vrot.slane %v8038, %v8145
        %v8147 = vlaneseq
        %v8148 = vshrl.u32 %v8147, 7
        %v8149 = vsub.s32 5, %v8148
        %v8150 = vrot.slane %v8038, %v8149
        %v8157 = vadd.f32 %v8120, %v8130
        %v8158 = vadd.f32 %v8121, %v8134
        %v8159 = vadd.f32 %v8122, %v8138
        %v8160 = vadd.f32 %v8123, %v8142
        %v8161 = vadd.f32 %v8124, %v8146
        %v8162 = vadd.f32 %v8125, %v8150
        %v8169 = vcombine.low %v8157, %v8158
        %v8170 = vcombine.low %v8159, %v8160
        %v8172 = vunpack.c.l.s4 1983009808
        %v8173 = vunpack.c.0.s8 %v8172
        %v8174 = vlaneseq
        %v8175 = vshrl.u32 %v8174, 7
        %v8176 = vsub.s32 %v8173, %v8175
        %v8177 = vrot.slane %v8169, %v8176
        %v8179 = vunpack.c.l.s4 1983009808
        %v8180 = vunpack.c.0.s8 %v8179
        %v8181 = vlaneseq
        %v8182 = vshrl.u32 %v8181, 7
        %v8183 = vsub.s32 %v8180, %v8182
        %v8184 = vrot.slane %v8170, %v8183
        %v8185 = vcombine.low %v8177, %v8184
        %v8186 = vcombine.low %v8161, %v8162
        %v8188 = vunpack.c.l.s4 1983009808
        %v8189 = vunpack.c.0.s8 %v8188
        %v8190 = vlaneseq
        %v8191 = vshrl.u32 %v8190, 7
        %v8192 = vsub.s32 %v8189, %v8191
        %v8193 = vrot.slane %v8186, %v8192
        %8196 = vst [vmem:[%s396] sm:$0xff] %v8185
        %8197 = vst [vmem:[%s396 + $0x8] sm:$0xf] %v8193
        %v8198 = vsel %vm8039, %v7703, 0.0
        %v8199 = vsel %vm8039, %v7705, 0.0
        %v8200 = vadd.f32 %v8198, %v8199
        %v8201 = vsel %vm8039, %v7867, 0.0
        %v8202 = vadd.f32 %v8200, %v8201
        %v8203 = vsel %vm8039, %v7869, 0.0
        %v8204 = vadd.f32 %v8202, %v8203
        %v8205 = vsel %vm8039, %v8031, 0.0
        %v8206 = vadd.f32 %v8204, %v8205
        %v8207 = vsel %vm8039, %v8033, 0.0
        %v8208 = vadd.f32 %v8206, %v8207
        %8209 = vadd.xlane.f32.xlu0 %v8208
        %v8210 = vpop.xlane.xlu0 %8209
        %v8211 = vmul.f32 %v8210, %v8053
        %v8212 = vsub.f32 %v7703, %v8211
        %v8213 = vsub.f32 %v7705, %v8211
        %v8214 = vsub.f32 %v7867, %v8211
        %v8215 = vsub.f32 %v7869, %v8211
        %v8216 = vsub.f32 %v8031, %v8211
        %v8217 = vsub.f32 %v8033, %v8211
        %v8218 = vmul.f32 %v8212, %v8212
        %v8219 = vmul.f32 %v8213, %v8213
        %v8220 = vmul.f32 %v8214, %v8214
        %v8221 = vmul.f32 %v8215, %v8215
        %v8222 = vmul.f32 %v8216, %v8216
        %v8223 = vmul.f32 %v8217, %v8217
        %v8224 = vsel %vm8039, %v8218, 0.0
        %v8225 = vsel %vm8039, %v8219, 0.0
        %v8226 = vadd.f32 %v8224, %v8225
        %v8227 = vsel %vm8039, %v8220, 0.0
        %v8228 = vadd.f32 %v8226, %v8227
        %v8229 = vsel %vm8039, %v8221, 0.0
        %v8230 = vadd.f32 %v8228, %v8229
        %v8231 = vsel %vm8039, %v8222, 0.0
        %v8232 = vadd.f32 %v8230, %v8231
        %v8233 = vsel %vm8039, %v8223, 0.0
        %v8234 = vadd.f32 %v8232, %v8233
        %8235 = vadd.xlane.f32.xlu0 %v8234
        %v8236 = vpop.xlane.xlu0 %8235
        %v8237 = vmul.f32 %v8236, %v8053
        %v8238 = vadd.f32 %v8237, 1e-05
        %v8239 = vrsqrt.pop %v8238
        %v8240 = vmul.f32 %v8212, %v8239
        %v8241 = vmul.f32 %v8213, %v8239
        %v8242 = vmul.f32 %v8214, %v8239
        %v8243 = vmul.f32 %v8215, %v8239
        %v8244 = vmul.f32 %v8216, %v8239
        %v8245 = vmul.f32 %v8217, %v8239
        %v8246 = vmul.f32 %v8240, %v8093
        %v8247 = vmul.f32 %v8241, %v8097
        %v8248 = vmul.f32 %v8242, %v8101
        %v8249 = vmul.f32 %v8243, %v8105
        %v8250 = vmul.f32 %v8244, %v8109
        %v8251 = vmul.f32 %v8245, %v8113
        %v8252 = vadd.f32 %v8246, %v8130
        %v8253 = vadd.f32 %v8247, %v8134
        %v8254 = vadd.f32 %v8248, %v8138
        %v8255 = vadd.f32 %v8249, %v8142
        %v8256 = vadd.f32 %v8250, %v8146
        %v8257 = vadd.f32 %v8251, %v8150
        %v8264 = vcombine.low %v8252, %v8253
        %v8265 = vcombine.low %v8254, %v8255
        %v8267 = vunpack.c.l.s4 1983009808
        %v8268 = vunpack.c.0.s8 %v8267
        %v8269 = vlaneseq
        %v8270 = vshrl.u32 %v8269, 7
        %v8271 = vsub.s32 %v8268, %v8270
        %v8272 = vrot.slane %v8264, %v8271
        %v8274 = vunpack.c.l.s4 1983009808
        %v8275 = vunpack.c.0.s8 %v8274
        %v8276 = vlaneseq
        %v8277 = vshrl.u32 %v8276, 7
        %v8278 = vsub.s32 %v8275, %v8277
        %v8279 = vrot.slane %v8265, %v8278
        %v8280 = vcombine.low %v8272, %v8279
        %v8281 = vcombine.low %v8256, %v8257
        %v8283 = vunpack.c.l.s4 1983009808
        %v8284 = vunpack.c.0.s8 %v8283
        %v8285 = vlaneseq
        %v8286 = vshrl.u32 %v8285, 7
        %v8287 = vsub.s32 %v8284, %v8286
        %v8288 = vrot.slane %v8281, %v8287
        %8291 = vst [vmem:[%s396 + $0xc] sm:$0xff] %v8280
        %8292 = vst [vmem:[%s396 + $0x14] sm:$0xf] %v8288
        %s8293 = sand.u32 %s192, 1
        %s8294 = scalar_lea.sflag [#allocation4], %s8293
        %s8295 = sand.u32 %s192, 1
        %s8296 = smul.addr %s8295, 24
        %s8297 = scalar_lea.vmem [#allocation14], %s8296
        // Predicated region
        $region77: #{tpu_custom_call.1} parent=47 // pred_check
          %p8298 = pneg %p202
        $region78: #{tpu_custom_call.1} parent=47 // pred_check_branch
          %8300 = sbr.rel (%p8298) target = $region80
        $region79: #{tpu_custom_call.1} parent=47 // pred_region
          %s8301 = smul.u32 12, %s27
          %s8303 = ssub.s32 384, 384
          %8304 = vsyncadd %s8294, %s8303
          %s8305 = smul.addr %s8301, 32
          %s8306 = scalar_lea.hbm %s7, %s8305
          %s8308 = sshll.u32 %s8297, 4
          %s8309 = int_to_ptr.vmem [resolvable:$true] %s8308
          %8311 = dma.vmem_to_hbm [thread:$0]  %s8309, 384, %s8306, %s8294
        $region80: #{tpu_custom_call.1} parent=47 // pred_fallthru
          _
      $region48: #{tpu_custom_call.1} parent=5 // pred_fallthru
        _
      %p8312 = scmp.le.s32.totalorder 2, %s22
      // Predicated region
      $region81: #{tpu_custom_call.1} parent=5 // pred_check
        %p8313 = pneg %p8312
      $region82: #{tpu_custom_call.1} parent=5 // pred_check_branch
        %8315 = sbr.rel (%p8313) target = $region84
      $region83: #{tpu_custom_call.1} parent=5 // pred_region
        %s8316 = ssub.s32 %s22, 2
        // Predicated region
        $region85: #{tpu_custom_call.1} parent=83 // pred_check
          %p8317 = pneg %p208
        $region86: #{tpu_custom_call.1} parent=83 // pred_check_branch
          %8319 = sbr.rel (%p8317) target = $region88
        $region87: #{tpu_custom_call.1} parent=83 // pred_region
          %s8320 = sand.u32 %s193, 1
          %s8321 = scalar_lea.sflag [#allocation4], %s8320
          %s8322 = sand.u32 %s193, 1
          %s8323 = smul.addr %s8322, 24
          %s8324 = scalar_lea.vmem [#allocation14], %s8323
          %8325 = dma.done %s8321, 384
        $region88: #{tpu_custom_call.1} parent=83 // pred_fallthru
          _
      $region84: #{tpu_custom_call.1} parent=5 // pred_fallthru
        _
    $region6: #{tpu_custom_call.1} parent=1 // loop_footer
      %s26 = sadd.s32 1, %s22
    $region7: #{tpu_custom_call.1} parent=1 // loop_footer_branch
      %21 = sbr.rel target = $region3
    $region8: #{tpu_custom_call.1} parent=1 // loop_exit
      _
    %8326 = vsyncpa [#allocation3], 1
    %s8327 = scalar_lea.sflag [#allocation3], 1
    %8328 = vsyncpa %s8327, 1
    %8329 = vsyncpa [#allocation6], 1
    %8330 = vsyncpa [#allocation9], 1
    %s8331 = scalar_lea.sflag [#allocation9], 1
    %8332 = vsyncpa %s8331, 1
    %8333 = vsyncpa [#allocation12], 1
    %8334 = vsyncpa [#allocation4], 1
    %s8335 = scalar_lea.sflag [#allocation4], 1
    %8336 = vsyncpa %s8335, 1

</llo_original>
